<compile_context>
chip_gen: v7x
topology: tpu7x:2x2x1
jax: 0.10.0
libtpu: 0.0.40
codegen_flags: <defaults>
</compile_context>

<pallas_src>
import jax
import jax.numpy as jnp
from jax.experimental import pallas as pl
from jax.experimental.pallas import tpu as pltpu


# Row/col tap offsets (into the 1-pixel-padded input) per output parity for a
# k=5, stride=2, pad=2, output_padding=1 ConvTranspose2d.
_TAPS = ((0, 1, 2), (1, 2))

_BETA_MIN = 1e-6
_REPARAM_OFFSET = 2.0 ** -18
_PEDESTAL = _REPARAM_OFFSET ** 2


# ----------------------------------------------------------------------------
# Pallas kernel: phase-combined ConvTranspose2d (+ bias, + inverse GDN)
# ----------------------------------------------------------------------------
def _make_deconv_kernel(H, W, Cin, Cout, Hb, apply_gdn):
    half = 2 * Cout

    def kernel(x_ref, w_ref, b_ref, *rest):
        if apply_gdn:
            g_ref, beta_ref, o_ref, xpad_ref = rest
        else:
            g_ref = beta_ref = None
            o_ref, xpad_ref = rest

        if Hb == H:                       # no row split: fully static indexing
            row0 = 0
        else:
            row0 = pl.multiple_of(pl.program_id(1) * Hb, Hb)

        # 1-pixel zero padding done in VMEM scratch (no XLA pad op).
        xpad_ref[...] = jnp.zeros_like(xpad_ref)
        xpad_ref[1:1 + H, 1:1 + W, :] = x_ref[...]

        # Single 9-tap im2col shared by all four phases: K = 9*Cin.
        taps = [xpad_ref[pl.ds(row0 + dr, Hb), dc:dc + W, :]
                for dr in range(3) for dc in range(3)]
        patches = jnp.concatenate(taps, axis=-1).reshape(Hb * W, 9 * Cin)

        # One MXU matmul producing all four phases; columns ordered (py,px,c).
        y = jnp.dot(patches, w_ref[...], preferred_element_type=jnp.float32)
        y = y + b_ref[...]                                   # read once
        if apply_gdn:
            # inverse GDN for all phases at once via block-diagonal gamma^T.
            norm = jnp.dot(y * y, g_ref[...],
                           preferred_element_type=jnp.float32)
            y = y * jnp.sqrt(norm + beta_ref[...])

        # Phase-separated output layout (Hb, 2, W, 2*Cout); its row-major order
        # equals the interleaved (2*Hb, 2*W, Cout) image -> free reshape in HBM.
        o_ref[:, 0:1, :, :] = y[:, :half].reshape(Hb, 1, W, half).astype(o_ref.dtype)
        o_ref[:, 1:2, :, :] = y[:, half:].reshape(Hb, 1, W, half).astype(o_ref.dtype)

    return kernel


def _deconv_layer(x_nhwc, layer):
    """One ConvTranspose2d(k=5,s=2,p=2,op=1) [+ fused inverse GDN] layer."""
    N, H, W, Cin = x_nhwc.shape
    w, b, g, beta = layer["w"], layer["b"], layer["g"], layer["beta"]
    Cout = w.shape[1] // 4
    apply_gdn = g is not None

    # Split output rows for the two big layers: tiles the matmul M dimension
    # to 256-512 rows and feeds both v7x TensorCores even at batch 1.
    RB = 2 if H >= 16 else 1
    Hb = H // RB

    operands = [x_nhwc, w, b]
    in_specs = [
        pl.BlockSpec((None, H, W, Cin), lambda n, rb: (n, 0, 0, 0)),
        pl.BlockSpec(w.shape, lambda n, rb: (0, 0)),
        pl.BlockSpec(b.shape, lambda n, rb: (0, 0)),
    ]
    if apply_gdn:
        operands += [g, beta]
        in_specs += [
            pl.BlockSpec(g.shape, lambda n, rb: (0, 0)),
            pl.BlockSpec(beta.shape, lambda n, rb: (0, 0)),
        ]

    out = pl.pallas_call(
        _make_deconv_kernel(H, W, Cin, Cout, Hb, apply_gdn),
        out_shape=jax.ShapeDtypeStruct((N * H, 2, W, 2 * Cout), jnp.float32),
        grid=(N, RB),
        in_specs=in_specs,
        out_specs=pl.BlockSpec((Hb, 2, W, 2 * Cout),
                               lambda n, rb: (n * RB + rb, 0, 0, 0)),
        scratch_shapes=[pltpu.VMEM((H + 2, W + 2, Cin), jnp.float32)],
        compiler_params=pltpu.CompilerParams(
            dimension_semantics=("parallel", "parallel"),
            vmem_limit_bytes=32 * 1024 * 1024),
    )(*operands)
    # Free (row-major) reshape: (N*H, 2, W, 2*Cout) == (N, 2H, 2W, Cout).
    return out.reshape(N, 2 * H, 2 * W, Cout)


# ----------------------------------------------------------------------------
# One-time parameter preparation (outside the jitted forward)
# ----------------------------------------------------------------------------
def _combined_phase_weight(w_t):
    """ConvTranspose2d weight (Cin, Cout, 5, 5) -> one (9*Cin, 4*Cout) matrix.

    Rows are ordered (dr, dc, cin) over the 3x3 padded-input tap grid; columns
    are ordered (py, px, cout).  Taps a phase does not use are zero rows, so a
    single im2col/matmul serves all four phases."""
    Cin, Cout = w_t.shape[0], w_t.shape[1]
    # Equivalent stride-1 conv weight, (dy, dx, Cin, Cout) layout.
    w_conv = jnp.transpose(w_t[:, :, ::-1, ::-1], (2, 3, 0, 1)).astype(jnp.float32)
    zero = jnp.zeros((Cin, Cout), jnp.float32)
    cols = []
    for py in (0, 1):
        for px in (0, 1):
            rows = []
            for dr in range(3):
                for dc in range(3):
                    if (dr in _TAPS[py]) and (dc in _TAPS[px]):
                        rows.append(w_conv[2 * dr - py, 2 * dc - px])
                    else:
                        rows.append(zero)
            cols.append(jnp.concatenate(rows, axis=0))        # (9*Cin, Cout)
    return jnp.concatenate(cols, axis=1)                      # (9*Cin, 4*Cout)


def _gdn_effective(beta_raw, gamma_raw):
    """Forward-pass reparametrisation used by the (inverse) GDN layer."""
    beta_bound = (_BETA_MIN + _PEDESTAL) ** 0.5
    beta = jnp.maximum(beta_raw, beta_bound) ** 2 - _PEDESTAL          # (C,)
    gamma = jnp.maximum(gamma_raw, _REPARAM_OFFSET) ** 2 - _PEDESTAL   # (C, C)
    return beta, gamma


def _gdn_blockdiag_gamma_t(gamma_eff):
    """(C, C) effective gamma -> (4C, 4C) block-diagonal gamma^T (one block
    per output-parity phase), so the GDN norm is a single MXU matmul."""
    gt = jnp.transpose(gamma_eff).astype(jnp.float32)
    return jnp.kron(jnp.eye(4, dtype=jnp.float32), gt)


def prepare_decoder_params(params):
    prep = []
    for wk, bk, gdn in [("w1", "b1", "g1"), ("w2", "b2", "g2"),
                        ("w3", "b3", "g3"), ("w4", "b4", None)]:
        w_t, b = params[wk], params[bk]
        cout = w_t.shape[1]
        entry = {
            "w": _combined_phase_weight(w_t),                           # (9Cin, 4Cout)
            "b": jnp.tile(b.astype(jnp.float32), 4).reshape(1, 4 * cout),
            "g": None,
            "beta": None,
        }
        if gdn is not None:
            beta_eff, gamma_eff = _gdn_effective(params[gdn + "_beta"],
                                                 params[gdn + "_gamma"])
            entry["g"] = _gdn_blockdiag_gamma_t(gamma_eff)              # (4C, 4C)
            entry["beta"] = jnp.tile(beta_eff.astype(jnp.float32),
                                     4).reshape(1, 4 * cout)
        prep.append(entry)
    return prep


def decoder_pallas(x_nchw, prep):
    """Decoder forward. NCHW in / NCHW out (PyTorch convention)."""
    x = jnp.transpose(x_nchw, (0, 2, 3, 1)).astype(jnp.float32)   # -> NHWC
    for layer in prep:
        x = _deconv_layer(x, layer)
    return jnp.transpose(x, (0, 3, 1, 2))                         # -> NCHW


# ----------------------------------------------------------------------------
# Pure-JAX reference (lax.conv_general_dilated) for the correctness check
# ----------------------------------------------------------------------------
def _ref_deconv(x_nhwc, w_t, b):
    k = w_t.shape[-1]
    w_conv = jnp.transpose(w_t[:, :, ::-1, ::-1], (2, 3, 0, 1))
    lo, hi = k - 1 - 2, k - 1 - 2 + 1
    y = jax.lax.conv_general_dilated(
        x_nhwc, w_conv, window_strides=(1, 1),
        padding=((lo, hi), (lo, hi)), lhs_dilation=(2, 2),
        dimension_numbers=("NHWC", "HWIO", "NHWC"),
        precision=jax.lax.Precision.HIGHEST)
    return y + b


def _ref_igdn(x_nhwc, beta_raw, gamma_raw):
    beta, gamma = _gdn_effective(beta_raw, gamma_raw)
    norm = jnp.einsum("nhwj,ij->nhwi", x_nhwc * x_nhwc, gamma,
                      precision=jax.lax.Precision.HIGHEST) + beta
    return x_nhwc * jnp.sqrt(norm)


def decoder_ref(x_nchw, params):
    x = jnp.transpose(x_nchw, (0, 2, 3, 1)).astype(jnp.float32)
    x = _ref_igdn(_ref_deconv(x, params["w1"], params["b1"]),
                  params["g1_beta"], params["g1_gamma"])
    x = _ref_igdn(_ref_deconv(x, params["w2"], params["b2"]),
                  params["g2_beta"], params["g2_gamma"])
    x = _ref_igdn(_ref_deconv(x, params["w3"], params["b3"]),
                  params["g3_beta"], params["g3_gamma"])
    x = _ref_deconv(x, params["w4"], params["b4"])
    return jnp.transpose(x, (0, 3, 1, 2))


# ----------------------------------------------------------------------------
# Deterministic parameter init (shapes follow the module's __init__)
# ----------------------------------------------------------------------------
def init_params(key, channel_in=32, channel_mid=32, channel_out=3):
    ks = jax.random.split(key, 14)
    scale = 0.05

    def gdn_init(kb, kg, c):
        beta = jnp.sqrt(jnp.ones((c,)) + 0.1 * jnp.abs(jax.random.normal(kb, (c,)))
                        + _PEDESTAL)
        gamma = jnp.sqrt(0.1 * jnp.eye(c)
                         + 0.02 * jnp.abs(jax.random.normal(kg, (c, c)))
                         + _PEDESTAL)
        return beta.astype(jnp.float32), gamma.astype(jnp.float32)

    p = {
        # ConvTranspose2d weights are (in_channels, out_channels, kH, kW)
        "w1": scale * jax.random.normal(ks[0], (channel_in, channel_mid, 5, 5), jnp.float32),
        "b1": scale * jax.random.normal(ks[1], (channel_mid,), jnp.float32),
        "w2": scale * jax.random.normal(ks[2], (channel_mid, channel_mid, 5, 5), jnp.float32),
        "b2": scale * jax.random.normal(ks[3], (channel_mid,), jnp.float32),
        "w3": scale * jax.random.normal(ks[4], (channel_mid, channel_mid, 5, 5), jnp.float32),
        "b3": scale * jax.random.normal(ks[5], (channel_mid,), jnp.float32),
        "w4": scale * jax.random.normal(ks[6], (channel_mid, channel_out, 5, 5), jnp.float32),
        "b4": scale * jax.random.normal(ks[7], (channel_out,), jnp.float32),
    }
    p["g1_beta"], p["g1_gamma"] = gdn_init(ks[8], ks[9], channel_mid)
    p["g2_beta"], p["g2_gamma"] = gdn_init(ks[10], ks[11], channel_mid)
    p["g3_beta"], p["g3_gamma"] = gdn_init(ks[12], ks[13], channel_mid)
    return p


if __name__ == "__main__":
    key = jax.random.PRNGKey(0)
    k_x, k_p = jax.random.split(key)

    # Small, module-consistent shapes: batch=2, channels 32->32->32->32->3,
    # latent spatial 4x4 -> image 64x64.
    channel_in, channel_mid, channel_out = 32, 32, 3
    x = jax.random.normal(k_x, (2, channel_in, 4, 4), jnp.float32)   # NCHW
    params = init_params(k_p, channel_in, channel_mid, channel_out)

    prep = prepare_decoder_params(params)        # one-time weight/GDN prep
    fwd = jax.jit(decoder_pallas)
    out = jax.block_until_ready(fwd(x, prep))

    ref = jax.block_until_ready(decoder_ref(x, params))

    assert out.shape == (2, channel_out, 64, 64), out.shape
    assert jnp.allclose(out, ref, atol=2e-3, rtol=2e-3), (
        float(jnp.max(jnp.abs(out - ref))))

    print("KERNEL_OK")
</pallas_src>

<mosaic_0001>
module attributes {stable_mosaic.version = 11 : i64} {
  func.func @kernel(%arg0: i32, %arg1: i32, %arg2: memref<1x4x4x32xf32, #tpu.memory_space<vmem>>, %arg3: memref<288x128xf32, #tpu.memory_space<vmem>>, %arg4: memref<1x128xf32, #tpu.memory_space<vmem>>, %arg5: memref<128x128xf32, #tpu.memory_space<vmem>>, %arg6: memref<1x128xf32, #tpu.memory_space<vmem>>, %arg7: memref<4x2x4x64xf32, #tpu.memory_space<vmem>>, %arg8: memref<6x6x32xf32, #tpu.memory_space<vmem>>) attributes {dimension_semantics = [#tpu.dimension_semantics<parallel>, #tpu.dimension_semantics<parallel>], iteration_bounds = array<i64: 2, 1>, scalar_prefetch = 0 : i64, scratch_operands = 1 : i64, tpu.core_type = #tpu.core_type<tc>, window_params = [{transform_indices = @transform_0, window_bounds = array<i64: 1, 4, 4, 32>}, {pipeline_mode = #tpu.pipeline_mode<synchronous>, transform_indices = @transform_1, window_bounds = array<i64: 288, 128>}, {pipeline_mode = #tpu.pipeline_mode<synchronous>, transform_indices = @transform_2, window_bounds = array<i64: 1, 128>}, {pipeline_mode = #tpu.pipeline_mode<synchronous>, transform_indices = @transform_3, window_bounds = array<i64: 128, 128>}, {pipeline_mode = #tpu.pipeline_mode<synchronous>, transform_indices = @transform_4, window_bounds = array<i64: 1, 128>}, {transform_indices = @transform_5, window_bounds = array<i64: 4, 2, 4, 64>}]} {
    %cst = arith.constant 0.000000e+00 : f32
    %0 = vector.broadcast %cst : f32 to vector<6x6x32xf32>
    %c0 = arith.constant 0 : index
    %c0_0 = arith.constant 0 : index
    %c0_1 = arith.constant 0 : index
    %1 = vector.load %arg8[%c0, %c0_0, %c0_1] : memref<6x6x32xf32, #tpu.memory_space<vmem>>, vector<6x6x32xf32>
    tpu.vector_store %arg8[%c0, %c0_0, %c0_1], %0 {strides = array<i32>} : memref<6x6x32xf32, #tpu.memory_space<vmem>>, vector<6x6x32xf32>,
    %c0_2 = arith.constant 0 : index
    %c0_3 = arith.constant 0 : index
    %c0_4 = arith.constant 0 : index
    %c0_5 = arith.constant 0 : index
    %2 = vector.load %arg2[%c0_2, %c0_3, %c0_4, %c0_5] : memref<1x4x4x32xf32, #tpu.memory_space<vmem>>, vector<1x4x4x32xf32>
    %3 = vector.shape_cast %2 : vector<1x4x4x32xf32> to vector<4x4x32xf32>
    %c1 = arith.constant 1 : index
    %c1_6 = arith.constant 1 : index
    %c0_7 = arith.constant 0 : index
    %4 = vector.load %arg8[%c1, %c1_6, %c0_7] : memref<6x6x32xf32, #tpu.memory_space<vmem>>, vector<4x4x32xf32>
    tpu.vector_store %arg8[%c1, %c1_6, %c0_7], %3 {strides = array<i32>} : memref<6x6x32xf32, #tpu.memory_space<vmem>>, vector<4x4x32xf32>,
    %c0_8 = arith.constant 0 : index
    %c0_9 = arith.constant 0 : index
    %c0_10 = arith.constant 0 : index
    %5 = vector.load %arg8[%c0_8, %c0_9, %c0_10] : memref<6x6x32xf32, #tpu.memory_space<vmem>>, vector<4x4x32xf32>
    %c0_11 = arith.constant 0 : index
    %c1_12 = arith.constant 1 : index
    %c0_13 = arith.constant 0 : index
    %6 = vector.load %arg8[%c0_11, %c1_12, %c0_13] : memref<6x6x32xf32, #tpu.memory_space<vmem>>, vector<4x4x32xf32>
    %c0_14 = arith.constant 0 : index
    %c2 = arith.constant 2 : index
    %c0_15 = arith.constant 0 : index
    %7 = vector.load %arg8[%c0_14, %c2, %c0_15] : memref<6x6x32xf32, #tpu.memory_space<vmem>>, vector<4x4x32xf32>
    %c1_16 = arith.constant 1 : index
    %c0_17 = arith.constant 0 : index
    %c0_18 = arith.constant 0 : index
    %8 = vector.load %arg8[%c1_16, %c0_17, %c0_18] : memref<6x6x32xf32, #tpu.memory_space<vmem>>, vector<4x4x32xf32>
    %c1_19 = arith.constant 1 : index
    %c1_20 = arith.constant 1 : index
    %c0_21 = arith.constant 0 : index
    %9 = vector.load %arg8[%c1_19, %c1_20, %c0_21] : memref<6x6x32xf32, #tpu.memory_space<vmem>>, vector<4x4x32xf32>
    %c1_22 = arith.constant 1 : index
    %c2_23 = arith.constant 2 : index
    %c0_24 = arith.constant 0 : index
    %10 = vector.load %arg8[%c1_22, %c2_23, %c0_24] : memref<6x6x32xf32, #tpu.memory_space<vmem>>, vector<4x4x32xf32>
    %c2_25 = arith.constant 2 : index
    %c0_26 = arith.constant 0 : index
    %c0_27 = arith.constant 0 : index
    %11 = vector.load %arg8[%c2_25, %c0_26, %c0_27] : memref<6x6x32xf32, #tpu.memory_space<vmem>>, vector<4x4x32xf32>
    %c2_28 = arith.constant 2 : index
    %c1_29 = arith.constant 1 : index
    %c0_30 = arith.constant 0 : index
    %12 = vector.load %arg8[%c2_28, %c1_29, %c0_30] : memref<6x6x32xf32, #tpu.memory_space<vmem>>, vector<4x4x32xf32>
    %c2_31 = arith.constant 2 : index
    %c2_32 = arith.constant 2 : index
    %c0_33 = arith.constant 0 : index
    %13 = vector.load %arg8[%c2_31, %c2_32, %c0_33] : memref<6x6x32xf32, #tpu.memory_space<vmem>>, vector<4x4x32xf32>
    %14 = tpu.concatenate %5, %6, %7, %8, %9, %10, %11, %12, %13 in 2 : vector<4x4x32xf32>, vector<4x4x32xf32>, vector<4x4x32xf32>, vector<4x4x32xf32>, vector<4x4x32xf32>, vector<4x4x32xf32>, vector<4x4x32xf32>, vector<4x4x32xf32>, vector<4x4x32xf32> -> vector<4x4x288xf32>
    %15 = vector.shape_cast %14 : vector<4x4x288xf32> to vector<16x288xf32>
    %c0_34 = arith.constant 0 : index
    %c0_35 = arith.constant 0 : index
    %16 = vector.load %arg3[%c0_34, %c0_35] : memref<288x128xf32, #tpu.memory_space<vmem>>, vector<288x128xf32>
    %cst_36 = arith.constant dense<0.000000e+00> : vector<16x128xf32>
    %17 = tpu.matmul %15, %16, %cst_36 {dimension_numbers = #tpu.dot_dimension_numbers<[1], [0], [0], [1], [0, 0, 1, 1], [], []>} : vector<16x288xf32>, vector<288x128xf32>, vector<16x128xf32> -> vector<16x128xf32>
    %c0_37 = arith.constant 0 : index
    %c0_38 = arith.constant 0 : index
    %18 = vector.load %arg4[%c0_37, %c0_38] : memref<1x128xf32, #tpu.memory_space<vmem>>, vector<1x128xf32>
    %19 = vector.broadcast %18 : vector<1x128xf32> to vector<16x128xf32>
    %20 = arith.addf %17, %19 : vector<16x128xf32>
    %21 = arith.mulf %20, %20 : vector<16x128xf32>
    %c0_39 = arith.constant 0 : index
    %c0_40 = arith.constant 0 : index
    %22 = vector.load %arg5[%c0_39, %c0_40] : memref<128x128xf32, #tpu.memory_space<vmem>>, vector<128x128xf32>
    %cst_41 = arith.constant dense<0.000000e+00> : vector<16x128xf32>
    %23 = tpu.matmul %21, %22, %cst_41 {dimension_numbers = #tpu.dot_dimension_numbers<[1], [0], [0], [1], [0, 0, 1, 1], [], []>} : vector<16x128xf32>, vector<128x128xf32>, vector<16x128xf32> -> vector<16x128xf32>
    %c0_42 = arith.constant 0 : index
    %c0_43 = arith.constant 0 : index
    %24 = vector.load %arg6[%c0_42, %c0_43] : memref<1x128xf32, #tpu.memory_space<vmem>>, vector<1x128xf32>
    %25 = vector.broadcast %24 : vector<1x128xf32> to vector<16x128xf32>
    %26 = arith.addf %23, %25 : vector<16x128xf32>
    %27 = math.sqrt %26 : vector<16x128xf32>
    %28 = arith.mulf %20, %27 : vector<16x128xf32>
    %29 = vector.extract_strided_slice %28 {offsets = [0, 0], sizes = [16, 64], strides = [1, 1]} : vector<16x128xf32> to vector<16x64xf32>
    %30 = vector.shape_cast %29 : vector<16x64xf32> to vector<4x1x4x64xf32>
    %c0_44 = arith.constant 0 : index
    %c0_45 = arith.constant 0 : index
    %c0_46 = arith.constant 0 : index
    %c0_47 = arith.constant 0 : index
    %31 = vector.load %arg7[%c0_44, %c0_45, %c0_46, %c0_47] : memref<4x2x4x64xf32, #tpu.memory_space<vmem>>, vector<4x1x4x64xf32>
    tpu.vector_store %arg7[%c0_44, %c0_45, %c0_46, %c0_47], %30 {strides = array<i32>} : memref<4x2x4x64xf32, #tpu.memory_space<vmem>>, vector<4x1x4x64xf32>,
    %32 = vector.extract_strided_slice %28 {offsets = [0, 64], sizes = [16, 64], strides = [1, 1]} : vector<16x128xf32> to vector<16x64xf32>
    %33 = vector.shape_cast %32 : vector<16x64xf32> to vector<4x1x4x64xf32>
    %c0_48 = arith.constant 0 : index
    %c1_49 = arith.constant 1 : index
    %c0_50 = arith.constant 0 : index
    %c0_51 = arith.constant 0 : index
    %34 = vector.load %arg7[%c0_48, %c1_49, %c0_50, %c0_51] : memref<4x2x4x64xf32, #tpu.memory_space<vmem>>, vector<4x1x4x64xf32>
    tpu.vector_store %arg7[%c0_48, %c1_49, %c0_50, %c0_51], %33 {strides = array<i32>} : memref<4x2x4x64xf32, #tpu.memory_space<vmem>>, vector<4x1x4x64xf32>,
    return
  }
  func.func @transform_0(%arg0: i32, %arg1: i32) -> (i32, i32, i32, i32) {
    %c0_i32 = arith.constant 0 : i32
    %c0_i32_0 = arith.constant 0 : i32
    %c0_i32_1 = arith.constant 0 : i32
    %c0_i32_2 = arith.constant 0 : i32
    return %arg0, %c0_i32, %c0_i32_0, %c0_i32_1 : i32, i32, i32, i32
  }
  func.func @transform_1(%arg0: i32, %arg1: i32) -> (i32, i32) {
    %c0_i32 = arith.constant 0 : i32
    %c0_i32_0 = arith.constant 0 : i32
    %c0_i32_1 = arith.constant 0 : i32
    return %c0_i32, %c0_i32_0 : i32, i32
  }
  func.func @transform_2(%arg0: i32, %arg1: i32) -> (i32, i32) {
    %c0_i32 = arith.constant 0 : i32
    %c0_i32_0 = arith.constant 0 : i32
    %c0_i32_1 = arith.constant 0 : i32
    return %c0_i32, %c0_i32_0 : i32, i32
  }
  func.func @transform_3(%arg0: i32, %arg1: i32) -> (i32, i32) {
    %c0_i32 = arith.constant 0 : i32
    %c0_i32_0 = arith.constant 0 : i32
    %c0_i32_1 = arith.constant 0 : i32
    return %c0_i32, %c0_i32_0 : i32, i32
  }
  func.func @transform_4(%arg0: i32, %arg1: i32) -> (i32, i32) {
    %c0_i32 = arith.constant 0 : i32
    %c0_i32_0 = arith.constant 0 : i32
    %c0_i32_1 = arith.constant 0 : i32
    return %c0_i32, %c0_i32_0 : i32, i32
  }
  func.func @transform_5(%arg0: i32, %arg1: i32) -> (i32, i32, i32, i32) {
    %c1_i32 = arith.constant 1 : i32
    %0 = arith.muli %arg0, %c1_i32 : i32
    %1 = arith.addi %0, %arg1 : i32
    %c0_i32 = arith.constant 0 : i32
    %c0_i32_0 = arith.constant 0 : i32
    %c0_i32_1 = arith.constant 0 : i32
    %c0_i32_2 = arith.constant 0 : i32
    return %1, %c0_i32, %c0_i32_0, %c0_i32_1 : i32, i32, i32, i32
  }
}

module attributes {stable_mosaic.version = 11 : i64} {
  func.func @kernel(%arg0: i32, %arg1: i32, %arg2: memref<1x8x8x32xf32, #tpu.memory_space<vmem>>, %arg3: memref<288x128xf32, #tpu.memory_space<vmem>>, %arg4: memref<1x128xf32, #tpu.memory_space<vmem>>, %arg5: memref<128x128xf32, #tpu.memory_space<vmem>>, %arg6: memref<1x128xf32, #tpu.memory_space<vmem>>, %arg7: memref<8x2x8x64xf32, #tpu.memory_space<vmem>>, %arg8: memref<10x10x32xf32, #tpu.memory_space<vmem>>) attributes {dimension_semantics = [#tpu.dimension_semantics<parallel>, #tpu.dimension_semantics<parallel>], iteration_bounds = array<i64: 2, 1>, scalar_prefetch = 0 : i64, scratch_operands = 1 : i64, tpu.core_type = #tpu.core_type<tc>, window_params = [{transform_indices = @transform_0, window_bounds = array<i64: 1, 8, 8, 32>}, {pipeline_mode = #tpu.pipeline_mode<synchronous>, transform_indices = @transform_1, window_bounds = array<i64: 288, 128>}, {pipeline_mode = #tpu.pipeline_mode<synchronous>, transform_indices = @transform_2, window_bounds = array<i64: 1, 128>}, {pipeline_mode = #tpu.pipeline_mode<synchronous>, transform_indices = @transform_3, window_bounds = array<i64: 128, 128>}, {pipeline_mode = #tpu.pipeline_mode<synchronous>, transform_indices = @transform_4, window_bounds = array<i64: 1, 128>}, {transform_indices = @transform_5, window_bounds = array<i64: 8, 2, 8, 64>}]} {
    %cst = arith.constant 0.000000e+00 : f32
    %0 = vector.broadcast %cst : f32 to vector<10x10x32xf32>
    %c0 = arith.constant 0 : index
    %c0_0 = arith.constant 0 : index
    %c0_1 = arith.constant 0 : index
    %1 = vector.load %arg8[%c0, %c0_0, %c0_1] : memref<10x10x32xf32, #tpu.memory_space<vmem>>, vector<10x10x32xf32>
    tpu.vector_store %arg8[%c0, %c0_0, %c0_1], %0 {strides = array<i32>} : memref<10x10x32xf32, #tpu.memory_space<vmem>>, vector<10x10x32xf32>,
    %c0_2 = arith.constant 0 : index
    %c0_3 = arith.constant 0 : index
    %c0_4 = arith.constant 0 : index
    %c0_5 = arith.constant 0 : index
    %2 = vector.load %arg2[%c0_2, %c0_3, %c0_4, %c0_5] : memref<1x8x8x32xf32, #tpu.memory_space<vmem>>, vector<1x8x8x32xf32>
    %3 = vector.shape_cast %2 : vector<1x8x8x32xf32> to vector<8x8x32xf32>
    %c1 = arith.constant 1 : index
    %c1_6 = arith.constant 1 : index
    %c0_7 = arith.constant 0 : index
    %4 = vector.load %arg8[%c1, %c1_6, %c0_7] : memref<10x10x32xf32, #tpu.memory_space<vmem>>, vector<8x8x32xf32>
    tpu.vector_store %arg8[%c1, %c1_6, %c0_7], %3 {strides = array<i32>} : memref<10x10x32xf32, #tpu.memory_space<vmem>>, vector<8x8x32xf32>,
    %c0_8 = arith.constant 0 : index
    %c0_9 = arith.constant 0 : index
    %c0_10 = arith.constant 0 : index
    %5 = vector.load %arg8[%c0_8, %c0_9, %c0_10] : memref<10x10x32xf32, #tpu.memory_space<vmem>>, vector<8x8x32xf32>
    %c0_11 = arith.constant 0 : index
    %c1_12 = arith.constant 1 : index
    %c0_13 = arith.constant 0 : index
    %6 = vector.load %arg8[%c0_11, %c1_12, %c0_13] : memref<10x10x32xf32, #tpu.memory_space<vmem>>, vector<8x8x32xf32>
    %c0_14 = arith.constant 0 : index
    %c2 = arith.constant 2 : index
    %c0_15 = arith.constant 0 : index
    %7 = vector.load %arg8[%c0_14, %c2, %c0_15] : memref<10x10x32xf32, #tpu.memory_space<vmem>>, vector<8x8x32xf32>
    %c1_16 = arith.constant 1 : index
    %c0_17 = arith.constant 0 : index
    %c0_18 = arith.constant 0 : index
    %8 = vector.load %arg8[%c1_16, %c0_17, %c0_18] : memref<10x10x32xf32, #tpu.memory_space<vmem>>, vector<8x8x32xf32>
    %c1_19 = arith.constant 1 : index
    %c1_20 = arith.constant 1 : index
    %c0_21 = arith.constant 0 : index
    %9 = vector.load %arg8[%c1_19, %c1_20, %c0_21] : memref<10x10x32xf32, #tpu.memory_space<vmem>>, vector<8x8x32xf32>
    %c1_22 = arith.constant 1 : index
    %c2_23 = arith.constant 2 : index
    %c0_24 = arith.constant 0 : index
    %10 = vector.load %arg8[%c1_22, %c2_23, %c0_24] : memref<10x10x32xf32, #tpu.memory_space<vmem>>, vector<8x8x32xf32>
    %c2_25 = arith.constant 2 : index
    %c0_26 = arith.constant 0 : index
    %c0_27 = arith.constant 0 : index
    %11 = vector.load %arg8[%c2_25, %c0_26, %c0_27] : memref<10x10x32xf32, #tpu.memory_space<vmem>>, vector<8x8x32xf32>
    %c2_28 = arith.constant 2 : index
    %c1_29 = arith.constant 1 : index
    %c0_30 = arith.constant 0 : index
    %12 = vector.load %arg8[%c2_28, %c1_29, %c0_30] : memref<10x10x32xf32, #tpu.memory_space<vmem>>, vector<8x8x32xf32>
    %c2_31 = arith.constant 2 : index
    %c2_32 = arith.constant 2 : index
    %c0_33 = arith.constant 0 : index
    %13 = vector.load %arg8[%c2_31, %c2_32, %c0_33] : memref<10x10x32xf32, #tpu.memory_space<vmem>>, vector<8x8x32xf32>
    %14 = tpu.concatenate %5, %6, %7, %8, %9, %10, %11, %12, %13 in 2 : vector<8x8x32xf32>, vector<8x8x32xf32>, vector<8x8x32xf32>, vector<8x8x32xf32>, vector<8x8x32xf32>, vector<8x8x32xf32>, vector<8x8x32xf32>, vector<8x8x32xf32>, vector<8x8x32xf32> -> vector<8x8x288xf32>
    %15 = vector.shape_cast %14 : vector<8x8x288xf32> to vector<64x288xf32>
    %c0_34 = arith.constant 0 : index
    %c0_35 = arith.constant 0 : index
    %16 = vector.load %arg3[%c0_34, %c0_35] : memref<288x128xf32, #tpu.memory_space<vmem>>, vector<288x128xf32>
    %cst_36 = arith.constant dense<0.000000e+00> : vector<64x128xf32>
    %17 = tpu.matmul %15, %16, %cst_36 {dimension_numbers = #tpu.dot_dimension_numbers<[1], [0], [0], [1], [0, 0, 1, 1], [], []>} : vector<64x288xf32>, vector<288x128xf32>, vector<64x128xf32> -> vector<64x128xf32>
    %c0_37 = arith.constant 0 : index
    %c0_38 = arith.constant 0 : index
    %18 = vector.load %arg4[%c0_37, %c0_38] : memref<1x128xf32, #tpu.memory_space<vmem>>, vector<1x128xf32>
    %19 = vector.broadcast %18 : vector<1x128xf32> to vector<64x128xf32>
    %20 = arith.addf %17, %19 : vector<64x128xf32>
    %21 = arith.mulf %20, %20 : vector<64x128xf32>
    %c0_39 = arith.constant 0 : index
    %c0_40 = arith.constant 0 : index
    %22 = vector.load %arg5[%c0_39, %c0_40] : memref<128x128xf32, #tpu.memory_space<vmem>>, vector<128x128xf32>
    %cst_41 = arith.constant dense<0.000000e+00> : vector<64x128xf32>
    %23 = tpu.matmul %21, %22, %cst_41 {dimension_numbers = #tpu.dot_dimension_numbers<[1], [0], [0], [1], [0, 0, 1, 1], [], []>} : vector<64x128xf32>, vector<128x128xf32>, vector<64x128xf32> -> vector<64x128xf32>
    %c0_42 = arith.constant 0 : index
    %c0_43 = arith.constant 0 : index
    %24 = vector.load %arg6[%c0_42, %c0_43] : memref<1x128xf32, #tpu.memory_space<vmem>>, vector<1x128xf32>
    %25 = vector.broadcast %24 : vector<1x128xf32> to vector<64x128xf32>
    %26 = arith.addf %23, %25 : vector<64x128xf32>
    %27 = math.sqrt %26 : vector<64x128xf32>
    %28 = arith.mulf %20, %27 : vector<64x128xf32>
    %29 = vector.extract_strided_slice %28 {offsets = [0, 0], sizes = [64, 64], strides = [1, 1]} : vector<64x128xf32> to vector<64x64xf32>
    %30 = vector.shape_cast %29 : vector<64x64xf32> to vector<8x1x8x64xf32>
    %c0_44 = arith.constant 0 : index
    %c0_45 = arith.constant 0 : index
    %c0_46 = arith.constant 0 : index
    %c0_47 = arith.constant 0 : index
    %31 = vector.load %arg7[%c0_44, %c0_45, %c0_46, %c0_47] : memref<8x2x8x64xf32, #tpu.memory_space<vmem>>, vector<8x1x8x64xf32>
    tpu.vector_store %arg7[%c0_44, %c0_45, %c0_46, %c0_47], %30 {strides = array<i32>} : memref<8x2x8x64xf32, #tpu.memory_space<vmem>>, vector<8x1x8x64xf32>,
    %32 = vector.extract_strided_slice %28 {offsets = [0, 64], sizes = [64, 64], strides = [1, 1]} : vector<64x128xf32> to vector<64x64xf32>
    %33 = vector.shape_cast %32 : vector<64x64xf32> to vector<8x1x8x64xf32>
    %c0_48 = arith.constant 0 : index
    %c1_49 = arith.constant 1 : index
    %c0_50 = arith.constant 0 : index
    %c0_51 = arith.constant 0 : index
    %34 = vector.load %arg7[%c0_48, %c1_49, %c0_50, %c0_51] : memref<8x2x8x64xf32, #tpu.memory_space<vmem>>, vector<8x1x8x64xf32>
    tpu.vector_store %arg7[%c0_48, %c1_49, %c0_50, %c0_51], %33 {strides = array<i32>} : memref<8x2x8x64xf32, #tpu.memory_space<vmem>>, vector<8x1x8x64xf32>,
    return
  }
  func.func @transform_0(%arg0: i32, %arg1: i32) -> (i32, i32, i32, i32) {
    %c0_i32 = arith.constant 0 : i32
    %c0_i32_0 = arith.constant 0 : i32
    %c0_i32_1 = arith.constant 0 : i32
    %c0_i32_2 = arith.constant 0 : i32
    return %arg0, %c0_i32, %c0_i32_0, %c0_i32_1 : i32, i32, i32, i32
  }
  func.func @transform_1(%arg0: i32, %arg1: i32) -> (i32, i32) {
    %c0_i32 = arith.constant 0 : i32
    %c0_i32_0 = arith.constant 0 : i32
    %c0_i32_1 = arith.constant 0 : i32
    return %c0_i32, %c0_i32_0 : i32, i32
  }
  func.func @transform_2(%arg0: i32, %arg1: i32) -> (i32, i32) {
    %c0_i32 = arith.constant 0 : i32
    %c0_i32_0 = arith.constant 0 : i32
    %c0_i32_1 = arith.constant 0 : i32
    return %c0_i32, %c0_i32_0 : i32, i32
  }
  func.func @transform_3(%arg0: i32, %arg1: i32) -> (i32, i32) {
    %c0_i32 = arith.constant 0 : i32
    %c0_i32_0 = arith.constant 0 : i32
    %c0_i32_1 = arith.constant 0 : i32
    return %c0_i32, %c0_i32_0 : i32, i32
  }
  func.func @transform_4(%arg0: i32, %arg1: i32) -> (i32, i32) {
    %c0_i32 = arith.constant 0 : i32
    %c0_i32_0 = arith.constant 0 : i32
    %c0_i32_1 = arith.constant 0 : i32
    return %c0_i32, %c0_i32_0 : i32, i32
  }
  func.func @transform_5(%arg0: i32, %arg1: i32) -> (i32, i32, i32, i32) {
    %c1_i32 = arith.constant 1 : i32
    %0 = arith.muli %arg0, %c1_i32 : i32
    %1 = arith.addi %0, %arg1 : i32
    %c0_i32 = arith.constant 0 : i32
    %c0_i32_0 = arith.constant 0 : i32
    %c0_i32_1 = arith.constant 0 : i32
    %c0_i32_2 = arith.constant 0 : i32
    return %1, %c0_i32, %c0_i32_0, %c0_i32_1 : i32, i32, i32, i32
  }
}

module attributes {stable_mosaic.version = 11 : i64} {
  func.func @kernel(%arg0: i32, %arg1: i32, %arg2: memref<1x16x16x32xf32, #tpu.memory_space<vmem>>, %arg3: memref<288x128xf32, #tpu.memory_space<vmem>>, %arg4: memref<1x128xf32, #tpu.memory_space<vmem>>, %arg5: memref<128x128xf32, #tpu.memory_space<vmem>>, %arg6: memref<1x128xf32, #tpu.memory_space<vmem>>, %arg7: memref<8x2x16x64xf32, #tpu.memory_space<vmem>>, %arg8: memref<18x18x32xf32, #tpu.memory_space<vmem>>) attributes {dimension_semantics = [#tpu.dimension_semantics<parallel>, #tpu.dimension_semantics<parallel>], iteration_bounds = array<i64: 2, 2>, scalar_prefetch = 0 : i64, scratch_operands = 1 : i64, tpu.core_type = #tpu.core_type<tc>, window_params = [{transform_indices = @transform_0, window_bounds = array<i64: 1, 16, 16, 32>}, {pipeline_mode = #tpu.pipeline_mode<synchronous>, transform_indices = @transform_1, window_bounds = array<i64: 288, 128>}, {pipeline_mode = #tpu.pipeline_mode<synchronous>, transform_indices = @transform_2, window_bounds = array<i64: 1, 128>}, {pipeline_mode = #tpu.pipeline_mode<synchronous>, transform_indices = @transform_3, window_bounds = array<i64: 128, 128>}, {pipeline_mode = #tpu.pipeline_mode<synchronous>, transform_indices = @transform_4, window_bounds = array<i64: 1, 128>}, {transform_indices = @transform_5, window_bounds = array<i64: 8, 2, 16, 64>}]} {
    %c8_i32 = arith.constant 8 : i32
    %0 = arith.muli %arg1, %c8_i32 : i32
    %1 = tpu.assume_multiple %0, 8 : i32
    %cst = arith.constant 0.000000e+00 : f32
    %2 = vector.broadcast %cst : f32 to vector<18x18x32xf32>
    %c0 = arith.constant 0 : index
    %c0_0 = arith.constant 0 : index
    %c0_1 = arith.constant 0 : index
    %3 = vector.load %arg8[%c0, %c0_0, %c0_1] : memref<18x18x32xf32, #tpu.memory_space<vmem>>, vector<18x18x32xf32>
    tpu.vector_store %arg8[%c0, %c0_0, %c0_1], %2 {strides = array<i32>} : memref<18x18x32xf32, #tpu.memory_space<vmem>>, vector<18x18x32xf32>,
    %c0_2 = arith.constant 0 : index
    %c0_3 = arith.constant 0 : index
    %c0_4 = arith.constant 0 : index
    %c0_5 = arith.constant 0 : index
    %4 = vector.load %arg2[%c0_2, %c0_3, %c0_4, %c0_5] : memref<1x16x16x32xf32, #tpu.memory_space<vmem>>, vector<1x16x16x32xf32>
    %5 = vector.shape_cast %4 : vector<1x16x16x32xf32> to vector<16x16x32xf32>
    %c1 = arith.constant 1 : index
    %c1_6 = arith.constant 1 : index
    %c0_7 = arith.constant 0 : index
    %6 = vector.load %arg8[%c1, %c1_6, %c0_7] : memref<18x18x32xf32, #tpu.memory_space<vmem>>, vector<16x16x32xf32>
    tpu.vector_store %arg8[%c1, %c1_6, %c0_7], %5 {strides = array<i32>} : memref<18x18x32xf32, #tpu.memory_space<vmem>>, vector<16x16x32xf32>,
    %c0_i32 = arith.constant 0 : i32
    %7 = arith.addi %1, %c0_i32 : i32
    %8 = arith.index_cast %7 : i32 to index
    %c0_8 = arith.constant 0 : index
    %c0_9 = arith.constant 0 : index
    %9 = vector.load %arg8[%8, %c0_8, %c0_9] : memref<18x18x32xf32, #tpu.memory_space<vmem>>, vector<8x16x32xf32>
    %c0_i32_10 = arith.constant 0 : i32
    %10 = arith.addi %1, %c0_i32_10 : i32
    %11 = arith.index_cast %10 : i32 to index
    %c1_11 = arith.constant 1 : index
    %c0_12 = arith.constant 0 : index
    %12 = vector.load %arg8[%11, %c1_11, %c0_12] : memref<18x18x32xf32, #tpu.memory_space<vmem>>, vector<8x16x32xf32>
    %c0_i32_13 = arith.constant 0 : i32
    %13 = arith.addi %1, %c0_i32_13 : i32
    %14 = arith.index_cast %13 : i32 to index
    %c2 = arith.constant 2 : index
    %c0_14 = arith.constant 0 : index
    %15 = vector.load %arg8[%14, %c2, %c0_14] : memref<18x18x32xf32, #tpu.memory_space<vmem>>, vector<8x16x32xf32>
    %c1_i32 = arith.constant 1 : i32
    %16 = arith.addi %1, %c1_i32 : i32
    %17 = arith.index_cast %16 : i32 to index
    %c0_15 = arith.constant 0 : index
    %c0_16 = arith.constant 0 : index
    %18 = vector.load %arg8[%17, %c0_15, %c0_16] : memref<18x18x32xf32, #tpu.memory_space<vmem>>, vector<8x16x32xf32>
    %c1_i32_17 = arith.constant 1 : i32
    %19 = arith.addi %1, %c1_i32_17 : i32
    %20 = arith.index_cast %19 : i32 to index
    %c1_18 = arith.constant 1 : index
    %c0_19 = arith.constant 0 : index
    %21 = vector.load %arg8[%20, %c1_18, %c0_19] : memref<18x18x32xf32, #tpu.memory_space<vmem>>, vector<8x16x32xf32>
    %c1_i32_20 = arith.constant 1 : i32
    %22 = arith.addi %1, %c1_i32_20 : i32
    %23 = arith.index_cast %22 : i32 to index
    %c2_21 = arith.constant 2 : index
    %c0_22 = arith.constant 0 : index
    %24 = vector.load %arg8[%23, %c2_21, %c0_22] : memref<18x18x32xf32, #tpu.memory_space<vmem>>, vector<8x16x32xf32>
    %c2_i32 = arith.constant 2 : i32
    %25 = arith.addi %1, %c2_i32 : i32
    %26 = arith.index_cast %25 : i32 to index
    %c0_23 = arith.constant 0 : index
    %c0_24 = arith.constant 0 : index
    %27 = vector.load %arg8[%26, %c0_23, %c0_24] : memref<18x18x32xf32, #tpu.memory_space<vmem>>, vector<8x16x32xf32>
    %c2_i32_25 = arith.constant 2 : i32
    %28 = arith.addi %1, %c2_i32_25 : i32
    %29 = arith.index_cast %28 : i32 to index
    %c1_26 = arith.constant 1 : index
    %c0_27 = arith.constant 0 : index
    %30 = vector.load %arg8[%29, %c1_26, %c0_27] : memref<18x18x32xf32, #tpu.memory_space<vmem>>, vector<8x16x32xf32>
    %c2_i32_28 = arith.constant 2 : i32
    %31 = arith.addi %1, %c2_i32_28 : i32
    %32 = arith.index_cast %31 : i32 to index
    %c2_29 = arith.constant 2 : index
    %c0_30 = arith.constant 0 : index
    %33 = vector.load %arg8[%32, %c2_29, %c0_30] : memref<18x18x32xf32, #tpu.memory_space<vmem>>, vector<8x16x32xf32>
    %34 = tpu.concatenate %9, %12, %15, %18, %21, %24, %27, %30, %33 in 2 : vector<8x16x32xf32>, vector<8x16x32xf32>, vector<8x16x32xf32>, vector<8x16x32xf32>, vector<8x16x32xf32>, vector<8x16x32xf32>, vector<8x16x32xf32>, vector<8x16x32xf32>, vector<8x16x32xf32> -> vector<8x16x288xf32>
    %35 = vector.shape_cast %34 : vector<8x16x288xf32> to vector<128x288xf32>
    %c0_31 = arith.constant 0 : index
    %c0_32 = arith.constant 0 : index
    %36 = vector.load %arg3[%c0_31, %c0_32] : memref<288x128xf32, #tpu.memory_space<vmem>>, vector<288x128xf32>
    %cst_33 = arith.constant dense<0.000000e+00> : vector<128x128xf32>
    %37 = tpu.matmul %35, %36, %cst_33 {dimension_numbers = #tpu.dot_dimension_numbers<[1], [0], [0], [1], [0, 0, 1, 1], [], []>} : vector<128x288xf32>, vector<288x128xf32>, vector<128x128xf32> -> vector<128x128xf32>
    %c0_34 = arith.constant 0 : index
    %c0_35 = arith.constant 0 : index
    %38 = vector.load %arg4[%c0_34, %c0_35] : memref<1x128xf32, #tpu.memory_space<vmem>>, vector<1x128xf32>
    %39 = vector.broadcast %38 : vector<1x128xf32> to vector<128x128xf32>
    %40 = arith.addf %37, %39 : vector<128x128xf32>
    %41 = arith.mulf %40, %40 : vector<128x128xf32>
    %c0_36 = arith.constant 0 : index
    %c0_37 = arith.constant 0 : index
    %42 = vector.load %arg5[%c0_36, %c0_37] : memref<128x128xf32, #tpu.memory_space<vmem>>, vector<128x128xf32>
    %cst_38 = arith.constant dense<0.000000e+00> : vector<128x128xf32>
    %43 = tpu.matmul %41, %42, %cst_38 {dimension_numbers = #tpu.dot_dimension_numbers<[1], [0], [0], [1], [0, 0, 1, 1], [], []>} : vector<128x128xf32>, vector<128x128xf32>, vector<128x128xf32> -> vector<128x128xf32>
    %c0_39 = arith.constant 0 : index
    %c0_40 = arith.constant 0 : index
    %44 = vector.load %arg6[%c0_39, %c0_40] : memref<1x128xf32, #tpu.memory_space<vmem>>, vector<1x128xf32>
    %45 = vector.broadcast %44 : vector<1x128xf32> to vector<128x128xf32>
    %46 = arith.addf %43, %45 : vector<128x128xf32>
    %47 = math.sqrt %46 : vector<128x128xf32>
    %48 = arith.mulf %40, %47 : vector<128x128xf32>
    %49 = vector.extract_strided_slice %48 {offsets = [0, 0], sizes = [128, 64], strides = [1, 1]} : vector<128x128xf32> to vector<128x64xf32>
    %50 = vector.shape_cast %49 : vector<128x64xf32> to vector<8x1x16x64xf32>
    %c0_41 = arith.constant 0 : index
    %c0_42 = arith.constant 0 : index
    %c0_43 = arith.constant 0 : index
    %c0_44 = arith.constant 0 : index
    %51 = vector.load %arg7[%c0_41, %c0_42, %c0_43, %c0_44] : memref<8x2x16x64xf32, #tpu.memory_space<vmem>>, vector<8x1x16x64xf32>
    tpu.vector_store %arg7[%c0_41, %c0_42, %c0_43, %c0_44], %50 {strides = array<i32>} : memref<8x2x16x64xf32, #tpu.memory_space<vmem>>, vector<8x1x16x64xf32>,
    %52 = vector.extract_strided_slice %48 {offsets = [0, 64], sizes = [128, 64], strides = [1, 1]} : vector<128x128xf32> to vector<128x64xf32>
    %53 = vector.shape_cast %52 : vector<128x64xf32> to vector<8x1x16x64xf32>
    %c0_45 = arith.constant 0 : index
    %c1_46 = arith.constant 1 : index
    %c0_47 = arith.constant 0 : index
    %c0_48 = arith.constant 0 : index
    %54 = vector.load %arg7[%c0_45, %c1_46, %c0_47, %c0_48] : memref<8x2x16x64xf32, #tpu.memory_space<vmem>>, vector<8x1x16x64xf32>
    tpu.vector_store %arg7[%c0_45, %c1_46, %c0_47, %c0_48], %53 {strides = array<i32>} : memref<8x2x16x64xf32, #tpu.memory_space<vmem>>, vector<8x1x16x64xf32>,
    return
  }
  func.func @transform_0(%arg0: i32, %arg1: i32) -> (i32, i32, i32, i32) {
    %c0_i32 = arith.constant 0 : i32
    %c0_i32_0 = arith.constant 0 : i32
    %c0_i32_1 = arith.constant 0 : i32
    %c0_i32_2 = arith.constant 0 : i32
    return %arg0, %c0_i32, %c0_i32_0, %c0_i32_1 : i32, i32, i32, i32
  }
  func.func @transform_1(%arg0: i32, %arg1: i32) -> (i32, i32) {
    %c0_i32 = arith.constant 0 : i32
    %c0_i32_0 = arith.constant 0 : i32
    %c0_i32_1 = arith.constant 0 : i32
    return %c0_i32, %c0_i32_0 : i32, i32
  }
  func.func @transform_2(%arg0: i32, %arg1: i32) -> (i32, i32) {
    %c0_i32 = arith.constant 0 : i32
    %c0_i32_0 = arith.constant 0 : i32
    %c0_i32_1 = arith.constant 0 : i32
    return %c0_i32, %c0_i32_0 : i32, i32
  }
  func.func @transform_3(%arg0: i32, %arg1: i32) -> (i32, i32) {
    %c0_i32 = arith.constant 0 : i32
    %c0_i32_0 = arith.constant 0 : i32
    %c0_i32_1 = arith.constant 0 : i32
    return %c0_i32, %c0_i32_0 : i32, i32
  }
  func.func @transform_4(%arg0: i32, %arg1: i32) -> (i32, i32) {
    %c0_i32 = arith.constant 0 : i32
    %c0_i32_0 = arith.constant 0 : i32
    %c0_i32_1 = arith.constant 0 : i32
    return %c0_i32, %c0_i32_0 : i32, i32
  }
  func.func @transform_5(%arg0: i32, %arg1: i32) -> (i32, i32, i32, i32) {
    %c2_i32 = arith.constant 2 : i32
    %0 = arith.muli %arg0, %c2_i32 : i32
    %1 = arith.addi %0, %arg1 : i32
    %c0_i32 = arith.constant 0 : i32
    %c0_i32_0 = arith.constant 0 : i32
    %c0_i32_1 = arith.constant 0 : i32
    %c0_i32_2 = arith.constant 0 : i32
    return %1, %c0_i32, %c0_i32_0, %c0_i32_1 : i32, i32, i32, i32
  }
}

module attributes {stable_mosaic.version = 11 : i64} {
  func.func @kernel(%arg0: i32, %arg1: i32, %arg2: memref<1x32x32x32xf32, #tpu.memory_space<vmem>>, %arg3: memref<288x12xf32, #tpu.memory_space<vmem>>, %arg4: memref<1x12xf32, #tpu.memory_space<vmem>>, %arg5: memref<16x2x32x6xf32, #tpu.memory_space<vmem>>, %arg6: memref<34x34x32xf32, #tpu.memory_space<vmem>>) attributes {dimension_semantics = [#tpu.dimension_semantics<parallel>, #tpu.dimension_semantics<parallel>], iteration_bounds = array<i64: 2, 2>, scalar_prefetch = 0 : i64, scratch_operands = 1 : i64, tpu.core_type = #tpu.core_type<tc>, window_params = [{transform_indices = @transform_0, window_bounds = array<i64: 1, 32, 32, 32>}, {pipeline_mode = #tpu.pipeline_mode<synchronous>, transform_indices = @transform_1, window_bounds = array<i64: 288, 12>}, {pipeline_mode = #tpu.pipeline_mode<synchronous>, transform_indices = @transform_2, window_bounds = array<i64: 1, 12>}, {transform_indices = @transform_3, window_bounds = array<i64: 16, 2, 32, 6>}]} {
    %c16_i32 = arith.constant 16 : i32
    %0 = arith.muli %arg1, %c16_i32 : i32
    %1 = tpu.assume_multiple %0, 16 : i32
    %cst = arith.constant 0.000000e+00 : f32
    %2 = vector.broadcast %cst : f32 to vector<34x34x32xf32>
    %c0 = arith.constant 0 : index
    %c0_0 = arith.constant 0 : index
    %c0_1 = arith.constant 0 : index
    %3 = vector.load %arg6[%c0, %c0_0, %c0_1] : memref<34x34x32xf32, #tpu.memory_space<vmem>>, vector<34x34x32xf32>
    tpu.vector_store %arg6[%c0, %c0_0, %c0_1], %2 {strides = array<i32>} : memref<34x34x32xf32, #tpu.memory_space<vmem>>, vector<34x34x32xf32>,
    %c0_2 = arith.constant 0 : index
    %c0_3 = arith.constant 0 : index
    %c0_4 = arith.constant 0 : index
    %c0_5 = arith.constant 0 : index
    %4 = vector.load %arg2[%c0_2, %c0_3, %c0_4, %c0_5] : memref<1x32x32x32xf32, #tpu.memory_space<vmem>>, vector<1x32x32x32xf32>
    %5 = vector.shape_cast %4 : vector<1x32x32x32xf32> to vector<32x32x32xf32>
    %c1 = arith.constant 1 : index
    %c1_6 = arith.constant 1 : index
    %c0_7 = arith.constant 0 : index
    %6 = vector.load %arg6[%c1, %c1_6, %c0_7] : memref<34x34x32xf32, #tpu.memory_space<vmem>>, vector<32x32x32xf32>
    tpu.vector_store %arg6[%c1, %c1_6, %c0_7], %5 {strides = array<i32>} : memref<34x34x32xf32, #tpu.memory_space<vmem>>, vector<32x32x32xf32>,
    %c0_i32 = arith.constant 0 : i32
    %7 = arith.addi %1, %c0_i32 : i32
    %8 = arith.index_cast %7 : i32 to index
    %c0_8 = arith.constant 0 : index
    %c0_9 = arith.constant 0 : index
    %9 = vector.load %arg6[%8, %c0_8, %c0_9] : memref<34x34x32xf32, #tpu.memory_space<vmem>>, vector<16x32x32xf32>
    %c0_i32_10 = arith.constant 0 : i32
    %10 = arith.addi %1, %c0_i32_10 : i32
    %11 = arith.index_cast %10 : i32 to index
    %c1_11 = arith.constant 1 : index
    %c0_12 = arith.constant 0 : index
    %12 = vector.load %arg6[%11, %c1_11, %c0_12] : memref<34x34x32xf32, #tpu.memory_space<vmem>>, vector<16x32x32xf32>
    %c0_i32_13 = arith.constant 0 : i32
    %13 = arith.addi %1, %c0_i32_13 : i32
    %14 = arith.index_cast %13 : i32 to index
    %c2 = arith.constant 2 : index
    %c0_14 = arith.constant 0 : index
    %15 = vector.load %arg6[%14, %c2, %c0_14] : memref<34x34x32xf32, #tpu.memory_space<vmem>>, vector<16x32x32xf32>
    %c1_i32 = arith.constant 1 : i32
    %16 = arith.addi %1, %c1_i32 : i32
    %17 = arith.index_cast %16 : i32 to index
    %c0_15 = arith.constant 0 : index
    %c0_16 = arith.constant 0 : index
    %18 = vector.load %arg6[%17, %c0_15, %c0_16] : memref<34x34x32xf32, #tpu.memory_space<vmem>>, vector<16x32x32xf32>
    %c1_i32_17 = arith.constant 1 : i32
    %19 = arith.addi %1, %c1_i32_17 : i32
    %20 = arith.index_cast %19 : i32 to index
    %c1_18 = arith.constant 1 : index
    %c0_19 = arith.constant 0 : index
    %21 = vector.load %arg6[%20, %c1_18, %c0_19] : memref<34x34x32xf32, #tpu.memory_space<vmem>>, vector<16x32x32xf32>
    %c1_i32_20 = arith.constant 1 : i32
    %22 = arith.addi %1, %c1_i32_20 : i32
    %23 = arith.index_cast %22 : i32 to index
    %c2_21 = arith.constant 2 : index
    %c0_22 = arith.constant 0 : index
    %24 = vector.load %arg6[%23, %c2_21, %c0_22] : memref<34x34x32xf32, #tpu.memory_space<vmem>>, vector<16x32x32xf32>
    %c2_i32 = arith.constant 2 : i32
    %25 = arith.addi %1, %c2_i32 : i32
    %26 = arith.index_cast %25 : i32 to index
    %c0_23 = arith.constant 0 : index
    %c0_24 = arith.constant 0 : index
    %27 = vector.load %arg6[%26, %c0_23, %c0_24] : memref<34x34x32xf32, #tpu.memory_space<vmem>>, vector<16x32x32xf32>
    %c2_i32_25 = arith.constant 2 : i32
    %28 = arith.addi %1, %c2_i32_25 : i32
    %29 = arith.index_cast %28 : i32 to index
    %c1_26 = arith.constant 1 : index
    %c0_27 = arith.constant 0 : index
    %30 = vector.load %arg6[%29, %c1_26, %c0_27] : memref<34x34x32xf32, #tpu.memory_space<vmem>>, vector<16x32x32xf32>
    %c2_i32_28 = arith.constant 2 : i32
    %31 = arith.addi %1, %c2_i32_28 : i32
    %32 = arith.index_cast %31 : i32 to index
    %c2_29 = arith.constant 2 : index
    %c0_30 = arith.constant 0 : index
    %33 = vector.load %arg6[%32, %c2_29, %c0_30] : memref<34x34x32xf32, #tpu.memory_space<vmem>>, vector<16x32x32xf32>
    %34 = tpu.concatenate %9, %12, %15, %18, %21, %24, %27, %30, %33 in 2 : vector<16x32x32xf32>, vector<16x32x32xf32>, vector<16x32x32xf32>, vector<16x32x32xf32>, vector<16x32x32xf32>, vector<16x32x32xf32>, vector<16x32x32xf32>, vector<16x32x32xf32>, vector<16x32x32xf32> -> vector<16x32x288xf32>
    %35 = vector.shape_cast %34 : vector<16x32x288xf32> to vector<512x288xf32>
    %c0_31 = arith.constant 0 : index
    %c0_32 = arith.constant 0 : index
    %36 = vector.load %arg3[%c0_31, %c0_32] : memref<288x12xf32, #tpu.memory_space<vmem>>, vector<288x12xf32>
    %cst_33 = arith.constant dense<0.000000e+00> : vector<512x12xf32>
    %37 = tpu.matmul %35, %36, %cst_33 {dimension_numbers = #tpu.dot_dimension_numbers<[1], [0], [0], [1], [0, 0, 1, 1], [], []>} : vector<512x288xf32>, vector<288x12xf32>, vector<512x12xf32> -> vector<512x12xf32>
    %c0_34 = arith.constant 0 : index
    %c0_35 = arith.constant 0 : index
    %38 = vector.load %arg4[%c0_34, %c0_35] : memref<1x12xf32, #tpu.memory_space<vmem>>, vector<1x12xf32>
    %39 = vector.broadcast %38 : vector<1x12xf32> to vector<512x12xf32>
    %40 = arith.addf %37, %39 : vector<512x12xf32>
    %41 = vector.extract_strided_slice %40 {offsets = [0, 0], sizes = [512, 6], strides = [1, 1]} : vector<512x12xf32> to vector<512x6xf32>
    %42 = vector.shape_cast %41 : vector<512x6xf32> to vector<16x1x32x6xf32>
    %c0_36 = arith.constant 0 : index
    %c0_37 = arith.constant 0 : index
    %c0_38 = arith.constant 0 : index
    %c0_39 = arith.constant 0 : index
    %43 = vector.load %arg5[%c0_36, %c0_37, %c0_38, %c0_39] : memref<16x2x32x6xf32, #tpu.memory_space<vmem>>, vector<16x1x32x6xf32>
    tpu.vector_store %arg5[%c0_36, %c0_37, %c0_38, %c0_39], %42 {strides = array<i32>} : memref<16x2x32x6xf32, #tpu.memory_space<vmem>>, vector<16x1x32x6xf32>,
    %44 = vector.extract_strided_slice %40 {offsets = [0, 6], sizes = [512, 6], strides = [1, 1]} : vector<512x12xf32> to vector<512x6xf32>
    %45 = vector.shape_cast %44 : vector<512x6xf32> to vector<16x1x32x6xf32>
    %c0_40 = arith.constant 0 : index
    %c1_41 = arith.constant 1 : index
    %c0_42 = arith.constant 0 : index
    %c0_43 = arith.constant 0 : index
    %46 = vector.load %arg5[%c0_40, %c1_41, %c0_42, %c0_43] : memref<16x2x32x6xf32, #tpu.memory_space<vmem>>, vector<16x1x32x6xf32>
    tpu.vector_store %arg5[%c0_40, %c1_41, %c0_42, %c0_43], %45 {strides = array<i32>} : memref<16x2x32x6xf32, #tpu.memory_space<vmem>>, vector<16x1x32x6xf32>,
    return
  }
  func.func @transform_0(%arg0: i32, %arg1: i32) -> (i32, i32, i32, i32) {
    %c0_i32 = arith.constant 0 : i32
    %c0_i32_0 = arith.constant 0 : i32
    %c0_i32_1 = arith.constant 0 : i32
    %c0_i32_2 = arith.constant 0 : i32
    return %arg0, %c0_i32, %c0_i32_0, %c0_i32_1 : i32, i32, i32, i32
  }
  func.func @transform_1(%arg0: i32, %arg1: i32) -> (i32, i32) {
    %c0_i32 = arith.constant 0 : i32
    %c0_i32_0 = arith.constant 0 : i32
    %c0_i32_1 = arith.constant 0 : i32
    return %c0_i32, %c0_i32_0 : i32, i32
  }
  func.func @transform_2(%arg0: i32, %arg1: i32) -> (i32, i32) {
    %c0_i32 = arith.constant 0 : i32
    %c0_i32_0 = arith.constant 0 : i32
    %c0_i32_1 = arith.constant 0 : i32
    return %c0_i32, %c0_i32_0 : i32, i32
  }
  func.func @transform_3(%arg0: i32, %arg1: i32) -> (i32, i32, i32, i32) {
    %c2_i32 = arith.constant 2 : i32
    %0 = arith.muli %arg0, %c2_i32 : i32
    %1 = arith.addi %0, %arg1 : i32
    %c0_i32 = arith.constant 0 : i32
    %c0_i32_0 = arith.constant 0 : i32
    %c0_i32_1 = arith.constant 0 : i32
    %c0_i32_2 = arith.constant 0 : i32
    return %1, %c0_i32, %c0_i32_0, %c0_i32_1 : i32, i32, i32, i32
  }
}

</mosaic_0001>

<llo_original>
// kernel: decoder_pallas.4
$region0: #{decoder_pallas.4}
  #allocation0 [shape = 'u32[]', space=smem, size = 0x4, offset = 0x4, fixed_abs, tag = 'smem constant byte address 0x4 - core index']
  #allocation1 [shape = 'u32[144,128]{1,0:T(1,128)}', space=vmem, size = 0x12000, scoped, tag = 'internal scratch']
  #allocation2 [shape = 'f32[6,6,32]{2,1,0:T(8,128)}', space=vmem, size = 0x6000, scoped, tag = 'scratch operand']
  %s0 = inlined_call_operand.hbm [shape: f32[2,4,4,32], index: 0, kind: input, shape index: {}]
  %s1 = inlined_call_operand.hbm [shape: f32[288,128], index: 1, kind: input, shape index: {}]
  %s2 = inlined_call_operand.hbm [shape: f32[1,128], index: 2, kind: input, shape index: {}]
  %s3 = inlined_call_operand.hbm [shape: f32[128,128], index: 3, kind: input, shape index: {}]
  %s4 = inlined_call_operand.hbm [shape: f32[1,128], index: 4, kind: input, shape index: {}]
  %s5 = inlined_call_operand.vmem [shape: f32[8,2,4,64], index: 5, kind: output, shape index: {}]
  %s6 = sld [smem:[#allocation0]]
  $region73: #{decoder_pallas.4} parent=0
    _
  %s8 = ssub.s32 1, %s6
  %s9 = scalar_select 0, %s8, %s6
  $region1: #{decoder_pallas.4} parent=0
    #allocation3 [shape = 'u8[16384]{0}', space=vmem, size = 0x4000, scoped, tag = 'input window, operand 0']
    #allocation4 [shape = 's32[2]{0}', space=sflag, size = 0x8, scoped, tag = 'scoped memory for decoder_pallas.4']
    #allocation5 [shape = 'u8[147456]{0}', space=vmem, size = 0x24000, scoped, tag = 'input window, operand 1, single buffered']
    #allocation6 [shape = 's32[1]{0}', space=sflag, size = 0x4, scoped, tag = 'scoped memory for decoder_pallas.4']
    #allocation7 [shape = 'u8[512]{0}', space=vmem, size = 0x400, scoped, tag = 'input window, operand 2, single buffered']
    #allocation8 [shape = 'u8[65536]{0}', space=vmem, size = 0x10000, scoped, tag = 'input window, operand 3, single buffered']
    #allocation9 [shape = 's32[1]{0}', space=sflag, size = 0x4, scoped, tag = 'scoped memory for decoder_pallas.4']
    #allocation10 [shape = 'u8[512]{0}', space=vmem, size = 0x400, scoped, tag = 'input window, operand 4, single buffered']
    %10 = vsyncpa [#allocation4], 0
    %s11 = scalar_lea.sflag [#allocation4], 1
    %12 = vsyncpa %s11, 0
    %13 = vsyncpa [#allocation6], 0
    %14 = vsyncpa [#allocation9], 0
    loop: start=0, step=1, limit=4
    $region2: #{decoder_pallas.4} parent=1 // loop_pre_header
      _
    $region3: #{decoder_pallas.4} parent=1 // loop_header
      %s16 = sphi 0, %s20
      %p17 = scmp.ge.s32.totalorder %s16, 4
      %s23 = sphi 0, %s35
      %s24 = sphi 0, %s31
      %s25 = sphi 0, %s23
      %s26 = sphi 0, %s24
      %s27 = sphi 0, %s25
      %s28 = sphi 0, %s26
      %s38 = sphi 0, %s40
      %s41 = sphi 0, %s38
      %s42 = sphi 0, %s41
      %s58 = sphi 0, %s42
      %s62 = sphi 0, %s62
      %s64 = sphi 0, %s62
      %s65 = sphi 0, %s64
      %s79 = sphi 0, %s65
      %s83 = sphi 0, %s83
      %s85 = sphi 0, %s83
      %s86 = sphi 0, %s85
      %s100 = sphi 0, %s86
      %s104 = sphi 0, %s104
      %s106 = sphi 0, %s104
      %s107 = sphi 0, %s106
      %s121 = sphi 0, %s107
      %s125 = sphi 0, %s125
      %s127 = sphi 0, %s125
      %s128 = sphi 0, %s127
      %s142 = sphi 0, %s128
      %s150 = sphi 0, %s152
      %s153 = sphi 0, %s150
      %s154 = sphi 0, %s153
      %s170 = sphi 0, %s154
    $region4: #{decoder_pallas.4} parent=1 // loop_header_branch
      %19 = sbr.rel (%p17) target = $region8
    $region5: #{decoder_pallas.4} parent=1 // loop_body
      %s21 = ssub.s32 %s16, 1
      %s22 = ssub.s32 %s16, 2
      %s29 = sadd.s32 1, %s24
      %p30 = scmp.ge.s32.totalorder %s29, 1
      %s31 = scalar_select %p30, 0, %s29
      %s32 = sadd.s32 1, %s23
      %s33 = scalar_select %p30, %s32, %s23
      %p34 = scmp.ge.s32.totalorder %s33, 2
      %s35 = scalar_select %p34, 0, %s33
      %s36 = ssub.s32 %s23, %s35
      %p37 = scmp.eq.s32.totalorder %s36, 0
      %s39 = sadd.s32 %s38, 1
      %s40 = scalar_select %p37, %s38, %s39
      %p43 = pneg %p37
      %p44 = scmp.eq.s32.totalorder %s16, 1
      %p45 = por %p43, %p44
      %p46 = scmp.ne.s32.totalorder %s38, %s41
      %p47 = scmp.eq.s32.totalorder %s16, 0
      %p48 = por %p46, %p47
      %p49 = scmp.ne.s32.totalorder %s38, %s41
      %p50 = scmp.eq.s32.totalorder %s21, 1
      %p51 = por %p49, %p50
      %p52 = scmp.ne.s32.totalorder %s41, %s42
      %p53 = scmp.eq.s32.totalorder %s21, 0
      %p54 = por %p52, %p53
      %p55 = scmp.ne.s32.totalorder %s41, %s42
      %p56 = scmp.eq.s32.totalorder %s22, 1
      %p57 = por %p55, %p56
      %p59 = scmp.ne.s32.totalorder %s42, %s58
      %p60 = scmp.eq.s32.totalorder %s22, 0
      %p61 = por %p59, %p60
      %s63 = sadd.s32 %s62, 1
      %p66 = scmp.eq.s32.totalorder %s16, 1
      %p67 = scmp.ne.s32.totalorder %s62, %s64
      %p68 = scmp.eq.s32.totalorder %s16, 0
      %p69 = por %p67, %p68
      %p70 = scmp.ne.s32.totalorder %s62, %s64
      %p71 = scmp.eq.s32.totalorder %s21, 1
      %p72 = por %p70, %p71
      %p73 = scmp.ne.s32.totalorder %s64, %s65
      %p74 = scmp.eq.s32.totalorder %s21, 0
      %p75 = por %p73, %p74
      %p76 = scmp.ne.s32.totalorder %s64, %s65
      %p77 = scmp.eq.s32.totalorder %s22, 1
      %p78 = por %p76, %p77
      %p80 = scmp.ne.s32.totalorder %s65, %s79
      %p81 = scmp.eq.s32.totalorder %s22, 0
      %p82 = por %p80, %p81
      %s84 = sadd.s32 %s83, 1
      %p87 = scmp.eq.s32.totalorder %s16, 1
      %p88 = scmp.ne.s32.totalorder %s83, %s85
      %p89 = scmp.eq.s32.totalorder %s16, 0
      %p90 = por %p88, %p89
      %p91 = scmp.ne.s32.totalorder %s83, %s85
      %p92 = scmp.eq.s32.totalorder %s21, 1
      %p93 = por %p91, %p92
      %p94 = scmp.ne.s32.totalorder %s85, %s86
      %p95 = scmp.eq.s32.totalorder %s21, 0
      %p96 = por %p94, %p95
      %p97 = scmp.ne.s32.totalorder %s85, %s86
      %p98 = scmp.eq.s32.totalorder %s22, 1
      %p99 = por %p97, %p98
      %p101 = scmp.ne.s32.totalorder %s86, %s100
      %p102 = scmp.eq.s32.totalorder %s22, 0
      %p103 = por %p101, %p102
      %s105 = sadd.s32 %s104, 1
      %p108 = scmp.eq.s32.totalorder %s16, 1
      %p109 = scmp.ne.s32.totalorder %s104, %s106
      %p110 = scmp.eq.s32.totalorder %s16, 0
      %p111 = por %p109, %p110
      %p112 = scmp.ne.s32.totalorder %s104, %s106
      %p113 = scmp.eq.s32.totalorder %s21, 1
      %p114 = por %p112, %p113
      %p115 = scmp.ne.s32.totalorder %s106, %s107
      %p116 = scmp.eq.s32.totalorder %s21, 0
      %p117 = por %p115, %p116
      %p118 = scmp.ne.s32.totalorder %s106, %s107
      %p119 = scmp.eq.s32.totalorder %s22, 1
      %p120 = por %p118, %p119
      %p122 = scmp.ne.s32.totalorder %s107, %s121
      %p123 = scmp.eq.s32.totalorder %s22, 0
      %p124 = por %p122, %p123
      %s126 = sadd.s32 %s125, 1
      %p129 = scmp.eq.s32.totalorder %s16, 1
      %p130 = scmp.ne.s32.totalorder %s125, %s127
      %p131 = scmp.eq.s32.totalorder %s16, 0
      %p132 = por %p130, %p131
      %p133 = scmp.ne.s32.totalorder %s125, %s127
      %p134 = scmp.eq.s32.totalorder %s21, 1
      %p135 = por %p133, %p134
      %p136 = scmp.ne.s32.totalorder %s127, %s128
      %p137 = scmp.eq.s32.totalorder %s21, 0
      %p138 = por %p136, %p137
      %p139 = scmp.ne.s32.totalorder %s127, %s128
      %p140 = scmp.eq.s32.totalorder %s22, 1
      %p141 = por %p139, %p140
      %p143 = scmp.ne.s32.totalorder %s128, %s142
      %p144 = scmp.eq.s32.totalorder %s22, 0
      %p145 = por %p143, %p144
      %s146 = sadd.s32 %s23, %s24
      %s147 = sadd.s32 %s35, %s31
      %s148 = ssub.s32 %s146, %s147
      %p149 = scmp.eq.s32.totalorder %s148, 0
      %s151 = sadd.s32 %s150, 1
      %s152 = scalar_select %p149, %s150, %s151
      %p155 = pneg %p149
      %p156 = scmp.eq.s32.totalorder %s16, 1
      %p157 = por %p155, %p156
      %p158 = scmp.ne.s32.totalorder %s150, %s153
      %p159 = scmp.eq.s32.totalorder %s16, 0
      %p160 = por %p158, %p159
      %p161 = scmp.ne.s32.totalorder %s150, %s153
      %p162 = scmp.eq.s32.totalorder %s21, 1
      %p163 = por %p161, %p162
      %p164 = scmp.ne.s32.totalorder %s153, %s154
      %p165 = scmp.eq.s32.totalorder %s21, 0
      %p166 = por %p164, %p165
      %p167 = scmp.ne.s32.totalorder %s153, %s154
      %p168 = scmp.eq.s32.totalorder %s22, 1
      %p169 = por %p167, %p168
      %p171 = scmp.ne.s32.totalorder %s154, %s170
      %p172 = scmp.eq.s32.totalorder %s22, 0
      %p173 = por %p171, %p172
      %p174 = scmp.le.s32.totalorder 1, %s16
      %p175 = scmp.lt.s32.totalorder %s16, 3
      %p176 = pnand %p174, %p175
      %p177 = pneg %p176
      // Predicated region
      $region9: #{decoder_pallas.4} parent=5 // pred_check
        _
      $region10: #{decoder_pallas.4} parent=5 // pred_check_branch
        %179 = sbr.rel (%p176) target = $region12
      $region11: #{decoder_pallas.4} parent=5 // pred_region
        %s180 = ssub.s32 %s16, 1
        // Predicated region
        $region13: #{decoder_pallas.4} parent=11 // pred_check
          %p181 = pneg %p75
        $region14: #{decoder_pallas.4} parent=11 // pred_check_branch
          %183 = sbr.rel (%p181) target = $region16
        $region15: #{decoder_pallas.4} parent=11 // pred_region
          %s185 = ssub.s32 4608, 4608
          %186 = vsyncadd [#allocation6], %s185
          %s187 = sshll.u32 [#allocation5], 4
          %s188 = int_to_ptr.vmem [resolvable:$true] %s187
          %193 = dma.hbm_to_vmem [thread:$0]  %s1, 4608, %s188, [#allocation6], 128, 128, 8
        $region16: #{decoder_pallas.4} parent=11 // pred_fallthru
          _
        // Predicated region
        $region17: #{decoder_pallas.4} parent=11 // pred_check
          %p194 = pneg %p96
        $region18: #{decoder_pallas.4} parent=11 // pred_check_branch
          %196 = sbr.rel (%p194) target = $region20
        $region19: #{decoder_pallas.4} parent=11 // pred_region
          %s198 = ssub.s32 16, 16
          %199 = vsyncadd [#allocation6], %s198
          %s201 = sshll.u32 [#allocation7], 4
          %s202 = int_to_ptr.vmem [resolvable:$true] %s201
          %204 = dma.hbm_to_vmem [thread:$0]  %s2, 16, %s202, [#allocation6]
        $region20: #{decoder_pallas.4} parent=11 // pred_fallthru
          _
        // Predicated region
        $region21: #{decoder_pallas.4} parent=11 // pred_check
          %p205 = pneg %p117
        $region22: #{decoder_pallas.4} parent=11 // pred_check_branch
          %207 = sbr.rel (%p205) target = $region24
        $region23: #{decoder_pallas.4} parent=11 // pred_region
          %s209 = ssub.s32 2048, 2048
          %210 = vsyncadd [#allocation9], %s209
          %s211 = sshll.u32 [#allocation8], 4
          %s212 = int_to_ptr.vmem [resolvable:$true] %s211
          %217 = dma.hbm_to_vmem [thread:$0]  %s3, 2048, %s212, [#allocation9], 128, 128, 8
        $region24: #{decoder_pallas.4} parent=11 // pred_fallthru
          _
        // Predicated region
        $region25: #{decoder_pallas.4} parent=11 // pred_check
          %p218 = pneg %p138
        $region26: #{decoder_pallas.4} parent=11 // pred_check_branch
          %220 = sbr.rel (%p218) target = $region28
        $region27: #{decoder_pallas.4} parent=11 // pred_region
          %s222 = ssub.s32 16, 16
          %223 = vsyncadd [#allocation9], %s222
          %s225 = sshll.u32 [#allocation10], 4
          %s226 = int_to_ptr.vmem [resolvable:$true] %s225
          %228 = dma.hbm_to_vmem [thread:$0]  %s4, 16, %s226, [#allocation9]
        $region28: #{decoder_pallas.4} parent=11 // pred_fallthru
          _
      $region12: #{decoder_pallas.4} parent=5 // pred_fallthru
        _
      %p229 = scmp.lt.s32.totalorder %s16, 2
      // Predicated region
      $region29: #{decoder_pallas.4} parent=5 // pred_check
        %p230 = pneg %p229
      $region30: #{decoder_pallas.4} parent=5 // pred_check_branch
        %232 = sbr.rel (%p230) target = $region32
      $region31: #{decoder_pallas.4} parent=5 // pred_region
        // Predicated region
        $region33: #{decoder_pallas.4} parent=31 // pred_check
          %p233 = pneg %p48
        $region34: #{decoder_pallas.4} parent=31 // pred_check_branch
          %235 = sbr.rel (%p233) target = $region36
        $region35: #{decoder_pallas.4} parent=31 // pred_region
          %s236 = sand.u32 %s38, 1
          %s237 = scalar_lea.sflag [#allocation4], %s236
          %s238 = sand.u32 %s38, 1
          %s239 = smul.addr %s238, 16
          %s240 = scalar_lea.vmem [#allocation3], %s239
          %s242 = ssub.s32 256, 256
          %243 = vsyncadd %s237, %s242
          %s244 = smul.addr %s23, 4
          %s245 = smul.addr %s244, 64
          %s246 = scalar_lea.hbm %s0, %s245
          %s247 = sshll.u32 %s240, 4
          %s248 = int_to_ptr.vmem [resolvable:$true] %s247
          %253 = dma.hbm_to_vmem [thread:$0]  %s246, 256, %s248, %s237, 64, 64, 4
        $region36: #{decoder_pallas.4} parent=31 // pred_fallthru
          _
      $region32: #{decoder_pallas.4} parent=5 // pred_fallthru
        _
      %p254 = scmp.le.s32.totalorder 1, %s16
      %p255 = scmp.lt.s32.totalorder %s16, 3
      %p256 = pnand %p254, %p255
      %p257 = pneg %p256
      // Predicated region
      $region37: #{decoder_pallas.4} parent=5 // pred_check
        _
      $region38: #{decoder_pallas.4} parent=5 // pred_check_branch
        %259 = sbr.rel (%p256) target = $region40
      $region39: #{decoder_pallas.4} parent=5 // pred_region
        %s260 = ssub.s32 %s16, 1
        %s261 = sand.u32 %s41, 1
        %s262 = scalar_lea.sflag [#allocation4], %s261
        %s263 = sand.u32 %s41, 1
        %s264 = smul.addr %s263, 16
        %s265 = scalar_lea.vmem [#allocation3], %s264
        // Predicated region
        $region41: #{decoder_pallas.4} parent=39 // pred_check
          %p266 = pneg %p54
        $region42: #{decoder_pallas.4} parent=39 // pred_check_branch
          %268 = sbr.rel (%p266) target = $region44
        $region43: #{decoder_pallas.4} parent=39 // pred_region
          %269 = dma.done %s262, 256
        $region44: #{decoder_pallas.4} parent=39 // pred_fallthru
          _
        // Predicated region
        $region45: #{decoder_pallas.4} parent=39 // pred_check
          %p270 = pneg %p75
        $region46: #{decoder_pallas.4} parent=39 // pred_check_branch
          %272 = sbr.rel (%p270) target = $region48
        $region47: #{decoder_pallas.4} parent=39 // pred_region
          %273 = dma.done [#allocation6], 4608
        $region48: #{decoder_pallas.4} parent=39 // pred_fallthru
          _
        // Predicated region
        $region49: #{decoder_pallas.4} parent=39 // pred_check
          %p274 = pneg %p96
        $region50: #{decoder_pallas.4} parent=39 // pred_check_branch
          %276 = sbr.rel (%p274) target = $region52
        $region51: #{decoder_pallas.4} parent=39 // pred_region
          %277 = dma.done [#allocation6], 16
        $region52: #{decoder_pallas.4} parent=39 // pred_fallthru
          _
        // Predicated region
        $region53: #{decoder_pallas.4} parent=39 // pred_check
          %p278 = pneg %p117
        $region54: #{decoder_pallas.4} parent=39 // pred_check_branch
          %280 = sbr.rel (%p278) target = $region56
        $region55: #{decoder_pallas.4} parent=39 // pred_region
          %281 = dma.done [#allocation9], 2048
        $region56: #{decoder_pallas.4} parent=39 // pred_fallthru
          _
        // Predicated region
        $region57: #{decoder_pallas.4} parent=39 // pred_check
          %p282 = pneg %p138
        $region58: #{decoder_pallas.4} parent=39 // pred_check_branch
          %284 = sbr.rel (%p282) target = $region60
        $region59: #{decoder_pallas.4} parent=39 // pred_region
          %285 = dma.done [#allocation9], 16
        $region60: #{decoder_pallas.4} parent=39 // pred_fallthru
          _
        %s286 = sand.u32 %s41, 1
        %s287 = scalar_lea.sflag [#allocation4], %s286
        %s288 = sand.u32 %s41, 1
        %s289 = smul.addr %s288, 16
        %s290 = scalar_lea.vmem [#allocation3], %s289
        %p291 = pneg %p54
        %p292 = pneg %p51
        %p293 = pneg %p75
        %p294 = pneg %p72
        %p295 = pneg %p96
        %p296 = pneg %p93
        %p297 = pneg %p117
        %p298 = pneg %p114
        %p299 = pneg %p138
        %p300 = pneg %p135
        %p301 = pneg %p166
        %p302 = pneg %p163
        %s303 = sadd.s32 %s25, %s26
        %s304 = smul.u32 4, %s303
        %p305 = scmp.lt.s32.totalorder %s304, 7
        %s306 = scalar_select %p305, %s304, 7
        %s307 = smul.addr %s306, 2
        %s308 = smul.addr %s307, 4
        %s309 = scalar_lea.vmem %s5, %s308
        %s310 = sadd.s32 %s25, %s26
        %s311 = smul.u32 4, %s310
        %p312 = scmp.lt.s32.totalorder %s311, 7
        %s313 = scalar_select %p312, %s311, 7
        %s314 = smul.addr %s313, 2
        %s315 = smul.addr %s314, 4
        %s316 = scalar_lea.vmem %s5, %s315
        %s317 = sadd.s32 %s25, %s26
        %s318 = smul.u32 4, %s317
        %vm319 = vcmask 259072
        %320 = vst.msk [vmem:[#allocation2] sm:$0x3f] %vm319, 0.0
        %321 = vst.msk [vmem:[#allocation2 + $0x8] sm:$0x3f] %vm319, 0.0
        %322 = vst.msk [vmem:[#allocation2 + $0x10] sm:$0x3f] %vm319, 0.0
        %323 = vst.msk [vmem:[#allocation2 + $0x18] sm:$0x3f] %vm319, 0.0
        %324 = vst.msk [vmem:[#allocation2 + $0x20] sm:$0x3f] %vm319, 0.0
        %325 = vst.msk [vmem:[#allocation2 + $0x28] sm:$0x3f] %vm319, 0.0
        %v326 = vld [vmem:[%s265] sm:$0xf]
        %v327 = vld [vmem:[%s265 + $0x4] sm:$0xf]
        %v328 = vld [vmem:[%s265 + $0x8] sm:$0xf]
        %v329 = vld [vmem:[%s265 + $0xc] sm:$0xf]
        %s330 = scalar_lea.vmem [#allocation2], 8
        %vm331 = vcmask 257024
        %332 = vst.msk [vmem:[%s330 + $0x1] sm:$0xf] %vm331, %v326
        %333 = vst.msk [vmem:[%s330 + $0x9] sm:$0xf] %vm331, %v327
        %334 = vst.msk [vmem:[%s330 + $0x11] sm:$0xf] %vm331, %v328
        %335 = vst.msk [vmem:[%s330 + $0x19] sm:$0xf] %vm331, %v329
        %v336 = vld [vmem:[#allocation2] sm:$0xf]
        %v337 = vld [vmem:[#allocation2 + $0x8] sm:$0xf]
        %v338 = vld [vmem:[#allocation2 + $0x10] sm:$0xf]
        %v339 = vld [vmem:[#allocation2 + $0x18] sm:$0xf]
        %v340 = vld [vmem:[#allocation2 + $0x1] sm:$0xf]
        %v341 = vld [vmem:[#allocation2 + $0x9] sm:$0xf]
        %v342 = vld [vmem:[#allocation2 + $0x11] sm:$0xf]
        %v343 = vld [vmem:[#allocation2 + $0x19] sm:$0xf]
        %v344 = vld [vmem:[#allocation2 + $0x2] sm:$0xf]
        %v345 = vld [vmem:[#allocation2 + $0xa] sm:$0xf]
        %v346 = vld [vmem:[#allocation2 + $0x12] sm:$0xf]
        %v347 = vld [vmem:[#allocation2 + $0x1a] sm:$0xf]
        %v348 = vld [vmem:[%s330] sm:$0xf]
        %v349 = vld [vmem:[%s330 + $0x8] sm:$0xf]
        %v350 = vld [vmem:[%s330 + $0x10] sm:$0xf]
        %v351 = vld [vmem:[%s330 + $0x18] sm:$0xf]
        %v352 = vld [vmem:[%s330 + $0x1] sm:$0xf]
        %v353 = vld [vmem:[%s330 + $0x9] sm:$0xf]
        %v354 = vld [vmem:[%s330 + $0x11] sm:$0xf]
        %v355 = vld [vmem:[%s330 + $0x19] sm:$0xf]
        %v356 = vld [vmem:[%s330 + $0x2] sm:$0xf]
        %v357 = vld [vmem:[%s330 + $0xa] sm:$0xf]
        %v358 = vld [vmem:[%s330 + $0x12] sm:$0xf]
        %v359 = vld [vmem:[%s330 + $0x1a] sm:$0xf]
        %s360 = scalar_lea.vmem [#allocation2], 16
        %v361 = vld [vmem:[%s360] sm:$0xf]
        %v362 = vld [vmem:[%s360 + $0x8] sm:$0xf]
        %v363 = vld [vmem:[%s360 + $0x10] sm:$0xf]
        %v364 = vld [vmem:[%s360 + $0x18] sm:$0xf]
        %v365 = vld [vmem:[%s360 + $0x1] sm:$0xf]
        %v366 = vld [vmem:[%s360 + $0x9] sm:$0xf]
        %v367 = vld [vmem:[%s360 + $0x11] sm:$0xf]
        %v368 = vld [vmem:[%s360 + $0x19] sm:$0xf]
        %v369 = vld [vmem:[%s360 + $0x2] sm:$0xf]
        %v370 = vld [vmem:[%s360 + $0xa] sm:$0xf]
        %v371 = vld [vmem:[%s360 + $0x12] sm:$0xf]
        %v372 = vld [vmem:[%s360 + $0x1a] sm:$0xf]
        %377 = vrot.lane.b32.xlu0 %v340, 32
        %v378 = vpop.permute.xlu0 %377
        %379 = vrot.lane.b32.xlu0 %v341, 32
        %v380 = vpop.permute.xlu0 %379
        %381 = vrot.lane.b32.xlu0 %v342, 32
        %v382 = vpop.permute.xlu0 %381
        %383 = vrot.lane.b32.xlu0 %v343, 32
        %v384 = vpop.permute.xlu0 %383
        %393 = vrot.lane.b32.xlu0 %v344, 64
        %v394 = vpop.permute.xlu0 %393
        %395 = vrot.lane.b32.xlu0 %v345, 64
        %v396 = vpop.permute.xlu0 %395
        %397 = vrot.lane.b32.xlu0 %v346, 64
        %v398 = vpop.permute.xlu0 %397
        %399 = vrot.lane.b32.xlu0 %v347, 64
        %v400 = vpop.permute.xlu0 %399
        %409 = vrot.lane.b32.xlu0 %v348, 96
        %v410 = vpop.permute.xlu0 %409
        %411 = vrot.lane.b32.xlu0 %v349, 96
        %v412 = vpop.permute.xlu0 %411
        %413 = vrot.lane.b32.xlu0 %v350, 96
        %v414 = vpop.permute.xlu0 %413
        %415 = vrot.lane.b32.xlu0 %v351, 96
        %v416 = vpop.permute.xlu0 %415
        %425 = vrot.lane.b32.xlu0 %v356, 32
        %v426 = vpop.permute.xlu0 %425
        %427 = vrot.lane.b32.xlu0 %v357, 32
        %v428 = vpop.permute.xlu0 %427
        %429 = vrot.lane.b32.xlu0 %v358, 32
        %v430 = vpop.permute.xlu0 %429
        %431 = vrot.lane.b32.xlu0 %v359, 32
        %v432 = vpop.permute.xlu0 %431
        %441 = vrot.lane.b32.xlu0 %v361, 64
        %v442 = vpop.permute.xlu0 %441
        %443 = vrot.lane.b32.xlu0 %v362, 64
        %v444 = vpop.permute.xlu0 %443
        %445 = vrot.lane.b32.xlu0 %v363, 64
        %v446 = vpop.permute.xlu0 %445
        %447 = vrot.lane.b32.xlu0 %v364, 64
        %v448 = vpop.permute.xlu0 %447
        %457 = vrot.lane.b32.xlu0 %v365, 96
        %v458 = vpop.permute.xlu0 %457
        %459 = vrot.lane.b32.xlu0 %v366, 96
        %v460 = vpop.permute.xlu0 %459
        %461 = vrot.lane.b32.xlu0 %v367, 96
        %v462 = vpop.permute.xlu0 %461
        %463 = vrot.lane.b32.xlu0 %v368, 96
        %v464 = vpop.permute.xlu0 %463
        %vm469 = vcmask 261120
        %v470 = vsel %vm469, %v336, %v378
        %v471 = vsel %vm469, %v337, %v380
        %v472 = vsel %vm469, %v338, %v382
        %v473 = vsel %vm469, %v339, %v384
        %vm474 = vcmask 523264
        %v475 = vsel %vm474, %v470, %v394
        %v476 = vsel %vm474, %v471, %v396
        %v477 = vsel %vm474, %v472, %v398
        %v478 = vsel %vm474, %v473, %v400
        %vm479 = vcmask 785408
        %v480 = vsel %vm479, %v475, %v410
        %v481 = vsel %vm479, %v476, %v412
        %v482 = vsel %vm479, %v477, %v414
        %v483 = vsel %vm479, %v478, %v416
        %v484 = vsel %vm469, %v352, %v426
        %v485 = vsel %vm469, %v353, %v428
        %v486 = vsel %vm469, %v354, %v430
        %v487 = vsel %vm469, %v355, %v432
        %v488 = vsel %vm474, %v484, %v442
        %v489 = vsel %vm474, %v485, %v444
        %v490 = vsel %vm474, %v486, %v446
        %v491 = vsel %vm474, %v487, %v448
        %v492 = vsel %vm479, %v488, %v458
        %v493 = vsel %vm479, %v489, %v460
        %v494 = vsel %vm479, %v490, %v462
        %v495 = vsel %vm479, %v491, %v464
        %v508 = vcombine.low %v480, %v492
        %v509 = vcombine.low %v481, %v493
        %v510 = vcombine.low %v482, %v494
        %v511 = vcombine.low %v483, %v495
        %v512 = vld [vmem:[#allocation5] sm:$0xff]
        %v513 = vld [vmem:[#allocation5 + $0x8] sm:$0xff]
        %v514 = vld [vmem:[#allocation5 + $0x10] sm:$0xff]
        %v515 = vld [vmem:[#allocation5 + $0x18] sm:$0xff]
        %v516 = vld [vmem:[#allocation5 + $0x20] sm:$0xff]
        %v517 = vld [vmem:[#allocation5 + $0x28] sm:$0xff]
        %v518 = vld [vmem:[#allocation5 + $0x30] sm:$0xff]
        %v519 = vld [vmem:[#allocation5 + $0x38] sm:$0xff]
        %v520 = vld [vmem:[#allocation5 + $0x40] sm:$0xff]
        %v521 = vld [vmem:[#allocation5 + $0x48] sm:$0xff]
        %v522 = vld [vmem:[#allocation5 + $0x50] sm:$0xff]
        %v523 = vld [vmem:[#allocation5 + $0x58] sm:$0xff]
        %v524 = vld [vmem:[#allocation5 + $0x60] sm:$0xff]
        %v525 = vld [vmem:[#allocation5 + $0x68] sm:$0xff]
        %v526 = vld [vmem:[#allocation5 + $0x70] sm:$0xff]
        %v527 = vld [vmem:[#allocation5 + $0x78] sm:$0xff]
        %v528 = vld [vmem:[#allocation5 + $0x80] sm:$0xff]
        %v529 = vld [vmem:[#allocation5 + $0x88] sm:$0xff]
        %v530 = vld [vmem:[#allocation5 + $0x90] sm:$0xff]
        %v531 = vld [vmem:[#allocation5 + $0x98] sm:$0xff]
        %v532 = vld [vmem:[#allocation5 + $0xa0] sm:$0xff]
        %v533 = vld [vmem:[#allocation5 + $0xa8] sm:$0xff]
        %v534 = vld [vmem:[#allocation5 + $0xb0] sm:$0xff]
        %v535 = vld [vmem:[#allocation5 + $0xb8] sm:$0xff]
        %v536 = vld [vmem:[#allocation5 + $0xc0] sm:$0xff]
        %v537 = vld [vmem:[#allocation5 + $0xc8] sm:$0xff]
        %v538 = vld [vmem:[#allocation5 + $0xd0] sm:$0xff]
        %v539 = vld [vmem:[#allocation5 + $0xd8] sm:$0xff]
        %v540 = vld [vmem:[#allocation5 + $0xe0] sm:$0xff]
        %v541 = vld [vmem:[#allocation5 + $0xe8] sm:$0xff]
        %v542 = vld [vmem:[#allocation5 + $0xf0] sm:$0xff]
        %v543 = vld [vmem:[#allocation5 + $0xf8] sm:$0xff]
        %v544 = vld [vmem:[#allocation5 + $0x100] sm:$0xff]
        %v545 = vld [vmem:[#allocation5 + $0x108] sm:$0xff]
        %v546 = vld [vmem:[#allocation5 + $0x110] sm:$0xff]
        %v547 = vld [vmem:[#allocation5 + $0x118] sm:$0xff]
        %v548 = vld [vmem:[#allocation7] sm:$0x1]
        %v550 = vlaneseq
        %v551 = vshrl.u32 %v550, 7
        %v552 = vsub.s32 0, %v551
        %v553 = vrot.slane %v548, %v552
        %v555 = vcombine.low %v508, %v509
        %v556 = vcombine.high %v508, %v509
        %v557 = vcombine.low %v369, %v370
        %v558 = vcombine.low %v510, %v511
        %v559 = vcombine.high %v510, %v511
        %v560 = vcombine.low %v371, %v372
        %v565 = vsel %vm469, %v557, 0
        %v567 = vsel %vm469, %v560, 0
        %569 = vmatprep.subr.mxu0 0.0
        %570 = vmatpush1.msra.mxu0 %v512
        %571 = vmatprep.subr.mxu0 0.0
        %572 = vmatpush1.msra.mxu0 %v513
        %573 = vmatprep.subr.mxu0 0.0
        %574 = vmatpush1.msra.mxu0 %v514
        %575 = vmatprep.subr.mxu0 0.0
        %576 = vmatpush1.msra.mxu0 %v515
        %577 = vmatprep.subr.mxu0 0.0
        %578 = vmatpush1.msra.mxu0 %v516
        %579 = vmatprep.subr.mxu0 0.0
        %580 = vmatpush1.msra.mxu0 %v517
        %581 = vmatprep.subr.mxu0 0.0
        %582 = vmatpush1.msra.mxu0 %v518
        %583 = vmatprep.subr.mxu0 0.0
        %584 = vmatpush1.msra.mxu0 %v519
        %585 = vmatprep.subr.mxu0 0.0
        %586 = vmatpush1.msra.mxu0 %v520
        %587 = vmatprep.subr.mxu0 0.0
        %588 = vmatpush1.msra.mxu0 %v521
        %589 = vmatprep.subr.mxu0 0.0
        %590 = vmatpush1.msra.mxu0 %v522
        %591 = vmatprep.subr.mxu0 0.0
        %592 = vmatpush1.msra.mxu0 %v523
        %593 = vmatprep.subr.mxu0 0.0
        %594 = vmatpush1.msra.mxu0 %v524
        %595 = vmatprep.subr.mxu0 0.0
        %596 = vmatpush1.msra.mxu0 %v525
        %597 = vmatprep.subr.mxu0 0.0
        %598 = vmatpush1.msra.mxu0 %v526
        %599 = vmatprep.subr.mxu0 0.0
        %600 = vmatpush1.msra.mxu0 %v527
        %601 = vmatprep.subr.mxu0 0.0
        %602 = vmatpush1.msra.mxu0 %v528
        %603 = vmatprep.subr.mxu0 0.0
        %604 = vmatpush1.msra.mxu0 %v529
        %605 = vmatprep.subr.mxu0 0.0
        %606 = vmatpush1.msra.mxu0 %v530
        %607 = vmatprep.subr.mxu0 0.0
        %608 = vmatpush1.msra.mxu0 %v531
        %609 = vmatprep.subr.mxu0 0.0
        %610 = vmatpush1.msra.mxu0 %v532
        %611 = vmatprep.subr.mxu0 0.0
        %612 = vmatpush1.msra.mxu0 %v533
        %613 = vmatprep.subr.mxu0 0.0
        %614 = vmatpush1.msra.mxu0 %v534
        %615 = vmatprep.subr.mxu0 0.0
        %616 = vmatpush1.msra.mxu0 %v535
        %617 = vmatprep.subr.mxu0 0.0
        %618 = vmatpush1.msra.mxu0 %v536
        %619 = vmatprep.subr.mxu0 0.0
        %620 = vmatpush1.msra.mxu0 %v537
        %621 = vmatprep.subr.mxu0 0.0
        %622 = vmatpush1.msra.mxu0 %v538
        %623 = vmatprep.subr.mxu0 0.0
        %624 = vmatpush1.msra.mxu0 %v539
        %625 = vmatprep.subr.mxu0 0.0
        %626 = vmatpush1.msra.mxu0 %v540
        %627 = vmatprep.subr.mxu0 0.0
        %628 = vmatpush1.msra.mxu0 %v541
        %629 = vmatprep.subr.mxu0 0.0
        %630 = vmatpush1.msra.mxu0 %v542
        %631 = vmatprep.subr.mxu0 0.0
        %632 = vmatpush1.msra.mxu0 %v543
        %633 = vmatprep.mubr.f32.mxu0 %v556
        %634 = vmatmul.mubr.f32.gmra.mrb[0].mxu0 %v555
        %v635 = vpop.f32.mrb[0].mxu0
        %v636 = vadd.f32 %v553, %v635
        %v637 = vpop.f32.mrb[0].mxu0
        %638 = vmatprep.mubr.f32.mxu0 %v559
        %639 = vmatmul.mubr.f32.gmra.mrb[0].mxu0 %v558
        %v640 = vpop.f32.mrb[0].mxu0
        %v641 = vadd.f32 %v553, %v640
        %v642 = vpop.f32.mrb[0].mxu0
        %643 = vdwg.mxu0
        %644 = vmatprep.subr.mxu0 0.0
        %645 = vmatpush1.msra.mxu0 %v544
        %646 = vmatprep.subr.mxu0 0.0
        %647 = vmatpush1.msra.mxu0 %v545
        %648 = vmatprep.subr.mxu0 0.0
        %649 = vmatpush1.msra.mxu0 %v546
        %650 = vmatprep.subr.mxu0 0.0
        %651 = vmatpush1.msra.mxu0 %v547
        %652 = vmatprep.subr.mxu0 0.0
        %653 = vmatpush1.msra.mxu0 0.0
        %654 = vmatprep.subr.mxu0 0.0
        %655 = vmatpush1.msra.mxu0 0.0
        %656 = vmatprep.subr.mxu0 0.0
        %657 = vmatpush1.msra.mxu0 0.0
        %658 = vmatprep.subr.mxu0 0.0
        %659 = vmatpush1.msra.mxu0 0.0
        %660 = vmatprep.subr.mxu0 0.0
        %661 = vmatpush1.msra.mxu0 0.0
        %662 = vmatprep.subr.mxu0 0.0
        %663 = vmatpush1.msra.mxu0 0.0
        %664 = vmatprep.subr.mxu0 0.0
        %665 = vmatpush1.msra.mxu0 0.0
        %666 = vmatprep.subr.mxu0 0.0
        %667 = vmatpush1.msra.mxu0 0.0
        %668 = vmatprep.subr.mxu0 0.0
        %669 = vmatpush1.msra.mxu0 0.0
        %670 = vmatprep.subr.mxu0 0.0
        %671 = vmatpush1.msra.mxu0 0.0
        %672 = vmatprep.subr.mxu0 0.0
        %673 = vmatpush1.msra.mxu0 0.0
        %674 = vmatprep.subr.mxu0 0.0
        %675 = vmatpush1.msra.mxu0 0.0
        %676 = vmatprep.subr.mxu0 0.0
        %677 = vmatpush1.msra.mxu0 0.0
        %678 = vmatprep.subr.mxu0 0.0
        %679 = vmatpush1.msra.mxu0 0.0
        %680 = vmatprep.subr.mxu0 0.0
        %681 = vmatpush1.msra.mxu0 0.0
        %682 = vmatprep.subr.mxu0 0.0
        %683 = vmatpush1.msra.mxu0 0.0
        %684 = vmatprep.subr.mxu0 0.0
        %685 = vmatpush1.msra.mxu0 0.0
        %686 = vmatprep.subr.mxu0 0.0
        %687 = vmatpush1.msra.mxu0 0.0
        %688 = vmatprep.subr.mxu0 0.0
        %689 = vmatpush1.msra.mxu0 0.0
        %690 = vmatprep.subr.mxu0 0.0
        %691 = vmatpush1.msra.mxu0 0.0
        %692 = vmatprep.subr.mxu0 0.0
        %693 = vmatpush1.msra.mxu0 0.0
        %694 = vmatprep.subr.mxu0 0.0
        %695 = vmatpush1.msra.mxu0 0.0
        %696 = vmatprep.subr.mxu0 0.0
        %697 = vmatpush1.msra.mxu0 0.0
        %698 = vmatprep.subr.mxu0 0.0
        %699 = vmatpush1.msra.mxu0 0.0
        %700 = vmatprep.subr.mxu0 0.0
        %701 = vmatpush1.msra.mxu0 0.0
        %702 = vmatprep.subr.mxu0 0.0
        %703 = vmatpush1.msra.mxu0 0.0
        %704 = vmatprep.subr.mxu0 0.0
        %705 = vmatpush1.msra.mxu0 0.0
        %706 = vmatprep.subr.mxu0 0.0
        %707 = vmatpush1.msra.mxu0 0.0
        %708 = vmatprep.mubr.f32.mxu0 0.0
        %709 = vmatmul.mubr.f32.gmra.mrb[0].mxu0 %v565
        %v710 = vpop.f32.mrb[0].mxu0
        %v711 = vadd.f32 %v636, %v710
        %v712 = vpop.f32.mrb[0].mxu0
        %713 = vmatprep.mubr.f32.mxu0 0.0
        %714 = vmatmul.mubr.f32.gmra.mrb[0].mxu0 %v567
        %v715 = vpop.f32.mrb[0].mxu0
        %v716 = vadd.f32 %v641, %v715
        %v717 = vpop.f32.mrb[0].mxu0
        %718 = vdwg.mxu0
        %v719 = vmul.f32 %v711, %v711
        %v720 = vmul.f32 %v716, %v716
        %v721 = vld [vmem:[#allocation8] sm:$0xff]
        %v722 = vld [vmem:[#allocation8 + $0x8] sm:$0xff]
        %v723 = vld [vmem:[#allocation8 + $0x10] sm:$0xff]
        %v724 = vld [vmem:[#allocation8 + $0x18] sm:$0xff]
        %v725 = vld [vmem:[#allocation8 + $0x20] sm:$0xff]
        %v726 = vld [vmem:[#allocation8 + $0x28] sm:$0xff]
        %v727 = vld [vmem:[#allocation8 + $0x30] sm:$0xff]
        %v728 = vld [vmem:[#allocation8 + $0x38] sm:$0xff]
        %v729 = vld [vmem:[#allocation8 + $0x40] sm:$0xff]
        %v730 = vld [vmem:[#allocation8 + $0x48] sm:$0xff]
        %v731 = vld [vmem:[#allocation8 + $0x50] sm:$0xff]
        %v732 = vld [vmem:[#allocation8 + $0x58] sm:$0xff]
        %v733 = vld [vmem:[#allocation8 + $0x60] sm:$0xff]
        %v734 = vld [vmem:[#allocation8 + $0x68] sm:$0xff]
        %v735 = vld [vmem:[#allocation8 + $0x70] sm:$0xff]
        %v736 = vld [vmem:[#allocation8 + $0x78] sm:$0xff]
        %v737 = vld [vmem:[#allocation10] sm:$0x1]
        %v739 = vlaneseq
        %v740 = vshrl.u32 %v739, 7
        %v741 = vsub.s32 0, %v740
        %v742 = vrot.slane %v737, %v741
        %744 = vmatprep.subr.mxu0 0.0
        %745 = vmatpush1.msra.mxu0 %v721
        %746 = vmatprep.subr.mxu0 0.0
        %747 = vmatpush1.msra.mxu0 %v722
        %748 = vmatprep.subr.mxu0 0.0
        %749 = vmatpush1.msra.mxu0 %v723
        %750 = vmatprep.subr.mxu0 0.0
        %751 = vmatpush1.msra.mxu0 %v724
        %752 = vmatprep.subr.mxu0 0.0
        %753 = vmatpush1.msra.mxu0 %v725
        %754 = vmatprep.subr.mxu0 0.0
        %755 = vmatpush1.msra.mxu0 %v726
        %756 = vmatprep.subr.mxu0 0.0
        %757 = vmatpush1.msra.mxu0 %v727
        %758 = vmatprep.subr.mxu0 0.0
        %759 = vmatpush1.msra.mxu0 %v728
        %760 = vmatprep.subr.mxu0 0.0
        %761 = vmatpush1.msra.mxu0 %v729
        %762 = vmatprep.subr.mxu0 0.0
        %763 = vmatpush1.msra.mxu0 %v730
        %764 = vmatprep.subr.mxu0 0.0
        %765 = vmatpush1.msra.mxu0 %v731
        %766 = vmatprep.subr.mxu0 0.0
        %767 = vmatpush1.msra.mxu0 %v732
        %768 = vmatprep.subr.mxu0 0.0
        %769 = vmatpush1.msra.mxu0 %v733
        %770 = vmatprep.subr.mxu0 0.0
        %771 = vmatpush1.msra.mxu0 %v734
        %772 = vmatprep.subr.mxu0 0.0
        %773 = vmatpush1.msra.mxu0 %v735
        %774 = vmatprep.subr.mxu0 0.0
        %775 = vmatpush1.msra.mxu0 %v736
        %776 = vmatprep.subr.mxu0 0.0
        %777 = vmatpush1.msra.mxu0 0.0
        %778 = vmatprep.subr.mxu0 0.0
        %779 = vmatpush1.msra.mxu0 0.0
        %780 = vmatprep.subr.mxu0 0.0
        %781 = vmatpush1.msra.mxu0 0.0
        %782 = vmatprep.subr.mxu0 0.0
        %783 = vmatpush1.msra.mxu0 0.0
        %784 = vmatprep.subr.mxu0 0.0
        %785 = vmatpush1.msra.mxu0 0.0
        %786 = vmatprep.subr.mxu0 0.0
        %787 = vmatpush1.msra.mxu0 0.0
        %788 = vmatprep.subr.mxu0 0.0
        %789 = vmatpush1.msra.mxu0 0.0
        %790 = vmatprep.subr.mxu0 0.0
        %791 = vmatpush1.msra.mxu0 0.0
        %792 = vmatprep.subr.mxu0 0.0
        %793 = vmatpush1.msra.mxu0 0.0
        %794 = vmatprep.subr.mxu0 0.0
        %795 = vmatpush1.msra.mxu0 0.0
        %796 = vmatprep.subr.mxu0 0.0
        %797 = vmatpush1.msra.mxu0 0.0
        %798 = vmatprep.subr.mxu0 0.0
        %799 = vmatpush1.msra.mxu0 0.0
        %800 = vmatprep.subr.mxu0 0.0
        %801 = vmatpush1.msra.mxu0 0.0
        %802 = vmatprep.subr.mxu0 0.0
        %803 = vmatpush1.msra.mxu0 0.0
        %804 = vmatprep.subr.mxu0 0.0
        %805 = vmatpush1.msra.mxu0 0.0
        %806 = vmatprep.subr.mxu0 0.0
        %807 = vmatpush1.msra.mxu0 0.0
        %808 = vmatprep.mubr.f32.mxu0 0.0
        %809 = vmatmul.mubr.f32.gmra.mrb[0].mxu0 %v719
        %v810 = vpop.f32.mrb[0].mxu0
        %v811 = vadd.f32 %v742, %v810
        %v812 = vpop.f32.mrb[0].mxu0
        %813 = vmatprep.mubr.f32.mxu0 0.0
        %814 = vmatmul.mubr.f32.gmra.mrb[0].mxu0 %v720
        %v815 = vpop.f32.mrb[0].mxu0
        %v816 = vadd.f32 %v742, %v815
        %v817 = vpop.f32.mrb[0].mxu0
        %818 = vdwg.mxu0
        %v819 = vrsqrt.pop %v811
        %v820 = vmul.f32 %v811, %v819
        %vm821 = vcmp.eq.f32.partialorder %v811, inf
        %v822 = vsel %vm821, %v811, %v820
        %vm823 = vcmp.eq.f32.partialorder %v811, 0.0
        %v824 = vand.u32 %v811, 2147483648
        %v825 = vsel %vm823, %v824, %v822
        %v826 = vrsqrt.pop %v816
        %v827 = vmul.f32 %v816, %v826
        %vm828 = vcmp.eq.f32.partialorder %v816, inf
        %v829 = vsel %vm828, %v816, %v827
        %vm830 = vcmp.eq.f32.partialorder %v816, 0.0
        %v831 = vand.u32 %v816, 2147483648
        %v832 = vsel %vm830, %v831, %v829
        %v833 = vmul.f32 %v711, %v825
        %v834 = vmul.f32 %v716, %v832
        %v837 = vcombine.high %v833, %v833
        %v838 = vcombine.high %v834, %v834
        %vm841 = vcmask 519168
        %842 = vst.msk [vmem:[%s316] sm:$0xf] %vm841, %v833
        %843 = vst.msk [vmem:[%s316 + $0x8] sm:$0xf] %vm841, %v837
        %844 = vst.msk [vmem:[%s316 + $0x10] sm:$0xf] %vm841, %v834
        %845 = vst.msk [vmem:[%s316 + $0x18] sm:$0xf] %vm841, %v838
        %846 = vrot.lane.b32.xlu0 %v833, 64
        %v847 = vpop.permute.xlu0 %846
        %848 = vrot.lane.b32.xlu0 %v837, 64
        %v849 = vpop.permute.xlu0 %848
        %850 = vrot.lane.b32.xlu0 %v834, 64
        %v851 = vpop.permute.xlu0 %850
        %852 = vrot.lane.b32.xlu0 %v838, 64
        %v853 = vpop.permute.xlu0 %852
        %s858 = scalar_lea.vmem %s316, 4
        %859 = vst.msk [vmem:[%s858] sm:$0xf] %vm841, %v847
        %860 = vst.msk [vmem:[%s858 + $0x8] sm:$0xf] %vm841, %v849
        %861 = vst.msk [vmem:[%s858 + $0x10] sm:$0xf] %vm841, %v851
        %862 = vst.msk [vmem:[%s858 + $0x18] sm:$0xf] %vm841, %v853
        %s863 = sadd.s32 %s25, %s26
        %s864 = smul.u32 4, %s863
        %p865 = scmp.lt.s32.totalorder %s864, 7
        %s866 = scalar_select %p865, %s864, 7
        %s867 = smul.addr %s866, 2
        %s868 = smul.addr %s867, 4
        %s869 = scalar_lea.vmem %s5, %s868
        // Predicated region
        $region61: #{decoder_pallas.4} parent=39 // pred_check
          %p870 = pneg %p163
        $region62: #{decoder_pallas.4} parent=39 // pred_check_branch
          %872 = sbr.rel (%p870) target = $region64
        $region63: #{decoder_pallas.4} parent=39 // pred_region
          %s873 = sadd.s32 %s25, %s26
          %s874 = smul.u32 4, %s873
        $region64: #{decoder_pallas.4} parent=39 // pred_fallthru
          _
      $region40: #{decoder_pallas.4} parent=5 // pred_fallthru
        _
      %p875 = scmp.le.s32.totalorder 2, %s16
      // Predicated region
      $region65: #{decoder_pallas.4} parent=5 // pred_check
        %p876 = pneg %p875
      $region66: #{decoder_pallas.4} parent=5 // pred_check_branch
        %878 = sbr.rel (%p876) target = $region68
      $region67: #{decoder_pallas.4} parent=5 // pred_region
        %s879 = ssub.s32 %s16, 2
        // Predicated region
        $region69: #{decoder_pallas.4} parent=67 // pred_check
          %p880 = pneg %p169
        $region70: #{decoder_pallas.4} parent=67 // pred_check_branch
          %882 = sbr.rel (%p880) target = $region72
        $region71: #{decoder_pallas.4} parent=67 // pred_region
          %s883 = sadd.s32 %s27, %s28
          %s884 = smul.u32 4, %s883
          %p885 = scmp.lt.s32.totalorder %s884, 7
          %s886 = scalar_select %p885, %s884, 7
          %s887 = smul.addr %s886, 2
          %s888 = smul.addr %s887, 4
          %s889 = scalar_lea.vmem %s5, %s888
        $region72: #{decoder_pallas.4} parent=67 // pred_fallthru
          _
      $region68: #{decoder_pallas.4} parent=5 // pred_fallthru
        _
    $region6: #{decoder_pallas.4} parent=1 // loop_footer
      %s20 = sadd.s32 1, %s16
    $region7: #{decoder_pallas.4} parent=1 // loop_footer_branch
      %15 = sbr.rel target = $region3
    $region8: #{decoder_pallas.4} parent=1 // loop_exit
      _
    %890 = vsyncpa [#allocation4], 1
    %s891 = scalar_lea.sflag [#allocation4], 1
    %892 = vsyncpa %s891, 1
    %893 = vsyncpa [#allocation6], 1
    %894 = vsyncpa [#allocation9], 1

// kernel: decoder_pallas.5
$region0: #{decoder_pallas.5}
  #allocation0 [shape = 'u32[]', space=smem, size = 0x4, offset = 0x4, fixed_abs, tag = 'smem constant byte address 0x4 - core index']
  #allocation1 [shape = 'u32[144,128]{1,0:T(1,128)}', space=vmem, size = 0x12000, scoped, tag = 'internal scratch']
  #allocation2 [shape = 'f32[10,10,32]{2,1,0:T(8,128)}', space=vmem, size = 0x14000, scoped, tag = 'scratch operand']
  %s0 = inlined_call_operand.vmem [shape: f32[2,8,8,32], index: 0, kind: input, shape index: {}]
  %s1 = inlined_call_operand.hbm [shape: f32[288,128], index: 1, kind: input, shape index: {}]
  %s2 = inlined_call_operand.hbm [shape: f32[1,128], index: 2, kind: input, shape index: {}]
  %s3 = inlined_call_operand.hbm [shape: f32[128,128], index: 3, kind: input, shape index: {}]
  %s4 = inlined_call_operand.hbm [shape: f32[1,128], index: 4, kind: input, shape index: {}]
  %s5 = inlined_call_operand.vmem [shape: f32[16,2,8,64], index: 5, kind: output, shape index: {}]
  %s6 = sld [smem:[#allocation0]]
  $region69: #{decoder_pallas.5} parent=0
    _
  %s8 = ssub.s32 1, %s6
  %s9 = scalar_select 0, %s8, %s6
  $region1: #{decoder_pallas.5} parent=0
    #allocation3 [shape = 'u8[147456]{0}', space=vmem, size = 0x24000, scoped, tag = 'input window, operand 1, single buffered']
    #allocation4 [shape = 's32[2]{0}', space=sflag, size = 0x8, scoped, tag = 'scoped memory for decoder_pallas.5']
    #allocation5 [shape = 'u8[512]{0}', space=vmem, size = 0x400, scoped, tag = 'input window, operand 2, single buffered']
    #allocation6 [shape = 's32[1]{0}', space=sflag, size = 0x4, scoped, tag = 'scoped memory for decoder_pallas.5']
    #allocation7 [shape = 'u8[65536]{0}', space=vmem, size = 0x10000, scoped, tag = 'input window, operand 3, single buffered']
    #allocation8 [shape = 'u8[512]{0}', space=vmem, size = 0x400, scoped, tag = 'input window, operand 4, single buffered']
    #allocation9 [shape = 's32[1]{0}', space=sflag, size = 0x4, scoped, tag = 'scoped memory for decoder_pallas.5']
    %10 = vsyncpa [#allocation4], 0
    %11 = vsyncpa [#allocation6], 0
    %12 = vsyncpa [#allocation9], 0
    loop: start=0, step=1, limit=4
    $region2: #{decoder_pallas.5} parent=1 // loop_pre_header
      _
    $region3: #{decoder_pallas.5} parent=1 // loop_header
      %s14 = sphi 0, %s18
      %p15 = scmp.ge.s32.totalorder %s14, 4
      %s21 = sphi 0, %s33
      %s22 = sphi 0, %s29
      %s23 = sphi 0, %s21
      %s24 = sphi 0, %s22
      %s25 = sphi 0, %s23
      %s26 = sphi 0, %s24
      %s36 = sphi 0, %s38
      %s39 = sphi 0, %s36
      %s40 = sphi 0, %s39
      %s56 = sphi 0, %s40
      %s60 = sphi 0, %s60
      %s62 = sphi 0, %s60
      %s63 = sphi 0, %s62
      %s77 = sphi 0, %s63
      %s81 = sphi 0, %s81
      %s83 = sphi 0, %s81
      %s84 = sphi 0, %s83
      %s98 = sphi 0, %s84
      %s102 = sphi 0, %s102
      %s104 = sphi 0, %s102
      %s105 = sphi 0, %s104
      %s119 = sphi 0, %s105
      %s123 = sphi 0, %s123
      %s125 = sphi 0, %s123
      %s126 = sphi 0, %s125
      %s140 = sphi 0, %s126
      %s148 = sphi 0, %s150
      %s151 = sphi 0, %s148
      %s152 = sphi 0, %s151
      %s168 = sphi 0, %s152
    $region4: #{decoder_pallas.5} parent=1 // loop_header_branch
      %17 = sbr.rel (%p15) target = $region8
    $region5: #{decoder_pallas.5} parent=1 // loop_body
      %s19 = ssub.s32 %s14, 1
      %s20 = ssub.s32 %s14, 2
      %s27 = sadd.s32 1, %s22
      %p28 = scmp.ge.s32.totalorder %s27, 1
      %s29 = scalar_select %p28, 0, %s27
      %s30 = sadd.s32 1, %s21
      %s31 = scalar_select %p28, %s30, %s21
      %p32 = scmp.ge.s32.totalorder %s31, 2
      %s33 = scalar_select %p32, 0, %s31
      %s34 = ssub.s32 %s21, %s33
      %p35 = scmp.eq.s32.totalorder %s34, 0
      %s37 = sadd.s32 %s36, 1
      %s38 = scalar_select %p35, %s36, %s37
      %p41 = pneg %p35
      %p42 = scmp.eq.s32.totalorder %s14, 1
      %p43 = por %p41, %p42
      %p44 = scmp.ne.s32.totalorder %s36, %s39
      %p45 = scmp.eq.s32.totalorder %s14, 0
      %p46 = por %p44, %p45
      %p47 = scmp.ne.s32.totalorder %s36, %s39
      %p48 = scmp.eq.s32.totalorder %s19, 1
      %p49 = por %p47, %p48
      %p50 = scmp.ne.s32.totalorder %s39, %s40
      %p51 = scmp.eq.s32.totalorder %s19, 0
      %p52 = por %p50, %p51
      %p53 = scmp.ne.s32.totalorder %s39, %s40
      %p54 = scmp.eq.s32.totalorder %s20, 1
      %p55 = por %p53, %p54
      %p57 = scmp.ne.s32.totalorder %s40, %s56
      %p58 = scmp.eq.s32.totalorder %s20, 0
      %p59 = por %p57, %p58
      %s61 = sadd.s32 %s60, 1
      %p64 = scmp.eq.s32.totalorder %s14, 1
      %p65 = scmp.ne.s32.totalorder %s60, %s62
      %p66 = scmp.eq.s32.totalorder %s14, 0
      %p67 = por %p65, %p66
      %p68 = scmp.ne.s32.totalorder %s60, %s62
      %p69 = scmp.eq.s32.totalorder %s19, 1
      %p70 = por %p68, %p69
      %p71 = scmp.ne.s32.totalorder %s62, %s63
      %p72 = scmp.eq.s32.totalorder %s19, 0
      %p73 = por %p71, %p72
      %p74 = scmp.ne.s32.totalorder %s62, %s63
      %p75 = scmp.eq.s32.totalorder %s20, 1
      %p76 = por %p74, %p75
      %p78 = scmp.ne.s32.totalorder %s63, %s77
      %p79 = scmp.eq.s32.totalorder %s20, 0
      %p80 = por %p78, %p79
      %s82 = sadd.s32 %s81, 1
      %p85 = scmp.eq.s32.totalorder %s14, 1
      %p86 = scmp.ne.s32.totalorder %s81, %s83
      %p87 = scmp.eq.s32.totalorder %s14, 0
      %p88 = por %p86, %p87
      %p89 = scmp.ne.s32.totalorder %s81, %s83
      %p90 = scmp.eq.s32.totalorder %s19, 1
      %p91 = por %p89, %p90
      %p92 = scmp.ne.s32.totalorder %s83, %s84
      %p93 = scmp.eq.s32.totalorder %s19, 0
      %p94 = por %p92, %p93
      %p95 = scmp.ne.s32.totalorder %s83, %s84
      %p96 = scmp.eq.s32.totalorder %s20, 1
      %p97 = por %p95, %p96
      %p99 = scmp.ne.s32.totalorder %s84, %s98
      %p100 = scmp.eq.s32.totalorder %s20, 0
      %p101 = por %p99, %p100
      %s103 = sadd.s32 %s102, 1
      %p106 = scmp.eq.s32.totalorder %s14, 1
      %p107 = scmp.ne.s32.totalorder %s102, %s104
      %p108 = scmp.eq.s32.totalorder %s14, 0
      %p109 = por %p107, %p108
      %p110 = scmp.ne.s32.totalorder %s102, %s104
      %p111 = scmp.eq.s32.totalorder %s19, 1
      %p112 = por %p110, %p111
      %p113 = scmp.ne.s32.totalorder %s104, %s105
      %p114 = scmp.eq.s32.totalorder %s19, 0
      %p115 = por %p113, %p114
      %p116 = scmp.ne.s32.totalorder %s104, %s105
      %p117 = scmp.eq.s32.totalorder %s20, 1
      %p118 = por %p116, %p117
      %p120 = scmp.ne.s32.totalorder %s105, %s119
      %p121 = scmp.eq.s32.totalorder %s20, 0
      %p122 = por %p120, %p121
      %s124 = sadd.s32 %s123, 1
      %p127 = scmp.eq.s32.totalorder %s14, 1
      %p128 = scmp.ne.s32.totalorder %s123, %s125
      %p129 = scmp.eq.s32.totalorder %s14, 0
      %p130 = por %p128, %p129
      %p131 = scmp.ne.s32.totalorder %s123, %s125
      %p132 = scmp.eq.s32.totalorder %s19, 1
      %p133 = por %p131, %p132
      %p134 = scmp.ne.s32.totalorder %s125, %s126
      %p135 = scmp.eq.s32.totalorder %s19, 0
      %p136 = por %p134, %p135
      %p137 = scmp.ne.s32.totalorder %s125, %s126
      %p138 = scmp.eq.s32.totalorder %s20, 1
      %p139 = por %p137, %p138
      %p141 = scmp.ne.s32.totalorder %s126, %s140
      %p142 = scmp.eq.s32.totalorder %s20, 0
      %p143 = por %p141, %p142
      %s144 = sadd.s32 %s21, %s22
      %s145 = sadd.s32 %s33, %s29
      %s146 = ssub.s32 %s144, %s145
      %p147 = scmp.eq.s32.totalorder %s146, 0
      %s149 = sadd.s32 %s148, 1
      %s150 = scalar_select %p147, %s148, %s149
      %p153 = pneg %p147
      %p154 = scmp.eq.s32.totalorder %s14, 1
      %p155 = por %p153, %p154
      %p156 = scmp.ne.s32.totalorder %s148, %s151
      %p157 = scmp.eq.s32.totalorder %s14, 0
      %p158 = por %p156, %p157
      %p159 = scmp.ne.s32.totalorder %s148, %s151
      %p160 = scmp.eq.s32.totalorder %s19, 1
      %p161 = por %p159, %p160
      %p162 = scmp.ne.s32.totalorder %s151, %s152
      %p163 = scmp.eq.s32.totalorder %s19, 0
      %p164 = por %p162, %p163
      %p165 = scmp.ne.s32.totalorder %s151, %s152
      %p166 = scmp.eq.s32.totalorder %s20, 1
      %p167 = por %p165, %p166
      %p169 = scmp.ne.s32.totalorder %s152, %s168
      %p170 = scmp.eq.s32.totalorder %s20, 0
      %p171 = por %p169, %p170
      %p172 = scmp.le.s32.totalorder 1, %s14
      %p173 = scmp.lt.s32.totalorder %s14, 3
      %p174 = pnand %p172, %p173
      %p175 = pneg %p174
      // Predicated region
      $region9: #{decoder_pallas.5} parent=5 // pred_check
        _
      $region10: #{decoder_pallas.5} parent=5 // pred_check_branch
        %177 = sbr.rel (%p174) target = $region12
      $region11: #{decoder_pallas.5} parent=5 // pred_region
        %s178 = ssub.s32 %s14, 1
        // Predicated region
        $region13: #{decoder_pallas.5} parent=11 // pred_check
          %p179 = pneg %p73
        $region14: #{decoder_pallas.5} parent=11 // pred_check_branch
          %181 = sbr.rel (%p179) target = $region16
        $region15: #{decoder_pallas.5} parent=11 // pred_region
          %s183 = ssub.s32 4608, 4608
          %184 = vsyncadd [#allocation4], %s183
          %s185 = sshll.u32 [#allocation3], 4
          %s186 = int_to_ptr.vmem [resolvable:$true] %s185
          %191 = dma.hbm_to_vmem [thread:$0]  %s1, 4608, %s186, [#allocation4], 128, 128, 8
        $region16: #{decoder_pallas.5} parent=11 // pred_fallthru
          _
        // Predicated region
        $region17: #{decoder_pallas.5} parent=11 // pred_check
          %p192 = pneg %p94
        $region18: #{decoder_pallas.5} parent=11 // pred_check_branch
          %194 = sbr.rel (%p192) target = $region20
        $region19: #{decoder_pallas.5} parent=11 // pred_region
          %s196 = ssub.s32 16, 16
          %197 = vsyncadd [#allocation6], %s196
          %s199 = sshll.u32 [#allocation5], 4
          %s200 = int_to_ptr.vmem [resolvable:$true] %s199
          %202 = dma.hbm_to_vmem [thread:$0]  %s2, 16, %s200, [#allocation6]
        $region20: #{decoder_pallas.5} parent=11 // pred_fallthru
          _
        // Predicated region
        $region21: #{decoder_pallas.5} parent=11 // pred_check
          %p203 = pneg %p115
        $region22: #{decoder_pallas.5} parent=11 // pred_check_branch
          %205 = sbr.rel (%p203) target = $region24
        $region23: #{decoder_pallas.5} parent=11 // pred_region
          %s207 = ssub.s32 2048, 2048
          %208 = vsyncadd [#allocation6], %s207
          %s209 = sshll.u32 [#allocation7], 4
          %s210 = int_to_ptr.vmem [resolvable:$true] %s209
          %215 = dma.hbm_to_vmem [thread:$0]  %s3, 2048, %s210, [#allocation6], 128, 128, 8
        $region24: #{decoder_pallas.5} parent=11 // pred_fallthru
          _
        // Predicated region
        $region25: #{decoder_pallas.5} parent=11 // pred_check
          %p216 = pneg %p136
        $region26: #{decoder_pallas.5} parent=11 // pred_check_branch
          %218 = sbr.rel (%p216) target = $region28
        $region27: #{decoder_pallas.5} parent=11 // pred_region
          %s220 = ssub.s32 16, 16
          %221 = vsyncadd [#allocation9], %s220
          %s223 = sshll.u32 [#allocation8], 4
          %s224 = int_to_ptr.vmem [resolvable:$true] %s223
          %226 = dma.hbm_to_vmem [thread:$0]  %s4, 16, %s224, [#allocation9]
        $region28: #{decoder_pallas.5} parent=11 // pred_fallthru
          _
      $region12: #{decoder_pallas.5} parent=5 // pred_fallthru
        _
      %p227 = scmp.lt.s32.totalorder %s14, 2
      // Predicated region
      $region29: #{decoder_pallas.5} parent=5 // pred_check
        %p228 = pneg %p227
      $region30: #{decoder_pallas.5} parent=5 // pred_check_branch
        %230 = sbr.rel (%p228) target = $region32
      $region31: #{decoder_pallas.5} parent=5 // pred_region
        // Predicated region
        $region33: #{decoder_pallas.5} parent=31 // pred_check
          %p231 = pneg %p46
        $region34: #{decoder_pallas.5} parent=31 // pred_check_branch
          %233 = sbr.rel (%p231) target = $region36
        $region35: #{decoder_pallas.5} parent=31 // pred_region
          %p234 = scmp.lt.s32.totalorder %s21, 1
          %s235 = scalar_select %p234, %s21, 1
          %s236 = smul.addr %s235, 8
          %s237 = smul.addr %s236, 8
          %s238 = scalar_lea.vmem %s0, %s237
        $region36: #{decoder_pallas.5} parent=31 // pred_fallthru
          _
      $region32: #{decoder_pallas.5} parent=5 // pred_fallthru
        _
      %p239 = scmp.le.s32.totalorder 1, %s14
      %p240 = scmp.lt.s32.totalorder %s14, 3
      %p241 = pnand %p239, %p240
      %p242 = pneg %p241
      // Predicated region
      $region37: #{decoder_pallas.5} parent=5 // pred_check
        _
      $region38: #{decoder_pallas.5} parent=5 // pred_check_branch
        %244 = sbr.rel (%p241) target = $region40
      $region39: #{decoder_pallas.5} parent=5 // pred_region
        %s245 = ssub.s32 %s14, 1
        // Predicated region
        $region41: #{decoder_pallas.5} parent=39 // pred_check
          %p246 = pneg %p73
        $region42: #{decoder_pallas.5} parent=39 // pred_check_branch
          %248 = sbr.rel (%p246) target = $region44
        $region43: #{decoder_pallas.5} parent=39 // pred_region
          %249 = dma.done [#allocation4], 4608
        $region44: #{decoder_pallas.5} parent=39 // pred_fallthru
          _
        // Predicated region
        $region45: #{decoder_pallas.5} parent=39 // pred_check
          %p250 = pneg %p94
        $region46: #{decoder_pallas.5} parent=39 // pred_check_branch
          %252 = sbr.rel (%p250) target = $region48
        $region47: #{decoder_pallas.5} parent=39 // pred_region
          %253 = dma.done [#allocation6], 16
        $region48: #{decoder_pallas.5} parent=39 // pred_fallthru
          _
        // Predicated region
        $region49: #{decoder_pallas.5} parent=39 // pred_check
          %p254 = pneg %p115
        $region50: #{decoder_pallas.5} parent=39 // pred_check_branch
          %256 = sbr.rel (%p254) target = $region52
        $region51: #{decoder_pallas.5} parent=39 // pred_region
          %257 = dma.done [#allocation6], 2048
        $region52: #{decoder_pallas.5} parent=39 // pred_fallthru
          _
        // Predicated region
        $region53: #{decoder_pallas.5} parent=39 // pred_check
          %p258 = pneg %p136
        $region54: #{decoder_pallas.5} parent=39 // pred_check_branch
          %260 = sbr.rel (%p258) target = $region56
        $region55: #{decoder_pallas.5} parent=39 // pred_region
          %261 = dma.done [#allocation9], 16
        $region56: #{decoder_pallas.5} parent=39 // pred_fallthru
          _
        %p262 = scmp.lt.s32.totalorder %s23, 1
        %s263 = scalar_select %p262, %s23, 1
        %s264 = smul.addr %s263, 8
        %s265 = smul.addr %s264, 8
        %s266 = scalar_lea.vmem %s0, %s265
        %p267 = pneg %p52
        %p268 = pneg %p49
        %p269 = pneg %p73
        %p270 = pneg %p70
        %p271 = pneg %p94
        %p272 = pneg %p91
        %p273 = pneg %p115
        %p274 = pneg %p112
        %p275 = pneg %p136
        %p276 = pneg %p133
        %p277 = pneg %p164
        %p278 = pneg %p161
        %s279 = sadd.s32 %s23, %s24
        %s280 = smul.u32 8, %s279
        %p281 = scmp.lt.s32.totalorder %s280, 15
        %s282 = scalar_select %p281, %s280, 15
        %s283 = smul.addr %s282, 2
        %s284 = smul.addr %s283, 8
        %s285 = scalar_lea.vmem %s5, %s284
        %p286 = scmp.lt.s32.totalorder %s23, 1
        %s287 = scalar_select %p286, %s23, 1
        %s288 = smul.addr %s287, 8
        %s289 = smul.addr %s288, 8
        %s290 = scalar_lea.vmem %s0, %s289
        %s291 = sadd.s32 %s23, %s24
        %s292 = smul.u32 8, %s291
        %p293 = scmp.lt.s32.totalorder %s292, 15
        %s294 = scalar_select %p293, %s292, 15
        %s295 = smul.addr %s294, 2
        %s296 = smul.addr %s295, 8
        %s297 = scalar_lea.vmem %s5, %s296
        %s298 = sadd.s32 %s23, %s24
        %s299 = smul.u32 8, %s298
        %vm300 = vcmask 261120
        %301 = vst.msk [vmem:[#allocation2] sm:$0xff] %vm300, 0.0
        %vm302 = vcmask 254976
        %303 = vst.msk [vmem:[#allocation2 + $0x8] sm:$0x3] %vm302, 0.0
        %304 = vst.msk [vmem:[#allocation2 + $0x10] sm:$0xff] %vm300, 0.0
        %305 = vst.msk [vmem:[#allocation2 + $0x18] sm:$0x3] %vm302, 0.0
        %306 = vst.msk [vmem:[#allocation2 + $0x20] sm:$0xff] %vm300, 0.0
        %307 = vst.msk [vmem:[#allocation2 + $0x28] sm:$0x3] %vm302, 0.0
        %308 = vst.msk [vmem:[#allocation2 + $0x30] sm:$0xff] %vm300, 0.0
        %309 = vst.msk [vmem:[#allocation2 + $0x38] sm:$0x3] %vm302, 0.0
        %310 = vst.msk [vmem:[#allocation2 + $0x40] sm:$0xff] %vm300, 0.0
        %311 = vst.msk [vmem:[#allocation2 + $0x48] sm:$0x3] %vm302, 0.0
        %312 = vst.msk [vmem:[#allocation2 + $0x50] sm:$0xff] %vm300, 0.0
        %313 = vst.msk [vmem:[#allocation2 + $0x58] sm:$0x3] %vm302, 0.0
        %314 = vst.msk [vmem:[#allocation2 + $0x60] sm:$0xff] %vm300, 0.0
        %315 = vst.msk [vmem:[#allocation2 + $0x68] sm:$0x3] %vm302, 0.0
        %316 = vst.msk [vmem:[#allocation2 + $0x70] sm:$0xff] %vm300, 0.0
        %317 = vst.msk [vmem:[#allocation2 + $0x78] sm:$0x3] %vm302, 0.0
        %318 = vst.msk [vmem:[#allocation2 + $0x80] sm:$0xff] %vm300, 0.0
        %319 = vst.msk [vmem:[#allocation2 + $0x88] sm:$0x3] %vm302, 0.0
        %320 = vst.msk [vmem:[#allocation2 + $0x90] sm:$0xff] %vm300, 0.0
        %321 = vst.msk [vmem:[#allocation2 + $0x98] sm:$0x3] %vm302, 0.0
        %v322 = vld [vmem:[%s290] sm:$0xff]
        %v323 = vld [vmem:[%s290 + $0x8] sm:$0xff]
        %v324 = vld [vmem:[%s290 + $0x10] sm:$0xff]
        %v325 = vld [vmem:[%s290 + $0x18] sm:$0xff]
        %v326 = vld [vmem:[%s290 + $0x20] sm:$0xff]
        %v327 = vld [vmem:[%s290 + $0x28] sm:$0xff]
        %v328 = vld [vmem:[%s290 + $0x30] sm:$0xff]
        %v329 = vld [vmem:[%s290 + $0x38] sm:$0xff]
        %s330 = scalar_lea.vmem [#allocation2], 16
        %331 = vst.msk [vmem:[%s330 + $0x1] sm:$0xff] %vm300, %v322
        %332 = vst.msk [vmem:[%s330 + $0x11] sm:$0xff] %vm300, %v323
        %333 = vst.msk [vmem:[%s330 + $0x21] sm:$0xff] %vm300, %v324
        %334 = vst.msk [vmem:[%s330 + $0x31] sm:$0xff] %vm300, %v325
        %335 = vst.msk [vmem:[%s330 + $0x41] sm:$0xff] %vm300, %v326
        %336 = vst.msk [vmem:[%s330 + $0x51] sm:$0xff] %vm300, %v327
        %337 = vst.msk [vmem:[%s330 + $0x61] sm:$0xff] %vm300, %v328
        %338 = vst.msk [vmem:[%s330 + $0x71] sm:$0xff] %vm300, %v329
        %v339 = vld [vmem:[#allocation2] sm:$0xff]
        %v340 = vld [vmem:[#allocation2 + $0x10] sm:$0xff]
        %v341 = vld [vmem:[#allocation2 + $0x20] sm:$0xff]
        %v342 = vld [vmem:[#allocation2 + $0x30] sm:$0xff]
        %v343 = vld [vmem:[#allocation2 + $0x40] sm:$0xff]
        %v344 = vld [vmem:[#allocation2 + $0x50] sm:$0xff]
        %v345 = vld [vmem:[#allocation2 + $0x60] sm:$0xff]
        %v346 = vld [vmem:[#allocation2 + $0x70] sm:$0xff]
        %v347 = vld [vmem:[#allocation2 + $0x1] sm:$0xff]
        %v348 = vld [vmem:[#allocation2 + $0x11] sm:$0xff]
        %v349 = vld [vmem:[#allocation2 + $0x21] sm:$0xff]
        %v350 = vld [vmem:[#allocation2 + $0x31] sm:$0xff]
        %v351 = vld [vmem:[#allocation2 + $0x41] sm:$0xff]
        %v352 = vld [vmem:[#allocation2 + $0x51] sm:$0xff]
        %v353 = vld [vmem:[#allocation2 + $0x61] sm:$0xff]
        %v354 = vld [vmem:[#allocation2 + $0x71] sm:$0xff]
        %v355 = vld [vmem:[#allocation2 + $0x2] sm:$0xff]
        %v356 = vld [vmem:[#allocation2 + $0x12] sm:$0xff]
        %v357 = vld [vmem:[#allocation2 + $0x22] sm:$0xff]
        %v358 = vld [vmem:[#allocation2 + $0x32] sm:$0xff]
        %v359 = vld [vmem:[#allocation2 + $0x42] sm:$0xff]
        %v360 = vld [vmem:[#allocation2 + $0x52] sm:$0xff]
        %v361 = vld [vmem:[#allocation2 + $0x62] sm:$0xff]
        %v362 = vld [vmem:[#allocation2 + $0x72] sm:$0xff]
        %v363 = vld [vmem:[%s330] sm:$0xff]
        %v364 = vld [vmem:[%s330 + $0x10] sm:$0xff]
        %v365 = vld [vmem:[%s330 + $0x20] sm:$0xff]
        %v366 = vld [vmem:[%s330 + $0x30] sm:$0xff]
        %v367 = vld [vmem:[%s330 + $0x40] sm:$0xff]
        %v368 = vld [vmem:[%s330 + $0x50] sm:$0xff]
        %v369 = vld [vmem:[%s330 + $0x60] sm:$0xff]
        %v370 = vld [vmem:[%s330 + $0x70] sm:$0xff]
        %v371 = vld [vmem:[%s330 + $0x1] sm:$0xff]
        %v372 = vld [vmem:[%s330 + $0x11] sm:$0xff]
        %v373 = vld [vmem:[%s330 + $0x21] sm:$0xff]
        %v374 = vld [vmem:[%s330 + $0x31] sm:$0xff]
        %v375 = vld [vmem:[%s330 + $0x41] sm:$0xff]
        %v376 = vld [vmem:[%s330 + $0x51] sm:$0xff]
        %v377 = vld [vmem:[%s330 + $0x61] sm:$0xff]
        %v378 = vld [vmem:[%s330 + $0x71] sm:$0xff]
        %v379 = vld [vmem:[%s330 + $0x2] sm:$0xff]
        %v380 = vld [vmem:[%s330 + $0x12] sm:$0xff]
        %v381 = vld [vmem:[%s330 + $0x22] sm:$0xff]
        %v382 = vld [vmem:[%s330 + $0x32] sm:$0xff]
        %v383 = vld [vmem:[%s330 + $0x42] sm:$0xff]
        %v384 = vld [vmem:[%s330 + $0x52] sm:$0xff]
        %v385 = vld [vmem:[%s330 + $0x62] sm:$0xff]
        %v386 = vld [vmem:[%s330 + $0x72] sm:$0xff]
        %s387 = scalar_lea.vmem [#allocation2], 32
        %v388 = vld [vmem:[%s387] sm:$0xff]
        %v389 = vld [vmem:[%s387 + $0x10] sm:$0xff]
        %v390 = vld [vmem:[%s387 + $0x20] sm:$0xff]
        %v391 = vld [vmem:[%s387 + $0x30] sm:$0xff]
        %v392 = vld [vmem:[%s387 + $0x40] sm:$0xff]
        %v393 = vld [vmem:[%s387 + $0x50] sm:$0xff]
        %v394 = vld [vmem:[%s387 + $0x60] sm:$0xff]
        %v395 = vld [vmem:[%s387 + $0x70] sm:$0xff]
        %v396 = vld [vmem:[%s387 + $0x1] sm:$0xff]
        %v397 = vld [vmem:[%s387 + $0x11] sm:$0xff]
        %v398 = vld [vmem:[%s387 + $0x21] sm:$0xff]
        %v399 = vld [vmem:[%s387 + $0x31] sm:$0xff]
        %v400 = vld [vmem:[%s387 + $0x41] sm:$0xff]
        %v401 = vld [vmem:[%s387 + $0x51] sm:$0xff]
        %v402 = vld [vmem:[%s387 + $0x61] sm:$0xff]
        %v403 = vld [vmem:[%s387 + $0x71] sm:$0xff]
        %v404 = vld [vmem:[%s387 + $0x2] sm:$0xff]
        %v405 = vld [vmem:[%s387 + $0x12] sm:$0xff]
        %v406 = vld [vmem:[%s387 + $0x22] sm:$0xff]
        %v407 = vld [vmem:[%s387 + $0x32] sm:$0xff]
        %v408 = vld [vmem:[%s387 + $0x42] sm:$0xff]
        %v409 = vld [vmem:[%s387 + $0x52] sm:$0xff]
        %v410 = vld [vmem:[%s387 + $0x62] sm:$0xff]
        %v411 = vld [vmem:[%s387 + $0x72] sm:$0xff]
        %420 = vrot.lane.b32.xlu0 %v347, 32
        %v421 = vpop.permute.xlu0 %420
        %422 = vrot.lane.b32.xlu0 %v348, 32
        %v423 = vpop.permute.xlu0 %422
        %424 = vrot.lane.b32.xlu0 %v349, 32
        %v425 = vpop.permute.xlu0 %424
        %426 = vrot.lane.b32.xlu0 %v350, 32
        %v427 = vpop.permute.xlu0 %426
        %428 = vrot.lane.b32.xlu0 %v351, 32
        %v429 = vpop.permute.xlu0 %428
        %430 = vrot.lane.b32.xlu0 %v352, 32
        %v431 = vpop.permute.xlu0 %430
        %432 = vrot.lane.b32.xlu0 %v353, 32
        %v433 = vpop.permute.xlu0 %432
        %434 = vrot.lane.b32.xlu0 %v354, 32
        %v435 = vpop.permute.xlu0 %434
        %452 = vrot.lane.b32.xlu0 %v355, 64
        %v453 = vpop.permute.xlu0 %452
        %454 = vrot.lane.b32.xlu0 %v356, 64
        %v455 = vpop.permute.xlu0 %454
        %456 = vrot.lane.b32.xlu0 %v357, 64
        %v457 = vpop.permute.xlu0 %456
        %458 = vrot.lane.b32.xlu0 %v358, 64
        %v459 = vpop.permute.xlu0 %458
        %460 = vrot.lane.b32.xlu0 %v359, 64
        %v461 = vpop.permute.xlu0 %460
        %462 = vrot.lane.b32.xlu0 %v360, 64
        %v463 = vpop.permute.xlu0 %462
        %464 = vrot.lane.b32.xlu0 %v361, 64
        %v465 = vpop.permute.xlu0 %464
        %466 = vrot.lane.b32.xlu0 %v362, 64
        %v467 = vpop.permute.xlu0 %466
        %484 = vrot.lane.b32.xlu0 %v363, 96
        %v485 = vpop.permute.xlu0 %484
        %486 = vrot.lane.b32.xlu0 %v364, 96
        %v487 = vpop.permute.xlu0 %486
        %488 = vrot.lane.b32.xlu0 %v365, 96
        %v489 = vpop.permute.xlu0 %488
        %490 = vrot.lane.b32.xlu0 %v366, 96
        %v491 = vpop.permute.xlu0 %490
        %492 = vrot.lane.b32.xlu0 %v367, 96
        %v493 = vpop.permute.xlu0 %492
        %494 = vrot.lane.b32.xlu0 %v368, 96
        %v495 = vpop.permute.xlu0 %494
        %496 = vrot.lane.b32.xlu0 %v369, 96
        %v497 = vpop.permute.xlu0 %496
        %498 = vrot.lane.b32.xlu0 %v370, 96
        %v499 = vpop.permute.xlu0 %498
        %516 = vrot.lane.b32.xlu0 %v379, 32
        %v517 = vpop.permute.xlu0 %516
        %518 = vrot.lane.b32.xlu0 %v380, 32
        %v519 = vpop.permute.xlu0 %518
        %520 = vrot.lane.b32.xlu0 %v381, 32
        %v521 = vpop.permute.xlu0 %520
        %522 = vrot.lane.b32.xlu0 %v382, 32
        %v523 = vpop.permute.xlu0 %522
        %524 = vrot.lane.b32.xlu0 %v383, 32
        %v525 = vpop.permute.xlu0 %524
        %526 = vrot.lane.b32.xlu0 %v384, 32
        %v527 = vpop.permute.xlu0 %526
        %528 = vrot.lane.b32.xlu0 %v385, 32
        %v529 = vpop.permute.xlu0 %528
        %530 = vrot.lane.b32.xlu0 %v386, 32
        %v531 = vpop.permute.xlu0 %530
        %548 = vrot.lane.b32.xlu0 %v388, 64
        %v549 = vpop.permute.xlu0 %548
        %550 = vrot.lane.b32.xlu0 %v389, 64
        %v551 = vpop.permute.xlu0 %550
        %552 = vrot.lane.b32.xlu0 %v390, 64
        %v553 = vpop.permute.xlu0 %552
        %554 = vrot.lane.b32.xlu0 %v391, 64
        %v555 = vpop.permute.xlu0 %554
        %556 = vrot.lane.b32.xlu0 %v392, 64
        %v557 = vpop.permute.xlu0 %556
        %558 = vrot.lane.b32.xlu0 %v393, 64
        %v559 = vpop.permute.xlu0 %558
        %560 = vrot.lane.b32.xlu0 %v394, 64
        %v561 = vpop.permute.xlu0 %560
        %562 = vrot.lane.b32.xlu0 %v395, 64
        %v563 = vpop.permute.xlu0 %562
        %580 = vrot.lane.b32.xlu0 %v396, 96
        %v581 = vpop.permute.xlu0 %580
        %582 = vrot.lane.b32.xlu0 %v397, 96
        %v583 = vpop.permute.xlu0 %582
        %584 = vrot.lane.b32.xlu0 %v398, 96
        %v585 = vpop.permute.xlu0 %584
        %586 = vrot.lane.b32.xlu0 %v399, 96
        %v587 = vpop.permute.xlu0 %586
        %588 = vrot.lane.b32.xlu0 %v400, 96
        %v589 = vpop.permute.xlu0 %588
        %590 = vrot.lane.b32.xlu0 %v401, 96
        %v591 = vpop.permute.xlu0 %590
        %592 = vrot.lane.b32.xlu0 %v402, 96
        %v593 = vpop.permute.xlu0 %592
        %594 = vrot.lane.b32.xlu0 %v403, 96
        %v595 = vpop.permute.xlu0 %594
        %v604 = vsel %vm300, %v339, %v421
        %v605 = vsel %vm300, %v340, %v423
        %v606 = vsel %vm300, %v341, %v425
        %v607 = vsel %vm300, %v342, %v427
        %v608 = vsel %vm300, %v343, %v429
        %v609 = vsel %vm300, %v344, %v431
        %v610 = vsel %vm300, %v345, %v433
        %v611 = vsel %vm300, %v346, %v435
        %vm612 = vcmask 523264
        %v613 = vsel %vm612, %v604, %v453
        %v614 = vsel %vm612, %v605, %v455
        %v615 = vsel %vm612, %v606, %v457
        %v616 = vsel %vm612, %v607, %v459
        %v617 = vsel %vm612, %v608, %v461
        %v618 = vsel %vm612, %v609, %v463
        %v619 = vsel %vm612, %v610, %v465
        %v620 = vsel %vm612, %v611, %v467
        %vm621 = vcmask 785408
        %v622 = vsel %vm621, %v613, %v485
        %v623 = vsel %vm621, %v614, %v487
        %v624 = vsel %vm621, %v615, %v489
        %v625 = vsel %vm621, %v616, %v491
        %v626 = vsel %vm621, %v617, %v493
        %v627 = vsel %vm621, %v618, %v495
        %v628 = vsel %vm621, %v619, %v497
        %v629 = vsel %vm621, %v620, %v499
        %v630 = vsel %vm300, %v371, %v517
        %v631 = vsel %vm300, %v372, %v519
        %v632 = vsel %vm300, %v373, %v521
        %v633 = vsel %vm300, %v374, %v523
        %v634 = vsel %vm300, %v375, %v525
        %v635 = vsel %vm300, %v376, %v527
        %v636 = vsel %vm300, %v377, %v529
        %v637 = vsel %vm300, %v378, %v531
        %v638 = vsel %vm612, %v630, %v549
        %v639 = vsel %vm612, %v631, %v551
        %v640 = vsel %vm612, %v632, %v553
        %v641 = vsel %vm612, %v633, %v555
        %v642 = vsel %vm612, %v634, %v557
        %v643 = vsel %vm612, %v635, %v559
        %v644 = vsel %vm612, %v636, %v561
        %v645 = vsel %vm612, %v637, %v563
        %v646 = vsel %vm621, %v638, %v581
        %v647 = vsel %vm621, %v639, %v583
        %v648 = vsel %vm621, %v640, %v585
        %v649 = vsel %vm621, %v641, %v587
        %v650 = vsel %vm621, %v642, %v589
        %v651 = vsel %vm621, %v643, %v591
        %v652 = vsel %vm621, %v644, %v593
        %v653 = vsel %vm621, %v645, %v595
        %v654 = vld [vmem:[#allocation3] sm:$0xff]
        %v655 = vld [vmem:[#allocation3 + $0x8] sm:$0xff]
        %v656 = vld [vmem:[#allocation3 + $0x10] sm:$0xff]
        %v657 = vld [vmem:[#allocation3 + $0x18] sm:$0xff]
        %v658 = vld [vmem:[#allocation3 + $0x20] sm:$0xff]
        %v659 = vld [vmem:[#allocation3 + $0x28] sm:$0xff]
        %v660 = vld [vmem:[#allocation3 + $0x30] sm:$0xff]
        %v661 = vld [vmem:[#allocation3 + $0x38] sm:$0xff]
        %v662 = vld [vmem:[#allocation3 + $0x40] sm:$0xff]
        %v663 = vld [vmem:[#allocation3 + $0x48] sm:$0xff]
        %v664 = vld [vmem:[#allocation3 + $0x50] sm:$0xff]
        %v665 = vld [vmem:[#allocation3 + $0x58] sm:$0xff]
        %v666 = vld [vmem:[#allocation3 + $0x60] sm:$0xff]
        %v667 = vld [vmem:[#allocation3 + $0x68] sm:$0xff]
        %v668 = vld [vmem:[#allocation3 + $0x70] sm:$0xff]
        %v669 = vld [vmem:[#allocation3 + $0x78] sm:$0xff]
        %v670 = vld [vmem:[#allocation3 + $0x80] sm:$0xff]
        %v671 = vld [vmem:[#allocation3 + $0x88] sm:$0xff]
        %v672 = vld [vmem:[#allocation3 + $0x90] sm:$0xff]
        %v673 = vld [vmem:[#allocation3 + $0x98] sm:$0xff]
        %v674 = vld [vmem:[#allocation3 + $0xa0] sm:$0xff]
        %v675 = vld [vmem:[#allocation3 + $0xa8] sm:$0xff]
        %v676 = vld [vmem:[#allocation3 + $0xb0] sm:$0xff]
        %v677 = vld [vmem:[#allocation3 + $0xb8] sm:$0xff]
        %v678 = vld [vmem:[#allocation3 + $0xc0] sm:$0xff]
        %v679 = vld [vmem:[#allocation3 + $0xc8] sm:$0xff]
        %v680 = vld [vmem:[#allocation3 + $0xd0] sm:$0xff]
        %v681 = vld [vmem:[#allocation3 + $0xd8] sm:$0xff]
        %v682 = vld [vmem:[#allocation3 + $0xe0] sm:$0xff]
        %v683 = vld [vmem:[#allocation3 + $0xe8] sm:$0xff]
        %v684 = vld [vmem:[#allocation3 + $0xf0] sm:$0xff]
        %v685 = vld [vmem:[#allocation3 + $0xf8] sm:$0xff]
        %v686 = vld [vmem:[#allocation3 + $0x100] sm:$0xff]
        %v687 = vld [vmem:[#allocation3 + $0x108] sm:$0xff]
        %v688 = vld [vmem:[#allocation3 + $0x110] sm:$0xff]
        %v689 = vld [vmem:[#allocation3 + $0x118] sm:$0xff]
        %v690 = vld [vmem:[#allocation5] sm:$0x1]
        %v692 = vlaneseq
        %v693 = vshrl.u32 %v692, 7
        %v694 = vsub.s32 0, %v693
        %v695 = vrot.slane %v690, %v694
        %v698 = vsel %vm300, %v404, 0
        %v701 = vsel %vm300, %v405, 0
        %v704 = vsel %vm300, %v406, 0
        %v707 = vsel %vm300, %v407, 0
        %v710 = vsel %vm300, %v408, 0
        %v713 = vsel %vm300, %v409, 0
        %v716 = vsel %vm300, %v410, 0
        %v719 = vsel %vm300, %v411, 0
        %721 = vmatprep.subr.mxu0 0.0
        %722 = vmatpush1.msra.mxu0 %v654
        %723 = vmatprep.subr.mxu0 0.0
        %724 = vmatpush1.msra.mxu0 %v655
        %725 = vmatprep.subr.mxu0 0.0
        %726 = vmatpush1.msra.mxu0 %v656
        %727 = vmatprep.subr.mxu0 0.0
        %728 = vmatpush1.msra.mxu0 %v657
        %729 = vmatprep.subr.mxu0 0.0
        %730 = vmatpush1.msra.mxu0 %v658
        %731 = vmatprep.subr.mxu0 0.0
        %732 = vmatpush1.msra.mxu0 %v659
        %733 = vmatprep.subr.mxu0 0.0
        %734 = vmatpush1.msra.mxu0 %v660
        %735 = vmatprep.subr.mxu0 0.0
        %736 = vmatpush1.msra.mxu0 %v661
        %737 = vmatprep.subr.mxu0 0.0
        %738 = vmatpush1.msra.mxu0 %v662
        %739 = vmatprep.subr.mxu0 0.0
        %740 = vmatpush1.msra.mxu0 %v663
        %741 = vmatprep.subr.mxu0 0.0
        %742 = vmatpush1.msra.mxu0 %v664
        %743 = vmatprep.subr.mxu0 0.0
        %744 = vmatpush1.msra.mxu0 %v665
        %745 = vmatprep.subr.mxu0 0.0
        %746 = vmatpush1.msra.mxu0 %v666
        %747 = vmatprep.subr.mxu0 0.0
        %748 = vmatpush1.msra.mxu0 %v667
        %749 = vmatprep.subr.mxu0 0.0
        %750 = vmatpush1.msra.mxu0 %v668
        %751 = vmatprep.subr.mxu0 0.0
        %752 = vmatpush1.msra.mxu0 %v669
        %753 = vmatprep.subr.mxu0 0.0
        %754 = vmatpush1.msra.mxu0 %v670
        %755 = vmatprep.subr.mxu0 0.0
        %756 = vmatpush1.msra.mxu0 %v671
        %757 = vmatprep.subr.mxu0 0.0
        %758 = vmatpush1.msra.mxu0 %v672
        %759 = vmatprep.subr.mxu0 0.0
        %760 = vmatpush1.msra.mxu0 %v673
        %761 = vmatprep.subr.mxu0 0.0
        %762 = vmatpush1.msra.mxu0 %v674
        %763 = vmatprep.subr.mxu0 0.0
        %764 = vmatpush1.msra.mxu0 %v675
        %765 = vmatprep.subr.mxu0 0.0
        %766 = vmatpush1.msra.mxu0 %v676
        %767 = vmatprep.subr.mxu0 0.0
        %768 = vmatpush1.msra.mxu0 %v677
        %769 = vmatprep.subr.mxu0 0.0
        %770 = vmatpush1.msra.mxu0 %v678
        %771 = vmatprep.subr.mxu0 0.0
        %772 = vmatpush1.msra.mxu0 %v679
        %773 = vmatprep.subr.mxu0 0.0
        %774 = vmatpush1.msra.mxu0 %v680
        %775 = vmatprep.subr.mxu0 0.0
        %776 = vmatpush1.msra.mxu0 %v681
        %777 = vmatprep.subr.mxu0 0.0
        %778 = vmatpush1.msra.mxu0 %v682
        %779 = vmatprep.subr.mxu0 0.0
        %780 = vmatpush1.msra.mxu0 %v683
        %781 = vmatprep.subr.mxu0 0.0
        %782 = vmatpush1.msra.mxu0 %v684
        %783 = vmatprep.subr.mxu0 0.0
        %784 = vmatpush1.msra.mxu0 %v685
        %785 = vmatprep.mubr.f32.mxu0 %v646
        %786 = vmatmul.mubr.f32.gmra.mrb[0].mxu0 %v622
        %v787 = vpop.f32.mrb[0].mxu0
        %v788 = vadd.f32 %v695, %v787
        %v789 = vpop.f32.mrb[0].mxu0
        %790 = vmatprep.mubr.f32.mxu0 %v647
        %791 = vmatmul.mubr.f32.gmra.mrb[0].mxu0 %v623
        %v792 = vpop.f32.mrb[0].mxu0
        %v793 = vadd.f32 %v695, %v792
        %v794 = vpop.f32.mrb[0].mxu0
        %795 = vmatprep.mubr.f32.mxu0 %v648
        %796 = vmatmul.mubr.f32.gmra.mrb[0].mxu0 %v624
        %v797 = vpop.f32.mrb[0].mxu0
        %v798 = vadd.f32 %v695, %v797
        %v799 = vpop.f32.mrb[0].mxu0
        %800 = vmatprep.mubr.f32.mxu0 %v649
        %801 = vmatmul.mubr.f32.gmra.mrb[0].mxu0 %v625
        %v802 = vpop.f32.mrb[0].mxu0
        %v803 = vadd.f32 %v695, %v802
        %v804 = vpop.f32.mrb[0].mxu0
        %805 = vmatprep.mubr.f32.mxu0 %v650
        %806 = vmatmul.mubr.f32.gmra.mrb[0].mxu0 %v626
        %v807 = vpop.f32.mrb[0].mxu0
        %v808 = vadd.f32 %v695, %v807
        %v809 = vpop.f32.mrb[0].mxu0
        %810 = vmatprep.mubr.f32.mxu0 %v651
        %811 = vmatmul.mubr.f32.gmra.mrb[0].mxu0 %v627
        %v812 = vpop.f32.mrb[0].mxu0
        %v813 = vadd.f32 %v695, %v812
        %v814 = vpop.f32.mrb[0].mxu0
        %815 = vmatprep.mubr.f32.mxu0 %v652
        %816 = vmatmul.mubr.f32.gmra.mrb[0].mxu0 %v628
        %v817 = vpop.f32.mrb[0].mxu0
        %v818 = vadd.f32 %v695, %v817
        %v819 = vpop.f32.mrb[0].mxu0
        %820 = vmatprep.mubr.f32.mxu0 %v653
        %821 = vmatmul.mubr.f32.gmra.mrb[0].mxu0 %v629
        %v822 = vpop.f32.mrb[0].mxu0
        %v823 = vadd.f32 %v695, %v822
        %v824 = vpop.f32.mrb[0].mxu0
        %825 = vdwg.mxu0
        %826 = vmatprep.subr.mxu0 0.0
        %827 = vmatpush1.msra.mxu0 %v686
        %828 = vmatprep.subr.mxu0 0.0
        %829 = vmatpush1.msra.mxu0 %v687
        %830 = vmatprep.subr.mxu0 0.0
        %831 = vmatpush1.msra.mxu0 %v688
        %832 = vmatprep.subr.mxu0 0.0
        %833 = vmatpush1.msra.mxu0 %v689
        %834 = vmatprep.subr.mxu0 0.0
        %835 = vmatpush1.msra.mxu0 0.0
        %836 = vmatprep.subr.mxu0 0.0
        %837 = vmatpush1.msra.mxu0 0.0
        %838 = vmatprep.subr.mxu0 0.0
        %839 = vmatpush1.msra.mxu0 0.0
        %840 = vmatprep.subr.mxu0 0.0
        %841 = vmatpush1.msra.mxu0 0.0
        %842 = vmatprep.subr.mxu0 0.0
        %843 = vmatpush1.msra.mxu0 0.0
        %844 = vmatprep.subr.mxu0 0.0
        %845 = vmatpush1.msra.mxu0 0.0
        %846 = vmatprep.subr.mxu0 0.0
        %847 = vmatpush1.msra.mxu0 0.0
        %848 = vmatprep.subr.mxu0 0.0
        %849 = vmatpush1.msra.mxu0 0.0
        %850 = vmatprep.subr.mxu0 0.0
        %851 = vmatpush1.msra.mxu0 0.0
        %852 = vmatprep.subr.mxu0 0.0
        %853 = vmatpush1.msra.mxu0 0.0
        %854 = vmatprep.subr.mxu0 0.0
        %855 = vmatpush1.msra.mxu0 0.0
        %856 = vmatprep.subr.mxu0 0.0
        %857 = vmatpush1.msra.mxu0 0.0
        %858 = vmatprep.subr.mxu0 0.0
        %859 = vmatpush1.msra.mxu0 0.0
        %860 = vmatprep.subr.mxu0 0.0
        %861 = vmatpush1.msra.mxu0 0.0
        %862 = vmatprep.subr.mxu0 0.0
        %863 = vmatpush1.msra.mxu0 0.0
        %864 = vmatprep.subr.mxu0 0.0
        %865 = vmatpush1.msra.mxu0 0.0
        %866 = vmatprep.subr.mxu0 0.0
        %867 = vmatpush1.msra.mxu0 0.0
        %868 = vmatprep.subr.mxu0 0.0
        %869 = vmatpush1.msra.mxu0 0.0
        %870 = vmatprep.subr.mxu0 0.0
        %871 = vmatpush1.msra.mxu0 0.0
        %872 = vmatprep.subr.mxu0 0.0
        %873 = vmatpush1.msra.mxu0 0.0
        %874 = vmatprep.subr.mxu0 0.0
        %875 = vmatpush1.msra.mxu0 0.0
        %876 = vmatprep.subr.mxu0 0.0
        %877 = vmatpush1.msra.mxu0 0.0
        %878 = vmatprep.subr.mxu0 0.0
        %879 = vmatpush1.msra.mxu0 0.0
        %880 = vmatprep.subr.mxu0 0.0
        %881 = vmatpush1.msra.mxu0 0.0
        %882 = vmatprep.subr.mxu0 0.0
        %883 = vmatpush1.msra.mxu0 0.0
        %884 = vmatprep.subr.mxu0 0.0
        %885 = vmatpush1.msra.mxu0 0.0
        %886 = vmatprep.subr.mxu0 0.0
        %887 = vmatpush1.msra.mxu0 0.0
        %888 = vmatprep.subr.mxu0 0.0
        %889 = vmatpush1.msra.mxu0 0.0
        %890 = vmatprep.mubr.f32.mxu0 0.0
        %891 = vmatmul.mubr.f32.gmra.mrb[0].mxu0 %v698
        %v892 = vpop.f32.mrb[0].mxu0
        %v893 = vadd.f32 %v788, %v892
        %v894 = vpop.f32.mrb[0].mxu0
        %895 = vmatprep.mubr.f32.mxu0 0.0
        %896 = vmatmul.mubr.f32.gmra.mrb[0].mxu0 %v701
        %v897 = vpop.f32.mrb[0].mxu0
        %v898 = vadd.f32 %v793, %v897
        %v899 = vpop.f32.mrb[0].mxu0
        %900 = vmatprep.mubr.f32.mxu0 0.0
        %901 = vmatmul.mubr.f32.gmra.mrb[0].mxu0 %v704
        %v902 = vpop.f32.mrb[0].mxu0
        %v903 = vadd.f32 %v798, %v902
        %v904 = vpop.f32.mrb[0].mxu0
        %905 = vmatprep.mubr.f32.mxu0 0.0
        %906 = vmatmul.mubr.f32.gmra.mrb[0].mxu0 %v707
        %v907 = vpop.f32.mrb[0].mxu0
        %v908 = vadd.f32 %v803, %v907
        %v909 = vpop.f32.mrb[0].mxu0
        %910 = vmatprep.mubr.f32.mxu0 0.0
        %911 = vmatmul.mubr.f32.gmra.mrb[0].mxu0 %v710
        %v912 = vpop.f32.mrb[0].mxu0
        %v913 = vadd.f32 %v808, %v912
        %v914 = vpop.f32.mrb[0].mxu0
        %915 = vmatprep.mubr.f32.mxu0 0.0
        %916 = vmatmul.mubr.f32.gmra.mrb[0].mxu0 %v713
        %v917 = vpop.f32.mrb[0].mxu0
        %v918 = vadd.f32 %v813, %v917
        %v919 = vpop.f32.mrb[0].mxu0
        %920 = vmatprep.mubr.f32.mxu0 0.0
        %921 = vmatmul.mubr.f32.gmra.mrb[0].mxu0 %v716
        %v922 = vpop.f32.mrb[0].mxu0
        %v923 = vadd.f32 %v818, %v922
        %v924 = vpop.f32.mrb[0].mxu0
        %925 = vmatprep.mubr.f32.mxu0 0.0
        %926 = vmatmul.mubr.f32.gmra.mrb[0].mxu0 %v719
        %v927 = vpop.f32.mrb[0].mxu0
        %v928 = vadd.f32 %v823, %v927
        %v929 = vpop.f32.mrb[0].mxu0
        %930 = vdwg.mxu0
        %v931 = vmul.f32 %v893, %v893
        %v932 = vmul.f32 %v898, %v898
        %v933 = vmul.f32 %v903, %v903
        %v934 = vmul.f32 %v908, %v908
        %v935 = vmul.f32 %v913, %v913
        %v936 = vmul.f32 %v918, %v918
        %v937 = vmul.f32 %v923, %v923
        %v938 = vmul.f32 %v928, %v928
        %v939 = vld [vmem:[#allocation7] sm:$0xff]
        %v940 = vld [vmem:[#allocation7 + $0x8] sm:$0xff]
        %v941 = vld [vmem:[#allocation7 + $0x10] sm:$0xff]
        %v942 = vld [vmem:[#allocation7 + $0x18] sm:$0xff]
        %v943 = vld [vmem:[#allocation7 + $0x20] sm:$0xff]
        %v944 = vld [vmem:[#allocation7 + $0x28] sm:$0xff]
        %v945 = vld [vmem:[#allocation7 + $0x30] sm:$0xff]
        %v946 = vld [vmem:[#allocation7 + $0x38] sm:$0xff]
        %v947 = vld [vmem:[#allocation7 + $0x40] sm:$0xff]
        %v948 = vld [vmem:[#allocation7 + $0x48] sm:$0xff]
        %v949 = vld [vmem:[#allocation7 + $0x50] sm:$0xff]
        %v950 = vld [vmem:[#allocation7 + $0x58] sm:$0xff]
        %v951 = vld [vmem:[#allocation7 + $0x60] sm:$0xff]
        %v952 = vld [vmem:[#allocation7 + $0x68] sm:$0xff]
        %v953 = vld [vmem:[#allocation7 + $0x70] sm:$0xff]
        %v954 = vld [vmem:[#allocation7 + $0x78] sm:$0xff]
        %v955 = vld [vmem:[#allocation8] sm:$0x1]
        %v957 = vlaneseq
        %v958 = vshrl.u32 %v957, 7
        %v959 = vsub.s32 0, %v958
        %v960 = vrot.slane %v955, %v959
        %962 = vmatprep.subr.mxu0 0.0
        %963 = vmatpush1.msra.mxu0 %v939
        %964 = vmatprep.subr.mxu0 0.0
        %965 = vmatpush1.msra.mxu0 %v940
        %966 = vmatprep.subr.mxu0 0.0
        %967 = vmatpush1.msra.mxu0 %v941
        %968 = vmatprep.subr.mxu0 0.0
        %969 = vmatpush1.msra.mxu0 %v942
        %970 = vmatprep.subr.mxu0 0.0
        %971 = vmatpush1.msra.mxu0 %v943
        %972 = vmatprep.subr.mxu0 0.0
        %973 = vmatpush1.msra.mxu0 %v944
        %974 = vmatprep.subr.mxu0 0.0
        %975 = vmatpush1.msra.mxu0 %v945
        %976 = vmatprep.subr.mxu0 0.0
        %977 = vmatpush1.msra.mxu0 %v946
        %978 = vmatprep.subr.mxu0 0.0
        %979 = vmatpush1.msra.mxu0 %v947
        %980 = vmatprep.subr.mxu0 0.0
        %981 = vmatpush1.msra.mxu0 %v948
        %982 = vmatprep.subr.mxu0 0.0
        %983 = vmatpush1.msra.mxu0 %v949
        %984 = vmatprep.subr.mxu0 0.0
        %985 = vmatpush1.msra.mxu0 %v950
        %986 = vmatprep.subr.mxu0 0.0
        %987 = vmatpush1.msra.mxu0 %v951
        %988 = vmatprep.subr.mxu0 0.0
        %989 = vmatpush1.msra.mxu0 %v952
        %990 = vmatprep.subr.mxu0 0.0
        %991 = vmatpush1.msra.mxu0 %v953
        %992 = vmatprep.subr.mxu0 0.0
        %993 = vmatpush1.msra.mxu0 %v954
        %994 = vmatprep.subr.mxu0 0.0
        %995 = vmatpush1.msra.mxu0 0.0
        %996 = vmatprep.subr.mxu0 0.0
        %997 = vmatpush1.msra.mxu0 0.0
        %998 = vmatprep.subr.mxu0 0.0
        %999 = vmatpush1.msra.mxu0 0.0
        %1000 = vmatprep.subr.mxu0 0.0
        %1001 = vmatpush1.msra.mxu0 0.0
        %1002 = vmatprep.subr.mxu0 0.0
        %1003 = vmatpush1.msra.mxu0 0.0
        %1004 = vmatprep.subr.mxu0 0.0
        %1005 = vmatpush1.msra.mxu0 0.0
        %1006 = vmatprep.subr.mxu0 0.0
        %1007 = vmatpush1.msra.mxu0 0.0
        %1008 = vmatprep.subr.mxu0 0.0
        %1009 = vmatpush1.msra.mxu0 0.0
        %1010 = vmatprep.subr.mxu0 0.0
        %1011 = vmatpush1.msra.mxu0 0.0
        %1012 = vmatprep.subr.mxu0 0.0
        %1013 = vmatpush1.msra.mxu0 0.0
        %1014 = vmatprep.subr.mxu0 0.0
        %1015 = vmatpush1.msra.mxu0 0.0
        %1016 = vmatprep.subr.mxu0 0.0
        %1017 = vmatpush1.msra.mxu0 0.0
        %1018 = vmatprep.subr.mxu0 0.0
        %1019 = vmatpush1.msra.mxu0 0.0
        %1020 = vmatprep.subr.mxu0 0.0
        %1021 = vmatpush1.msra.mxu0 0.0
        %1022 = vmatprep.subr.mxu0 0.0
        %1023 = vmatpush1.msra.mxu0 0.0
        %1024 = vmatprep.subr.mxu0 0.0
        %1025 = vmatpush1.msra.mxu0 0.0
        %1026 = vmatprep.mubr.f32.mxu0 0.0
        %1027 = vmatmul.mubr.f32.gmra.mrb[0].mxu0 %v931
        %v1028 = vpop.f32.mrb[0].mxu0
        %v1029 = vadd.f32 %v960, %v1028
        %v1030 = vpop.f32.mrb[0].mxu0
        %1031 = vmatprep.mubr.f32.mxu0 0.0
        %1032 = vmatmul.mubr.f32.gmra.mrb[0].mxu0 %v932
        %v1033 = vpop.f32.mrb[0].mxu0
        %v1034 = vadd.f32 %v960, %v1033
        %v1035 = vpop.f32.mrb[0].mxu0
        %1036 = vmatprep.mubr.f32.mxu0 0.0
        %1037 = vmatmul.mubr.f32.gmra.mrb[0].mxu0 %v933
        %v1038 = vpop.f32.mrb[0].mxu0
        %v1039 = vadd.f32 %v960, %v1038
        %v1040 = vpop.f32.mrb[0].mxu0
        %1041 = vmatprep.mubr.f32.mxu0 0.0
        %1042 = vmatmul.mubr.f32.gmra.mrb[0].mxu0 %v934
        %v1043 = vpop.f32.mrb[0].mxu0
        %v1044 = vadd.f32 %v960, %v1043
        %v1045 = vpop.f32.mrb[0].mxu0
        %1046 = vmatprep.mubr.f32.mxu0 0.0
        %1047 = vmatmul.mubr.f32.gmra.mrb[0].mxu0 %v935
        %v1048 = vpop.f32.mrb[0].mxu0
        %v1049 = vadd.f32 %v960, %v1048
        %v1050 = vpop.f32.mrb[0].mxu0
        %1051 = vmatprep.mubr.f32.mxu0 0.0
        %1052 = vmatmul.mubr.f32.gmra.mrb[0].mxu0 %v936
        %v1053 = vpop.f32.mrb[0].mxu0
        %v1054 = vadd.f32 %v960, %v1053
        %v1055 = vpop.f32.mrb[0].mxu0
        %1056 = vmatprep.mubr.f32.mxu0 0.0
        %1057 = vmatmul.mubr.f32.gmra.mrb[0].mxu0 %v937
        %v1058 = vpop.f32.mrb[0].mxu0
        %v1059 = vadd.f32 %v960, %v1058
        %v1060 = vpop.f32.mrb[0].mxu0
        %1061 = vmatprep.mubr.f32.mxu0 0.0
        %1062 = vmatmul.mubr.f32.gmra.mrb[0].mxu0 %v938
        %v1063 = vpop.f32.mrb[0].mxu0
        %v1064 = vadd.f32 %v960, %v1063
        %v1065 = vpop.f32.mrb[0].mxu0
        %1066 = vdwg.mxu0
        %v1067 = vrsqrt.pop %v1029
        %v1068 = vmul.f32 %v1029, %v1067
        %vm1069 = vcmp.eq.f32.partialorder %v1029, inf
        %v1070 = vsel %vm1069, %v1029, %v1068
        %vm1071 = vcmp.eq.f32.partialorder %v1029, 0.0
        %v1072 = vand.u32 %v1029, 2147483648
        %v1073 = vsel %vm1071, %v1072, %v1070
        %v1074 = vrsqrt.pop %v1034
        %v1075 = vmul.f32 %v1034, %v1074
        %vm1076 = vcmp.eq.f32.partialorder %v1034, inf
        %v1077 = vsel %vm1076, %v1034, %v1075
        %vm1078 = vcmp.eq.f32.partialorder %v1034, 0.0
        %v1079 = vand.u32 %v1034, 2147483648
        %v1080 = vsel %vm1078, %v1079, %v1077
        %v1081 = vrsqrt.pop %v1039
        %v1082 = vmul.f32 %v1039, %v1081
        %vm1083 = vcmp.eq.f32.partialorder %v1039, inf
        %v1084 = vsel %vm1083, %v1039, %v1082
        %vm1085 = vcmp.eq.f32.partialorder %v1039, 0.0
        %v1086 = vand.u32 %v1039, 2147483648
        %v1087 = vsel %vm1085, %v1086, %v1084
        %v1088 = vrsqrt.pop %v1044
        %v1089 = vmul.f32 %v1044, %v1088
        %vm1090 = vcmp.eq.f32.partialorder %v1044, inf
        %v1091 = vsel %vm1090, %v1044, %v1089
        %vm1092 = vcmp.eq.f32.partialorder %v1044, 0.0
        %v1093 = vand.u32 %v1044, 2147483648
        %v1094 = vsel %vm1092, %v1093, %v1091
        %v1095 = vrsqrt.pop %v1049
        %v1096 = vmul.f32 %v1049, %v1095
        %vm1097 = vcmp.eq.f32.partialorder %v1049, inf
        %v1098 = vsel %vm1097, %v1049, %v1096
        %vm1099 = vcmp.eq.f32.partialorder %v1049, 0.0
        %v1100 = vand.u32 %v1049, 2147483648
        %v1101 = vsel %vm1099, %v1100, %v1098
        %v1102 = vrsqrt.pop %v1054
        %v1103 = vmul.f32 %v1054, %v1102
        %vm1104 = vcmp.eq.f32.partialorder %v1054, inf
        %v1105 = vsel %vm1104, %v1054, %v1103
        %vm1106 = vcmp.eq.f32.partialorder %v1054, 0.0
        %v1107 = vand.u32 %v1054, 2147483648
        %v1108 = vsel %vm1106, %v1107, %v1105
        %v1109 = vrsqrt.pop %v1059
        %v1110 = vmul.f32 %v1059, %v1109
        %vm1111 = vcmp.eq.f32.partialorder %v1059, inf
        %v1112 = vsel %vm1111, %v1059, %v1110
        %vm1113 = vcmp.eq.f32.partialorder %v1059, 0.0
        %v1114 = vand.u32 %v1059, 2147483648
        %v1115 = vsel %vm1113, %v1114, %v1112
        %v1116 = vrsqrt.pop %v1064
        %v1117 = vmul.f32 %v1064, %v1116
        %vm1118 = vcmp.eq.f32.partialorder %v1064, inf
        %v1119 = vsel %vm1118, %v1064, %v1117
        %vm1120 = vcmp.eq.f32.partialorder %v1064, 0.0
        %v1121 = vand.u32 %v1064, 2147483648
        %v1122 = vsel %vm1120, %v1121, %v1119
        %v1123 = vmul.f32 %v893, %v1073
        %v1124 = vmul.f32 %v898, %v1080
        %v1125 = vmul.f32 %v903, %v1087
        %v1126 = vmul.f32 %v908, %v1094
        %v1127 = vmul.f32 %v913, %v1101
        %v1128 = vmul.f32 %v918, %v1108
        %v1129 = vmul.f32 %v923, %v1115
        %v1130 = vmul.f32 %v928, %v1122
        %1131 = vst.msk [vmem:[%s297] sm:$0xff] %vm612, %v1123
        %1132 = vst.msk [vmem:[%s297 + $0x10] sm:$0xff] %vm612, %v1124
        %1133 = vst.msk [vmem:[%s297 + $0x20] sm:$0xff] %vm612, %v1125
        %1134 = vst.msk [vmem:[%s297 + $0x30] sm:$0xff] %vm612, %v1126
        %1135 = vst.msk [vmem:[%s297 + $0x40] sm:$0xff] %vm612, %v1127
        %1136 = vst.msk [vmem:[%s297 + $0x50] sm:$0xff] %vm612, %v1128
        %1137 = vst.msk [vmem:[%s297 + $0x60] sm:$0xff] %vm612, %v1129
        %1138 = vst.msk [vmem:[%s297 + $0x70] sm:$0xff] %vm612, %v1130
        %1147 = vrot.lane.b32.xlu0 %v1123, 64
        %v1148 = vpop.permute.xlu0 %1147
        %1149 = vrot.lane.b32.xlu0 %v1124, 64
        %v1150 = vpop.permute.xlu0 %1149
        %1151 = vrot.lane.b32.xlu0 %v1125, 64
        %v1152 = vpop.permute.xlu0 %1151
        %1153 = vrot.lane.b32.xlu0 %v1126, 64
        %v1154 = vpop.permute.xlu0 %1153
        %1155 = vrot.lane.b32.xlu0 %v1127, 64
        %v1156 = vpop.permute.xlu0 %1155
        %1157 = vrot.lane.b32.xlu0 %v1128, 64
        %v1158 = vpop.permute.xlu0 %1157
        %1159 = vrot.lane.b32.xlu0 %v1129, 64
        %v1160 = vpop.permute.xlu0 %1159
        %1161 = vrot.lane.b32.xlu0 %v1130, 64
        %v1162 = vpop.permute.xlu0 %1161
        %s1171 = scalar_lea.vmem %s297, 8
        %1172 = vst.msk [vmem:[%s1171] sm:$0xff] %vm612, %v1148
        %1173 = vst.msk [vmem:[%s1171 + $0x10] sm:$0xff] %vm612, %v1150
        %1174 = vst.msk [vmem:[%s1171 + $0x20] sm:$0xff] %vm612, %v1152
        %1175 = vst.msk [vmem:[%s1171 + $0x30] sm:$0xff] %vm612, %v1154
        %1176 = vst.msk [vmem:[%s1171 + $0x40] sm:$0xff] %vm612, %v1156
        %1177 = vst.msk [vmem:[%s1171 + $0x50] sm:$0xff] %vm612, %v1158
        %1178 = vst.msk [vmem:[%s1171 + $0x60] sm:$0xff] %vm612, %v1160
        %1179 = vst.msk [vmem:[%s1171 + $0x70] sm:$0xff] %vm612, %v1162
        %s1180 = sadd.s32 %s23, %s24
        %s1181 = smul.u32 8, %s1180
        %p1182 = scmp.lt.s32.totalorder %s1181, 15
        %s1183 = scalar_select %p1182, %s1181, 15
        %s1184 = smul.addr %s1183, 2
        %s1185 = smul.addr %s1184, 8
        %s1186 = scalar_lea.vmem %s5, %s1185
        // Predicated region
        $region57: #{decoder_pallas.5} parent=39 // pred_check
          %p1187 = pneg %p161
        $region58: #{decoder_pallas.5} parent=39 // pred_check_branch
          %1189 = sbr.rel (%p1187) target = $region60
        $region59: #{decoder_pallas.5} parent=39 // pred_region
          %s1190 = sadd.s32 %s23, %s24
          %s1191 = smul.u32 8, %s1190
        $region60: #{decoder_pallas.5} parent=39 // pred_fallthru
          _
      $region40: #{decoder_pallas.5} parent=5 // pred_fallthru
        _
      %p1192 = scmp.le.s32.totalorder 2, %s14
      // Predicated region
      $region61: #{decoder_pallas.5} parent=5 // pred_check
        %p1193 = pneg %p1192
      $region62: #{decoder_pallas.5} parent=5 // pred_check_branch
        %1195 = sbr.rel (%p1193) target = $region64
      $region63: #{decoder_pallas.5} parent=5 // pred_region
        %s1196 = ssub.s32 %s14, 2
        // Predicated region
        $region65: #{decoder_pallas.5} parent=63 // pred_check
          %p1197 = pneg %p167
        $region66: #{decoder_pallas.5} parent=63 // pred_check_branch
          %1199 = sbr.rel (%p1197) target = $region68
        $region67: #{decoder_pallas.5} parent=63 // pred_region
          %s1200 = sadd.s32 %s25, %s26
          %s1201 = smul.u32 8, %s1200
          %p1202 = scmp.lt.s32.totalorder %s1201, 15
          %s1203 = scalar_select %p1202, %s1201, 15
          %s1204 = smul.addr %s1203, 2
          %s1205 = smul.addr %s1204, 8
          %s1206 = scalar_lea.vmem %s5, %s1205
        $region68: #{decoder_pallas.5} parent=63 // pred_fallthru
          _
      $region64: #{decoder_pallas.5} parent=5 // pred_fallthru
        _
    $region6: #{decoder_pallas.5} parent=1 // loop_footer
      %s18 = sadd.s32 1, %s14
    $region7: #{decoder_pallas.5} parent=1 // loop_footer_branch
      %13 = sbr.rel target = $region3
    $region8: #{decoder_pallas.5} parent=1 // loop_exit
      _
    %1207 = vsyncpa [#allocation4], 1
    %s1208 = scalar_lea.sflag [#allocation4], 1
    %1209 = vsyncpa %s1208, 1
    %1210 = vsyncpa [#allocation6], 1
    %1211 = vsyncpa [#allocation9], 1

// kernel: decoder_pallas.6
$region0: #{decoder_pallas.6}
  #allocation0 [shape = 'u32[]', space=smem, size = 0x4, offset = 0x4, fixed_abs, tag = 'smem constant byte address 0x4 - core index']
  #allocation1 [shape = 'u32[144,128]{1,0:T(1,128)}', space=vmem, size = 0x12000, scoped, tag = 'internal scratch']
  #allocation2 [shape = 'f32[18,18,32]{2,1,0:T(8,128)}', space=vmem, size = 0x36000, scoped, tag = 'scratch operand']
  %s0 = inlined_call_operand.vmem [shape: f32[2,16,16,32], index: 0, kind: input, shape index: {}]
  %s1 = inlined_call_operand.hbm [shape: f32[288,128], index: 1, kind: input, shape index: {}]
  %s2 = inlined_call_operand.hbm [shape: f32[1,128], index: 2, kind: input, shape index: {}]
  %s3 = inlined_call_operand.hbm [shape: f32[128,128], index: 3, kind: input, shape index: {}]
  %s4 = inlined_call_operand.hbm [shape: f32[1,128], index: 4, kind: input, shape index: {}]
  %s5 = inlined_call_operand.vmem [shape: f32[32,2,16,64], index: 5, kind: output, shape index: {}]
  %s6 = sld [smem:[#allocation0]]
  $region69: #{decoder_pallas.6} parent=0
    _
  %s8 = ssub.s32 1, %s6
  %s9 = scalar_select 0, %s8, %s6
  $region1: #{decoder_pallas.6} parent=0
    #allocation3 [shape = 'u8[147456]{0}', space=vmem, size = 0x24000, scoped, tag = 'input window, operand 1, single buffered']
    #allocation4 [shape = 's32[2]{0}', space=sflag, size = 0x8, scoped, tag = 'scoped memory for decoder_pallas.6']
    #allocation5 [shape = 'u8[512]{0}', space=vmem, size = 0x400, scoped, tag = 'input window, operand 2, single buffered']
    #allocation6 [shape = 's32[1]{0}', space=sflag, size = 0x4, scoped, tag = 'scoped memory for decoder_pallas.6']
    #allocation7 [shape = 'u8[65536]{0}', space=vmem, size = 0x10000, scoped, tag = 'input window, operand 3, single buffered']
    #allocation8 [shape = 'u8[512]{0}', space=vmem, size = 0x400, scoped, tag = 'input window, operand 4, single buffered']
    #allocation9 [shape = 's32[1]{0}', space=sflag, size = 0x4, scoped, tag = 'scoped memory for decoder_pallas.6']
    %10 = vsyncpa [#allocation4], 0
    %11 = vsyncpa [#allocation6], 0
    %12 = vsyncpa [#allocation9], 0
    loop: start=0, step=1, limit=6
    $region2: #{decoder_pallas.6} parent=1 // loop_pre_header
      _
    $region3: #{decoder_pallas.6} parent=1 // loop_header
      %s14 = sphi 0, %s18
      %p15 = scmp.ge.s32.totalorder %s14, 6
      %s21 = sphi 0, %s33
      %s22 = sphi 0, %s29
      %s23 = sphi 0, %s21
      %s24 = sphi 0, %s22
      %s25 = sphi 0, %s23
      %s26 = sphi 0, %s24
      %s36 = sphi 0, %s38
      %s39 = sphi 0, %s36
      %s40 = sphi 0, %s39
      %s56 = sphi 0, %s40
      %s60 = sphi 0, %s60
      %s62 = sphi 0, %s60
      %s63 = sphi 0, %s62
      %s77 = sphi 0, %s63
      %s81 = sphi 0, %s81
      %s83 = sphi 0, %s81
      %s84 = sphi 0, %s83
      %s98 = sphi 0, %s84
      %s102 = sphi 0, %s102
      %s104 = sphi 0, %s102
      %s105 = sphi 0, %s104
      %s119 = sphi 0, %s105
      %s123 = sphi 0, %s123
      %s125 = sphi 0, %s123
      %s126 = sphi 0, %s125
      %s140 = sphi 0, %s126
      %s150 = sphi 0, %s152
      %s153 = sphi 0, %s150
      %s154 = sphi 0, %s153
      %s170 = sphi 0, %s154
    $region4: #{decoder_pallas.6} parent=1 // loop_header_branch
      %17 = sbr.rel (%p15) target = $region8
    $region5: #{decoder_pallas.6} parent=1 // loop_body
      %s19 = ssub.s32 %s14, 1
      %s20 = ssub.s32 %s14, 2
      %s27 = sadd.s32 1, %s22
      %p28 = scmp.ge.s32.totalorder %s27, 2
      %s29 = scalar_select %p28, 0, %s27
      %s30 = sadd.s32 1, %s21
      %s31 = scalar_select %p28, %s30, %s21
      %p32 = scmp.ge.s32.totalorder %s31, 2
      %s33 = scalar_select %p32, 0, %s31
      %s34 = ssub.s32 %s21, %s33
      %p35 = scmp.eq.s32.totalorder %s34, 0
      %s37 = sadd.s32 %s36, 1
      %s38 = scalar_select %p35, %s36, %s37
      %p41 = pneg %p35
      %p42 = scmp.eq.s32.totalorder %s14, 3
      %p43 = por %p41, %p42
      %p44 = scmp.ne.s32.totalorder %s36, %s39
      %p45 = scmp.eq.s32.totalorder %s14, 0
      %p46 = por %p44, %p45
      %p47 = scmp.ne.s32.totalorder %s36, %s39
      %p48 = scmp.eq.s32.totalorder %s19, 3
      %p49 = por %p47, %p48
      %p50 = scmp.ne.s32.totalorder %s39, %s40
      %p51 = scmp.eq.s32.totalorder %s19, 0
      %p52 = por %p50, %p51
      %p53 = scmp.ne.s32.totalorder %s39, %s40
      %p54 = scmp.eq.s32.totalorder %s20, 3
      %p55 = por %p53, %p54
      %p57 = scmp.ne.s32.totalorder %s40, %s56
      %p58 = scmp.eq.s32.totalorder %s20, 0
      %p59 = por %p57, %p58
      %s61 = sadd.s32 %s60, 1
      %p64 = scmp.eq.s32.totalorder %s14, 3
      %p65 = scmp.ne.s32.totalorder %s60, %s62
      %p66 = scmp.eq.s32.totalorder %s14, 0
      %p67 = por %p65, %p66
      %p68 = scmp.ne.s32.totalorder %s60, %s62
      %p69 = scmp.eq.s32.totalorder %s19, 3
      %p70 = por %p68, %p69
      %p71 = scmp.ne.s32.totalorder %s62, %s63
      %p72 = scmp.eq.s32.totalorder %s19, 0
      %p73 = por %p71, %p72
      %p74 = scmp.ne.s32.totalorder %s62, %s63
      %p75 = scmp.eq.s32.totalorder %s20, 3
      %p76 = por %p74, %p75
      %p78 = scmp.ne.s32.totalorder %s63, %s77
      %p79 = scmp.eq.s32.totalorder %s20, 0
      %p80 = por %p78, %p79
      %s82 = sadd.s32 %s81, 1
      %p85 = scmp.eq.s32.totalorder %s14, 3
      %p86 = scmp.ne.s32.totalorder %s81, %s83
      %p87 = scmp.eq.s32.totalorder %s14, 0
      %p88 = por %p86, %p87
      %p89 = scmp.ne.s32.totalorder %s81, %s83
      %p90 = scmp.eq.s32.totalorder %s19, 3
      %p91 = por %p89, %p90
      %p92 = scmp.ne.s32.totalorder %s83, %s84
      %p93 = scmp.eq.s32.totalorder %s19, 0
      %p94 = por %p92, %p93
      %p95 = scmp.ne.s32.totalorder %s83, %s84
      %p96 = scmp.eq.s32.totalorder %s20, 3
      %p97 = por %p95, %p96
      %p99 = scmp.ne.s32.totalorder %s84, %s98
      %p100 = scmp.eq.s32.totalorder %s20, 0
      %p101 = por %p99, %p100
      %s103 = sadd.s32 %s102, 1
      %p106 = scmp.eq.s32.totalorder %s14, 3
      %p107 = scmp.ne.s32.totalorder %s102, %s104
      %p108 = scmp.eq.s32.totalorder %s14, 0
      %p109 = por %p107, %p108
      %p110 = scmp.ne.s32.totalorder %s102, %s104
      %p111 = scmp.eq.s32.totalorder %s19, 3
      %p112 = por %p110, %p111
      %p113 = scmp.ne.s32.totalorder %s104, %s105
      %p114 = scmp.eq.s32.totalorder %s19, 0
      %p115 = por %p113, %p114
      %p116 = scmp.ne.s32.totalorder %s104, %s105
      %p117 = scmp.eq.s32.totalorder %s20, 3
      %p118 = por %p116, %p117
      %p120 = scmp.ne.s32.totalorder %s105, %s119
      %p121 = scmp.eq.s32.totalorder %s20, 0
      %p122 = por %p120, %p121
      %s124 = sadd.s32 %s123, 1
      %p127 = scmp.eq.s32.totalorder %s14, 3
      %p128 = scmp.ne.s32.totalorder %s123, %s125
      %p129 = scmp.eq.s32.totalorder %s14, 0
      %p130 = por %p128, %p129
      %p131 = scmp.ne.s32.totalorder %s123, %s125
      %p132 = scmp.eq.s32.totalorder %s19, 3
      %p133 = por %p131, %p132
      %p134 = scmp.ne.s32.totalorder %s125, %s126
      %p135 = scmp.eq.s32.totalorder %s19, 0
      %p136 = por %p134, %p135
      %p137 = scmp.ne.s32.totalorder %s125, %s126
      %p138 = scmp.eq.s32.totalorder %s20, 3
      %p139 = por %p137, %p138
      %p141 = scmp.ne.s32.totalorder %s126, %s140
      %p142 = scmp.eq.s32.totalorder %s20, 0
      %p143 = por %p141, %p142
      %s144 = smul.u32 %s21, 2
      %s145 = sadd.s32 %s144, %s22
      %s146 = smul.u32 %s33, 2
      %s147 = sadd.s32 %s146, %s29
      %s148 = ssub.s32 %s145, %s147
      %p149 = scmp.eq.s32.totalorder %s148, 0
      %s151 = sadd.s32 %s150, 1
      %s152 = scalar_select %p149, %s150, %s151
      %p155 = pneg %p149
      %p156 = scmp.eq.s32.totalorder %s14, 3
      %p157 = por %p155, %p156
      %p158 = scmp.ne.s32.totalorder %s150, %s153
      %p159 = scmp.eq.s32.totalorder %s14, 0
      %p160 = por %p158, %p159
      %p161 = scmp.ne.s32.totalorder %s150, %s153
      %p162 = scmp.eq.s32.totalorder %s19, 3
      %p163 = por %p161, %p162
      %p164 = scmp.ne.s32.totalorder %s153, %s154
      %p165 = scmp.eq.s32.totalorder %s19, 0
      %p166 = por %p164, %p165
      %p167 = scmp.ne.s32.totalorder %s153, %s154
      %p168 = scmp.eq.s32.totalorder %s20, 3
      %p169 = por %p167, %p168
      %p171 = scmp.ne.s32.totalorder %s154, %s170
      %p172 = scmp.eq.s32.totalorder %s20, 0
      %p173 = por %p171, %p172
      %p174 = scmp.le.s32.totalorder 1, %s14
      %p175 = scmp.lt.s32.totalorder %s14, 5
      %p176 = pnand %p174, %p175
      %p177 = pneg %p176
      // Predicated region
      $region9: #{decoder_pallas.6} parent=5 // pred_check
        _
      $region10: #{decoder_pallas.6} parent=5 // pred_check_branch
        %179 = sbr.rel (%p176) target = $region12
      $region11: #{decoder_pallas.6} parent=5 // pred_region
        %s180 = ssub.s32 %s14, 1
        // Predicated region
        $region13: #{decoder_pallas.6} parent=11 // pred_check
          %p181 = pneg %p73
        $region14: #{decoder_pallas.6} parent=11 // pred_check_branch
          %183 = sbr.rel (%p181) target = $region16
        $region15: #{decoder_pallas.6} parent=11 // pred_region
          %s185 = ssub.s32 4608, 4608
          %186 = vsyncadd [#allocation4], %s185
          %s187 = sshll.u32 [#allocation3], 4
          %s188 = int_to_ptr.vmem [resolvable:$true] %s187
          %193 = dma.hbm_to_vmem [thread:$0]  %s1, 4608, %s188, [#allocation4], 128, 128, 8
        $region16: #{decoder_pallas.6} parent=11 // pred_fallthru
          _
        // Predicated region
        $region17: #{decoder_pallas.6} parent=11 // pred_check
          %p194 = pneg %p94
        $region18: #{decoder_pallas.6} parent=11 // pred_check_branch
          %196 = sbr.rel (%p194) target = $region20
        $region19: #{decoder_pallas.6} parent=11 // pred_region
          %s198 = ssub.s32 16, 16
          %199 = vsyncadd [#allocation6], %s198
          %s201 = sshll.u32 [#allocation5], 4
          %s202 = int_to_ptr.vmem [resolvable:$true] %s201
          %204 = dma.hbm_to_vmem [thread:$0]  %s2, 16, %s202, [#allocation6]
        $region20: #{decoder_pallas.6} parent=11 // pred_fallthru
          _
        // Predicated region
        $region21: #{decoder_pallas.6} parent=11 // pred_check
          %p205 = pneg %p115
        $region22: #{decoder_pallas.6} parent=11 // pred_check_branch
          %207 = sbr.rel (%p205) target = $region24
        $region23: #{decoder_pallas.6} parent=11 // pred_region
          %s209 = ssub.s32 2048, 2048
          %210 = vsyncadd [#allocation6], %s209
          %s211 = sshll.u32 [#allocation7], 4
          %s212 = int_to_ptr.vmem [resolvable:$true] %s211
          %217 = dma.hbm_to_vmem [thread:$0]  %s3, 2048, %s212, [#allocation6], 128, 128, 8
        $region24: #{decoder_pallas.6} parent=11 // pred_fallthru
          _
        // Predicated region
        $region25: #{decoder_pallas.6} parent=11 // pred_check
          %p218 = pneg %p136
        $region26: #{decoder_pallas.6} parent=11 // pred_check_branch
          %220 = sbr.rel (%p218) target = $region28
        $region27: #{decoder_pallas.6} parent=11 // pred_region
          %s222 = ssub.s32 16, 16
          %223 = vsyncadd [#allocation9], %s222
          %s225 = sshll.u32 [#allocation8], 4
          %s226 = int_to_ptr.vmem [resolvable:$true] %s225
          %228 = dma.hbm_to_vmem [thread:$0]  %s4, 16, %s226, [#allocation9]
        $region28: #{decoder_pallas.6} parent=11 // pred_fallthru
          _
      $region12: #{decoder_pallas.6} parent=5 // pred_fallthru
        _
      %p229 = scmp.lt.s32.totalorder %s14, 4
      // Predicated region
      $region29: #{decoder_pallas.6} parent=5 // pred_check
        %p230 = pneg %p229
      $region30: #{decoder_pallas.6} parent=5 // pred_check_branch
        %232 = sbr.rel (%p230) target = $region32
      $region31: #{decoder_pallas.6} parent=5 // pred_region
        // Predicated region
        $region33: #{decoder_pallas.6} parent=31 // pred_check
          %p233 = pneg %p46
        $region34: #{decoder_pallas.6} parent=31 // pred_check_branch
          %235 = sbr.rel (%p233) target = $region36
        $region35: #{decoder_pallas.6} parent=31 // pred_region
          %p236 = scmp.lt.s32.totalorder %s21, 1
          %s237 = scalar_select %p236, %s21, 1
          %s238 = smul.addr %s237, 32
          %s239 = smul.addr %s238, 8
          %s240 = scalar_lea.vmem %s0, %s239
        $region36: #{decoder_pallas.6} parent=31 // pred_fallthru
          _
      $region32: #{decoder_pallas.6} parent=5 // pred_fallthru
        _
      %p241 = scmp.le.s32.totalorder 1, %s14
      %p242 = scmp.lt.s32.totalorder %s14, 5
      %p243 = pnand %p241, %p242
      %p244 = pneg %p243
      // Predicated region
      $region37: #{decoder_pallas.6} parent=5 // pred_check
        _
      $region38: #{decoder_pallas.6} parent=5 // pred_check_branch
        %246 = sbr.rel (%p243) target = $region40
      $region39: #{decoder_pallas.6} parent=5 // pred_region
        %s247 = ssub.s32 %s14, 1
        // Predicated region
        $region41: #{decoder_pallas.6} parent=39 // pred_check
          %p248 = pneg %p73
        $region42: #{decoder_pallas.6} parent=39 // pred_check_branch
          %250 = sbr.rel (%p248) target = $region44
        $region43: #{decoder_pallas.6} parent=39 // pred_region
          %251 = dma.done [#allocation4], 4608
        $region44: #{decoder_pallas.6} parent=39 // pred_fallthru
          _
        // Predicated region
        $region45: #{decoder_pallas.6} parent=39 // pred_check
          %p252 = pneg %p94
        $region46: #{decoder_pallas.6} parent=39 // pred_check_branch
          %254 = sbr.rel (%p252) target = $region48
        $region47: #{decoder_pallas.6} parent=39 // pred_region
          %255 = dma.done [#allocation6], 16
        $region48: #{decoder_pallas.6} parent=39 // pred_fallthru
          _
        // Predicated region
        $region49: #{decoder_pallas.6} parent=39 // pred_check
          %p256 = pneg %p115
        $region50: #{decoder_pallas.6} parent=39 // pred_check_branch
          %258 = sbr.rel (%p256) target = $region52
        $region51: #{decoder_pallas.6} parent=39 // pred_region
          %259 = dma.done [#allocation6], 2048
        $region52: #{decoder_pallas.6} parent=39 // pred_fallthru
          _
        // Predicated region
        $region53: #{decoder_pallas.6} parent=39 // pred_check
          %p260 = pneg %p136
        $region54: #{decoder_pallas.6} parent=39 // pred_check_branch
          %262 = sbr.rel (%p260) target = $region56
        $region55: #{decoder_pallas.6} parent=39 // pred_region
          %263 = dma.done [#allocation9], 16
        $region56: #{decoder_pallas.6} parent=39 // pred_fallthru
          _
        %p264 = scmp.lt.s32.totalorder %s23, 1
        %s265 = scalar_select %p264, %s23, 1
        %s266 = smul.addr %s265, 32
        %s267 = smul.addr %s266, 8
        %s268 = scalar_lea.vmem %s0, %s267
        %p269 = pneg %p52
        %p270 = pneg %p49
        %p271 = pneg %p73
        %p272 = pneg %p70
        %p273 = pneg %p94
        %p274 = pneg %p91
        %p275 = pneg %p115
        %p276 = pneg %p112
        %p277 = pneg %p136
        %p278 = pneg %p133
        %p279 = pneg %p166
        %p280 = pneg %p163
        %s281 = smul.u32 %s23, 2
        %s282 = sadd.s32 %s281, %s24
        %s283 = smul.u32 8, %s282
        %p284 = scmp.lt.s32.totalorder %s283, 31
        %s285 = scalar_select %p284, %s283, 31
        %s286 = smul.addr %s285, 4
        %s287 = smul.addr %s286, 8
        %s288 = scalar_lea.vmem %s5, %s287
        %p289 = scmp.lt.s32.totalorder %s23, 1
        %s290 = scalar_select %p289, %s23, 1
        %s291 = smul.addr %s290, 32
        %s292 = smul.addr %s291, 8
        %s293 = scalar_lea.vmem %s0, %s292
        %s294 = smul.u32 %s23, 2
        %s295 = sadd.s32 %s294, %s24
        %s296 = smul.u32 8, %s295
        %p297 = scmp.lt.s32.totalorder %s296, 31
        %s298 = scalar_select %p297, %s296, 31
        %s299 = smul.addr %s298, 4
        %s300 = smul.addr %s299, 8
        %s301 = scalar_lea.vmem %s5, %s300
        %s302 = smul.u32 %s23, 2
        %s303 = sadd.s32 %s302, %s24
        %s304 = smul.u32 8, %s303
        %s305 = smul.u32 %s24, 8
        %vm306 = vcmask 261120
        %307 = vst.msk [vmem:[#allocation2] sm:$0xff] %vm306, 0.0
        %308 = vst.msk [vmem:[#allocation2 + $0x8] sm:$0xff] %vm306, 0.0
        %vm309 = vcmask 254976
        %310 = vst.msk [vmem:[#allocation2 + $0x10] sm:$0x3] %vm309, 0.0
        %311 = vst.msk [vmem:[#allocation2 + $0x18] sm:$0xff] %vm306, 0.0
        %312 = vst.msk [vmem:[#allocation2 + $0x20] sm:$0xff] %vm306, 0.0
        %313 = vst.msk [vmem:[#allocation2 + $0x28] sm:$0x3] %vm309, 0.0
        %314 = vst.msk [vmem:[#allocation2 + $0x30] sm:$0xff] %vm306, 0.0
        %315 = vst.msk [vmem:[#allocation2 + $0x38] sm:$0xff] %vm306, 0.0
        %316 = vst.msk [vmem:[#allocation2 + $0x40] sm:$0x3] %vm309, 0.0
        %317 = vst.msk [vmem:[#allocation2 + $0x48] sm:$0xff] %vm306, 0.0
        %318 = vst.msk [vmem:[#allocation2 + $0x50] sm:$0xff] %vm306, 0.0
        %319 = vst.msk [vmem:[#allocation2 + $0x58] sm:$0x3] %vm309, 0.0
        %320 = vst.msk [vmem:[#allocation2 + $0x60] sm:$0xff] %vm306, 0.0
        %321 = vst.msk [vmem:[#allocation2 + $0x68] sm:$0xff] %vm306, 0.0
        %322 = vst.msk [vmem:[#allocation2 + $0x70] sm:$0x3] %vm309, 0.0
        %323 = vst.msk [vmem:[#allocation2 + $0x78] sm:$0xff] %vm306, 0.0
        %324 = vst.msk [vmem:[#allocation2 + $0x80] sm:$0xff] %vm306, 0.0
        %325 = vst.msk [vmem:[#allocation2 + $0x88] sm:$0x3] %vm309, 0.0
        %326 = vst.msk [vmem:[#allocation2 + $0x90] sm:$0xff] %vm306, 0.0
        %327 = vst.msk [vmem:[#allocation2 + $0x98] sm:$0xff] %vm306, 0.0
        %328 = vst.msk [vmem:[#allocation2 + $0xa0] sm:$0x3] %vm309, 0.0
        %329 = vst.msk [vmem:[#allocation2 + $0xa8] sm:$0xff] %vm306, 0.0
        %330 = vst.msk [vmem:[#allocation2 + $0xb0] sm:$0xff] %vm306, 0.0
        %331 = vst.msk [vmem:[#allocation2 + $0xb8] sm:$0x3] %vm309, 0.0
        %332 = vst.msk [vmem:[#allocation2 + $0xc0] sm:$0xff] %vm306, 0.0
        %333 = vst.msk [vmem:[#allocation2 + $0xc8] sm:$0xff] %vm306, 0.0
        %334 = vst.msk [vmem:[#allocation2 + $0xd0] sm:$0x3] %vm309, 0.0
        %335 = vst.msk [vmem:[#allocation2 + $0xd8] sm:$0xff] %vm306, 0.0
        %336 = vst.msk [vmem:[#allocation2 + $0xe0] sm:$0xff] %vm306, 0.0
        %337 = vst.msk [vmem:[#allocation2 + $0xe8] sm:$0x3] %vm309, 0.0
        %338 = vst.msk [vmem:[#allocation2 + $0xf0] sm:$0xff] %vm306, 0.0
        %339 = vst.msk [vmem:[#allocation2 + $0xf8] sm:$0xff] %vm306, 0.0
        %340 = vst.msk [vmem:[#allocation2 + $0x100] sm:$0x3] %vm309, 0.0
        %341 = vst.msk [vmem:[#allocation2 + $0x108] sm:$0xff] %vm306, 0.0
        %342 = vst.msk [vmem:[#allocation2 + $0x110] sm:$0xff] %vm306, 0.0
        %343 = vst.msk [vmem:[#allocation2 + $0x118] sm:$0x3] %vm309, 0.0
        %344 = vst.msk [vmem:[#allocation2 + $0x120] sm:$0xff] %vm306, 0.0
        %345 = vst.msk [vmem:[#allocation2 + $0x128] sm:$0xff] %vm306, 0.0
        %346 = vst.msk [vmem:[#allocation2 + $0x130] sm:$0x3] %vm309, 0.0
        %347 = vst.msk [vmem:[#allocation2 + $0x138] sm:$0xff] %vm306, 0.0
        %348 = vst.msk [vmem:[#allocation2 + $0x140] sm:$0xff] %vm306, 0.0
        %349 = vst.msk [vmem:[#allocation2 + $0x148] sm:$0x3] %vm309, 0.0
        %350 = vst.msk [vmem:[#allocation2 + $0x150] sm:$0xff] %vm306, 0.0
        %351 = vst.msk [vmem:[#allocation2 + $0x158] sm:$0xff] %vm306, 0.0
        %352 = vst.msk [vmem:[#allocation2 + $0x160] sm:$0x3] %vm309, 0.0
        %353 = vst.msk [vmem:[#allocation2 + $0x168] sm:$0xff] %vm306, 0.0
        %354 = vst.msk [vmem:[#allocation2 + $0x170] sm:$0xff] %vm306, 0.0
        %355 = vst.msk [vmem:[#allocation2 + $0x178] sm:$0x3] %vm309, 0.0
        %356 = vst.msk [vmem:[#allocation2 + $0x180] sm:$0xff] %vm306, 0.0
        %357 = vst.msk [vmem:[#allocation2 + $0x188] sm:$0xff] %vm306, 0.0
        %358 = vst.msk [vmem:[#allocation2 + $0x190] sm:$0x3] %vm309, 0.0
        %359 = vst.msk [vmem:[#allocation2 + $0x198] sm:$0xff] %vm306, 0.0
        %360 = vst.msk [vmem:[#allocation2 + $0x1a0] sm:$0xff] %vm306, 0.0
        %361 = vst.msk [vmem:[#allocation2 + $0x1a8] sm:$0x3] %vm309, 0.0
        %v362 = vld [vmem:[%s293] sm:$0xff]
        %v363 = vld [vmem:[%s293 + $0x8] sm:$0xff]
        %v364 = vld [vmem:[%s293 + $0x10] sm:$0xff]
        %v365 = vld [vmem:[%s293 + $0x18] sm:$0xff]
        %v366 = vld [vmem:[%s293 + $0x20] sm:$0xff]
        %v367 = vld [vmem:[%s293 + $0x28] sm:$0xff]
        %v368 = vld [vmem:[%s293 + $0x30] sm:$0xff]
        %v369 = vld [vmem:[%s293 + $0x38] sm:$0xff]
        %v370 = vld [vmem:[%s293 + $0x40] sm:$0xff]
        %v371 = vld [vmem:[%s293 + $0x48] sm:$0xff]
        %v372 = vld [vmem:[%s293 + $0x50] sm:$0xff]
        %v373 = vld [vmem:[%s293 + $0x58] sm:$0xff]
        %v374 = vld [vmem:[%s293 + $0x60] sm:$0xff]
        %v375 = vld [vmem:[%s293 + $0x68] sm:$0xff]
        %v376 = vld [vmem:[%s293 + $0x70] sm:$0xff]
        %v377 = vld [vmem:[%s293 + $0x78] sm:$0xff]
        %v378 = vld [vmem:[%s293 + $0x80] sm:$0xff]
        %v379 = vld [vmem:[%s293 + $0x88] sm:$0xff]
        %v380 = vld [vmem:[%s293 + $0x90] sm:$0xff]
        %v381 = vld [vmem:[%s293 + $0x98] sm:$0xff]
        %v382 = vld [vmem:[%s293 + $0xa0] sm:$0xff]
        %v383 = vld [vmem:[%s293 + $0xa8] sm:$0xff]
        %v384 = vld [vmem:[%s293 + $0xb0] sm:$0xff]
        %v385 = vld [vmem:[%s293 + $0xb8] sm:$0xff]
        %v386 = vld [vmem:[%s293 + $0xc0] sm:$0xff]
        %v387 = vld [vmem:[%s293 + $0xc8] sm:$0xff]
        %v388 = vld [vmem:[%s293 + $0xd0] sm:$0xff]
        %v389 = vld [vmem:[%s293 + $0xd8] sm:$0xff]
        %v390 = vld [vmem:[%s293 + $0xe0] sm:$0xff]
        %v391 = vld [vmem:[%s293 + $0xe8] sm:$0xff]
        %v392 = vld [vmem:[%s293 + $0xf0] sm:$0xff]
        %v393 = vld [vmem:[%s293 + $0xf8] sm:$0xff]
        %s394 = scalar_lea.vmem [#allocation2], 24
        %395 = vst.msk [vmem:[%s394 + $0x1] sm:$0xff] %vm306, %v362
        %396 = vst.msk [vmem:[%s394 + $0x9] sm:$0xff] %vm306, %v363
        %397 = vst.msk [vmem:[%s394 + $0x19] sm:$0xff] %vm306, %v364
        %398 = vst.msk [vmem:[%s394 + $0x21] sm:$0xff] %vm306, %v365
        %399 = vst.msk [vmem:[%s394 + $0x31] sm:$0xff] %vm306, %v366
        %400 = vst.msk [vmem:[%s394 + $0x39] sm:$0xff] %vm306, %v367
        %401 = vst.msk [vmem:[%s394 + $0x49] sm:$0xff] %vm306, %v368
        %402 = vst.msk [vmem:[%s394 + $0x51] sm:$0xff] %vm306, %v369
        %403 = vst.msk [vmem:[%s394 + $0x61] sm:$0xff] %vm306, %v370
        %404 = vst.msk [vmem:[%s394 + $0x69] sm:$0xff] %vm306, %v371
        %405 = vst.msk [vmem:[%s394 + $0x79] sm:$0xff] %vm306, %v372
        %406 = vst.msk [vmem:[%s394 + $0x81] sm:$0xff] %vm306, %v373
        %407 = vst.msk [vmem:[%s394 + $0x91] sm:$0xff] %vm306, %v374
        %408 = vst.msk [vmem:[%s394 + $0x99] sm:$0xff] %vm306, %v375
        %409 = vst.msk [vmem:[%s394 + $0xa9] sm:$0xff] %vm306, %v376
        %410 = vst.msk [vmem:[%s394 + $0xb1] sm:$0xff] %vm306, %v377
        %411 = vst.msk [vmem:[%s394 + $0xc1] sm:$0xff] %vm306, %v378
        %412 = vst.msk [vmem:[%s394 + $0xc9] sm:$0xff] %vm306, %v379
        %413 = vst.msk [vmem:[%s394 + $0xd9] sm:$0xff] %vm306, %v380
        %414 = vst.msk [vmem:[%s394 + $0xe1] sm:$0xff] %vm306, %v381
        %415 = vst.msk [vmem:[%s394 + $0xf1] sm:$0xff] %vm306, %v382
        %416 = vst.msk [vmem:[%s394 + $0xf9] sm:$0xff] %vm306, %v383
        %417 = vst.msk [vmem:[%s394 + $0x109] sm:$0xff] %vm306, %v384
        %418 = vst.msk [vmem:[%s394 + $0x111] sm:$0xff] %vm306, %v385
        %419 = vst.msk [vmem:[%s394 + $0x121] sm:$0xff] %vm306, %v386
        %420 = vst.msk [vmem:[%s394 + $0x129] sm:$0xff] %vm306, %v387
        %421 = vst.msk [vmem:[%s394 + $0x139] sm:$0xff] %vm306, %v388
        %422 = vst.msk [vmem:[%s394 + $0x141] sm:$0xff] %vm306, %v389
        %423 = vst.msk [vmem:[%s394 + $0x151] sm:$0xff] %vm306, %v390
        %424 = vst.msk [vmem:[%s394 + $0x159] sm:$0xff] %vm306, %v391
        %425 = vst.msk [vmem:[%s394 + $0x169] sm:$0xff] %vm306, %v392
        %426 = vst.msk [vmem:[%s394 + $0x171] sm:$0xff] %vm306, %v393
        %s427 = smul.u32 %s305, 24
        %s428 = scalar_lea.vmem [#allocation2], %s427
        %v429 = vld [vmem:[%s428] sm:$0xff]
        %v430 = vld [vmem:[%s428 + $0x8] sm:$0xff]
        %v431 = vld [vmem:[%s428 + $0x18] sm:$0xff]
        %v432 = vld [vmem:[%s428 + $0x20] sm:$0xff]
        %v433 = vld [vmem:[%s428 + $0x30] sm:$0xff]
        %v434 = vld [vmem:[%s428 + $0x38] sm:$0xff]
        %v435 = vld [vmem:[%s428 + $0x48] sm:$0xff]
        %v436 = vld [vmem:[%s428 + $0x50] sm:$0xff]
        %v437 = vld [vmem:[%s428 + $0x60] sm:$0xff]
        %v438 = vld [vmem:[%s428 + $0x68] sm:$0xff]
        %v439 = vld [vmem:[%s428 + $0x78] sm:$0xff]
        %v440 = vld [vmem:[%s428 + $0x80] sm:$0xff]
        %v441 = vld [vmem:[%s428 + $0x90] sm:$0xff]
        %v442 = vld [vmem:[%s428 + $0x98] sm:$0xff]
        %v443 = vld [vmem:[%s428 + $0xa8] sm:$0xff]
        %v444 = vld [vmem:[%s428 + $0xb0] sm:$0xff]
        %v445 = vld [vmem:[%s428 + $0x1] sm:$0xff]
        %v446 = vld [vmem:[%s428 + $0x9] sm:$0xff]
        %v447 = vld [vmem:[%s428 + $0x19] sm:$0xff]
        %v448 = vld [vmem:[%s428 + $0x21] sm:$0xff]
        %v449 = vld [vmem:[%s428 + $0x31] sm:$0xff]
        %v450 = vld [vmem:[%s428 + $0x39] sm:$0xff]
        %v451 = vld [vmem:[%s428 + $0x49] sm:$0xff]
        %v452 = vld [vmem:[%s428 + $0x51] sm:$0xff]
        %v453 = vld [vmem:[%s428 + $0x61] sm:$0xff]
        %v454 = vld [vmem:[%s428 + $0x69] sm:$0xff]
        %v455 = vld [vmem:[%s428 + $0x79] sm:$0xff]
        %v456 = vld [vmem:[%s428 + $0x81] sm:$0xff]
        %v457 = vld [vmem:[%s428 + $0x91] sm:$0xff]
        %v458 = vld [vmem:[%s428 + $0x99] sm:$0xff]
        %v459 = vld [vmem:[%s428 + $0xa9] sm:$0xff]
        %v460 = vld [vmem:[%s428 + $0xb1] sm:$0xff]
        %v461 = vld [vmem:[%s428 + $0x2] sm:$0xff]
        %v462 = vld [vmem:[%s428 + $0xa] sm:$0xff]
        %v463 = vld [vmem:[%s428 + $0x1a] sm:$0xff]
        %v464 = vld [vmem:[%s428 + $0x22] sm:$0xff]
        %v465 = vld [vmem:[%s428 + $0x32] sm:$0xff]
        %v466 = vld [vmem:[%s428 + $0x3a] sm:$0xff]
        %v467 = vld [vmem:[%s428 + $0x4a] sm:$0xff]
        %v468 = vld [vmem:[%s428 + $0x52] sm:$0xff]
        %v469 = vld [vmem:[%s428 + $0x62] sm:$0xff]
        %v470 = vld [vmem:[%s428 + $0x6a] sm:$0xff]
        %v471 = vld [vmem:[%s428 + $0x7a] sm:$0xff]
        %v472 = vld [vmem:[%s428 + $0x82] sm:$0xff]
        %v473 = vld [vmem:[%s428 + $0x92] sm:$0xff]
        %v474 = vld [vmem:[%s428 + $0x9a] sm:$0xff]
        %v475 = vld [vmem:[%s428 + $0xaa] sm:$0xff]
        %v476 = vld [vmem:[%s428 + $0xb2] sm:$0xff]
        %s477 = sadd.s32 %s305, 1
        %s478 = smul.u32 %s477, 24
        %s479 = scalar_lea.vmem [#allocation2], %s478
        %v480 = vld [vmem:[%s479] sm:$0xff]
        %v481 = vld [vmem:[%s479 + $0x8] sm:$0xff]
        %v482 = vld [vmem:[%s479 + $0x18] sm:$0xff]
        %v483 = vld [vmem:[%s479 + $0x20] sm:$0xff]
        %v484 = vld [vmem:[%s479 + $0x30] sm:$0xff]
        %v485 = vld [vmem:[%s479 + $0x38] sm:$0xff]
        %v486 = vld [vmem:[%s479 + $0x48] sm:$0xff]
        %v487 = vld [vmem:[%s479 + $0x50] sm:$0xff]
        %v488 = vld [vmem:[%s479 + $0x60] sm:$0xff]
        %v489 = vld [vmem:[%s479 + $0x68] sm:$0xff]
        %v490 = vld [vmem:[%s479 + $0x78] sm:$0xff]
        %v491 = vld [vmem:[%s479 + $0x80] sm:$0xff]
        %v492 = vld [vmem:[%s479 + $0x90] sm:$0xff]
        %v493 = vld [vmem:[%s479 + $0x98] sm:$0xff]
        %v494 = vld [vmem:[%s479 + $0xa8] sm:$0xff]
        %v495 = vld [vmem:[%s479 + $0xb0] sm:$0xff]
        %v496 = vld [vmem:[%s479 + $0x1] sm:$0xff]
        %v497 = vld [vmem:[%s479 + $0x9] sm:$0xff]
        %v498 = vld [vmem:[%s479 + $0x19] sm:$0xff]
        %v499 = vld [vmem:[%s479 + $0x21] sm:$0xff]
        %v500 = vld [vmem:[%s479 + $0x31] sm:$0xff]
        %v501 = vld [vmem:[%s479 + $0x39] sm:$0xff]
        %v502 = vld [vmem:[%s479 + $0x49] sm:$0xff]
        %v503 = vld [vmem:[%s479 + $0x51] sm:$0xff]
        %v504 = vld [vmem:[%s479 + $0x61] sm:$0xff]
        %v505 = vld [vmem:[%s479 + $0x69] sm:$0xff]
        %v506 = vld [vmem:[%s479 + $0x79] sm:$0xff]
        %v507 = vld [vmem:[%s479 + $0x81] sm:$0xff]
        %v508 = vld [vmem:[%s479 + $0x91] sm:$0xff]
        %v509 = vld [vmem:[%s479 + $0x99] sm:$0xff]
        %v510 = vld [vmem:[%s479 + $0xa9] sm:$0xff]
        %v511 = vld [vmem:[%s479 + $0xb1] sm:$0xff]
        %v512 = vld [vmem:[%s479 + $0x2] sm:$0xff]
        %v513 = vld [vmem:[%s479 + $0xa] sm:$0xff]
        %v514 = vld [vmem:[%s479 + $0x1a] sm:$0xff]
        %v515 = vld [vmem:[%s479 + $0x22] sm:$0xff]
        %v516 = vld [vmem:[%s479 + $0x32] sm:$0xff]
        %v517 = vld [vmem:[%s479 + $0x3a] sm:$0xff]
        %v518 = vld [vmem:[%s479 + $0x4a] sm:$0xff]
        %v519 = vld [vmem:[%s479 + $0x52] sm:$0xff]
        %v520 = vld [vmem:[%s479 + $0x62] sm:$0xff]
        %v521 = vld [vmem:[%s479 + $0x6a] sm:$0xff]
        %v522 = vld [vmem:[%s479 + $0x7a] sm:$0xff]
        %v523 = vld [vmem:[%s479 + $0x82] sm:$0xff]
        %v524 = vld [vmem:[%s479 + $0x92] sm:$0xff]
        %v525 = vld [vmem:[%s479 + $0x9a] sm:$0xff]
        %v526 = vld [vmem:[%s479 + $0xaa] sm:$0xff]
        %v527 = vld [vmem:[%s479 + $0xb2] sm:$0xff]
        %s528 = sadd.s32 %s305, 2
        %s529 = smul.u32 %s528, 24
        %s530 = scalar_lea.vmem [#allocation2], %s529
        %v531 = vld [vmem:[%s530] sm:$0xff]
        %v532 = vld [vmem:[%s530 + $0x8] sm:$0xff]
        %v533 = vld [vmem:[%s530 + $0x18] sm:$0xff]
        %v534 = vld [vmem:[%s530 + $0x20] sm:$0xff]
        %v535 = vld [vmem:[%s530 + $0x30] sm:$0xff]
        %v536 = vld [vmem:[%s530 + $0x38] sm:$0xff]
        %v537 = vld [vmem:[%s530 + $0x48] sm:$0xff]
        %v538 = vld [vmem:[%s530 + $0x50] sm:$0xff]
        %v539 = vld [vmem:[%s530 + $0x60] sm:$0xff]
        %v540 = vld [vmem:[%s530 + $0x68] sm:$0xff]
        %v541 = vld [vmem:[%s530 + $0x78] sm:$0xff]
        %v542 = vld [vmem:[%s530 + $0x80] sm:$0xff]
        %v543 = vld [vmem:[%s530 + $0x90] sm:$0xff]
        %v544 = vld [vmem:[%s530 + $0x98] sm:$0xff]
        %v545 = vld [vmem:[%s530 + $0xa8] sm:$0xff]
        %v546 = vld [vmem:[%s530 + $0xb0] sm:$0xff]
        %v547 = vld [vmem:[%s530 + $0x1] sm:$0xff]
        %v548 = vld [vmem:[%s530 + $0x9] sm:$0xff]
        %v549 = vld [vmem:[%s530 + $0x19] sm:$0xff]
        %v550 = vld [vmem:[%s530 + $0x21] sm:$0xff]
        %v551 = vld [vmem:[%s530 + $0x31] sm:$0xff]
        %v552 = vld [vmem:[%s530 + $0x39] sm:$0xff]
        %v553 = vld [vmem:[%s530 + $0x49] sm:$0xff]
        %v554 = vld [vmem:[%s530 + $0x51] sm:$0xff]
        %v555 = vld [vmem:[%s530 + $0x61] sm:$0xff]
        %v556 = vld [vmem:[%s530 + $0x69] sm:$0xff]
        %v557 = vld [vmem:[%s530 + $0x79] sm:$0xff]
        %v558 = vld [vmem:[%s530 + $0x81] sm:$0xff]
        %v559 = vld [vmem:[%s530 + $0x91] sm:$0xff]
        %v560 = vld [vmem:[%s530 + $0x99] sm:$0xff]
        %v561 = vld [vmem:[%s530 + $0xa9] sm:$0xff]
        %v562 = vld [vmem:[%s530 + $0xb1] sm:$0xff]
        %v563 = vld [vmem:[%s530 + $0x2] sm:$0xff]
        %v564 = vld [vmem:[%s530 + $0xa] sm:$0xff]
        %v565 = vld [vmem:[%s530 + $0x1a] sm:$0xff]
        %v566 = vld [vmem:[%s530 + $0x22] sm:$0xff]
        %v567 = vld [vmem:[%s530 + $0x32] sm:$0xff]
        %v568 = vld [vmem:[%s530 + $0x3a] sm:$0xff]
        %v569 = vld [vmem:[%s530 + $0x4a] sm:$0xff]
        %v570 = vld [vmem:[%s530 + $0x52] sm:$0xff]
        %v571 = vld [vmem:[%s530 + $0x62] sm:$0xff]
        %v572 = vld [vmem:[%s530 + $0x6a] sm:$0xff]
        %v573 = vld [vmem:[%s530 + $0x7a] sm:$0xff]
        %v574 = vld [vmem:[%s530 + $0x82] sm:$0xff]
        %v575 = vld [vmem:[%s530 + $0x92] sm:$0xff]
        %v576 = vld [vmem:[%s530 + $0x9a] sm:$0xff]
        %v577 = vld [vmem:[%s530 + $0xaa] sm:$0xff]
        %v578 = vld [vmem:[%s530 + $0xb2] sm:$0xff]
        %595 = vrot.lane.b32.xlu0 %v445, 32
        %v596 = vpop.permute.xlu0 %595
        %597 = vrot.lane.b32.xlu0 %v446, 32
        %v598 = vpop.permute.xlu0 %597
        %599 = vrot.lane.b32.xlu0 %v447, 32
        %v600 = vpop.permute.xlu0 %599
        %601 = vrot.lane.b32.xlu0 %v448, 32
        %v602 = vpop.permute.xlu0 %601
        %603 = vrot.lane.b32.xlu0 %v449, 32
        %v604 = vpop.permute.xlu0 %603
        %605 = vrot.lane.b32.xlu0 %v450, 32
        %v606 = vpop.permute.xlu0 %605
        %607 = vrot.lane.b32.xlu0 %v451, 32
        %v608 = vpop.permute.xlu0 %607
        %609 = vrot.lane.b32.xlu0 %v452, 32
        %v610 = vpop.permute.xlu0 %609
        %611 = vrot.lane.b32.xlu0 %v453, 32
        %v612 = vpop.permute.xlu0 %611
        %613 = vrot.lane.b32.xlu0 %v454, 32
        %v614 = vpop.permute.xlu0 %613
        %615 = vrot.lane.b32.xlu0 %v455, 32
        %v616 = vpop.permute.xlu0 %615
        %617 = vrot.lane.b32.xlu0 %v456, 32
        %v618 = vpop.permute.xlu0 %617
        %619 = vrot.lane.b32.xlu0 %v457, 32
        %v620 = vpop.permute.xlu0 %619
        %621 = vrot.lane.b32.xlu0 %v458, 32
        %v622 = vpop.permute.xlu0 %621
        %623 = vrot.lane.b32.xlu0 %v459, 32
        %v624 = vpop.permute.xlu0 %623
        %625 = vrot.lane.b32.xlu0 %v460, 32
        %v626 = vpop.permute.xlu0 %625
        %659 = vrot.lane.b32.xlu0 %v461, 64
        %v660 = vpop.permute.xlu0 %659
        %661 = vrot.lane.b32.xlu0 %v462, 64
        %v662 = vpop.permute.xlu0 %661
        %663 = vrot.lane.b32.xlu0 %v463, 64
        %v664 = vpop.permute.xlu0 %663
        %665 = vrot.lane.b32.xlu0 %v464, 64
        %v666 = vpop.permute.xlu0 %665
        %667 = vrot.lane.b32.xlu0 %v465, 64
        %v668 = vpop.permute.xlu0 %667
        %669 = vrot.lane.b32.xlu0 %v466, 64
        %v670 = vpop.permute.xlu0 %669
        %671 = vrot.lane.b32.xlu0 %v467, 64
        %v672 = vpop.permute.xlu0 %671
        %673 = vrot.lane.b32.xlu0 %v468, 64
        %v674 = vpop.permute.xlu0 %673
        %675 = vrot.lane.b32.xlu0 %v469, 64
        %v676 = vpop.permute.xlu0 %675
        %677 = vrot.lane.b32.xlu0 %v470, 64
        %v678 = vpop.permute.xlu0 %677
        %679 = vrot.lane.b32.xlu0 %v471, 64
        %v680 = vpop.permute.xlu0 %679
        %681 = vrot.lane.b32.xlu0 %v472, 64
        %v682 = vpop.permute.xlu0 %681
        %683 = vrot.lane.b32.xlu0 %v473, 64
        %v684 = vpop.permute.xlu0 %683
        %685 = vrot.lane.b32.xlu0 %v474, 64
        %v686 = vpop.permute.xlu0 %685
        %687 = vrot.lane.b32.xlu0 %v475, 64
        %v688 = vpop.permute.xlu0 %687
        %689 = vrot.lane.b32.xlu0 %v476, 64
        %v690 = vpop.permute.xlu0 %689
        %723 = vrot.lane.b32.xlu0 %v480, 96
        %v724 = vpop.permute.xlu0 %723
        %725 = vrot.lane.b32.xlu0 %v481, 96
        %v726 = vpop.permute.xlu0 %725
        %727 = vrot.lane.b32.xlu0 %v482, 96
        %v728 = vpop.permute.xlu0 %727
        %729 = vrot.lane.b32.xlu0 %v483, 96
        %v730 = vpop.permute.xlu0 %729
        %731 = vrot.lane.b32.xlu0 %v484, 96
        %v732 = vpop.permute.xlu0 %731
        %733 = vrot.lane.b32.xlu0 %v485, 96
        %v734 = vpop.permute.xlu0 %733
        %735 = vrot.lane.b32.xlu0 %v486, 96
        %v736 = vpop.permute.xlu0 %735
        %737 = vrot.lane.b32.xlu0 %v487, 96
        %v738 = vpop.permute.xlu0 %737
        %739 = vrot.lane.b32.xlu0 %v488, 96
        %v740 = vpop.permute.xlu0 %739
        %741 = vrot.lane.b32.xlu0 %v489, 96
        %v742 = vpop.permute.xlu0 %741
        %743 = vrot.lane.b32.xlu0 %v490, 96
        %v744 = vpop.permute.xlu0 %743
        %745 = vrot.lane.b32.xlu0 %v491, 96
        %v746 = vpop.permute.xlu0 %745
        %747 = vrot.lane.b32.xlu0 %v492, 96
        %v748 = vpop.permute.xlu0 %747
        %749 = vrot.lane.b32.xlu0 %v493, 96
        %v750 = vpop.permute.xlu0 %749
        %751 = vrot.lane.b32.xlu0 %v494, 96
        %v752 = vpop.permute.xlu0 %751
        %753 = vrot.lane.b32.xlu0 %v495, 96
        %v754 = vpop.permute.xlu0 %753
        %787 = vrot.lane.b32.xlu0 %v512, 32
        %v788 = vpop.permute.xlu0 %787
        %789 = vrot.lane.b32.xlu0 %v513, 32
        %v790 = vpop.permute.xlu0 %789
        %791 = vrot.lane.b32.xlu0 %v514, 32
        %v792 = vpop.permute.xlu0 %791
        %793 = vrot.lane.b32.xlu0 %v515, 32
        %v794 = vpop.permute.xlu0 %793
        %795 = vrot.lane.b32.xlu0 %v516, 32
        %v796 = vpop.permute.xlu0 %795
        %797 = vrot.lane.b32.xlu0 %v517, 32
        %v798 = vpop.permute.xlu0 %797
        %799 = vrot.lane.b32.xlu0 %v518, 32
        %v800 = vpop.permute.xlu0 %799
        %801 = vrot.lane.b32.xlu0 %v519, 32
        %v802 = vpop.permute.xlu0 %801
        %803 = vrot.lane.b32.xlu0 %v520, 32
        %v804 = vpop.permute.xlu0 %803
        %805 = vrot.lane.b32.xlu0 %v521, 32
        %v806 = vpop.permute.xlu0 %805
        %807 = vrot.lane.b32.xlu0 %v522, 32
        %v808 = vpop.permute.xlu0 %807
        %809 = vrot.lane.b32.xlu0 %v523, 32
        %v810 = vpop.permute.xlu0 %809
        %811 = vrot.lane.b32.xlu0 %v524, 32
        %v812 = vpop.permute.xlu0 %811
        %813 = vrot.lane.b32.xlu0 %v525, 32
        %v814 = vpop.permute.xlu0 %813
        %815 = vrot.lane.b32.xlu0 %v526, 32
        %v816 = vpop.permute.xlu0 %815
        %817 = vrot.lane.b32.xlu0 %v527, 32
        %v818 = vpop.permute.xlu0 %817
        %851 = vrot.lane.b32.xlu0 %v531, 64
        %v852 = vpop.permute.xlu0 %851
        %853 = vrot.lane.b32.xlu0 %v532, 64
        %v854 = vpop.permute.xlu0 %853
        %855 = vrot.lane.b32.xlu0 %v533, 64
        %v856 = vpop.permute.xlu0 %855
        %857 = vrot.lane.b32.xlu0 %v534, 64
        %v858 = vpop.permute.xlu0 %857
        %859 = vrot.lane.b32.xlu0 %v535, 64
        %v860 = vpop.permute.xlu0 %859
        %861 = vrot.lane.b32.xlu0 %v536, 64
        %v862 = vpop.permute.xlu0 %861
        %863 = vrot.lane.b32.xlu0 %v537, 64
        %v864 = vpop.permute.xlu0 %863
        %865 = vrot.lane.b32.xlu0 %v538, 64
        %v866 = vpop.permute.xlu0 %865
        %867 = vrot.lane.b32.xlu0 %v539, 64
        %v868 = vpop.permute.xlu0 %867
        %869 = vrot.lane.b32.xlu0 %v540, 64
        %v870 = vpop.permute.xlu0 %869
        %871 = vrot.lane.b32.xlu0 %v541, 64
        %v872 = vpop.permute.xlu0 %871
        %873 = vrot.lane.b32.xlu0 %v542, 64
        %v874 = vpop.permute.xlu0 %873
        %875 = vrot.lane.b32.xlu0 %v543, 64
        %v876 = vpop.permute.xlu0 %875
        %877 = vrot.lane.b32.xlu0 %v544, 64
        %v878 = vpop.permute.xlu0 %877
        %879 = vrot.lane.b32.xlu0 %v545, 64
        %v880 = vpop.permute.xlu0 %879
        %881 = vrot.lane.b32.xlu0 %v546, 64
        %v882 = vpop.permute.xlu0 %881
        %915 = vrot.lane.b32.xlu0 %v547, 96
        %v916 = vpop.permute.xlu0 %915
        %917 = vrot.lane.b32.xlu0 %v548, 96
        %v918 = vpop.permute.xlu0 %917
        %919 = vrot.lane.b32.xlu0 %v549, 96
        %v920 = vpop.permute.xlu0 %919
        %921 = vrot.lane.b32.xlu0 %v550, 96
        %v922 = vpop.permute.xlu0 %921
        %923 = vrot.lane.b32.xlu0 %v551, 96
        %v924 = vpop.permute.xlu0 %923
        %925 = vrot.lane.b32.xlu0 %v552, 96
        %v926 = vpop.permute.xlu0 %925
        %927 = vrot.lane.b32.xlu0 %v553, 96
        %v928 = vpop.permute.xlu0 %927
        %929 = vrot.lane.b32.xlu0 %v554, 96
        %v930 = vpop.permute.xlu0 %929
        %931 = vrot.lane.b32.xlu0 %v555, 96
        %v932 = vpop.permute.xlu0 %931
        %933 = vrot.lane.b32.xlu0 %v556, 96
        %v934 = vpop.permute.xlu0 %933
        %935 = vrot.lane.b32.xlu0 %v557, 96
        %v936 = vpop.permute.xlu0 %935
        %937 = vrot.lane.b32.xlu0 %v558, 96
        %v938 = vpop.permute.xlu0 %937
        %939 = vrot.lane.b32.xlu0 %v559, 96
        %v940 = vpop.permute.xlu0 %939
        %941 = vrot.lane.b32.xlu0 %v560, 96
        %v942 = vpop.permute.xlu0 %941
        %943 = vrot.lane.b32.xlu0 %v561, 96
        %v944 = vpop.permute.xlu0 %943
        %945 = vrot.lane.b32.xlu0 %v562, 96
        %v946 = vpop.permute.xlu0 %945
        %v963 = vsel %vm306, %v429, %v596
        %v964 = vsel %vm306, %v430, %v598
        %v965 = vsel %vm306, %v431, %v600
        %v966 = vsel %vm306, %v432, %v602
        %v967 = vsel %vm306, %v433, %v604
        %v968 = vsel %vm306, %v434, %v606
        %v969 = vsel %vm306, %v435, %v608
        %v970 = vsel %vm306, %v436, %v610
        %v971 = vsel %vm306, %v437, %v612
        %v972 = vsel %vm306, %v438, %v614
        %v973 = vsel %vm306, %v439, %v616
        %v974 = vsel %vm306, %v440, %v618
        %v975 = vsel %vm306, %v441, %v620
        %v976 = vsel %vm306, %v442, %v622
        %v977 = vsel %vm306, %v443, %v624
        %v978 = vsel %vm306, %v444, %v626
        %vm979 = vcmask 523264
        %v980 = vsel %vm979, %v963, %v660
        %v981 = vsel %vm979, %v964, %v662
        %v982 = vsel %vm979, %v965, %v664
        %v983 = vsel %vm979, %v966, %v666
        %v984 = vsel %vm979, %v967, %v668
        %v985 = vsel %vm979, %v968, %v670
        %v986 = vsel %vm979, %v969, %v672
        %v987 = vsel %vm979, %v970, %v674
        %v988 = vsel %vm979, %v971, %v676
        %v989 = vsel %vm979, %v972, %v678
        %v990 = vsel %vm979, %v973, %v680
        %v991 = vsel %vm979, %v974, %v682
        %v992 = vsel %vm979, %v975, %v684
        %v993 = vsel %vm979, %v976, %v686
        %v994 = vsel %vm979, %v977, %v688
        %v995 = vsel %vm979, %v978, %v690
        %vm996 = vcmask 785408
        %v997 = vsel %vm996, %v980, %v724
        %v998 = vsel %vm996, %v981, %v726
        %v999 = vsel %vm996, %v982, %v728
        %v1000 = vsel %vm996, %v983, %v730
        %v1001 = vsel %vm996, %v984, %v732
        %v1002 = vsel %vm996, %v985, %v734
        %v1003 = vsel %vm996, %v986, %v736
        %v1004 = vsel %vm996, %v987, %v738
        %v1005 = vsel %vm996, %v988, %v740
        %v1006 = vsel %vm996, %v989, %v742
        %v1007 = vsel %vm996, %v990, %v744
        %v1008 = vsel %vm996, %v991, %v746
        %v1009 = vsel %vm996, %v992, %v748
        %v1010 = vsel %vm996, %v993, %v750
        %v1011 = vsel %vm996, %v994, %v752
        %v1012 = vsel %vm996, %v995, %v754
        %v1013 = vsel %vm306, %v496, %v788
        %v1014 = vsel %vm306, %v497, %v790
        %v1015 = vsel %vm306, %v498, %v792
        %v1016 = vsel %vm306, %v499, %v794
        %v1017 = vsel %vm306, %v500, %v796
        %v1018 = vsel %vm306, %v501, %v798
        %v1019 = vsel %vm306, %v502, %v800
        %v1020 = vsel %vm306, %v503, %v802
        %v1021 = vsel %vm306, %v504, %v804
        %v1022 = vsel %vm306, %v505, %v806
        %v1023 = vsel %vm306, %v506, %v808
        %v1024 = vsel %vm306, %v507, %v810
        %v1025 = vsel %vm306, %v508, %v812
        %v1026 = vsel %vm306, %v509, %v814
        %v1027 = vsel %vm306, %v510, %v816
        %v1028 = vsel %vm306, %v511, %v818
        %v1029 = vsel %vm979, %v1013, %v852
        %v1030 = vsel %vm979, %v1014, %v854
        %v1031 = vsel %vm979, %v1015, %v856
        %v1032 = vsel %vm979, %v1016, %v858
        %v1033 = vsel %vm979, %v1017, %v860
        %v1034 = vsel %vm979, %v1018, %v862
        %v1035 = vsel %vm979, %v1019, %v864
        %v1036 = vsel %vm979, %v1020, %v866
        %v1037 = vsel %vm979, %v1021, %v868
        %v1038 = vsel %vm979, %v1022, %v870
        %v1039 = vsel %vm979, %v1023, %v872
        %v1040 = vsel %vm979, %v1024, %v874
        %v1041 = vsel %vm979, %v1025, %v876
        %v1042 = vsel %vm979, %v1026, %v878
        %v1043 = vsel %vm979, %v1027, %v880
        %v1044 = vsel %vm979, %v1028, %v882
        %v1045 = vsel %vm996, %v1029, %v916
        %v1046 = vsel %vm996, %v1030, %v918
        %v1047 = vsel %vm996, %v1031, %v920
        %v1048 = vsel %vm996, %v1032, %v922
        %v1049 = vsel %vm996, %v1033, %v924
        %v1050 = vsel %vm996, %v1034, %v926
        %v1051 = vsel %vm996, %v1035, %v928
        %v1052 = vsel %vm996, %v1036, %v930
        %v1053 = vsel %vm996, %v1037, %v932
        %v1054 = vsel %vm996, %v1038, %v934
        %v1055 = vsel %vm996, %v1039, %v936
        %v1056 = vsel %vm996, %v1040, %v938
        %v1057 = vsel %vm996, %v1041, %v940
        %v1058 = vsel %vm996, %v1042, %v942
        %v1059 = vsel %vm996, %v1043, %v944
        %v1060 = vsel %vm996, %v1044, %v946
        %v1061 = vld [vmem:[#allocation3] sm:$0xff]
        %v1062 = vld [vmem:[#allocation3 + $0x8] sm:$0xff]
        %v1063 = vld [vmem:[#allocation3 + $0x10] sm:$0xff]
        %v1064 = vld [vmem:[#allocation3 + $0x18] sm:$0xff]
        %v1065 = vld [vmem:[#allocation3 + $0x20] sm:$0xff]
        %v1066 = vld [vmem:[#allocation3 + $0x28] sm:$0xff]
        %v1067 = vld [vmem:[#allocation3 + $0x30] sm:$0xff]
        %v1068 = vld [vmem:[#allocation3 + $0x38] sm:$0xff]
        %v1069 = vld [vmem:[#allocation3 + $0x40] sm:$0xff]
        %v1070 = vld [vmem:[#allocation3 + $0x48] sm:$0xff]
        %v1071 = vld [vmem:[#allocation3 + $0x50] sm:$0xff]
        %v1072 = vld [vmem:[#allocation3 + $0x58] sm:$0xff]
        %v1073 = vld [vmem:[#allocation3 + $0x60] sm:$0xff]
        %v1074 = vld [vmem:[#allocation3 + $0x68] sm:$0xff]
        %v1075 = vld [vmem:[#allocation3 + $0x70] sm:$0xff]
        %v1076 = vld [vmem:[#allocation3 + $0x78] sm:$0xff]
        %v1077 = vld [vmem:[#allocation3 + $0x80] sm:$0xff]
        %v1078 = vld [vmem:[#allocation3 + $0x88] sm:$0xff]
        %v1079 = vld [vmem:[#allocation3 + $0x90] sm:$0xff]
        %v1080 = vld [vmem:[#allocation3 + $0x98] sm:$0xff]
        %v1081 = vld [vmem:[#allocation3 + $0xa0] sm:$0xff]
        %v1082 = vld [vmem:[#allocation3 + $0xa8] sm:$0xff]
        %v1083 = vld [vmem:[#allocation3 + $0xb0] sm:$0xff]
        %v1084 = vld [vmem:[#allocation3 + $0xb8] sm:$0xff]
        %v1085 = vld [vmem:[#allocation3 + $0xc0] sm:$0xff]
        %v1086 = vld [vmem:[#allocation3 + $0xc8] sm:$0xff]
        %v1087 = vld [vmem:[#allocation3 + $0xd0] sm:$0xff]
        %v1088 = vld [vmem:[#allocation3 + $0xd8] sm:$0xff]
        %v1089 = vld [vmem:[#allocation3 + $0xe0] sm:$0xff]
        %v1090 = vld [vmem:[#allocation3 + $0xe8] sm:$0xff]
        %v1091 = vld [vmem:[#allocation3 + $0xf0] sm:$0xff]
        %v1092 = vld [vmem:[#allocation3 + $0xf8] sm:$0xff]
        %v1093 = vld [vmem:[#allocation3 + $0x100] sm:$0xff]
        %v1094 = vld [vmem:[#allocation3 + $0x108] sm:$0xff]
        %v1095 = vld [vmem:[#allocation3 + $0x110] sm:$0xff]
        %v1096 = vld [vmem:[#allocation3 + $0x118] sm:$0xff]
        %v1097 = vld [vmem:[#allocation5] sm:$0x1]
        %v1099 = vlaneseq
        %v1100 = vshrl.u32 %v1099, 7
        %v1101 = vsub.s32 0, %v1100
        %v1102 = vrot.slane %v1097, %v1101
        %v1105 = vsel %vm306, %v563, 0
        %v1108 = vsel %vm306, %v564, 0
        %v1111 = vsel %vm306, %v565, 0
        %v1114 = vsel %vm306, %v566, 0
        %v1117 = vsel %vm306, %v567, 0
        %v1120 = vsel %vm306, %v568, 0
        %v1123 = vsel %vm306, %v569, 0
        %v1126 = vsel %vm306, %v570, 0
        %v1129 = vsel %vm306, %v571, 0
        %v1132 = vsel %vm306, %v572, 0
        %v1135 = vsel %vm306, %v573, 0
        %v1138 = vsel %vm306, %v574, 0
        %v1141 = vsel %vm306, %v575, 0
        %v1144 = vsel %vm306, %v576, 0
        %v1147 = vsel %vm306, %v577, 0
        %v1150 = vsel %vm306, %v578, 0
        %1152 = vmatprep.subr.mxu0 0.0
        %1153 = vmatpush1.msra.mxu0 %v1061
        %1154 = vmatprep.subr.mxu0 0.0
        %1155 = vmatpush1.msra.mxu0 %v1062
        %1156 = vmatprep.subr.mxu0 0.0
        %1157 = vmatpush1.msra.mxu0 %v1063
        %1158 = vmatprep.subr.mxu0 0.0
        %1159 = vmatpush1.msra.mxu0 %v1064
        %1160 = vmatprep.subr.mxu0 0.0
        %1161 = vmatpush1.msra.mxu0 %v1065
        %1162 = vmatprep.subr.mxu0 0.0
        %1163 = vmatpush1.msra.mxu0 %v1066
        %1164 = vmatprep.subr.mxu0 0.0
        %1165 = vmatpush1.msra.mxu0 %v1067
        %1166 = vmatprep.subr.mxu0 0.0
        %1167 = vmatpush1.msra.mxu0 %v1068
        %1168 = vmatprep.subr.mxu0 0.0
        %1169 = vmatpush1.msra.mxu0 %v1069
        %1170 = vmatprep.subr.mxu0 0.0
        %1171 = vmatpush1.msra.mxu0 %v1070
        %1172 = vmatprep.subr.mxu0 0.0
        %1173 = vmatpush1.msra.mxu0 %v1071
        %1174 = vmatprep.subr.mxu0 0.0
        %1175 = vmatpush1.msra.mxu0 %v1072
        %1176 = vmatprep.subr.mxu0 0.0
        %1177 = vmatpush1.msra.mxu0 %v1073
        %1178 = vmatprep.subr.mxu0 0.0
        %1179 = vmatpush1.msra.mxu0 %v1074
        %1180 = vmatprep.subr.mxu0 0.0
        %1181 = vmatpush1.msra.mxu0 %v1075
        %1182 = vmatprep.subr.mxu0 0.0
        %1183 = vmatpush1.msra.mxu0 %v1076
        %1184 = vmatprep.subr.mxu0 0.0
        %1185 = vmatpush1.msra.mxu0 %v1077
        %1186 = vmatprep.subr.mxu0 0.0
        %1187 = vmatpush1.msra.mxu0 %v1078
        %1188 = vmatprep.subr.mxu0 0.0
        %1189 = vmatpush1.msra.mxu0 %v1079
        %1190 = vmatprep.subr.mxu0 0.0
        %1191 = vmatpush1.msra.mxu0 %v1080
        %1192 = vmatprep.subr.mxu0 0.0
        %1193 = vmatpush1.msra.mxu0 %v1081
        %1194 = vmatprep.subr.mxu0 0.0
        %1195 = vmatpush1.msra.mxu0 %v1082
        %1196 = vmatprep.subr.mxu0 0.0
        %1197 = vmatpush1.msra.mxu0 %v1083
        %1198 = vmatprep.subr.mxu0 0.0
        %1199 = vmatpush1.msra.mxu0 %v1084
        %1200 = vmatprep.subr.mxu0 0.0
        %1201 = vmatpush1.msra.mxu0 %v1085
        %1202 = vmatprep.subr.mxu0 0.0
        %1203 = vmatpush1.msra.mxu0 %v1086
        %1204 = vmatprep.subr.mxu0 0.0
        %1205 = vmatpush1.msra.mxu0 %v1087
        %1206 = vmatprep.subr.mxu0 0.0
        %1207 = vmatpush1.msra.mxu0 %v1088
        %1208 = vmatprep.subr.mxu0 0.0
        %1209 = vmatpush1.msra.mxu0 %v1089
        %1210 = vmatprep.subr.mxu0 0.0
        %1211 = vmatpush1.msra.mxu0 %v1090
        %1212 = vmatprep.subr.mxu0 0.0
        %1213 = vmatpush1.msra.mxu0 %v1091
        %1214 = vmatprep.subr.mxu0 0.0
        %1215 = vmatpush1.msra.mxu0 %v1092
        %1216 = vmatprep.mubr.f32.mxu0 %v1045
        %1217 = vmatmul.mubr.f32.gmra.mrb[0].mxu0 %v997
        %v1218 = vpop.f32.mrb[0].mxu0
        %v1219 = vadd.f32 %v1102, %v1218
        %v1220 = vpop.f32.mrb[0].mxu0
        %1221 = vmatprep.mubr.f32.mxu0 %v1046
        %1222 = vmatmul.mubr.f32.gmra.mrb[0].mxu0 %v998
        %v1223 = vpop.f32.mrb[0].mxu0
        %v1224 = vadd.f32 %v1102, %v1223
        %v1225 = vpop.f32.mrb[0].mxu0
        %1226 = vmatprep.mubr.f32.mxu0 %v1047
        %1227 = vmatmul.mubr.f32.gmra.mrb[0].mxu0 %v999
        %v1228 = vpop.f32.mrb[0].mxu0
        %v1229 = vadd.f32 %v1102, %v1228
        %v1230 = vpop.f32.mrb[0].mxu0
        %1231 = vmatprep.mubr.f32.mxu0 %v1048
        %1232 = vmatmul.mubr.f32.gmra.mrb[0].mxu0 %v1000
        %v1233 = vpop.f32.mrb[0].mxu0
        %v1234 = vadd.f32 %v1102, %v1233
        %v1235 = vpop.f32.mrb[0].mxu0
        %1236 = vmatprep.mubr.f32.mxu0 %v1049
        %1237 = vmatmul.mubr.f32.gmra.mrb[0].mxu0 %v1001
        %v1238 = vpop.f32.mrb[0].mxu0
        %v1239 = vadd.f32 %v1102, %v1238
        %v1240 = vpop.f32.mrb[0].mxu0
        %1241 = vmatprep.mubr.f32.mxu0 %v1050
        %1242 = vmatmul.mubr.f32.gmra.mrb[0].mxu0 %v1002
        %v1243 = vpop.f32.mrb[0].mxu0
        %v1244 = vadd.f32 %v1102, %v1243
        %v1245 = vpop.f32.mrb[0].mxu0
        %1246 = vmatprep.mubr.f32.mxu0 %v1051
        %1247 = vmatmul.mubr.f32.gmra.mrb[0].mxu0 %v1003
        %v1248 = vpop.f32.mrb[0].mxu0
        %v1249 = vadd.f32 %v1102, %v1248
        %v1250 = vpop.f32.mrb[0].mxu0
        %1251 = vmatprep.mubr.f32.mxu0 %v1052
        %1252 = vmatmul.mubr.f32.gmra.mrb[0].mxu0 %v1004
        %v1253 = vpop.f32.mrb[0].mxu0
        %v1254 = vadd.f32 %v1102, %v1253
        %v1255 = vpop.f32.mrb[0].mxu0
        %1256 = vmatprep.mubr.f32.mxu0 %v1053
        %1257 = vmatmul.mubr.f32.gmra.mrb[0].mxu0 %v1005
        %v1258 = vpop.f32.mrb[0].mxu0
        %v1259 = vadd.f32 %v1102, %v1258
        %v1260 = vpop.f32.mrb[0].mxu0
        %1261 = vmatprep.mubr.f32.mxu0 %v1054
        %1262 = vmatmul.mubr.f32.gmra.mrb[0].mxu0 %v1006
        %v1263 = vpop.f32.mrb[0].mxu0
        %v1264 = vadd.f32 %v1102, %v1263
        %v1265 = vpop.f32.mrb[0].mxu0
        %1266 = vmatprep.mubr.f32.mxu0 %v1055
        %1267 = vmatmul.mubr.f32.gmra.mrb[0].mxu0 %v1007
        %v1268 = vpop.f32.mrb[0].mxu0
        %v1269 = vadd.f32 %v1102, %v1268
        %v1270 = vpop.f32.mrb[0].mxu0
        %1271 = vmatprep.mubr.f32.mxu0 %v1056
        %1272 = vmatmul.mubr.f32.gmra.mrb[0].mxu0 %v1008
        %v1273 = vpop.f32.mrb[0].mxu0
        %v1274 = vadd.f32 %v1102, %v1273
        %v1275 = vpop.f32.mrb[0].mxu0
        %1276 = vmatprep.mubr.f32.mxu0 %v1057
        %1277 = vmatmul.mubr.f32.gmra.mrb[0].mxu0 %v1009
        %v1278 = vpop.f32.mrb[0].mxu0
        %v1279 = vadd.f32 %v1102, %v1278
        %v1280 = vpop.f32.mrb[0].mxu0
        %1281 = vmatprep.mubr.f32.mxu0 %v1058
        %1282 = vmatmul.mubr.f32.gmra.mrb[0].mxu0 %v1010
        %v1283 = vpop.f32.mrb[0].mxu0
        %v1284 = vadd.f32 %v1102, %v1283
        %v1285 = vpop.f32.mrb[0].mxu0
        %1286 = vmatprep.mubr.f32.mxu0 %v1059
        %1287 = vmatmul.mubr.f32.gmra.mrb[0].mxu0 %v1011
        %v1288 = vpop.f32.mrb[0].mxu0
        %v1289 = vadd.f32 %v1102, %v1288
        %v1290 = vpop.f32.mrb[0].mxu0
        %1291 = vmatprep.mubr.f32.mxu0 %v1060
        %1292 = vmatmul.mubr.f32.gmra.mrb[0].mxu0 %v1012
        %v1293 = vpop.f32.mrb[0].mxu0
        %v1294 = vadd.f32 %v1102, %v1293
        %v1295 = vpop.f32.mrb[0].mxu0
        %1296 = vdwg.mxu0
        %1297 = vmatprep.subr.mxu0 0.0
        %1298 = vmatpush1.msra.mxu0 %v1093
        %1299 = vmatprep.subr.mxu0 0.0
        %1300 = vmatpush1.msra.mxu0 %v1094
        %1301 = vmatprep.subr.mxu0 0.0
        %1302 = vmatpush1.msra.mxu0 %v1095
        %1303 = vmatprep.subr.mxu0 0.0
        %1304 = vmatpush1.msra.mxu0 %v1096
        %1305 = vmatprep.subr.mxu0 0.0
        %1306 = vmatpush1.msra.mxu0 0.0
        %1307 = vmatprep.subr.mxu0 0.0
        %1308 = vmatpush1.msra.mxu0 0.0
        %1309 = vmatprep.subr.mxu0 0.0
        %1310 = vmatpush1.msra.mxu0 0.0
        %1311 = vmatprep.subr.mxu0 0.0
        %1312 = vmatpush1.msra.mxu0 0.0
        %1313 = vmatprep.subr.mxu0 0.0
        %1314 = vmatpush1.msra.mxu0 0.0
        %1315 = vmatprep.subr.mxu0 0.0
        %1316 = vmatpush1.msra.mxu0 0.0
        %1317 = vmatprep.subr.mxu0 0.0
        %1318 = vmatpush1.msra.mxu0 0.0
        %1319 = vmatprep.subr.mxu0 0.0
        %1320 = vmatpush1.msra.mxu0 0.0
        %1321 = vmatprep.subr.mxu0 0.0
        %1322 = vmatpush1.msra.mxu0 0.0
        %1323 = vmatprep.subr.mxu0 0.0
        %1324 = vmatpush1.msra.mxu0 0.0
        %1325 = vmatprep.subr.mxu0 0.0
        %1326 = vmatpush1.msra.mxu0 0.0
        %1327 = vmatprep.subr.mxu0 0.0
        %1328 = vmatpush1.msra.mxu0 0.0
        %1329 = vmatprep.subr.mxu0 0.0
        %1330 = vmatpush1.msra.mxu0 0.0
        %1331 = vmatprep.subr.mxu0 0.0
        %1332 = vmatpush1.msra.mxu0 0.0
        %1333 = vmatprep.subr.mxu0 0.0
        %1334 = vmatpush1.msra.mxu0 0.0
        %1335 = vmatprep.subr.mxu0 0.0
        %1336 = vmatpush1.msra.mxu0 0.0
        %1337 = vmatprep.subr.mxu0 0.0
        %1338 = vmatpush1.msra.mxu0 0.0
        %1339 = vmatprep.subr.mxu0 0.0
        %1340 = vmatpush1.msra.mxu0 0.0
        %1341 = vmatprep.subr.mxu0 0.0
        %1342 = vmatpush1.msra.mxu0 0.0
        %1343 = vmatprep.subr.mxu0 0.0
        %1344 = vmatpush1.msra.mxu0 0.0
        %1345 = vmatprep.subr.mxu0 0.0
        %1346 = vmatpush1.msra.mxu0 0.0
        %1347 = vmatprep.subr.mxu0 0.0
        %1348 = vmatpush1.msra.mxu0 0.0
        %1349 = vmatprep.subr.mxu0 0.0
        %1350 = vmatpush1.msra.mxu0 0.0
        %1351 = vmatprep.subr.mxu0 0.0
        %1352 = vmatpush1.msra.mxu0 0.0
        %1353 = vmatprep.subr.mxu0 0.0
        %1354 = vmatpush1.msra.mxu0 0.0
        %1355 = vmatprep.subr.mxu0 0.0
        %1356 = vmatpush1.msra.mxu0 0.0
        %1357 = vmatprep.subr.mxu0 0.0
        %1358 = vmatpush1.msra.mxu0 0.0
        %1359 = vmatprep.subr.mxu0 0.0
        %1360 = vmatpush1.msra.mxu0 0.0
        %1361 = vmatprep.mubr.f32.mxu0 0.0
        %1362 = vmatmul.mubr.f32.gmra.mrb[0].mxu0 %v1105
        %v1363 = vpop.f32.mrb[0].mxu0
        %v1364 = vadd.f32 %v1219, %v1363
        %v1365 = vpop.f32.mrb[0].mxu0
        %1366 = vmatprep.mubr.f32.mxu0 0.0
        %1367 = vmatmul.mubr.f32.gmra.mrb[0].mxu0 %v1108
        %v1368 = vpop.f32.mrb[0].mxu0
        %v1369 = vadd.f32 %v1224, %v1368
        %v1370 = vpop.f32.mrb[0].mxu0
        %1371 = vmatprep.mubr.f32.mxu0 0.0
        %1372 = vmatmul.mubr.f32.gmra.mrb[0].mxu0 %v1111
        %v1373 = vpop.f32.mrb[0].mxu0
        %v1374 = vadd.f32 %v1229, %v1373
        %v1375 = vpop.f32.mrb[0].mxu0
        %1376 = vmatprep.mubr.f32.mxu0 0.0
        %1377 = vmatmul.mubr.f32.gmra.mrb[0].mxu0 %v1114
        %v1378 = vpop.f32.mrb[0].mxu0
        %v1379 = vadd.f32 %v1234, %v1378
        %v1380 = vpop.f32.mrb[0].mxu0
        %1381 = vmatprep.mubr.f32.mxu0 0.0
        %1382 = vmatmul.mubr.f32.gmra.mrb[0].mxu0 %v1117
        %v1383 = vpop.f32.mrb[0].mxu0
        %v1384 = vadd.f32 %v1239, %v1383
        %v1385 = vpop.f32.mrb[0].mxu0
        %1386 = vmatprep.mubr.f32.mxu0 0.0
        %1387 = vmatmul.mubr.f32.gmra.mrb[0].mxu0 %v1120
        %v1388 = vpop.f32.mrb[0].mxu0
        %v1389 = vadd.f32 %v1244, %v1388
        %v1390 = vpop.f32.mrb[0].mxu0
        %1391 = vmatprep.mubr.f32.mxu0 0.0
        %1392 = vmatmul.mubr.f32.gmra.mrb[0].mxu0 %v1123
        %v1393 = vpop.f32.mrb[0].mxu0
        %v1394 = vadd.f32 %v1249, %v1393
        %v1395 = vpop.f32.mrb[0].mxu0
        %1396 = vmatprep.mubr.f32.mxu0 0.0
        %1397 = vmatmul.mubr.f32.gmra.mrb[0].mxu0 %v1126
        %v1398 = vpop.f32.mrb[0].mxu0
        %v1399 = vadd.f32 %v1254, %v1398
        %v1400 = vpop.f32.mrb[0].mxu0
        %1401 = vmatprep.mubr.f32.mxu0 0.0
        %1402 = vmatmul.mubr.f32.gmra.mrb[0].mxu0 %v1129
        %v1403 = vpop.f32.mrb[0].mxu0
        %v1404 = vadd.f32 %v1259, %v1403
        %v1405 = vpop.f32.mrb[0].mxu0
        %1406 = vmatprep.mubr.f32.mxu0 0.0
        %1407 = vmatmul.mubr.f32.gmra.mrb[0].mxu0 %v1132
        %v1408 = vpop.f32.mrb[0].mxu0
        %v1409 = vadd.f32 %v1264, %v1408
        %v1410 = vpop.f32.mrb[0].mxu0
        %1411 = vmatprep.mubr.f32.mxu0 0.0
        %1412 = vmatmul.mubr.f32.gmra.mrb[0].mxu0 %v1135
        %v1413 = vpop.f32.mrb[0].mxu0
        %v1414 = vadd.f32 %v1269, %v1413
        %v1415 = vpop.f32.mrb[0].mxu0
        %1416 = vmatprep.mubr.f32.mxu0 0.0
        %1417 = vmatmul.mubr.f32.gmra.mrb[0].mxu0 %v1138
        %v1418 = vpop.f32.mrb[0].mxu0
        %v1419 = vadd.f32 %v1274, %v1418
        %v1420 = vpop.f32.mrb[0].mxu0
        %1421 = vmatprep.mubr.f32.mxu0 0.0
        %1422 = vmatmul.mubr.f32.gmra.mrb[0].mxu0 %v1141
        %v1423 = vpop.f32.mrb[0].mxu0
        %v1424 = vadd.f32 %v1279, %v1423
        %v1425 = vpop.f32.mrb[0].mxu0
        %1426 = vmatprep.mubr.f32.mxu0 0.0
        %1427 = vmatmul.mubr.f32.gmra.mrb[0].mxu0 %v1144
        %v1428 = vpop.f32.mrb[0].mxu0
        %v1429 = vadd.f32 %v1284, %v1428
        %v1430 = vpop.f32.mrb[0].mxu0
        %1431 = vmatprep.mubr.f32.mxu0 0.0
        %1432 = vmatmul.mubr.f32.gmra.mrb[0].mxu0 %v1147
        %v1433 = vpop.f32.mrb[0].mxu0
        %v1434 = vadd.f32 %v1289, %v1433
        %v1435 = vpop.f32.mrb[0].mxu0
        %1436 = vmatprep.mubr.f32.mxu0 0.0
        %1437 = vmatmul.mubr.f32.gmra.mrb[0].mxu0 %v1150
        %v1438 = vpop.f32.mrb[0].mxu0
        %v1439 = vadd.f32 %v1294, %v1438
        %v1440 = vpop.f32.mrb[0].mxu0
        %1441 = vdwg.mxu0
        %v1442 = vmul.f32 %v1364, %v1364
        %v1443 = vmul.f32 %v1369, %v1369
        %v1444 = vmul.f32 %v1374, %v1374
        %v1445 = vmul.f32 %v1379, %v1379
        %v1446 = vmul.f32 %v1384, %v1384
        %v1447 = vmul.f32 %v1389, %v1389
        %v1448 = vmul.f32 %v1394, %v1394
        %v1449 = vmul.f32 %v1399, %v1399
        %v1450 = vmul.f32 %v1404, %v1404
        %v1451 = vmul.f32 %v1409, %v1409
        %v1452 = vmul.f32 %v1414, %v1414
        %v1453 = vmul.f32 %v1419, %v1419
        %v1454 = vmul.f32 %v1424, %v1424
        %v1455 = vmul.f32 %v1429, %v1429
        %v1456 = vmul.f32 %v1434, %v1434
        %v1457 = vmul.f32 %v1439, %v1439
        %v1458 = vld [vmem:[#allocation7] sm:$0xff]
        %v1459 = vld [vmem:[#allocation7 + $0x8] sm:$0xff]
        %v1460 = vld [vmem:[#allocation7 + $0x10] sm:$0xff]
        %v1461 = vld [vmem:[#allocation7 + $0x18] sm:$0xff]
        %v1462 = vld [vmem:[#allocation7 + $0x20] sm:$0xff]
        %v1463 = vld [vmem:[#allocation7 + $0x28] sm:$0xff]
        %v1464 = vld [vmem:[#allocation7 + $0x30] sm:$0xff]
        %v1465 = vld [vmem:[#allocation7 + $0x38] sm:$0xff]
        %v1466 = vld [vmem:[#allocation7 + $0x40] sm:$0xff]
        %v1467 = vld [vmem:[#allocation7 + $0x48] sm:$0xff]
        %v1468 = vld [vmem:[#allocation7 + $0x50] sm:$0xff]
        %v1469 = vld [vmem:[#allocation7 + $0x58] sm:$0xff]
        %v1470 = vld [vmem:[#allocation7 + $0x60] sm:$0xff]
        %v1471 = vld [vmem:[#allocation7 + $0x68] sm:$0xff]
        %v1472 = vld [vmem:[#allocation7 + $0x70] sm:$0xff]
        %v1473 = vld [vmem:[#allocation7 + $0x78] sm:$0xff]
        %v1474 = vld [vmem:[#allocation8] sm:$0x1]
        %v1476 = vlaneseq
        %v1477 = vshrl.u32 %v1476, 7
        %v1478 = vsub.s32 0, %v1477
        %v1479 = vrot.slane %v1474, %v1478
        %1481 = vmatprep.subr.mxu0 0.0
        %1482 = vmatpush1.msra.mxu0 %v1458
        %1483 = vmatprep.subr.mxu0 0.0
        %1484 = vmatpush1.msra.mxu0 %v1459
        %1485 = vmatprep.subr.mxu0 0.0
        %1486 = vmatpush1.msra.mxu0 %v1460
        %1487 = vmatprep.subr.mxu0 0.0
        %1488 = vmatpush1.msra.mxu0 %v1461
        %1489 = vmatprep.subr.mxu0 0.0
        %1490 = vmatpush1.msra.mxu0 %v1462
        %1491 = vmatprep.subr.mxu0 0.0
        %1492 = vmatpush1.msra.mxu0 %v1463
        %1493 = vmatprep.subr.mxu0 0.0
        %1494 = vmatpush1.msra.mxu0 %v1464
        %1495 = vmatprep.subr.mxu0 0.0
        %1496 = vmatpush1.msra.mxu0 %v1465
        %1497 = vmatprep.subr.mxu0 0.0
        %1498 = vmatpush1.msra.mxu0 %v1466
        %1499 = vmatprep.subr.mxu0 0.0
        %1500 = vmatpush1.msra.mxu0 %v1467
        %1501 = vmatprep.subr.mxu0 0.0
        %1502 = vmatpush1.msra.mxu0 %v1468
        %1503 = vmatprep.subr.mxu0 0.0
        %1504 = vmatpush1.msra.mxu0 %v1469
        %1505 = vmatprep.subr.mxu0 0.0
        %1506 = vmatpush1.msra.mxu0 %v1470
        %1507 = vmatprep.subr.mxu0 0.0
        %1508 = vmatpush1.msra.mxu0 %v1471
        %1509 = vmatprep.subr.mxu0 0.0
        %1510 = vmatpush1.msra.mxu0 %v1472
        %1511 = vmatprep.subr.mxu0 0.0
        %1512 = vmatpush1.msra.mxu0 %v1473
        %1513 = vmatprep.subr.mxu0 0.0
        %1514 = vmatpush1.msra.mxu0 0.0
        %1515 = vmatprep.subr.mxu0 0.0
        %1516 = vmatpush1.msra.mxu0 0.0
        %1517 = vmatprep.subr.mxu0 0.0
        %1518 = vmatpush1.msra.mxu0 0.0
        %1519 = vmatprep.subr.mxu0 0.0
        %1520 = vmatpush1.msra.mxu0 0.0
        %1521 = vmatprep.subr.mxu0 0.0
        %1522 = vmatpush1.msra.mxu0 0.0
        %1523 = vmatprep.subr.mxu0 0.0
        %1524 = vmatpush1.msra.mxu0 0.0
        %1525 = vmatprep.subr.mxu0 0.0
        %1526 = vmatpush1.msra.mxu0 0.0
        %1527 = vmatprep.subr.mxu0 0.0
        %1528 = vmatpush1.msra.mxu0 0.0
        %1529 = vmatprep.subr.mxu0 0.0
        %1530 = vmatpush1.msra.mxu0 0.0
        %1531 = vmatprep.subr.mxu0 0.0
        %1532 = vmatpush1.msra.mxu0 0.0
        %1533 = vmatprep.subr.mxu0 0.0
        %1534 = vmatpush1.msra.mxu0 0.0
        %1535 = vmatprep.subr.mxu0 0.0
        %1536 = vmatpush1.msra.mxu0 0.0
        %1537 = vmatprep.subr.mxu0 0.0
        %1538 = vmatpush1.msra.mxu0 0.0
        %1539 = vmatprep.subr.mxu0 0.0
        %1540 = vmatpush1.msra.mxu0 0.0
        %1541 = vmatprep.subr.mxu0 0.0
        %1542 = vmatpush1.msra.mxu0 0.0
        %1543 = vmatprep.subr.mxu0 0.0
        %1544 = vmatpush1.msra.mxu0 0.0
        %1545 = vmatprep.mubr.f32.mxu0 0.0
        %1546 = vmatmul.mubr.f32.gmra.mrb[0].mxu0 %v1442
        %v1547 = vpop.f32.mrb[0].mxu0
        %v1548 = vadd.f32 %v1479, %v1547
        %v1549 = vpop.f32.mrb[0].mxu0
        %1550 = vmatprep.mubr.f32.mxu0 0.0
        %1551 = vmatmul.mubr.f32.gmra.mrb[0].mxu0 %v1443
        %v1552 = vpop.f32.mrb[0].mxu0
        %v1553 = vadd.f32 %v1479, %v1552
        %v1554 = vpop.f32.mrb[0].mxu0
        %1555 = vmatprep.mubr.f32.mxu0 0.0
        %1556 = vmatmul.mubr.f32.gmra.mrb[0].mxu0 %v1444
        %v1557 = vpop.f32.mrb[0].mxu0
        %v1558 = vadd.f32 %v1479, %v1557
        %v1559 = vpop.f32.mrb[0].mxu0
        %1560 = vmatprep.mubr.f32.mxu0 0.0
        %1561 = vmatmul.mubr.f32.gmra.mrb[0].mxu0 %v1445
        %v1562 = vpop.f32.mrb[0].mxu0
        %v1563 = vadd.f32 %v1479, %v1562
        %v1564 = vpop.f32.mrb[0].mxu0
        %1565 = vmatprep.mubr.f32.mxu0 0.0
        %1566 = vmatmul.mubr.f32.gmra.mrb[0].mxu0 %v1446
        %v1567 = vpop.f32.mrb[0].mxu0
        %v1568 = vadd.f32 %v1479, %v1567
        %v1569 = vpop.f32.mrb[0].mxu0
        %1570 = vmatprep.mubr.f32.mxu0 0.0
        %1571 = vmatmul.mubr.f32.gmra.mrb[0].mxu0 %v1447
        %v1572 = vpop.f32.mrb[0].mxu0
        %v1573 = vadd.f32 %v1479, %v1572
        %v1574 = vpop.f32.mrb[0].mxu0
        %1575 = vmatprep.mubr.f32.mxu0 0.0
        %1576 = vmatmul.mubr.f32.gmra.mrb[0].mxu0 %v1448
        %v1577 = vpop.f32.mrb[0].mxu0
        %v1578 = vadd.f32 %v1479, %v1577
        %v1579 = vpop.f32.mrb[0].mxu0
        %1580 = vmatprep.mubr.f32.mxu0 0.0
        %1581 = vmatmul.mubr.f32.gmra.mrb[0].mxu0 %v1449
        %v1582 = vpop.f32.mrb[0].mxu0
        %v1583 = vadd.f32 %v1479, %v1582
        %v1584 = vpop.f32.mrb[0].mxu0
        %1585 = vmatprep.mubr.f32.mxu0 0.0
        %1586 = vmatmul.mubr.f32.gmra.mrb[0].mxu0 %v1450
        %v1587 = vpop.f32.mrb[0].mxu0
        %v1588 = vadd.f32 %v1479, %v1587
        %v1589 = vpop.f32.mrb[0].mxu0
        %1590 = vmatprep.mubr.f32.mxu0 0.0
        %1591 = vmatmul.mubr.f32.gmra.mrb[0].mxu0 %v1451
        %v1592 = vpop.f32.mrb[0].mxu0
        %v1593 = vadd.f32 %v1479, %v1592
        %v1594 = vpop.f32.mrb[0].mxu0
        %1595 = vmatprep.mubr.f32.mxu0 0.0
        %1596 = vmatmul.mubr.f32.gmra.mrb[0].mxu0 %v1452
        %v1597 = vpop.f32.mrb[0].mxu0
        %v1598 = vadd.f32 %v1479, %v1597
        %v1599 = vpop.f32.mrb[0].mxu0
        %1600 = vmatprep.mubr.f32.mxu0 0.0
        %1601 = vmatmul.mubr.f32.gmra.mrb[0].mxu0 %v1453
        %v1602 = vpop.f32.mrb[0].mxu0
        %v1603 = vadd.f32 %v1479, %v1602
        %v1604 = vpop.f32.mrb[0].mxu0
        %1605 = vmatprep.mubr.f32.mxu0 0.0
        %1606 = vmatmul.mubr.f32.gmra.mrb[0].mxu0 %v1454
        %v1607 = vpop.f32.mrb[0].mxu0
        %v1608 = vadd.f32 %v1479, %v1607
        %v1609 = vpop.f32.mrb[0].mxu0
        %1610 = vmatprep.mubr.f32.mxu0 0.0
        %1611 = vmatmul.mubr.f32.gmra.mrb[0].mxu0 %v1455
        %v1612 = vpop.f32.mrb[0].mxu0
        %v1613 = vadd.f32 %v1479, %v1612
        %v1614 = vpop.f32.mrb[0].mxu0
        %1615 = vmatprep.mubr.f32.mxu0 0.0
        %1616 = vmatmul.mubr.f32.gmra.mrb[0].mxu0 %v1456
        %v1617 = vpop.f32.mrb[0].mxu0
        %v1618 = vadd.f32 %v1479, %v1617
        %v1619 = vpop.f32.mrb[0].mxu0
        %1620 = vmatprep.mubr.f32.mxu0 0.0
        %1621 = vmatmul.mubr.f32.gmra.mrb[0].mxu0 %v1457
        %v1622 = vpop.f32.mrb[0].mxu0
        %v1623 = vadd.f32 %v1479, %v1622
        %v1624 = vpop.f32.mrb[0].mxu0
        %1625 = vdwg.mxu0
        %v1626 = vrsqrt.pop %v1548
        %v1627 = vmul.f32 %v1548, %v1626
        %vm1628 = vcmp.eq.f32.partialorder %v1548, inf
        %v1629 = vsel %vm1628, %v1548, %v1627
        %vm1630 = vcmp.eq.f32.partialorder %v1548, 0.0
        %v1631 = vand.u32 %v1548, 2147483648
        %v1632 = vsel %vm1630, %v1631, %v1629
        %v1633 = vrsqrt.pop %v1553
        %v1634 = vmul.f32 %v1553, %v1633
        %vm1635 = vcmp.eq.f32.partialorder %v1553, inf
        %v1636 = vsel %vm1635, %v1553, %v1634
        %vm1637 = vcmp.eq.f32.partialorder %v1553, 0.0
        %v1638 = vand.u32 %v1553, 2147483648
        %v1639 = vsel %vm1637, %v1638, %v1636
        %v1640 = vrsqrt.pop %v1558
        %v1641 = vmul.f32 %v1558, %v1640
        %vm1642 = vcmp.eq.f32.partialorder %v1558, inf
        %v1643 = vsel %vm1642, %v1558, %v1641
        %vm1644 = vcmp.eq.f32.partialorder %v1558, 0.0
        %v1645 = vand.u32 %v1558, 2147483648
        %v1646 = vsel %vm1644, %v1645, %v1643
        %v1647 = vrsqrt.pop %v1563
        %v1648 = vmul.f32 %v1563, %v1647
        %vm1649 = vcmp.eq.f32.partialorder %v1563, inf
        %v1650 = vsel %vm1649, %v1563, %v1648
        %vm1651 = vcmp.eq.f32.partialorder %v1563, 0.0
        %v1652 = vand.u32 %v1563, 2147483648
        %v1653 = vsel %vm1651, %v1652, %v1650
        %v1654 = vrsqrt.pop %v1568
        %v1655 = vmul.f32 %v1568, %v1654
        %vm1656 = vcmp.eq.f32.partialorder %v1568, inf
        %v1657 = vsel %vm1656, %v1568, %v1655
        %vm1658 = vcmp.eq.f32.partialorder %v1568, 0.0
        %v1659 = vand.u32 %v1568, 2147483648
        %v1660 = vsel %vm1658, %v1659, %v1657
        %v1661 = vrsqrt.pop %v1573
        %v1662 = vmul.f32 %v1573, %v1661
        %vm1663 = vcmp.eq.f32.partialorder %v1573, inf
        %v1664 = vsel %vm1663, %v1573, %v1662
        %vm1665 = vcmp.eq.f32.partialorder %v1573, 0.0
        %v1666 = vand.u32 %v1573, 2147483648
        %v1667 = vsel %vm1665, %v1666, %v1664
        %v1668 = vrsqrt.pop %v1578
        %v1669 = vmul.f32 %v1578, %v1668
        %vm1670 = vcmp.eq.f32.partialorder %v1578, inf
        %v1671 = vsel %vm1670, %v1578, %v1669
        %vm1672 = vcmp.eq.f32.partialorder %v1578, 0.0
        %v1673 = vand.u32 %v1578, 2147483648
        %v1674 = vsel %vm1672, %v1673, %v1671
        %v1675 = vrsqrt.pop %v1583
        %v1676 = vmul.f32 %v1583, %v1675
        %vm1677 = vcmp.eq.f32.partialorder %v1583, inf
        %v1678 = vsel %vm1677, %v1583, %v1676
        %vm1679 = vcmp.eq.f32.partialorder %v1583, 0.0
        %v1680 = vand.u32 %v1583, 2147483648
        %v1681 = vsel %vm1679, %v1680, %v1678
        %v1682 = vrsqrt.pop %v1588
        %v1683 = vmul.f32 %v1588, %v1682
        %vm1684 = vcmp.eq.f32.partialorder %v1588, inf
        %v1685 = vsel %vm1684, %v1588, %v1683
        %vm1686 = vcmp.eq.f32.partialorder %v1588, 0.0
        %v1687 = vand.u32 %v1588, 2147483648
        %v1688 = vsel %vm1686, %v1687, %v1685
        %v1689 = vrsqrt.pop %v1593
        %v1690 = vmul.f32 %v1593, %v1689
        %vm1691 = vcmp.eq.f32.partialorder %v1593, inf
        %v1692 = vsel %vm1691, %v1593, %v1690
        %vm1693 = vcmp.eq.f32.partialorder %v1593, 0.0
        %v1694 = vand.u32 %v1593, 2147483648
        %v1695 = vsel %vm1693, %v1694, %v1692
        %v1696 = vrsqrt.pop %v1598
        %v1697 = vmul.f32 %v1598, %v1696
        %vm1698 = vcmp.eq.f32.partialorder %v1598, inf
        %v1699 = vsel %vm1698, %v1598, %v1697
        %vm1700 = vcmp.eq.f32.partialorder %v1598, 0.0
        %v1701 = vand.u32 %v1598, 2147483648
        %v1702 = vsel %vm1700, %v1701, %v1699
        %v1703 = vrsqrt.pop %v1603
        %v1704 = vmul.f32 %v1603, %v1703
        %vm1705 = vcmp.eq.f32.partialorder %v1603, inf
        %v1706 = vsel %vm1705, %v1603, %v1704
        %vm1707 = vcmp.eq.f32.partialorder %v1603, 0.0
        %v1708 = vand.u32 %v1603, 2147483648
        %v1709 = vsel %vm1707, %v1708, %v1706
        %v1710 = vrsqrt.pop %v1608
        %v1711 = vmul.f32 %v1608, %v1710
        %vm1712 = vcmp.eq.f32.partialorder %v1608, inf
        %v1713 = vsel %vm1712, %v1608, %v1711
        %vm1714 = vcmp.eq.f32.partialorder %v1608, 0.0
        %v1715 = vand.u32 %v1608, 2147483648
        %v1716 = vsel %vm1714, %v1715, %v1713
        %v1717 = vrsqrt.pop %v1613
        %v1718 = vmul.f32 %v1613, %v1717
        %vm1719 = vcmp.eq.f32.partialorder %v1613, inf
        %v1720 = vsel %vm1719, %v1613, %v1718
        %vm1721 = vcmp.eq.f32.partialorder %v1613, 0.0
        %v1722 = vand.u32 %v1613, 2147483648
        %v1723 = vsel %vm1721, %v1722, %v1720
        %v1724 = vrsqrt.pop %v1618
        %v1725 = vmul.f32 %v1618, %v1724
        %vm1726 = vcmp.eq.f32.partialorder %v1618, inf
        %v1727 = vsel %vm1726, %v1618, %v1725
        %vm1728 = vcmp.eq.f32.partialorder %v1618, 0.0
        %v1729 = vand.u32 %v1618, 2147483648
        %v1730 = vsel %vm1728, %v1729, %v1727
        %v1731 = vrsqrt.pop %v1623
        %v1732 = vmul.f32 %v1623, %v1731
        %vm1733 = vcmp.eq.f32.partialorder %v1623, inf
        %v1734 = vsel %vm1733, %v1623, %v1732
        %vm1735 = vcmp.eq.f32.partialorder %v1623, 0.0
        %v1736 = vand.u32 %v1623, 2147483648
        %v1737 = vsel %vm1735, %v1736, %v1734
        %v1738 = vmul.f32 %v1364, %v1632
        %v1739 = vmul.f32 %v1369, %v1639
        %v1740 = vmul.f32 %v1374, %v1646
        %v1741 = vmul.f32 %v1379, %v1653
        %v1742 = vmul.f32 %v1384, %v1660
        %v1743 = vmul.f32 %v1389, %v1667
        %v1744 = vmul.f32 %v1394, %v1674
        %v1745 = vmul.f32 %v1399, %v1681
        %v1746 = vmul.f32 %v1404, %v1688
        %v1747 = vmul.f32 %v1409, %v1695
        %v1748 = vmul.f32 %v1414, %v1702
        %v1749 = vmul.f32 %v1419, %v1709
        %v1750 = vmul.f32 %v1424, %v1716
        %v1751 = vmul.f32 %v1429, %v1723
        %v1752 = vmul.f32 %v1434, %v1730
        %v1753 = vmul.f32 %v1439, %v1737
        %1754 = vst.msk [vmem:[%s301] sm:$0xff] %vm979, %v1738
        %1755 = vst.msk [vmem:[%s301 + $0x8] sm:$0xff] %vm979, %v1739
        %1756 = vst.msk [vmem:[%s301 + $0x20] sm:$0xff] %vm979, %v1740
        %1757 = vst.msk [vmem:[%s301 + $0x28] sm:$0xff] %vm979, %v1741
        %1758 = vst.msk [vmem:[%s301 + $0x40] sm:$0xff] %vm979, %v1742
        %1759 = vst.msk [vmem:[%s301 + $0x48] sm:$0xff] %vm979, %v1743
        %1760 = vst.msk [vmem:[%s301 + $0x60] sm:$0xff] %vm979, %v1744
        %1761 = vst.msk [vmem:[%s301 + $0x68] sm:$0xff] %vm979, %v1745
        %1762 = vst.msk [vmem:[%s301 + $0x80] sm:$0xff] %vm979, %v1746
        %1763 = vst.msk [vmem:[%s301 + $0x88] sm:$0xff] %vm979, %v1747
        %1764 = vst.msk [vmem:[%s301 + $0xa0] sm:$0xff] %vm979, %v1748
        %1765 = vst.msk [vmem:[%s301 + $0xa8] sm:$0xff] %vm979, %v1749
        %1766 = vst.msk [vmem:[%s301 + $0xc0] sm:$0xff] %vm979, %v1750
        %1767 = vst.msk [vmem:[%s301 + $0xc8] sm:$0xff] %vm979, %v1751
        %1768 = vst.msk [vmem:[%s301 + $0xe0] sm:$0xff] %vm979, %v1752
        %1769 = vst.msk [vmem:[%s301 + $0xe8] sm:$0xff] %vm979, %v1753
        %1786 = vrot.lane.b32.xlu0 %v1738, 64
        %v1787 = vpop.permute.xlu0 %1786
        %1788 = vrot.lane.b32.xlu0 %v1739, 64
        %v1789 = vpop.permute.xlu0 %1788
        %1790 = vrot.lane.b32.xlu0 %v1740, 64
        %v1791 = vpop.permute.xlu0 %1790
        %1792 = vrot.lane.b32.xlu0 %v1741, 64
        %v1793 = vpop.permute.xlu0 %1792
        %1794 = vrot.lane.b32.xlu0 %v1742, 64
        %v1795 = vpop.permute.xlu0 %1794
        %1796 = vrot.lane.b32.xlu0 %v1743, 64
        %v1797 = vpop.permute.xlu0 %1796
        %1798 = vrot.lane.b32.xlu0 %v1744, 64
        %v1799 = vpop.permute.xlu0 %1798
        %1800 = vrot.lane.b32.xlu0 %v1745, 64
        %v1801 = vpop.permute.xlu0 %1800
        %1802 = vrot.lane.b32.xlu0 %v1746, 64
        %v1803 = vpop.permute.xlu0 %1802
        %1804 = vrot.lane.b32.xlu0 %v1747, 64
        %v1805 = vpop.permute.xlu0 %1804
        %1806 = vrot.lane.b32.xlu0 %v1748, 64
        %v1807 = vpop.permute.xlu0 %1806
        %1808 = vrot.lane.b32.xlu0 %v1749, 64
        %v1809 = vpop.permute.xlu0 %1808
        %1810 = vrot.lane.b32.xlu0 %v1750, 64
        %v1811 = vpop.permute.xlu0 %1810
        %1812 = vrot.lane.b32.xlu0 %v1751, 64
        %v1813 = vpop.permute.xlu0 %1812
        %1814 = vrot.lane.b32.xlu0 %v1752, 64
        %v1815 = vpop.permute.xlu0 %1814
        %1816 = vrot.lane.b32.xlu0 %v1753, 64
        %v1817 = vpop.permute.xlu0 %1816
        %s1834 = scalar_lea.vmem %s301, 16
        %1835 = vst.msk [vmem:[%s1834] sm:$0xff] %vm979, %v1787
        %1836 = vst.msk [vmem:[%s1834 + $0x8] sm:$0xff] %vm979, %v1789
        %1837 = vst.msk [vmem:[%s1834 + $0x20] sm:$0xff] %vm979, %v1791
        %1838 = vst.msk [vmem:[%s1834 + $0x28] sm:$0xff] %vm979, %v1793
        %1839 = vst.msk [vmem:[%s1834 + $0x40] sm:$0xff] %vm979, %v1795
        %1840 = vst.msk [vmem:[%s1834 + $0x48] sm:$0xff] %vm979, %v1797
        %1841 = vst.msk [vmem:[%s1834 + $0x60] sm:$0xff] %vm979, %v1799
        %1842 = vst.msk [vmem:[%s1834 + $0x68] sm:$0xff] %vm979, %v1801
        %1843 = vst.msk [vmem:[%s1834 + $0x80] sm:$0xff] %vm979, %v1803
        %1844 = vst.msk [vmem:[%s1834 + $0x88] sm:$0xff] %vm979, %v1805
        %1845 = vst.msk [vmem:[%s1834 + $0xa0] sm:$0xff] %vm979, %v1807
        %1846 = vst.msk [vmem:[%s1834 + $0xa8] sm:$0xff] %vm979, %v1809
        %1847 = vst.msk [vmem:[%s1834 + $0xc0] sm:$0xff] %vm979, %v1811
        %1848 = vst.msk [vmem:[%s1834 + $0xc8] sm:$0xff] %vm979, %v1813
        %1849 = vst.msk [vmem:[%s1834 + $0xe0] sm:$0xff] %vm979, %v1815
        %1850 = vst.msk [vmem:[%s1834 + $0xe8] sm:$0xff] %vm979, %v1817
        %s1851 = smul.u32 %s23, 2
        %s1852 = sadd.s32 %s1851, %s24
        %s1853 = smul.u32 8, %s1852
        %p1854 = scmp.lt.s32.totalorder %s1853, 31
        %s1855 = scalar_select %p1854, %s1853, 31
        %s1856 = smul.addr %s1855, 4
        %s1857 = smul.addr %s1856, 8
        %s1858 = scalar_lea.vmem %s5, %s1857
        // Predicated region
        $region57: #{decoder_pallas.6} parent=39 // pred_check
          %p1859 = pneg %p163
        $region58: #{decoder_pallas.6} parent=39 // pred_check_branch
          %1861 = sbr.rel (%p1859) target = $region60
        $region59: #{decoder_pallas.6} parent=39 // pred_region
          %s1862 = smul.u32 %s23, 2
          %s1863 = sadd.s32 %s1862, %s24
          %s1864 = smul.u32 8, %s1863
        $region60: #{decoder_pallas.6} parent=39 // pred_fallthru
          _
      $region40: #{decoder_pallas.6} parent=5 // pred_fallthru
        _
      %p1865 = scmp.le.s32.totalorder 2, %s14
      // Predicated region
      $region61: #{decoder_pallas.6} parent=5 // pred_check
        %p1866 = pneg %p1865
      $region62: #{decoder_pallas.6} parent=5 // pred_check_branch
        %1868 = sbr.rel (%p1866) target = $region64
      $region63: #{decoder_pallas.6} parent=5 // pred_region
        %s1869 = ssub.s32 %s14, 2
        // Predicated region
        $region65: #{decoder_pallas.6} parent=63 // pred_check
          %p1870 = pneg %p169
        $region66: #{decoder_pallas.6} parent=63 // pred_check_branch
          %1872 = sbr.rel (%p1870) target = $region68
        $region67: #{decoder_pallas.6} parent=63 // pred_region
          %s1873 = smul.u32 %s25, 2
          %s1874 = sadd.s32 %s1873, %s26
          %s1875 = smul.u32 8, %s1874
          %p1876 = scmp.lt.s32.totalorder %s1875, 31
          %s1877 = scalar_select %p1876, %s1875, 31
          %s1878 = smul.addr %s1877, 4
          %s1879 = smul.addr %s1878, 8
          %s1880 = scalar_lea.vmem %s5, %s1879
        $region68: #{decoder_pallas.6} parent=63 // pred_fallthru
          _
      $region64: #{decoder_pallas.6} parent=5 // pred_fallthru
        _
    $region6: #{decoder_pallas.6} parent=1 // loop_footer
      %s18 = sadd.s32 1, %s14
    $region7: #{decoder_pallas.6} parent=1 // loop_footer_branch
      %13 = sbr.rel target = $region3
    $region8: #{decoder_pallas.6} parent=1 // loop_exit
      _
    %1881 = vsyncpa [#allocation4], 1
    %s1882 = scalar_lea.sflag [#allocation4], 1
    %1883 = vsyncpa %s1882, 1
    %1884 = vsyncpa [#allocation6], 1
    %1885 = vsyncpa [#allocation9], 1

// kernel: decoder_pallas.7
$region0: #{decoder_pallas.7}
  #allocation0 [shape = 'u32[]', space=smem, size = 0x4, offset = 0x4, fixed_abs, tag = 'smem constant byte address 0x4 - core index']
  #allocation1 [shape = 'u32[144,128]{1,0:T(1,128)}', space=vmem, size = 0x12000, scoped, tag = 'internal scratch']
  #allocation2 [shape = 'f32[34,34,32]{2,1,0:T(8,128)}', space=vmem, size = 0xaa000, scoped, tag = 'scratch operand']
  %s0 = inlined_call_operand.vmem [shape: f32[2,32,32,32], index: 0, kind: input, shape index: {}]
  %s1 = inlined_call_operand.vmem [shape: f32[288,12], index: 1, kind: input, shape index: {}]
  %s2 = inlined_call_operand.hbm [shape: f32[1,12], index: 2, kind: input, shape index: {}]
  %s3 = inlined_call_operand.vmem [shape: f32[64,2,32,6], index: 3, kind: output, shape index: {}]
  %s4 = sld [smem:[#allocation0]]
  $region49: #{decoder_pallas.7} parent=0
    _
  %s6 = ssub.s32 1, %s4
  %s7 = scalar_select 0, %s6, %s4
  $region1: #{decoder_pallas.7} parent=0
    #allocation3 [shape = 'u8[512]{0}', space=vmem, size = 0x400, scoped, tag = 'input window, operand 2, single buffered']
    #allocation4 [shape = 's32[2]{0}', space=sflag, size = 0x8, scoped, tag = 'scoped memory for decoder_pallas.7']
    %8 = vsyncpa [#allocation4], 0
    loop: start=0, step=1, limit=6
    $region2: #{decoder_pallas.7} parent=1 // loop_pre_header
      _
    $region3: #{decoder_pallas.7} parent=1 // loop_header
      %s10 = sphi 0, %s14
      %p11 = scmp.ge.s32.totalorder %s10, 6
      %s17 = sphi 0, %s29
      %s18 = sphi 0, %s25
      %s19 = sphi 0, %s17
      %s20 = sphi 0, %s18
      %s21 = sphi 0, %s19
      %s22 = sphi 0, %s20
      %s32 = sphi 0, %s34
      %s35 = sphi 0, %s32
      %s36 = sphi 0, %s35
      %s52 = sphi 0, %s36
      %s56 = sphi 0, %s56
      %s58 = sphi 0, %s56
      %s59 = sphi 0, %s58
      %s73 = sphi 0, %s59
      %s77 = sphi 0, %s77
      %s79 = sphi 0, %s77
      %s80 = sphi 0, %s79
      %s94 = sphi 0, %s80
      %s104 = sphi 0, %s106
      %s107 = sphi 0, %s104
      %s108 = sphi 0, %s107
      %s124 = sphi 0, %s108
    $region4: #{decoder_pallas.7} parent=1 // loop_header_branch
      %13 = sbr.rel (%p11) target = $region8
    $region5: #{decoder_pallas.7} parent=1 // loop_body
      %s15 = ssub.s32 %s10, 1
      %s16 = ssub.s32 %s10, 2
      %s23 = sadd.s32 1, %s18
      %p24 = scmp.ge.s32.totalorder %s23, 2
      %s25 = scalar_select %p24, 0, %s23
      %s26 = sadd.s32 1, %s17
      %s27 = scalar_select %p24, %s26, %s17
      %p28 = scmp.ge.s32.totalorder %s27, 2
      %s29 = scalar_select %p28, 0, %s27
      %s30 = ssub.s32 %s17, %s29
      %p31 = scmp.eq.s32.totalorder %s30, 0
      %s33 = sadd.s32 %s32, 1
      %s34 = scalar_select %p31, %s32, %s33
      %p37 = pneg %p31
      %p38 = scmp.eq.s32.totalorder %s10, 3
      %p39 = por %p37, %p38
      %p40 = scmp.ne.s32.totalorder %s32, %s35
      %p41 = scmp.eq.s32.totalorder %s10, 0
      %p42 = por %p40, %p41
      %p43 = scmp.ne.s32.totalorder %s32, %s35
      %p44 = scmp.eq.s32.totalorder %s15, 3
      %p45 = por %p43, %p44
      %p46 = scmp.ne.s32.totalorder %s35, %s36
      %p47 = scmp.eq.s32.totalorder %s15, 0
      %p48 = por %p46, %p47
      %p49 = scmp.ne.s32.totalorder %s35, %s36
      %p50 = scmp.eq.s32.totalorder %s16, 3
      %p51 = por %p49, %p50
      %p53 = scmp.ne.s32.totalorder %s36, %s52
      %p54 = scmp.eq.s32.totalorder %s16, 0
      %p55 = por %p53, %p54
      %s57 = sadd.s32 %s56, 1
      %p60 = scmp.eq.s32.totalorder %s10, 3
      %p61 = scmp.ne.s32.totalorder %s56, %s58
      %p62 = scmp.eq.s32.totalorder %s10, 0
      %p63 = por %p61, %p62
      %p64 = scmp.ne.s32.totalorder %s56, %s58
      %p65 = scmp.eq.s32.totalorder %s15, 3
      %p66 = por %p64, %p65
      %p67 = scmp.ne.s32.totalorder %s58, %s59
      %p68 = scmp.eq.s32.totalorder %s15, 0
      %p69 = por %p67, %p68
      %p70 = scmp.ne.s32.totalorder %s58, %s59
      %p71 = scmp.eq.s32.totalorder %s16, 3
      %p72 = por %p70, %p71
      %p74 = scmp.ne.s32.totalorder %s59, %s73
      %p75 = scmp.eq.s32.totalorder %s16, 0
      %p76 = por %p74, %p75
      %s78 = sadd.s32 %s77, 1
      %p81 = scmp.eq.s32.totalorder %s10, 3
      %p82 = scmp.ne.s32.totalorder %s77, %s79
      %p83 = scmp.eq.s32.totalorder %s10, 0
      %p84 = por %p82, %p83
      %p85 = scmp.ne.s32.totalorder %s77, %s79
      %p86 = scmp.eq.s32.totalorder %s15, 3
      %p87 = por %p85, %p86
      %p88 = scmp.ne.s32.totalorder %s79, %s80
      %p89 = scmp.eq.s32.totalorder %s15, 0
      %p90 = por %p88, %p89
      %p91 = scmp.ne.s32.totalorder %s79, %s80
      %p92 = scmp.eq.s32.totalorder %s16, 3
      %p93 = por %p91, %p92
      %p95 = scmp.ne.s32.totalorder %s80, %s94
      %p96 = scmp.eq.s32.totalorder %s16, 0
      %p97 = por %p95, %p96
      %s98 = smul.u32 %s17, 2
      %s99 = sadd.s32 %s98, %s18
      %s100 = smul.u32 %s29, 2
      %s101 = sadd.s32 %s100, %s25
      %s102 = ssub.s32 %s99, %s101
      %p103 = scmp.eq.s32.totalorder %s102, 0
      %s105 = sadd.s32 %s104, 1
      %s106 = scalar_select %p103, %s104, %s105
      %p109 = pneg %p103
      %p110 = scmp.eq.s32.totalorder %s10, 3
      %p111 = por %p109, %p110
      %p112 = scmp.ne.s32.totalorder %s104, %s107
      %p113 = scmp.eq.s32.totalorder %s10, 0
      %p114 = por %p112, %p113
      %p115 = scmp.ne.s32.totalorder %s104, %s107
      %p116 = scmp.eq.s32.totalorder %s15, 3
      %p117 = por %p115, %p116
      %p118 = scmp.ne.s32.totalorder %s107, %s108
      %p119 = scmp.eq.s32.totalorder %s15, 0
      %p120 = por %p118, %p119
      %p121 = scmp.ne.s32.totalorder %s107, %s108
      %p122 = scmp.eq.s32.totalorder %s16, 3
      %p123 = por %p121, %p122
      %p125 = scmp.ne.s32.totalorder %s108, %s124
      %p126 = scmp.eq.s32.totalorder %s16, 0
      %p127 = por %p125, %p126
      %p128 = scmp.le.s32.totalorder 1, %s10
      %p129 = scmp.lt.s32.totalorder %s10, 5
      %p130 = pnand %p128, %p129
      %p131 = pneg %p130
      // Predicated region
      $region9: #{decoder_pallas.7} parent=5 // pred_check
        _
      $region10: #{decoder_pallas.7} parent=5 // pred_check_branch
        %133 = sbr.rel (%p130) target = $region12
      $region11: #{decoder_pallas.7} parent=5 // pred_region
        %s134 = ssub.s32 %s10, 1
        // Predicated region
        $region13: #{decoder_pallas.7} parent=11 // pred_check
          %p135 = pneg %p69
        $region14: #{decoder_pallas.7} parent=11 // pred_check_branch
          %137 = sbr.rel (%p135) target = $region16
        $region15: #{decoder_pallas.7} parent=11 // pred_region
          _
        $region16: #{decoder_pallas.7} parent=11 // pred_fallthru
          _
        // Predicated region
        $region17: #{decoder_pallas.7} parent=11 // pred_check
          %p138 = pneg %p90
        $region18: #{decoder_pallas.7} parent=11 // pred_check_branch
          %140 = sbr.rel (%p138) target = $region20
        $region19: #{decoder_pallas.7} parent=11 // pred_region
          %s142 = ssub.s32 16, 16
          %143 = vsyncadd [#allocation4], %s142
          %s145 = sshll.u32 [#allocation3], 4
          %s146 = int_to_ptr.vmem [resolvable:$true] %s145
          %148 = dma.hbm_to_vmem [thread:$0]  %s2, 16, %s146, [#allocation4]
        $region20: #{decoder_pallas.7} parent=11 // pred_fallthru
          _
      $region12: #{decoder_pallas.7} parent=5 // pred_fallthru
        _
      %p149 = scmp.lt.s32.totalorder %s10, 4
      // Predicated region
      $region21: #{decoder_pallas.7} parent=5 // pred_check
        %p150 = pneg %p149
      $region22: #{decoder_pallas.7} parent=5 // pred_check_branch
        %152 = sbr.rel (%p150) target = $region24
      $region23: #{decoder_pallas.7} parent=5 // pred_region
        // Predicated region
        $region25: #{decoder_pallas.7} parent=23 // pred_check
          %p153 = pneg %p42
        $region26: #{decoder_pallas.7} parent=23 // pred_check_branch
          %155 = sbr.rel (%p153) target = $region28
        $region27: #{decoder_pallas.7} parent=23 // pred_region
          %p156 = scmp.lt.s32.totalorder %s17, 1
          %s157 = scalar_select %p156, %s17, 1
          %s158 = smul.addr %s157, 128
          %s159 = smul.addr %s158, 8
          %s160 = scalar_lea.vmem %s0, %s159
        $region28: #{decoder_pallas.7} parent=23 // pred_fallthru
          _
      $region24: #{decoder_pallas.7} parent=5 // pred_fallthru
        _
      %p161 = scmp.le.s32.totalorder 1, %s10
      %p162 = scmp.lt.s32.totalorder %s10, 5
      %p163 = pnand %p161, %p162
      %p164 = pneg %p163
      // Predicated region
      $region29: #{decoder_pallas.7} parent=5 // pred_check
        _
      $region30: #{decoder_pallas.7} parent=5 // pred_check_branch
        %166 = sbr.rel (%p163) target = $region32
      $region31: #{decoder_pallas.7} parent=5 // pred_region
        %s167 = ssub.s32 %s10, 1
        // Predicated region
        $region33: #{decoder_pallas.7} parent=31 // pred_check
          %p168 = pneg %p90
        $region34: #{decoder_pallas.7} parent=31 // pred_check_branch
          %170 = sbr.rel (%p168) target = $region36
        $region35: #{decoder_pallas.7} parent=31 // pred_region
          %171 = dma.done [#allocation4], 16
        $region36: #{decoder_pallas.7} parent=31 // pred_fallthru
          _
        %p172 = scmp.lt.s32.totalorder %s19, 1
        %s173 = scalar_select %p172, %s19, 1
        %s174 = smul.addr %s173, 128
        %s175 = smul.addr %s174, 8
        %s176 = scalar_lea.vmem %s0, %s175
        %p177 = pneg %p48
        %p178 = pneg %p45
        %p179 = pneg %p69
        %p180 = pneg %p66
        %p181 = pneg %p90
        %p182 = pneg %p87
        %p183 = pneg %p120
        %p184 = pneg %p117
        %s185 = smul.u32 %s19, 2
        %s186 = sadd.s32 %s185, %s20
        %s187 = smul.u32 16, %s186
        %p188 = scmp.lt.s32.totalorder %s187, 63
        %s189 = scalar_select %p188, %s187, 63
        %s190 = smul.addr %s189, 8
        %s191 = smul.addr %s190, 8
        %s192 = scalar_lea.vmem %s3, %s191
        %p193 = scmp.lt.s32.totalorder %s19, 1
        %s194 = scalar_select %p193, %s19, 1
        %s195 = smul.addr %s194, 128
        %s196 = smul.addr %s195, 8
        %s197 = scalar_lea.vmem %s0, %s196
        %s198 = smul.u32 %s19, 2
        %s199 = sadd.s32 %s198, %s20
        %s200 = smul.u32 16, %s199
        %p201 = scmp.lt.s32.totalorder %s200, 63
        %s202 = scalar_select %p201, %s200, 63
        %s203 = smul.addr %s202, 8
        %s204 = smul.addr %s203, 8
        %s205 = scalar_lea.vmem %s3, %s204
        %s206 = smul.u32 %s19, 2
        %s207 = sadd.s32 %s206, %s20
        %s208 = smul.u32 16, %s207
        %s209 = smul.u32 %s20, 16
        %vm210 = vcmask 261120
        %211 = vst.msk [vmem:[#allocation2] sm:$0xff] %vm210, 0.0
        %212 = vst.msk [vmem:[#allocation2 + $0x8] sm:$0xff] %vm210, 0.0
        %213 = vst.msk [vmem:[#allocation2 + $0x10] sm:$0xff] %vm210, 0.0
        %214 = vst.msk [vmem:[#allocation2 + $0x18] sm:$0xff] %vm210, 0.0
        %vm215 = vcmask 254976
        %216 = vst.msk [vmem:[#allocation2 + $0x20] sm:$0x3] %vm215, 0.0
        %217 = vst.msk [vmem:[#allocation2 + $0x28] sm:$0xff] %vm210, 0.0
        %218 = vst.msk [vmem:[#allocation2 + $0x30] sm:$0xff] %vm210, 0.0
        %219 = vst.msk [vmem:[#allocation2 + $0x38] sm:$0xff] %vm210, 0.0
        %220 = vst.msk [vmem:[#allocation2 + $0x40] sm:$0xff] %vm210, 0.0
        %221 = vst.msk [vmem:[#allocation2 + $0x48] sm:$0x3] %vm215, 0.0
        %222 = vst.msk [vmem:[#allocation2 + $0x50] sm:$0xff] %vm210, 0.0
        %223 = vst.msk [vmem:[#allocation2 + $0x58] sm:$0xff] %vm210, 0.0
        %224 = vst.msk [vmem:[#allocation2 + $0x60] sm:$0xff] %vm210, 0.0
        %225 = vst.msk [vmem:[#allocation2 + $0x68] sm:$0xff] %vm210, 0.0
        %226 = vst.msk [vmem:[#allocation2 + $0x70] sm:$0x3] %vm215, 0.0
        %227 = vst.msk [vmem:[#allocation2 + $0x78] sm:$0xff] %vm210, 0.0
        %228 = vst.msk [vmem:[#allocation2 + $0x80] sm:$0xff] %vm210, 0.0
        %229 = vst.msk [vmem:[#allocation2 + $0x88] sm:$0xff] %vm210, 0.0
        %230 = vst.msk [vmem:[#allocation2 + $0x90] sm:$0xff] %vm210, 0.0
        %231 = vst.msk [vmem:[#allocation2 + $0x98] sm:$0x3] %vm215, 0.0
        %232 = vst.msk [vmem:[#allocation2 + $0xa0] sm:$0xff] %vm210, 0.0
        %233 = vst.msk [vmem:[#allocation2 + $0xa8] sm:$0xff] %vm210, 0.0
        %234 = vst.msk [vmem:[#allocation2 + $0xb0] sm:$0xff] %vm210, 0.0
        %235 = vst.msk [vmem:[#allocation2 + $0xb8] sm:$0xff] %vm210, 0.0
        %236 = vst.msk [vmem:[#allocation2 + $0xc0] sm:$0x3] %vm215, 0.0
        %237 = vst.msk [vmem:[#allocation2 + $0xc8] sm:$0xff] %vm210, 0.0
        %238 = vst.msk [vmem:[#allocation2 + $0xd0] sm:$0xff] %vm210, 0.0
        %239 = vst.msk [vmem:[#allocation2 + $0xd8] sm:$0xff] %vm210, 0.0
        %240 = vst.msk [vmem:[#allocation2 + $0xe0] sm:$0xff] %vm210, 0.0
        %241 = vst.msk [vmem:[#allocation2 + $0xe8] sm:$0x3] %vm215, 0.0
        %242 = vst.msk [vmem:[#allocation2 + $0xf0] sm:$0xff] %vm210, 0.0
        %243 = vst.msk [vmem:[#allocation2 + $0xf8] sm:$0xff] %vm210, 0.0
        %244 = vst.msk [vmem:[#allocation2 + $0x100] sm:$0xff] %vm210, 0.0
        %245 = vst.msk [vmem:[#allocation2 + $0x108] sm:$0xff] %vm210, 0.0
        %246 = vst.msk [vmem:[#allocation2 + $0x110] sm:$0x3] %vm215, 0.0
        %247 = vst.msk [vmem:[#allocation2 + $0x118] sm:$0xff] %vm210, 0.0
        %248 = vst.msk [vmem:[#allocation2 + $0x120] sm:$0xff] %vm210, 0.0
        %249 = vst.msk [vmem:[#allocation2 + $0x128] sm:$0xff] %vm210, 0.0
        %250 = vst.msk [vmem:[#allocation2 + $0x130] sm:$0xff] %vm210, 0.0
        %251 = vst.msk [vmem:[#allocation2 + $0x138] sm:$0x3] %vm215, 0.0
        %252 = vst.msk [vmem:[#allocation2 + $0x140] sm:$0xff] %vm210, 0.0
        %253 = vst.msk [vmem:[#allocation2 + $0x148] sm:$0xff] %vm210, 0.0
        %254 = vst.msk [vmem:[#allocation2 + $0x150] sm:$0xff] %vm210, 0.0
        %255 = vst.msk [vmem:[#allocation2 + $0x158] sm:$0xff] %vm210, 0.0
        %256 = vst.msk [vmem:[#allocation2 + $0x160] sm:$0x3] %vm215, 0.0
        %257 = vst.msk [vmem:[#allocation2 + $0x168] sm:$0xff] %vm210, 0.0
        %258 = vst.msk [vmem:[#allocation2 + $0x170] sm:$0xff] %vm210, 0.0
        %259 = vst.msk [vmem:[#allocation2 + $0x178] sm:$0xff] %vm210, 0.0
        %260 = vst.msk [vmem:[#allocation2 + $0x180] sm:$0xff] %vm210, 0.0
        %261 = vst.msk [vmem:[#allocation2 + $0x188] sm:$0x3] %vm215, 0.0
        %262 = vst.msk [vmem:[#allocation2 + $0x190] sm:$0xff] %vm210, 0.0
        %263 = vst.msk [vmem:[#allocation2 + $0x198] sm:$0xff] %vm210, 0.0
        %264 = vst.msk [vmem:[#allocation2 + $0x1a0] sm:$0xff] %vm210, 0.0
        %265 = vst.msk [vmem:[#allocation2 + $0x1a8] sm:$0xff] %vm210, 0.0
        %266 = vst.msk [vmem:[#allocation2 + $0x1b0] sm:$0x3] %vm215, 0.0
        %267 = vst.msk [vmem:[#allocation2 + $0x1b8] sm:$0xff] %vm210, 0.0
        %268 = vst.msk [vmem:[#allocation2 + $0x1c0] sm:$0xff] %vm210, 0.0
        %269 = vst.msk [vmem:[#allocation2 + $0x1c8] sm:$0xff] %vm210, 0.0
        %270 = vst.msk [vmem:[#allocation2 + $0x1d0] sm:$0xff] %vm210, 0.0
        %271 = vst.msk [vmem:[#allocation2 + $0x1d8] sm:$0x3] %vm215, 0.0
        %272 = vst.msk [vmem:[#allocation2 + $0x1e0] sm:$0xff] %vm210, 0.0
        %273 = vst.msk [vmem:[#allocation2 + $0x1e8] sm:$0xff] %vm210, 0.0
        %274 = vst.msk [vmem:[#allocation2 + $0x1f0] sm:$0xff] %vm210, 0.0
        %275 = vst.msk [vmem:[#allocation2 + $0x1f8] sm:$0xff] %vm210, 0.0
        %276 = vst.msk [vmem:[#allocation2 + $0x200] sm:$0x3] %vm215, 0.0
        %277 = vst.msk [vmem:[#allocation2 + $0x208] sm:$0xff] %vm210, 0.0
        %278 = vst.msk [vmem:[#allocation2 + $0x210] sm:$0xff] %vm210, 0.0
        %279 = vst.msk [vmem:[#allocation2 + $0x218] sm:$0xff] %vm210, 0.0
        %280 = vst.msk [vmem:[#allocation2 + $0x220] sm:$0xff] %vm210, 0.0
        %281 = vst.msk [vmem:[#allocation2 + $0x228] sm:$0x3] %vm215, 0.0
        %282 = vst.msk [vmem:[#allocation2 + $0x230] sm:$0xff] %vm210, 0.0
        %283 = vst.msk [vmem:[#allocation2 + $0x238] sm:$0xff] %vm210, 0.0
        %284 = vst.msk [vmem:[#allocation2 + $0x240] sm:$0xff] %vm210, 0.0
        %285 = vst.msk [vmem:[#allocation2 + $0x248] sm:$0xff] %vm210, 0.0
        %286 = vst.msk [vmem:[#allocation2 + $0x250] sm:$0x3] %vm215, 0.0
        %287 = vst.msk [vmem:[#allocation2 + $0x258] sm:$0xff] %vm210, 0.0
        %288 = vst.msk [vmem:[#allocation2 + $0x260] sm:$0xff] %vm210, 0.0
        %289 = vst.msk [vmem:[#allocation2 + $0x268] sm:$0xff] %vm210, 0.0
        %290 = vst.msk [vmem:[#allocation2 + $0x270] sm:$0xff] %vm210, 0.0
        %291 = vst.msk [vmem:[#allocation2 + $0x278] sm:$0x3] %vm215, 0.0
        %292 = vst.msk [vmem:[#allocation2 + $0x280] sm:$0xff] %vm210, 0.0
        %293 = vst.msk [vmem:[#allocation2 + $0x288] sm:$0xff] %vm210, 0.0
        %294 = vst.msk [vmem:[#allocation2 + $0x290] sm:$0xff] %vm210, 0.0
        %295 = vst.msk [vmem:[#allocation2 + $0x298] sm:$0xff] %vm210, 0.0
        %296 = vst.msk [vmem:[#allocation2 + $0x2a0] sm:$0x3] %vm215, 0.0
        %297 = vst.msk [vmem:[#allocation2 + $0x2a8] sm:$0xff] %vm210, 0.0
        %298 = vst.msk [vmem:[#allocation2 + $0x2b0] sm:$0xff] %vm210, 0.0
        %299 = vst.msk [vmem:[#allocation2 + $0x2b8] sm:$0xff] %vm210, 0.0
        %300 = vst.msk [vmem:[#allocation2 + $0x2c0] sm:$0xff] %vm210, 0.0
        %301 = vst.msk [vmem:[#allocation2 + $0x2c8] sm:$0x3] %vm215, 0.0
        %302 = vst.msk [vmem:[#allocation2 + $0x2d0] sm:$0xff] %vm210, 0.0
        %303 = vst.msk [vmem:[#allocation2 + $0x2d8] sm:$0xff] %vm210, 0.0
        %304 = vst.msk [vmem:[#allocation2 + $0x2e0] sm:$0xff] %vm210, 0.0
        %305 = vst.msk [vmem:[#allocation2 + $0x2e8] sm:$0xff] %vm210, 0.0
        %306 = vst.msk [vmem:[#allocation2 + $0x2f0] sm:$0x3] %vm215, 0.0
        %307 = vst.msk [vmem:[#allocation2 + $0x2f8] sm:$0xff] %vm210, 0.0
        %308 = vst.msk [vmem:[#allocation2 + $0x300] sm:$0xff] %vm210, 0.0
        %309 = vst.msk [vmem:[#allocation2 + $0x308] sm:$0xff] %vm210, 0.0
        %310 = vst.msk [vmem:[#allocation2 + $0x310] sm:$0xff] %vm210, 0.0
        %311 = vst.msk [vmem:[#allocation2 + $0x318] sm:$0x3] %vm215, 0.0
        %312 = vst.msk [vmem:[#allocation2 + $0x320] sm:$0xff] %vm210, 0.0
        %313 = vst.msk [vmem:[#allocation2 + $0x328] sm:$0xff] %vm210, 0.0
        %314 = vst.msk [vmem:[#allocation2 + $0x330] sm:$0xff] %vm210, 0.0
        %315 = vst.msk [vmem:[#allocation2 + $0x338] sm:$0xff] %vm210, 0.0
        %316 = vst.msk [vmem:[#allocation2 + $0x340] sm:$0x3] %vm215, 0.0
        %317 = vst.msk [vmem:[#allocation2 + $0x348] sm:$0xff] %vm210, 0.0
        %318 = vst.msk [vmem:[#allocation2 + $0x350] sm:$0xff] %vm210, 0.0
        %319 = vst.msk [vmem:[#allocation2 + $0x358] sm:$0xff] %vm210, 0.0
        %320 = vst.msk [vmem:[#allocation2 + $0x360] sm:$0xff] %vm210, 0.0
        %321 = vst.msk [vmem:[#allocation2 + $0x368] sm:$0x3] %vm215, 0.0
        %322 = vst.msk [vmem:[#allocation2 + $0x370] sm:$0xff] %vm210, 0.0
        %323 = vst.msk [vmem:[#allocation2 + $0x378] sm:$0xff] %vm210, 0.0
        %324 = vst.msk [vmem:[#allocation2 + $0x380] sm:$0xff] %vm210, 0.0
        %325 = vst.msk [vmem:[#allocation2 + $0x388] sm:$0xff] %vm210, 0.0
        %326 = vst.msk [vmem:[#allocation2 + $0x390] sm:$0x3] %vm215, 0.0
        %327 = vst.msk [vmem:[#allocation2 + $0x398] sm:$0xff] %vm210, 0.0
        %328 = vst.msk [vmem:[#allocation2 + $0x3a0] sm:$0xff] %vm210, 0.0
        %329 = vst.msk [vmem:[#allocation2 + $0x3a8] sm:$0xff] %vm210, 0.0
        %330 = vst.msk [vmem:[#allocation2 + $0x3b0] sm:$0xff] %vm210, 0.0
        %331 = vst.msk [vmem:[#allocation2 + $0x3b8] sm:$0x3] %vm215, 0.0
        %332 = vst.msk [vmem:[#allocation2 + $0x3c0] sm:$0xff] %vm210, 0.0
        %333 = vst.msk [vmem:[#allocation2 + $0x3c8] sm:$0xff] %vm210, 0.0
        %334 = vst.msk [vmem:[#allocation2 + $0x3d0] sm:$0xff] %vm210, 0.0
        %335 = vst.msk [vmem:[#allocation2 + $0x3d8] sm:$0xff] %vm210, 0.0
        %336 = vst.msk [vmem:[#allocation2 + $0x3e0] sm:$0x3] %vm215, 0.0
        %337 = vst.msk [vmem:[#allocation2 + $0x3e8] sm:$0xff] %vm210, 0.0
        %338 = vst.msk [vmem:[#allocation2 + $0x3f0] sm:$0xff] %vm210, 0.0
        %339 = vst.msk [vmem:[#allocation2 + $0x3f8] sm:$0xff] %vm210, 0.0
        %340 = vst.msk [vmem:[#allocation2 + $0x400] sm:$0xff] %vm210, 0.0
        %341 = vst.msk [vmem:[#allocation2 + $0x408] sm:$0x3] %vm215, 0.0
        %342 = vst.msk [vmem:[#allocation2 + $0x410] sm:$0xff] %vm210, 0.0
        %343 = vst.msk [vmem:[#allocation2 + $0x418] sm:$0xff] %vm210, 0.0
        %344 = vst.msk [vmem:[#allocation2 + $0x420] sm:$0xff] %vm210, 0.0
        %345 = vst.msk [vmem:[#allocation2 + $0x428] sm:$0xff] %vm210, 0.0
        %346 = vst.msk [vmem:[#allocation2 + $0x430] sm:$0x3] %vm215, 0.0
        %347 = vst.msk [vmem:[#allocation2 + $0x438] sm:$0xff] %vm210, 0.0
        %348 = vst.msk [vmem:[#allocation2 + $0x440] sm:$0xff] %vm210, 0.0
        %349 = vst.msk [vmem:[#allocation2 + $0x448] sm:$0xff] %vm210, 0.0
        %350 = vst.msk [vmem:[#allocation2 + $0x450] sm:$0xff] %vm210, 0.0
        %351 = vst.msk [vmem:[#allocation2 + $0x458] sm:$0x3] %vm215, 0.0
        %352 = vst.msk [vmem:[#allocation2 + $0x460] sm:$0xff] %vm210, 0.0
        %353 = vst.msk [vmem:[#allocation2 + $0x468] sm:$0xff] %vm210, 0.0
        %354 = vst.msk [vmem:[#allocation2 + $0x470] sm:$0xff] %vm210, 0.0
        %355 = vst.msk [vmem:[#allocation2 + $0x478] sm:$0xff] %vm210, 0.0
        %356 = vst.msk [vmem:[#allocation2 + $0x480] sm:$0x3] %vm215, 0.0
        %357 = vst.msk [vmem:[#allocation2 + $0x488] sm:$0xff] %vm210, 0.0
        %358 = vst.msk [vmem:[#allocation2 + $0x490] sm:$0xff] %vm210, 0.0
        %359 = vst.msk [vmem:[#allocation2 + $0x498] sm:$0xff] %vm210, 0.0
        %360 = vst.msk [vmem:[#allocation2 + $0x4a0] sm:$0xff] %vm210, 0.0
        %361 = vst.msk [vmem:[#allocation2 + $0x4a8] sm:$0x3] %vm215, 0.0
        %362 = vst.msk [vmem:[#allocation2 + $0x4b0] sm:$0xff] %vm210, 0.0
        %363 = vst.msk [vmem:[#allocation2 + $0x4b8] sm:$0xff] %vm210, 0.0
        %364 = vst.msk [vmem:[#allocation2 + $0x4c0] sm:$0xff] %vm210, 0.0
        %365 = vst.msk [vmem:[#allocation2 + $0x4c8] sm:$0xff] %vm210, 0.0
        %366 = vst.msk [vmem:[#allocation2 + $0x4d0] sm:$0x3] %vm215, 0.0
        %367 = vst.msk [vmem:[#allocation2 + $0x4d8] sm:$0xff] %vm210, 0.0
        %368 = vst.msk [vmem:[#allocation2 + $0x4e0] sm:$0xff] %vm210, 0.0
        %369 = vst.msk [vmem:[#allocation2 + $0x4e8] sm:$0xff] %vm210, 0.0
        %370 = vst.msk [vmem:[#allocation2 + $0x4f0] sm:$0xff] %vm210, 0.0
        %371 = vst.msk [vmem:[#allocation2 + $0x4f8] sm:$0x3] %vm215, 0.0
        %372 = vst.msk [vmem:[#allocation2 + $0x500] sm:$0xff] %vm210, 0.0
        %373 = vst.msk [vmem:[#allocation2 + $0x508] sm:$0xff] %vm210, 0.0
        %374 = vst.msk [vmem:[#allocation2 + $0x510] sm:$0xff] %vm210, 0.0
        %375 = vst.msk [vmem:[#allocation2 + $0x518] sm:$0xff] %vm210, 0.0
        %376 = vst.msk [vmem:[#allocation2 + $0x520] sm:$0x3] %vm215, 0.0
        %377 = vst.msk [vmem:[#allocation2 + $0x528] sm:$0xff] %vm210, 0.0
        %378 = vst.msk [vmem:[#allocation2 + $0x530] sm:$0xff] %vm210, 0.0
        %379 = vst.msk [vmem:[#allocation2 + $0x538] sm:$0xff] %vm210, 0.0
        %380 = vst.msk [vmem:[#allocation2 + $0x540] sm:$0xff] %vm210, 0.0
        %381 = vst.msk [vmem:[#allocation2 + $0x548] sm:$0x3] %vm215, 0.0
        %v382 = vld [vmem:[%s197] sm:$0xff]
        %v383 = vld [vmem:[%s197 + $0x8] sm:$0xff]
        %v384 = vld [vmem:[%s197 + $0x10] sm:$0xff]
        %v385 = vld [vmem:[%s197 + $0x18] sm:$0xff]
        %v386 = vld [vmem:[%s197 + $0x20] sm:$0xff]
        %v387 = vld [vmem:[%s197 + $0x28] sm:$0xff]
        %v388 = vld [vmem:[%s197 + $0x30] sm:$0xff]
        %v389 = vld [vmem:[%s197 + $0x38] sm:$0xff]
        %v390 = vld [vmem:[%s197 + $0x40] sm:$0xff]
        %v391 = vld [vmem:[%s197 + $0x48] sm:$0xff]
        %v392 = vld [vmem:[%s197 + $0x50] sm:$0xff]
        %v393 = vld [vmem:[%s197 + $0x58] sm:$0xff]
        %v394 = vld [vmem:[%s197 + $0x60] sm:$0xff]
        %v395 = vld [vmem:[%s197 + $0x68] sm:$0xff]
        %v396 = vld [vmem:[%s197 + $0x70] sm:$0xff]
        %v397 = vld [vmem:[%s197 + $0x78] sm:$0xff]
        %v398 = vld [vmem:[%s197 + $0x80] sm:$0xff]
        %v399 = vld [vmem:[%s197 + $0x88] sm:$0xff]
        %v400 = vld [vmem:[%s197 + $0x90] sm:$0xff]
        %v401 = vld [vmem:[%s197 + $0x98] sm:$0xff]
        %v402 = vld [vmem:[%s197 + $0xa0] sm:$0xff]
        %v403 = vld [vmem:[%s197 + $0xa8] sm:$0xff]
        %v404 = vld [vmem:[%s197 + $0xb0] sm:$0xff]
        %v405 = vld [vmem:[%s197 + $0xb8] sm:$0xff]
        %v406 = vld [vmem:[%s197 + $0xc0] sm:$0xff]
        %v407 = vld [vmem:[%s197 + $0xc8] sm:$0xff]
        %v408 = vld [vmem:[%s197 + $0xd0] sm:$0xff]
        %v409 = vld [vmem:[%s197 + $0xd8] sm:$0xff]
        %v410 = vld [vmem:[%s197 + $0xe0] sm:$0xff]
        %v411 = vld [vmem:[%s197 + $0xe8] sm:$0xff]
        %v412 = vld [vmem:[%s197 + $0xf0] sm:$0xff]
        %v413 = vld [vmem:[%s197 + $0xf8] sm:$0xff]
        %v414 = vld [vmem:[%s197 + $0x100] sm:$0xff]
        %v415 = vld [vmem:[%s197 + $0x108] sm:$0xff]
        %v416 = vld [vmem:[%s197 + $0x110] sm:$0xff]
        %v417 = vld [vmem:[%s197 + $0x118] sm:$0xff]
        %v418 = vld [vmem:[%s197 + $0x120] sm:$0xff]
        %v419 = vld [vmem:[%s197 + $0x128] sm:$0xff]
        %v420 = vld [vmem:[%s197 + $0x130] sm:$0xff]
        %v421 = vld [vmem:[%s197 + $0x138] sm:$0xff]
        %v422 = vld [vmem:[%s197 + $0x140] sm:$0xff]
        %v423 = vld [vmem:[%s197 + $0x148] sm:$0xff]
        %v424 = vld [vmem:[%s197 + $0x150] sm:$0xff]
        %v425 = vld [vmem:[%s197 + $0x158] sm:$0xff]
        %v426 = vld [vmem:[%s197 + $0x160] sm:$0xff]
        %v427 = vld [vmem:[%s197 + $0x168] sm:$0xff]
        %v428 = vld [vmem:[%s197 + $0x170] sm:$0xff]
        %v429 = vld [vmem:[%s197 + $0x178] sm:$0xff]
        %v430 = vld [vmem:[%s197 + $0x180] sm:$0xff]
        %v431 = vld [vmem:[%s197 + $0x188] sm:$0xff]
        %v432 = vld [vmem:[%s197 + $0x190] sm:$0xff]
        %v433 = vld [vmem:[%s197 + $0x198] sm:$0xff]
        %v434 = vld [vmem:[%s197 + $0x1a0] sm:$0xff]
        %v435 = vld [vmem:[%s197 + $0x1a8] sm:$0xff]
        %v436 = vld [vmem:[%s197 + $0x1b0] sm:$0xff]
        %v437 = vld [vmem:[%s197 + $0x1b8] sm:$0xff]
        %v438 = vld [vmem:[%s197 + $0x1c0] sm:$0xff]
        %v439 = vld [vmem:[%s197 + $0x1c8] sm:$0xff]
        %v440 = vld [vmem:[%s197 + $0x1d0] sm:$0xff]
        %v441 = vld [vmem:[%s197 + $0x1d8] sm:$0xff]
        %v442 = vld [vmem:[%s197 + $0x1e0] sm:$0xff]
        %v443 = vld [vmem:[%s197 + $0x1e8] sm:$0xff]
        %v444 = vld [vmem:[%s197 + $0x1f0] sm:$0xff]
        %v445 = vld [vmem:[%s197 + $0x1f8] sm:$0xff]
        %v446 = vld [vmem:[%s197 + $0x200] sm:$0xff]
        %v447 = vld [vmem:[%s197 + $0x208] sm:$0xff]
        %v448 = vld [vmem:[%s197 + $0x210] sm:$0xff]
        %v449 = vld [vmem:[%s197 + $0x218] sm:$0xff]
        %v450 = vld [vmem:[%s197 + $0x220] sm:$0xff]
        %v451 = vld [vmem:[%s197 + $0x228] sm:$0xff]
        %v452 = vld [vmem:[%s197 + $0x230] sm:$0xff]
        %v453 = vld [vmem:[%s197 + $0x238] sm:$0xff]
        %v454 = vld [vmem:[%s197 + $0x240] sm:$0xff]
        %v455 = vld [vmem:[%s197 + $0x248] sm:$0xff]
        %v456 = vld [vmem:[%s197 + $0x250] sm:$0xff]
        %v457 = vld [vmem:[%s197 + $0x258] sm:$0xff]
        %v458 = vld [vmem:[%s197 + $0x260] sm:$0xff]
        %v459 = vld [vmem:[%s197 + $0x268] sm:$0xff]
        %v460 = vld [vmem:[%s197 + $0x270] sm:$0xff]
        %v461 = vld [vmem:[%s197 + $0x278] sm:$0xff]
        %v462 = vld [vmem:[%s197 + $0x280] sm:$0xff]
        %v463 = vld [vmem:[%s197 + $0x288] sm:$0xff]
        %v464 = vld [vmem:[%s197 + $0x290] sm:$0xff]
        %v465 = vld [vmem:[%s197 + $0x298] sm:$0xff]
        %v466 = vld [vmem:[%s197 + $0x2a0] sm:$0xff]
        %v467 = vld [vmem:[%s197 + $0x2a8] sm:$0xff]
        %v468 = vld [vmem:[%s197 + $0x2b0] sm:$0xff]
        %v469 = vld [vmem:[%s197 + $0x2b8] sm:$0xff]
        %v470 = vld [vmem:[%s197 + $0x2c0] sm:$0xff]
        %v471 = vld [vmem:[%s197 + $0x2c8] sm:$0xff]
        %v472 = vld [vmem:[%s197 + $0x2d0] sm:$0xff]
        %v473 = vld [vmem:[%s197 + $0x2d8] sm:$0xff]
        %v474 = vld [vmem:[%s197 + $0x2e0] sm:$0xff]
        %v475 = vld [vmem:[%s197 + $0x2e8] sm:$0xff]
        %v476 = vld [vmem:[%s197 + $0x2f0] sm:$0xff]
        %v477 = vld [vmem:[%s197 + $0x2f8] sm:$0xff]
        %v478 = vld [vmem:[%s197 + $0x300] sm:$0xff]
        %v479 = vld [vmem:[%s197 + $0x308] sm:$0xff]
        %v480 = vld [vmem:[%s197 + $0x310] sm:$0xff]
        %v481 = vld [vmem:[%s197 + $0x318] sm:$0xff]
        %v482 = vld [vmem:[%s197 + $0x320] sm:$0xff]
        %v483 = vld [vmem:[%s197 + $0x328] sm:$0xff]
        %v484 = vld [vmem:[%s197 + $0x330] sm:$0xff]
        %v485 = vld [vmem:[%s197 + $0x338] sm:$0xff]
        %v486 = vld [vmem:[%s197 + $0x340] sm:$0xff]
        %v487 = vld [vmem:[%s197 + $0x348] sm:$0xff]
        %v488 = vld [vmem:[%s197 + $0x350] sm:$0xff]
        %v489 = vld [vmem:[%s197 + $0x358] sm:$0xff]
        %v490 = vld [vmem:[%s197 + $0x360] sm:$0xff]
        %v491 = vld [vmem:[%s197 + $0x368] sm:$0xff]
        %v492 = vld [vmem:[%s197 + $0x370] sm:$0xff]
        %v493 = vld [vmem:[%s197 + $0x378] sm:$0xff]
        %v494 = vld [vmem:[%s197 + $0x380] sm:$0xff]
        %v495 = vld [vmem:[%s197 + $0x388] sm:$0xff]
        %v496 = vld [vmem:[%s197 + $0x390] sm:$0xff]
        %v497 = vld [vmem:[%s197 + $0x398] sm:$0xff]
        %v498 = vld [vmem:[%s197 + $0x3a0] sm:$0xff]
        %v499 = vld [vmem:[%s197 + $0x3a8] sm:$0xff]
        %v500 = vld [vmem:[%s197 + $0x3b0] sm:$0xff]
        %v501 = vld [vmem:[%s197 + $0x3b8] sm:$0xff]
        %v502 = vld [vmem:[%s197 + $0x3c0] sm:$0xff]
        %v503 = vld [vmem:[%s197 + $0x3c8] sm:$0xff]
        %v504 = vld [vmem:[%s197 + $0x3d0] sm:$0xff]
        %v505 = vld [vmem:[%s197 + $0x3d8] sm:$0xff]
        %v506 = vld [vmem:[%s197 + $0x3e0] sm:$0xff]
        %v507 = vld [vmem:[%s197 + $0x3e8] sm:$0xff]
        %v508 = vld [vmem:[%s197 + $0x3f0] sm:$0xff]
        %v509 = vld [vmem:[%s197 + $0x3f8] sm:$0xff]
        %s510 = scalar_lea.vmem [#allocation2], 40
        %511 = vst.msk [vmem:[%s510 + $0x1] sm:$0xff] %vm210, %v382
        %512 = vst.msk [vmem:[%s510 + $0x9] sm:$0xff] %vm210, %v383
        %513 = vst.msk [vmem:[%s510 + $0x11] sm:$0xff] %vm210, %v384
        %514 = vst.msk [vmem:[%s510 + $0x19] sm:$0xff] %vm210, %v385
        %515 = vst.msk [vmem:[%s510 + $0x29] sm:$0xff] %vm210, %v386
        %516 = vst.msk [vmem:[%s510 + $0x31] sm:$0xff] %vm210, %v387
        %517 = vst.msk [vmem:[%s510 + $0x39] sm:$0xff] %vm210, %v388
        %518 = vst.msk [vmem:[%s510 + $0x41] sm:$0xff] %vm210, %v389
        %519 = vst.msk [vmem:[%s510 + $0x51] sm:$0xff] %vm210, %v390
        %520 = vst.msk [vmem:[%s510 + $0x59] sm:$0xff] %vm210, %v391
        %521 = vst.msk [vmem:[%s510 + $0x61] sm:$0xff] %vm210, %v392
        %522 = vst.msk [vmem:[%s510 + $0x69] sm:$0xff] %vm210, %v393
        %523 = vst.msk [vmem:[%s510 + $0x79] sm:$0xff] %vm210, %v394
        %524 = vst.msk [vmem:[%s510 + $0x81] sm:$0xff] %vm210, %v395
        %525 = vst.msk [vmem:[%s510 + $0x89] sm:$0xff] %vm210, %v396
        %526 = vst.msk [vmem:[%s510 + $0x91] sm:$0xff] %vm210, %v397
        %527 = vst.msk [vmem:[%s510 + $0xa1] sm:$0xff] %vm210, %v398
        %528 = vst.msk [vmem:[%s510 + $0xa9] sm:$0xff] %vm210, %v399
        %529 = vst.msk [vmem:[%s510 + $0xb1] sm:$0xff] %vm210, %v400
        %530 = vst.msk [vmem:[%s510 + $0xb9] sm:$0xff] %vm210, %v401
        %531 = vst.msk [vmem:[%s510 + $0xc9] sm:$0xff] %vm210, %v402
        %532 = vst.msk [vmem:[%s510 + $0xd1] sm:$0xff] %vm210, %v403
        %533 = vst.msk [vmem:[%s510 + $0xd9] sm:$0xff] %vm210, %v404
        %534 = vst.msk [vmem:[%s510 + $0xe1] sm:$0xff] %vm210, %v405
        %535 = vst.msk [vmem:[%s510 + $0xf1] sm:$0xff] %vm210, %v406
        %536 = vst.msk [vmem:[%s510 + $0xf9] sm:$0xff] %vm210, %v407
        %537 = vst.msk [vmem:[%s510 + $0x101] sm:$0xff] %vm210, %v408
        %538 = vst.msk [vmem:[%s510 + $0x109] sm:$0xff] %vm210, %v409
        %539 = vst.msk [vmem:[%s510 + $0x119] sm:$0xff] %vm210, %v410
        %540 = vst.msk [vmem:[%s510 + $0x121] sm:$0xff] %vm210, %v411
        %541 = vst.msk [vmem:[%s510 + $0x129] sm:$0xff] %vm210, %v412
        %542 = vst.msk [vmem:[%s510 + $0x131] sm:$0xff] %vm210, %v413
        %543 = vst.msk [vmem:[%s510 + $0x141] sm:$0xff] %vm210, %v414
        %544 = vst.msk [vmem:[%s510 + $0x149] sm:$0xff] %vm210, %v415
        %545 = vst.msk [vmem:[%s510 + $0x151] sm:$0xff] %vm210, %v416
        %546 = vst.msk [vmem:[%s510 + $0x159] sm:$0xff] %vm210, %v417
        %547 = vst.msk [vmem:[%s510 + $0x169] sm:$0xff] %vm210, %v418
        %548 = vst.msk [vmem:[%s510 + $0x171] sm:$0xff] %vm210, %v419
        %549 = vst.msk [vmem:[%s510 + $0x179] sm:$0xff] %vm210, %v420
        %550 = vst.msk [vmem:[%s510 + $0x181] sm:$0xff] %vm210, %v421
        %551 = vst.msk [vmem:[%s510 + $0x191] sm:$0xff] %vm210, %v422
        %552 = vst.msk [vmem:[%s510 + $0x199] sm:$0xff] %vm210, %v423
        %553 = vst.msk [vmem:[%s510 + $0x1a1] sm:$0xff] %vm210, %v424
        %554 = vst.msk [vmem:[%s510 + $0x1a9] sm:$0xff] %vm210, %v425
        %555 = vst.msk [vmem:[%s510 + $0x1b9] sm:$0xff] %vm210, %v426
        %556 = vst.msk [vmem:[%s510 + $0x1c1] sm:$0xff] %vm210, %v427
        %557 = vst.msk [vmem:[%s510 + $0x1c9] sm:$0xff] %vm210, %v428
        %558 = vst.msk [vmem:[%s510 + $0x1d1] sm:$0xff] %vm210, %v429
        %559 = vst.msk [vmem:[%s510 + $0x1e1] sm:$0xff] %vm210, %v430
        %560 = vst.msk [vmem:[%s510 + $0x1e9] sm:$0xff] %vm210, %v431
        %561 = vst.msk [vmem:[%s510 + $0x1f1] sm:$0xff] %vm210, %v432
        %562 = vst.msk [vmem:[%s510 + $0x1f9] sm:$0xff] %vm210, %v433
        %563 = vst.msk [vmem:[%s510 + $0x209] sm:$0xff] %vm210, %v434
        %564 = vst.msk [vmem:[%s510 + $0x211] sm:$0xff] %vm210, %v435
        %565 = vst.msk [vmem:[%s510 + $0x219] sm:$0xff] %vm210, %v436
        %566 = vst.msk [vmem:[%s510 + $0x221] sm:$0xff] %vm210, %v437
        %567 = vst.msk [vmem:[%s510 + $0x231] sm:$0xff] %vm210, %v438
        %568 = vst.msk [vmem:[%s510 + $0x239] sm:$0xff] %vm210, %v439
        %569 = vst.msk [vmem:[%s510 + $0x241] sm:$0xff] %vm210, %v440
        %570 = vst.msk [vmem:[%s510 + $0x249] sm:$0xff] %vm210, %v441
        %571 = vst.msk [vmem:[%s510 + $0x259] sm:$0xff] %vm210, %v442
        %572 = vst.msk [vmem:[%s510 + $0x261] sm:$0xff] %vm210, %v443
        %573 = vst.msk [vmem:[%s510 + $0x269] sm:$0xff] %vm210, %v444
        %574 = vst.msk [vmem:[%s510 + $0x271] sm:$0xff] %vm210, %v445
        %575 = vst.msk [vmem:[%s510 + $0x281] sm:$0xff] %vm210, %v446
        %576 = vst.msk [vmem:[%s510 + $0x289] sm:$0xff] %vm210, %v447
        %577 = vst.msk [vmem:[%s510 + $0x291] sm:$0xff] %vm210, %v448
        %578 = vst.msk [vmem:[%s510 + $0x299] sm:$0xff] %vm210, %v449
        %579 = vst.msk [vmem:[%s510 + $0x2a9] sm:$0xff] %vm210, %v450
        %580 = vst.msk [vmem:[%s510 + $0x2b1] sm:$0xff] %vm210, %v451
        %581 = vst.msk [vmem:[%s510 + $0x2b9] sm:$0xff] %vm210, %v452
        %582 = vst.msk [vmem:[%s510 + $0x2c1] sm:$0xff] %vm210, %v453
        %583 = vst.msk [vmem:[%s510 + $0x2d1] sm:$0xff] %vm210, %v454
        %584 = vst.msk [vmem:[%s510 + $0x2d9] sm:$0xff] %vm210, %v455
        %585 = vst.msk [vmem:[%s510 + $0x2e1] sm:$0xff] %vm210, %v456
        %586 = vst.msk [vmem:[%s510 + $0x2e9] sm:$0xff] %vm210, %v457
        %587 = vst.msk [vmem:[%s510 + $0x2f9] sm:$0xff] %vm210, %v458
        %588 = vst.msk [vmem:[%s510 + $0x301] sm:$0xff] %vm210, %v459
        %589 = vst.msk [vmem:[%s510 + $0x309] sm:$0xff] %vm210, %v460
        %590 = vst.msk [vmem:[%s510 + $0x311] sm:$0xff] %vm210, %v461
        %591 = vst.msk [vmem:[%s510 + $0x321] sm:$0xff] %vm210, %v462
        %592 = vst.msk [vmem:[%s510 + $0x329] sm:$0xff] %vm210, %v463
        %593 = vst.msk [vmem:[%s510 + $0x331] sm:$0xff] %vm210, %v464
        %594 = vst.msk [vmem:[%s510 + $0x339] sm:$0xff] %vm210, %v465
        %595 = vst.msk [vmem:[%s510 + $0x349] sm:$0xff] %vm210, %v466
        %596 = vst.msk [vmem:[%s510 + $0x351] sm:$0xff] %vm210, %v467
        %597 = vst.msk [vmem:[%s510 + $0x359] sm:$0xff] %vm210, %v468
        %598 = vst.msk [vmem:[%s510 + $0x361] sm:$0xff] %vm210, %v469
        %599 = vst.msk [vmem:[%s510 + $0x371] sm:$0xff] %vm210, %v470
        %600 = vst.msk [vmem:[%s510 + $0x379] sm:$0xff] %vm210, %v471
        %601 = vst.msk [vmem:[%s510 + $0x381] sm:$0xff] %vm210, %v472
        %602 = vst.msk [vmem:[%s510 + $0x389] sm:$0xff] %vm210, %v473
        %603 = vst.msk [vmem:[%s510 + $0x399] sm:$0xff] %vm210, %v474
        %604 = vst.msk [vmem:[%s510 + $0x3a1] sm:$0xff] %vm210, %v475
        %605 = vst.msk [vmem:[%s510 + $0x3a9] sm:$0xff] %vm210, %v476
        %606 = vst.msk [vmem:[%s510 + $0x3b1] sm:$0xff] %vm210, %v477
        %607 = vst.msk [vmem:[%s510 + $0x3c1] sm:$0xff] %vm210, %v478
        %608 = vst.msk [vmem:[%s510 + $0x3c9] sm:$0xff] %vm210, %v479
        %609 = vst.msk [vmem:[%s510 + $0x3d1] sm:$0xff] %vm210, %v480
        %610 = vst.msk [vmem:[%s510 + $0x3d9] sm:$0xff] %vm210, %v481
        %611 = vst.msk [vmem:[%s510 + $0x3e9] sm:$0xff] %vm210, %v482
        %612 = vst.msk [vmem:[%s510 + $0x3f1] sm:$0xff] %vm210, %v483
        %613 = vst.msk [vmem:[%s510 + $0x3f9] sm:$0xff] %vm210, %v484
        %614 = vst.msk [vmem:[%s510 + $0x401] sm:$0xff] %vm210, %v485
        %615 = vst.msk [vmem:[%s510 + $0x411] sm:$0xff] %vm210, %v486
        %616 = vst.msk [vmem:[%s510 + $0x419] sm:$0xff] %vm210, %v487
        %617 = vst.msk [vmem:[%s510 + $0x421] sm:$0xff] %vm210, %v488
        %618 = vst.msk [vmem:[%s510 + $0x429] sm:$0xff] %vm210, %v489
        %619 = vst.msk [vmem:[%s510 + $0x439] sm:$0xff] %vm210, %v490
        %620 = vst.msk [vmem:[%s510 + $0x441] sm:$0xff] %vm210, %v491
        %621 = vst.msk [vmem:[%s510 + $0x449] sm:$0xff] %vm210, %v492
        %622 = vst.msk [vmem:[%s510 + $0x451] sm:$0xff] %vm210, %v493
        %623 = vst.msk [vmem:[%s510 + $0x461] sm:$0xff] %vm210, %v494
        %624 = vst.msk [vmem:[%s510 + $0x469] sm:$0xff] %vm210, %v495
        %625 = vst.msk [vmem:[%s510 + $0x471] sm:$0xff] %vm210, %v496
        %626 = vst.msk [vmem:[%s510 + $0x479] sm:$0xff] %vm210, %v497
        %627 = vst.msk [vmem:[%s510 + $0x489] sm:$0xff] %vm210, %v498
        %628 = vst.msk [vmem:[%s510 + $0x491] sm:$0xff] %vm210, %v499
        %629 = vst.msk [vmem:[%s510 + $0x499] sm:$0xff] %vm210, %v500
        %630 = vst.msk [vmem:[%s510 + $0x4a1] sm:$0xff] %vm210, %v501
        %631 = vst.msk [vmem:[%s510 + $0x4b1] sm:$0xff] %vm210, %v502
        %632 = vst.msk [vmem:[%s510 + $0x4b9] sm:$0xff] %vm210, %v503
        %633 = vst.msk [vmem:[%s510 + $0x4c1] sm:$0xff] %vm210, %v504
        %634 = vst.msk [vmem:[%s510 + $0x4c9] sm:$0xff] %vm210, %v505
        %635 = vst.msk [vmem:[%s510 + $0x4d9] sm:$0xff] %vm210, %v506
        %636 = vst.msk [vmem:[%s510 + $0x4e1] sm:$0xff] %vm210, %v507
        %637 = vst.msk [vmem:[%s510 + $0x4e9] sm:$0xff] %vm210, %v508
        %638 = vst.msk [vmem:[%s510 + $0x4f1] sm:$0xff] %vm210, %v509
        %s639 = smul.u32 %s209, 40
        %s640 = scalar_lea.vmem [#allocation2], %s639
        %v641 = vld [vmem:[%s640] sm:$0xff]
        %v642 = vld [vmem:[%s640 + $0x8] sm:$0xff]
        %v643 = vld [vmem:[%s640 + $0x10] sm:$0xff]
        %v644 = vld [vmem:[%s640 + $0x18] sm:$0xff]
        %v645 = vld [vmem:[%s640 + $0x28] sm:$0xff]
        %v646 = vld [vmem:[%s640 + $0x30] sm:$0xff]
        %v647 = vld [vmem:[%s640 + $0x38] sm:$0xff]
        %v648 = vld [vmem:[%s640 + $0x40] sm:$0xff]
        %v649 = vld [vmem:[%s640 + $0x50] sm:$0xff]
        %v650 = vld [vmem:[%s640 + $0x58] sm:$0xff]
        %v651 = vld [vmem:[%s640 + $0x60] sm:$0xff]
        %v652 = vld [vmem:[%s640 + $0x68] sm:$0xff]
        %v653 = vld [vmem:[%s640 + $0x78] sm:$0xff]
        %v654 = vld [vmem:[%s640 + $0x80] sm:$0xff]
        %v655 = vld [vmem:[%s640 + $0x88] sm:$0xff]
        %v656 = vld [vmem:[%s640 + $0x90] sm:$0xff]
        %v657 = vld [vmem:[%s640 + $0xa0] sm:$0xff]
        %v658 = vld [vmem:[%s640 + $0xa8] sm:$0xff]
        %v659 = vld [vmem:[%s640 + $0xb0] sm:$0xff]
        %v660 = vld [vmem:[%s640 + $0xb8] sm:$0xff]
        %v661 = vld [vmem:[%s640 + $0xc8] sm:$0xff]
        %v662 = vld [vmem:[%s640 + $0xd0] sm:$0xff]
        %v663 = vld [vmem:[%s640 + $0xd8] sm:$0xff]
        %v664 = vld [vmem:[%s640 + $0xe0] sm:$0xff]
        %v665 = vld [vmem:[%s640 + $0xf0] sm:$0xff]
        %v666 = vld [vmem:[%s640 + $0xf8] sm:$0xff]
        %v667 = vld [vmem:[%s640 + $0x100] sm:$0xff]
        %v668 = vld [vmem:[%s640 + $0x108] sm:$0xff]
        %v669 = vld [vmem:[%s640 + $0x118] sm:$0xff]
        %v670 = vld [vmem:[%s640 + $0x120] sm:$0xff]
        %v671 = vld [vmem:[%s640 + $0x128] sm:$0xff]
        %v672 = vld [vmem:[%s640 + $0x130] sm:$0xff]
        %v673 = vld [vmem:[%s640 + $0x140] sm:$0xff]
        %v674 = vld [vmem:[%s640 + $0x148] sm:$0xff]
        %v675 = vld [vmem:[%s640 + $0x150] sm:$0xff]
        %v676 = vld [vmem:[%s640 + $0x158] sm:$0xff]
        %v677 = vld [vmem:[%s640 + $0x168] sm:$0xff]
        %v678 = vld [vmem:[%s640 + $0x170] sm:$0xff]
        %v679 = vld [vmem:[%s640 + $0x178] sm:$0xff]
        %v680 = vld [vmem:[%s640 + $0x180] sm:$0xff]
        %v681 = vld [vmem:[%s640 + $0x190] sm:$0xff]
        %v682 = vld [vmem:[%s640 + $0x198] sm:$0xff]
        %v683 = vld [vmem:[%s640 + $0x1a0] sm:$0xff]
        %v684 = vld [vmem:[%s640 + $0x1a8] sm:$0xff]
        %v685 = vld [vmem:[%s640 + $0x1b8] sm:$0xff]
        %v686 = vld [vmem:[%s640 + $0x1c0] sm:$0xff]
        %v687 = vld [vmem:[%s640 + $0x1c8] sm:$0xff]
        %v688 = vld [vmem:[%s640 + $0x1d0] sm:$0xff]
        %v689 = vld [vmem:[%s640 + $0x1e0] sm:$0xff]
        %v690 = vld [vmem:[%s640 + $0x1e8] sm:$0xff]
        %v691 = vld [vmem:[%s640 + $0x1f0] sm:$0xff]
        %v692 = vld [vmem:[%s640 + $0x1f8] sm:$0xff]
        %v693 = vld [vmem:[%s640 + $0x208] sm:$0xff]
        %v694 = vld [vmem:[%s640 + $0x210] sm:$0xff]
        %v695 = vld [vmem:[%s640 + $0x218] sm:$0xff]
        %v696 = vld [vmem:[%s640 + $0x220] sm:$0xff]
        %v697 = vld [vmem:[%s640 + $0x230] sm:$0xff]
        %v698 = vld [vmem:[%s640 + $0x238] sm:$0xff]
        %v699 = vld [vmem:[%s640 + $0x240] sm:$0xff]
        %v700 = vld [vmem:[%s640 + $0x248] sm:$0xff]
        %v701 = vld [vmem:[%s640 + $0x258] sm:$0xff]
        %v702 = vld [vmem:[%s640 + $0x260] sm:$0xff]
        %v703 = vld [vmem:[%s640 + $0x268] sm:$0xff]
        %v704 = vld [vmem:[%s640 + $0x270] sm:$0xff]
        %v705 = vld [vmem:[%s640 + $0x1] sm:$0xff]
        %v706 = vld [vmem:[%s640 + $0x9] sm:$0xff]
        %v707 = vld [vmem:[%s640 + $0x11] sm:$0xff]
        %v708 = vld [vmem:[%s640 + $0x19] sm:$0xff]
        %v709 = vld [vmem:[%s640 + $0x29] sm:$0xff]
        %v710 = vld [vmem:[%s640 + $0x31] sm:$0xff]
        %v711 = vld [vmem:[%s640 + $0x39] sm:$0xff]
        %v712 = vld [vmem:[%s640 + $0x41] sm:$0xff]
        %v713 = vld [vmem:[%s640 + $0x51] sm:$0xff]
        %v714 = vld [vmem:[%s640 + $0x59] sm:$0xff]
        %v715 = vld [vmem:[%s640 + $0x61] sm:$0xff]
        %v716 = vld [vmem:[%s640 + $0x69] sm:$0xff]
        %v717 = vld [vmem:[%s640 + $0x79] sm:$0xff]
        %v718 = vld [vmem:[%s640 + $0x81] sm:$0xff]
        %v719 = vld [vmem:[%s640 + $0x89] sm:$0xff]
        %v720 = vld [vmem:[%s640 + $0x91] sm:$0xff]
        %v721 = vld [vmem:[%s640 + $0xa1] sm:$0xff]
        %v722 = vld [vmem:[%s640 + $0xa9] sm:$0xff]
        %v723 = vld [vmem:[%s640 + $0xb1] sm:$0xff]
        %v724 = vld [vmem:[%s640 + $0xb9] sm:$0xff]
        %v725 = vld [vmem:[%s640 + $0xc9] sm:$0xff]
        %v726 = vld [vmem:[%s640 + $0xd1] sm:$0xff]
        %v727 = vld [vmem:[%s640 + $0xd9] sm:$0xff]
        %v728 = vld [vmem:[%s640 + $0xe1] sm:$0xff]
        %v729 = vld [vmem:[%s640 + $0xf1] sm:$0xff]
        %v730 = vld [vmem:[%s640 + $0xf9] sm:$0xff]
        %v731 = vld [vmem:[%s640 + $0x101] sm:$0xff]
        %v732 = vld [vmem:[%s640 + $0x109] sm:$0xff]
        %v733 = vld [vmem:[%s640 + $0x119] sm:$0xff]
        %v734 = vld [vmem:[%s640 + $0x121] sm:$0xff]
        %v735 = vld [vmem:[%s640 + $0x129] sm:$0xff]
        %v736 = vld [vmem:[%s640 + $0x131] sm:$0xff]
        %v737 = vld [vmem:[%s640 + $0x141] sm:$0xff]
        %v738 = vld [vmem:[%s640 + $0x149] sm:$0xff]
        %v739 = vld [vmem:[%s640 + $0x151] sm:$0xff]
        %v740 = vld [vmem:[%s640 + $0x159] sm:$0xff]
        %v741 = vld [vmem:[%s640 + $0x169] sm:$0xff]
        %v742 = vld [vmem:[%s640 + $0x171] sm:$0xff]
        %v743 = vld [vmem:[%s640 + $0x179] sm:$0xff]
        %v744 = vld [vmem:[%s640 + $0x181] sm:$0xff]
        %v745 = vld [vmem:[%s640 + $0x191] sm:$0xff]
        %v746 = vld [vmem:[%s640 + $0x199] sm:$0xff]
        %v747 = vld [vmem:[%s640 + $0x1a1] sm:$0xff]
        %v748 = vld [vmem:[%s640 + $0x1a9] sm:$0xff]
        %v749 = vld [vmem:[%s640 + $0x1b9] sm:$0xff]
        %v750 = vld [vmem:[%s640 + $0x1c1] sm:$0xff]
        %v751 = vld [vmem:[%s640 + $0x1c9] sm:$0xff]
        %v752 = vld [vmem:[%s640 + $0x1d1] sm:$0xff]
        %v753 = vld [vmem:[%s640 + $0x1e1] sm:$0xff]
        %v754 = vld [vmem:[%s640 + $0x1e9] sm:$0xff]
        %v755 = vld [vmem:[%s640 + $0x1f1] sm:$0xff]
        %v756 = vld [vmem:[%s640 + $0x1f9] sm:$0xff]
        %v757 = vld [vmem:[%s640 + $0x209] sm:$0xff]
        %v758 = vld [vmem:[%s640 + $0x211] sm:$0xff]
        %v759 = vld [vmem:[%s640 + $0x219] sm:$0xff]
        %v760 = vld [vmem:[%s640 + $0x221] sm:$0xff]
        %v761 = vld [vmem:[%s640 + $0x231] sm:$0xff]
        %v762 = vld [vmem:[%s640 + $0x239] sm:$0xff]
        %v763 = vld [vmem:[%s640 + $0x241] sm:$0xff]
        %v764 = vld [vmem:[%s640 + $0x249] sm:$0xff]
        %v765 = vld [vmem:[%s640 + $0x259] sm:$0xff]
        %v766 = vld [vmem:[%s640 + $0x261] sm:$0xff]
        %v767 = vld [vmem:[%s640 + $0x269] sm:$0xff]
        %v768 = vld [vmem:[%s640 + $0x271] sm:$0xff]
        %v769 = vld [vmem:[%s640 + $0x2] sm:$0xff]
        %v770 = vld [vmem:[%s640 + $0xa] sm:$0xff]
        %v771 = vld [vmem:[%s640 + $0x12] sm:$0xff]
        %v772 = vld [vmem:[%s640 + $0x1a] sm:$0xff]
        %v773 = vld [vmem:[%s640 + $0x2a] sm:$0xff]
        %v774 = vld [vmem:[%s640 + $0x32] sm:$0xff]
        %v775 = vld [vmem:[%s640 + $0x3a] sm:$0xff]
        %v776 = vld [vmem:[%s640 + $0x42] sm:$0xff]
        %v777 = vld [vmem:[%s640 + $0x52] sm:$0xff]
        %v778 = vld [vmem:[%s640 + $0x5a] sm:$0xff]
        %v779 = vld [vmem:[%s640 + $0x62] sm:$0xff]
        %v780 = vld [vmem:[%s640 + $0x6a] sm:$0xff]
        %v781 = vld [vmem:[%s640 + $0x7a] sm:$0xff]
        %v782 = vld [vmem:[%s640 + $0x82] sm:$0xff]
        %v783 = vld [vmem:[%s640 + $0x8a] sm:$0xff]
        %v784 = vld [vmem:[%s640 + $0x92] sm:$0xff]
        %v785 = vld [vmem:[%s640 + $0xa2] sm:$0xff]
        %v786 = vld [vmem:[%s640 + $0xaa] sm:$0xff]
        %v787 = vld [vmem:[%s640 + $0xb2] sm:$0xff]
        %v788 = vld [vmem:[%s640 + $0xba] sm:$0xff]
        %v789 = vld [vmem:[%s640 + $0xca] sm:$0xff]
        %v790 = vld [vmem:[%s640 + $0xd2] sm:$0xff]
        %v791 = vld [vmem:[%s640 + $0xda] sm:$0xff]
        %v792 = vld [vmem:[%s640 + $0xe2] sm:$0xff]
        %v793 = vld [vmem:[%s640 + $0xf2] sm:$0xff]
        %v794 = vld [vmem:[%s640 + $0xfa] sm:$0xff]
        %v795 = vld [vmem:[%s640 + $0x102] sm:$0xff]
        %v796 = vld [vmem:[%s640 + $0x10a] sm:$0xff]
        %v797 = vld [vmem:[%s640 + $0x11a] sm:$0xff]
        %v798 = vld [vmem:[%s640 + $0x122] sm:$0xff]
        %v799 = vld [vmem:[%s640 + $0x12a] sm:$0xff]
        %v800 = vld [vmem:[%s640 + $0x132] sm:$0xff]
        %v801 = vld [vmem:[%s640 + $0x142] sm:$0xff]
        %v802 = vld [vmem:[%s640 + $0x14a] sm:$0xff]
        %v803 = vld [vmem:[%s640 + $0x152] sm:$0xff]
        %v804 = vld [vmem:[%s640 + $0x15a] sm:$0xff]
        %v805 = vld [vmem:[%s640 + $0x16a] sm:$0xff]
        %v806 = vld [vmem:[%s640 + $0x172] sm:$0xff]
        %v807 = vld [vmem:[%s640 + $0x17a] sm:$0xff]
        %v808 = vld [vmem:[%s640 + $0x182] sm:$0xff]
        %v809 = vld [vmem:[%s640 + $0x192] sm:$0xff]
        %v810 = vld [vmem:[%s640 + $0x19a] sm:$0xff]
        %v811 = vld [vmem:[%s640 + $0x1a2] sm:$0xff]
        %v812 = vld [vmem:[%s640 + $0x1aa] sm:$0xff]
        %v813 = vld [vmem:[%s640 + $0x1ba] sm:$0xff]
        %v814 = vld [vmem:[%s640 + $0x1c2] sm:$0xff]
        %v815 = vld [vmem:[%s640 + $0x1ca] sm:$0xff]
        %v816 = vld [vmem:[%s640 + $0x1d2] sm:$0xff]
        %v817 = vld [vmem:[%s640 + $0x1e2] sm:$0xff]
        %v818 = vld [vmem:[%s640 + $0x1ea] sm:$0xff]
        %v819 = vld [vmem:[%s640 + $0x1f2] sm:$0xff]
        %v820 = vld [vmem:[%s640 + $0x1fa] sm:$0xff]
        %v821 = vld [vmem:[%s640 + $0x20a] sm:$0xff]
        %v822 = vld [vmem:[%s640 + $0x212] sm:$0xff]
        %v823 = vld [vmem:[%s640 + $0x21a] sm:$0xff]
        %v824 = vld [vmem:[%s640 + $0x222] sm:$0xff]
        %v825 = vld [vmem:[%s640 + $0x232] sm:$0xff]
        %v826 = vld [vmem:[%s640 + $0x23a] sm:$0xff]
        %v827 = vld [vmem:[%s640 + $0x242] sm:$0xff]
        %v828 = vld [vmem:[%s640 + $0x24a] sm:$0xff]
        %v829 = vld [vmem:[%s640 + $0x25a] sm:$0xff]
        %v830 = vld [vmem:[%s640 + $0x262] sm:$0xff]
        %v831 = vld [vmem:[%s640 + $0x26a] sm:$0xff]
        %v832 = vld [vmem:[%s640 + $0x272] sm:$0xff]
        %s833 = sadd.s32 %s209, 1
        %s834 = smul.u32 %s833, 40
        %s835 = scalar_lea.vmem [#allocation2], %s834
        %v836 = vld [vmem:[%s835] sm:$0xff]
        %v837 = vld [vmem:[%s835 + $0x8] sm:$0xff]
        %v838 = vld [vmem:[%s835 + $0x10] sm:$0xff]
        %v839 = vld [vmem:[%s835 + $0x18] sm:$0xff]
        %v840 = vld [vmem:[%s835 + $0x28] sm:$0xff]
        %v841 = vld [vmem:[%s835 + $0x30] sm:$0xff]
        %v842 = vld [vmem:[%s835 + $0x38] sm:$0xff]
        %v843 = vld [vmem:[%s835 + $0x40] sm:$0xff]
        %v844 = vld [vmem:[%s835 + $0x50] sm:$0xff]
        %v845 = vld [vmem:[%s835 + $0x58] sm:$0xff]
        %v846 = vld [vmem:[%s835 + $0x60] sm:$0xff]
        %v847 = vld [vmem:[%s835 + $0x68] sm:$0xff]
        %v848 = vld [vmem:[%s835 + $0x78] sm:$0xff]
        %v849 = vld [vmem:[%s835 + $0x80] sm:$0xff]
        %v850 = vld [vmem:[%s835 + $0x88] sm:$0xff]
        %v851 = vld [vmem:[%s835 + $0x90] sm:$0xff]
        %v852 = vld [vmem:[%s835 + $0xa0] sm:$0xff]
        %v853 = vld [vmem:[%s835 + $0xa8] sm:$0xff]
        %v854 = vld [vmem:[%s835 + $0xb0] sm:$0xff]
        %v855 = vld [vmem:[%s835 + $0xb8] sm:$0xff]
        %v856 = vld [vmem:[%s835 + $0xc8] sm:$0xff]
        %v857 = vld [vmem:[%s835 + $0xd0] sm:$0xff]
        %v858 = vld [vmem:[%s835 + $0xd8] sm:$0xff]
        %v859 = vld [vmem:[%s835 + $0xe0] sm:$0xff]
        %v860 = vld [vmem:[%s835 + $0xf0] sm:$0xff]
        %v861 = vld [vmem:[%s835 + $0xf8] sm:$0xff]
        %v862 = vld [vmem:[%s835 + $0x100] sm:$0xff]
        %v863 = vld [vmem:[%s835 + $0x108] sm:$0xff]
        %v864 = vld [vmem:[%s835 + $0x118] sm:$0xff]
        %v865 = vld [vmem:[%s835 + $0x120] sm:$0xff]
        %v866 = vld [vmem:[%s835 + $0x128] sm:$0xff]
        %v867 = vld [vmem:[%s835 + $0x130] sm:$0xff]
        %v868 = vld [vmem:[%s835 + $0x140] sm:$0xff]
        %v869 = vld [vmem:[%s835 + $0x148] sm:$0xff]
        %v870 = vld [vmem:[%s835 + $0x150] sm:$0xff]
        %v871 = vld [vmem:[%s835 + $0x158] sm:$0xff]
        %v872 = vld [vmem:[%s835 + $0x168] sm:$0xff]
        %v873 = vld [vmem:[%s835 + $0x170] sm:$0xff]
        %v874 = vld [vmem:[%s835 + $0x178] sm:$0xff]
        %v875 = vld [vmem:[%s835 + $0x180] sm:$0xff]
        %v876 = vld [vmem:[%s835 + $0x190] sm:$0xff]
        %v877 = vld [vmem:[%s835 + $0x198] sm:$0xff]
        %v878 = vld [vmem:[%s835 + $0x1a0] sm:$0xff]
        %v879 = vld [vmem:[%s835 + $0x1a8] sm:$0xff]
        %v880 = vld [vmem:[%s835 + $0x1b8] sm:$0xff]
        %v881 = vld [vmem:[%s835 + $0x1c0] sm:$0xff]
        %v882 = vld [vmem:[%s835 + $0x1c8] sm:$0xff]
        %v883 = vld [vmem:[%s835 + $0x1d0] sm:$0xff]
        %v884 = vld [vmem:[%s835 + $0x1e0] sm:$0xff]
        %v885 = vld [vmem:[%s835 + $0x1e8] sm:$0xff]
        %v886 = vld [vmem:[%s835 + $0x1f0] sm:$0xff]
        %v887 = vld [vmem:[%s835 + $0x1f8] sm:$0xff]
        %v888 = vld [vmem:[%s835 + $0x208] sm:$0xff]
        %v889 = vld [vmem:[%s835 + $0x210] sm:$0xff]
        %v890 = vld [vmem:[%s835 + $0x218] sm:$0xff]
        %v891 = vld [vmem:[%s835 + $0x220] sm:$0xff]
        %v892 = vld [vmem:[%s835 + $0x230] sm:$0xff]
        %v893 = vld [vmem:[%s835 + $0x238] sm:$0xff]
        %v894 = vld [vmem:[%s835 + $0x240] sm:$0xff]
        %v895 = vld [vmem:[%s835 + $0x248] sm:$0xff]
        %v896 = vld [vmem:[%s835 + $0x258] sm:$0xff]
        %v897 = vld [vmem:[%s835 + $0x260] sm:$0xff]
        %v898 = vld [vmem:[%s835 + $0x268] sm:$0xff]
        %v899 = vld [vmem:[%s835 + $0x270] sm:$0xff]
        %v900 = vld [vmem:[%s835 + $0x1] sm:$0xff]
        %v901 = vld [vmem:[%s835 + $0x9] sm:$0xff]
        %v902 = vld [vmem:[%s835 + $0x11] sm:$0xff]
        %v903 = vld [vmem:[%s835 + $0x19] sm:$0xff]
        %v904 = vld [vmem:[%s835 + $0x29] sm:$0xff]
        %v905 = vld [vmem:[%s835 + $0x31] sm:$0xff]
        %v906 = vld [vmem:[%s835 + $0x39] sm:$0xff]
        %v907 = vld [vmem:[%s835 + $0x41] sm:$0xff]
        %v908 = vld [vmem:[%s835 + $0x51] sm:$0xff]
        %v909 = vld [vmem:[%s835 + $0x59] sm:$0xff]
        %v910 = vld [vmem:[%s835 + $0x61] sm:$0xff]
        %v911 = vld [vmem:[%s835 + $0x69] sm:$0xff]
        %v912 = vld [vmem:[%s835 + $0x79] sm:$0xff]
        %v913 = vld [vmem:[%s835 + $0x81] sm:$0xff]
        %v914 = vld [vmem:[%s835 + $0x89] sm:$0xff]
        %v915 = vld [vmem:[%s835 + $0x91] sm:$0xff]
        %v916 = vld [vmem:[%s835 + $0xa1] sm:$0xff]
        %v917 = vld [vmem:[%s835 + $0xa9] sm:$0xff]
        %v918 = vld [vmem:[%s835 + $0xb1] sm:$0xff]
        %v919 = vld [vmem:[%s835 + $0xb9] sm:$0xff]
        %v920 = vld [vmem:[%s835 + $0xc9] sm:$0xff]
        %v921 = vld [vmem:[%s835 + $0xd1] sm:$0xff]
        %v922 = vld [vmem:[%s835 + $0xd9] sm:$0xff]
        %v923 = vld [vmem:[%s835 + $0xe1] sm:$0xff]
        %v924 = vld [vmem:[%s835 + $0xf1] sm:$0xff]
        %v925 = vld [vmem:[%s835 + $0xf9] sm:$0xff]
        %v926 = vld [vmem:[%s835 + $0x101] sm:$0xff]
        %v927 = vld [vmem:[%s835 + $0x109] sm:$0xff]
        %v928 = vld [vmem:[%s835 + $0x119] sm:$0xff]
        %v929 = vld [vmem:[%s835 + $0x121] sm:$0xff]
        %v930 = vld [vmem:[%s835 + $0x129] sm:$0xff]
        %v931 = vld [vmem:[%s835 + $0x131] sm:$0xff]
        %v932 = vld [vmem:[%s835 + $0x141] sm:$0xff]
        %v933 = vld [vmem:[%s835 + $0x149] sm:$0xff]
        %v934 = vld [vmem:[%s835 + $0x151] sm:$0xff]
        %v935 = vld [vmem:[%s835 + $0x159] sm:$0xff]
        %v936 = vld [vmem:[%s835 + $0x169] sm:$0xff]
        %v937 = vld [vmem:[%s835 + $0x171] sm:$0xff]
        %v938 = vld [vmem:[%s835 + $0x179] sm:$0xff]
        %v939 = vld [vmem:[%s835 + $0x181] sm:$0xff]
        %v940 = vld [vmem:[%s835 + $0x191] sm:$0xff]
        %v941 = vld [vmem:[%s835 + $0x199] sm:$0xff]
        %v942 = vld [vmem:[%s835 + $0x1a1] sm:$0xff]
        %v943 = vld [vmem:[%s835 + $0x1a9] sm:$0xff]
        %v944 = vld [vmem:[%s835 + $0x1b9] sm:$0xff]
        %v945 = vld [vmem:[%s835 + $0x1c1] sm:$0xff]
        %v946 = vld [vmem:[%s835 + $0x1c9] sm:$0xff]
        %v947 = vld [vmem:[%s835 + $0x1d1] sm:$0xff]
        %v948 = vld [vmem:[%s835 + $0x1e1] sm:$0xff]
        %v949 = vld [vmem:[%s835 + $0x1e9] sm:$0xff]
        %v950 = vld [vmem:[%s835 + $0x1f1] sm:$0xff]
        %v951 = vld [vmem:[%s835 + $0x1f9] sm:$0xff]
        %v952 = vld [vmem:[%s835 + $0x209] sm:$0xff]
        %v953 = vld [vmem:[%s835 + $0x211] sm:$0xff]
        %v954 = vld [vmem:[%s835 + $0x219] sm:$0xff]
        %v955 = vld [vmem:[%s835 + $0x221] sm:$0xff]
        %v956 = vld [vmem:[%s835 + $0x231] sm:$0xff]
        %v957 = vld [vmem:[%s835 + $0x239] sm:$0xff]
        %v958 = vld [vmem:[%s835 + $0x241] sm:$0xff]
        %v959 = vld [vmem:[%s835 + $0x249] sm:$0xff]
        %v960 = vld [vmem:[%s835 + $0x259] sm:$0xff]
        %v961 = vld [vmem:[%s835 + $0x261] sm:$0xff]
        %v962 = vld [vmem:[%s835 + $0x269] sm:$0xff]
        %v963 = vld [vmem:[%s835 + $0x271] sm:$0xff]
        %v964 = vld [vmem:[%s835 + $0x2] sm:$0xff]
        %v965 = vld [vmem:[%s835 + $0xa] sm:$0xff]
        %v966 = vld [vmem:[%s835 + $0x12] sm:$0xff]
        %v967 = vld [vmem:[%s835 + $0x1a] sm:$0xff]
        %v968 = vld [vmem:[%s835 + $0x2a] sm:$0xff]
        %v969 = vld [vmem:[%s835 + $0x32] sm:$0xff]
        %v970 = vld [vmem:[%s835 + $0x3a] sm:$0xff]
        %v971 = vld [vmem:[%s835 + $0x42] sm:$0xff]
        %v972 = vld [vmem:[%s835 + $0x52] sm:$0xff]
        %v973 = vld [vmem:[%s835 + $0x5a] sm:$0xff]
        %v974 = vld [vmem:[%s835 + $0x62] sm:$0xff]
        %v975 = vld [vmem:[%s835 + $0x6a] sm:$0xff]
        %v976 = vld [vmem:[%s835 + $0x7a] sm:$0xff]
        %v977 = vld [vmem:[%s835 + $0x82] sm:$0xff]
        %v978 = vld [vmem:[%s835 + $0x8a] sm:$0xff]
        %v979 = vld [vmem:[%s835 + $0x92] sm:$0xff]
        %v980 = vld [vmem:[%s835 + $0xa2] sm:$0xff]
        %v981 = vld [vmem:[%s835 + $0xaa] sm:$0xff]
        %v982 = vld [vmem:[%s835 + $0xb2] sm:$0xff]
        %v983 = vld [vmem:[%s835 + $0xba] sm:$0xff]
        %v984 = vld [vmem:[%s835 + $0xca] sm:$0xff]
        %v985 = vld [vmem:[%s835 + $0xd2] sm:$0xff]
        %v986 = vld [vmem:[%s835 + $0xda] sm:$0xff]
        %v987 = vld [vmem:[%s835 + $0xe2] sm:$0xff]
        %v988 = vld [vmem:[%s835 + $0xf2] sm:$0xff]
        %v989 = vld [vmem:[%s835 + $0xfa] sm:$0xff]
        %v990 = vld [vmem:[%s835 + $0x102] sm:$0xff]
        %v991 = vld [vmem:[%s835 + $0x10a] sm:$0xff]
        %v992 = vld [vmem:[%s835 + $0x11a] sm:$0xff]
        %v993 = vld [vmem:[%s835 + $0x122] sm:$0xff]
        %v994 = vld [vmem:[%s835 + $0x12a] sm:$0xff]
        %v995 = vld [vmem:[%s835 + $0x132] sm:$0xff]
        %v996 = vld [vmem:[%s835 + $0x142] sm:$0xff]
        %v997 = vld [vmem:[%s835 + $0x14a] sm:$0xff]
        %v998 = vld [vmem:[%s835 + $0x152] sm:$0xff]
        %v999 = vld [vmem:[%s835 + $0x15a] sm:$0xff]
        %v1000 = vld [vmem:[%s835 + $0x16a] sm:$0xff]
        %v1001 = vld [vmem:[%s835 + $0x172] sm:$0xff]
        %v1002 = vld [vmem:[%s835 + $0x17a] sm:$0xff]
        %v1003 = vld [vmem:[%s835 + $0x182] sm:$0xff]
        %v1004 = vld [vmem:[%s835 + $0x192] sm:$0xff]
        %v1005 = vld [vmem:[%s835 + $0x19a] sm:$0xff]
        %v1006 = vld [vmem:[%s835 + $0x1a2] sm:$0xff]
        %v1007 = vld [vmem:[%s835 + $0x1aa] sm:$0xff]
        %v1008 = vld [vmem:[%s835 + $0x1ba] sm:$0xff]
        %v1009 = vld [vmem:[%s835 + $0x1c2] sm:$0xff]
        %v1010 = vld [vmem:[%s835 + $0x1ca] sm:$0xff]
        %v1011 = vld [vmem:[%s835 + $0x1d2] sm:$0xff]
        %v1012 = vld [vmem:[%s835 + $0x1e2] sm:$0xff]
        %v1013 = vld [vmem:[%s835 + $0x1ea] sm:$0xff]
        %v1014 = vld [vmem:[%s835 + $0x1f2] sm:$0xff]
        %v1015 = vld [vmem:[%s835 + $0x1fa] sm:$0xff]
        %v1016 = vld [vmem:[%s835 + $0x20a] sm:$0xff]
        %v1017 = vld [vmem:[%s835 + $0x212] sm:$0xff]
        %v1018 = vld [vmem:[%s835 + $0x21a] sm:$0xff]
        %v1019 = vld [vmem:[%s835 + $0x222] sm:$0xff]
        %v1020 = vld [vmem:[%s835 + $0x232] sm:$0xff]
        %v1021 = vld [vmem:[%s835 + $0x23a] sm:$0xff]
        %v1022 = vld [vmem:[%s835 + $0x242] sm:$0xff]
        %v1023 = vld [vmem:[%s835 + $0x24a] sm:$0xff]
        %v1024 = vld [vmem:[%s835 + $0x25a] sm:$0xff]
        %v1025 = vld [vmem:[%s835 + $0x262] sm:$0xff]
        %v1026 = vld [vmem:[%s835 + $0x26a] sm:$0xff]
        %v1027 = vld [vmem:[%s835 + $0x272] sm:$0xff]
        %s1028 = sadd.s32 %s209, 2
        %s1029 = smul.u32 %s1028, 40
        %s1030 = scalar_lea.vmem [#allocation2], %s1029
        %v1031 = vld [vmem:[%s1030] sm:$0xff]
        %v1032 = vld [vmem:[%s1030 + $0x8] sm:$0xff]
        %v1033 = vld [vmem:[%s1030 + $0x10] sm:$0xff]
        %v1034 = vld [vmem:[%s1030 + $0x18] sm:$0xff]
        %v1035 = vld [vmem:[%s1030 + $0x28] sm:$0xff]
        %v1036 = vld [vmem:[%s1030 + $0x30] sm:$0xff]
        %v1037 = vld [vmem:[%s1030 + $0x38] sm:$0xff]
        %v1038 = vld [vmem:[%s1030 + $0x40] sm:$0xff]
        %v1039 = vld [vmem:[%s1030 + $0x50] sm:$0xff]
        %v1040 = vld [vmem:[%s1030 + $0x58] sm:$0xff]
        %v1041 = vld [vmem:[%s1030 + $0x60] sm:$0xff]
        %v1042 = vld [vmem:[%s1030 + $0x68] sm:$0xff]
        %v1043 = vld [vmem:[%s1030 + $0x78] sm:$0xff]
        %v1044 = vld [vmem:[%s1030 + $0x80] sm:$0xff]
        %v1045 = vld [vmem:[%s1030 + $0x88] sm:$0xff]
        %v1046 = vld [vmem:[%s1030 + $0x90] sm:$0xff]
        %v1047 = vld [vmem:[%s1030 + $0xa0] sm:$0xff]
        %v1048 = vld [vmem:[%s1030 + $0xa8] sm:$0xff]
        %v1049 = vld [vmem:[%s1030 + $0xb0] sm:$0xff]
        %v1050 = vld [vmem:[%s1030 + $0xb8] sm:$0xff]
        %v1051 = vld [vmem:[%s1030 + $0xc8] sm:$0xff]
        %v1052 = vld [vmem:[%s1030 + $0xd0] sm:$0xff]
        %v1053 = vld [vmem:[%s1030 + $0xd8] sm:$0xff]
        %v1054 = vld [vmem:[%s1030 + $0xe0] sm:$0xff]
        %v1055 = vld [vmem:[%s1030 + $0xf0] sm:$0xff]
        %v1056 = vld [vmem:[%s1030 + $0xf8] sm:$0xff]
        %v1057 = vld [vmem:[%s1030 + $0x100] sm:$0xff]
        %v1058 = vld [vmem:[%s1030 + $0x108] sm:$0xff]
        %v1059 = vld [vmem:[%s1030 + $0x118] sm:$0xff]
        %v1060 = vld [vmem:[%s1030 + $0x120] sm:$0xff]
        %v1061 = vld [vmem:[%s1030 + $0x128] sm:$0xff]
        %v1062 = vld [vmem:[%s1030 + $0x130] sm:$0xff]
        %v1063 = vld [vmem:[%s1030 + $0x140] sm:$0xff]
        %v1064 = vld [vmem:[%s1030 + $0x148] sm:$0xff]
        %v1065 = vld [vmem:[%s1030 + $0x150] sm:$0xff]
        %v1066 = vld [vmem:[%s1030 + $0x158] sm:$0xff]
        %v1067 = vld [vmem:[%s1030 + $0x168] sm:$0xff]
        %v1068 = vld [vmem:[%s1030 + $0x170] sm:$0xff]
        %v1069 = vld [vmem:[%s1030 + $0x178] sm:$0xff]
        %v1070 = vld [vmem:[%s1030 + $0x180] sm:$0xff]
        %v1071 = vld [vmem:[%s1030 + $0x190] sm:$0xff]
        %v1072 = vld [vmem:[%s1030 + $0x198] sm:$0xff]
        %v1073 = vld [vmem:[%s1030 + $0x1a0] sm:$0xff]
        %v1074 = vld [vmem:[%s1030 + $0x1a8] sm:$0xff]
        %v1075 = vld [vmem:[%s1030 + $0x1b8] sm:$0xff]
        %v1076 = vld [vmem:[%s1030 + $0x1c0] sm:$0xff]
        %v1077 = vld [vmem:[%s1030 + $0x1c8] sm:$0xff]
        %v1078 = vld [vmem:[%s1030 + $0x1d0] sm:$0xff]
        %v1079 = vld [vmem:[%s1030 + $0x1e0] sm:$0xff]
        %v1080 = vld [vmem:[%s1030 + $0x1e8] sm:$0xff]
        %v1081 = vld [vmem:[%s1030 + $0x1f0] sm:$0xff]
        %v1082 = vld [vmem:[%s1030 + $0x1f8] sm:$0xff]
        %v1083 = vld [vmem:[%s1030 + $0x208] sm:$0xff]
        %v1084 = vld [vmem:[%s1030 + $0x210] sm:$0xff]
        %v1085 = vld [vmem:[%s1030 + $0x218] sm:$0xff]
        %v1086 = vld [vmem:[%s1030 + $0x220] sm:$0xff]
        %v1087 = vld [vmem:[%s1030 + $0x230] sm:$0xff]
        %v1088 = vld [vmem:[%s1030 + $0x238] sm:$0xff]
        %v1089 = vld [vmem:[%s1030 + $0x240] sm:$0xff]
        %v1090 = vld [vmem:[%s1030 + $0x248] sm:$0xff]
        %v1091 = vld [vmem:[%s1030 + $0x258] sm:$0xff]
        %v1092 = vld [vmem:[%s1030 + $0x260] sm:$0xff]
        %v1093 = vld [vmem:[%s1030 + $0x268] sm:$0xff]
        %v1094 = vld [vmem:[%s1030 + $0x270] sm:$0xff]
        %v1095 = vld [vmem:[%s1030 + $0x1] sm:$0xff]
        %v1096 = vld [vmem:[%s1030 + $0x9] sm:$0xff]
        %v1097 = vld [vmem:[%s1030 + $0x11] sm:$0xff]
        %v1098 = vld [vmem:[%s1030 + $0x19] sm:$0xff]
        %v1099 = vld [vmem:[%s1030 + $0x29] sm:$0xff]
        %v1100 = vld [vmem:[%s1030 + $0x31] sm:$0xff]
        %v1101 = vld [vmem:[%s1030 + $0x39] sm:$0xff]
        %v1102 = vld [vmem:[%s1030 + $0x41] sm:$0xff]
        %v1103 = vld [vmem:[%s1030 + $0x51] sm:$0xff]
        %v1104 = vld [vmem:[%s1030 + $0x59] sm:$0xff]
        %v1105 = vld [vmem:[%s1030 + $0x61] sm:$0xff]
        %v1106 = vld [vmem:[%s1030 + $0x69] sm:$0xff]
        %v1107 = vld [vmem:[%s1030 + $0x79] sm:$0xff]
        %v1108 = vld [vmem:[%s1030 + $0x81] sm:$0xff]
        %v1109 = vld [vmem:[%s1030 + $0x89] sm:$0xff]
        %v1110 = vld [vmem:[%s1030 + $0x91] sm:$0xff]
        %v1111 = vld [vmem:[%s1030 + $0xa1] sm:$0xff]
        %v1112 = vld [vmem:[%s1030 + $0xa9] sm:$0xff]
        %v1113 = vld [vmem:[%s1030 + $0xb1] sm:$0xff]
        %v1114 = vld [vmem:[%s1030 + $0xb9] sm:$0xff]
        %v1115 = vld [vmem:[%s1030 + $0xc9] sm:$0xff]
        %v1116 = vld [vmem:[%s1030 + $0xd1] sm:$0xff]
        %v1117 = vld [vmem:[%s1030 + $0xd9] sm:$0xff]
        %v1118 = vld [vmem:[%s1030 + $0xe1] sm:$0xff]
        %v1119 = vld [vmem:[%s1030 + $0xf1] sm:$0xff]
        %v1120 = vld [vmem:[%s1030 + $0xf9] sm:$0xff]
        %v1121 = vld [vmem:[%s1030 + $0x101] sm:$0xff]
        %v1122 = vld [vmem:[%s1030 + $0x109] sm:$0xff]
        %v1123 = vld [vmem:[%s1030 + $0x119] sm:$0xff]
        %v1124 = vld [vmem:[%s1030 + $0x121] sm:$0xff]
        %v1125 = vld [vmem:[%s1030 + $0x129] sm:$0xff]
        %v1126 = vld [vmem:[%s1030 + $0x131] sm:$0xff]
        %v1127 = vld [vmem:[%s1030 + $0x141] sm:$0xff]
        %v1128 = vld [vmem:[%s1030 + $0x149] sm:$0xff]
        %v1129 = vld [vmem:[%s1030 + $0x151] sm:$0xff]
        %v1130 = vld [vmem:[%s1030 + $0x159] sm:$0xff]
        %v1131 = vld [vmem:[%s1030 + $0x169] sm:$0xff]
        %v1132 = vld [vmem:[%s1030 + $0x171] sm:$0xff]
        %v1133 = vld [vmem:[%s1030 + $0x179] sm:$0xff]
        %v1134 = vld [vmem:[%s1030 + $0x181] sm:$0xff]
        %v1135 = vld [vmem:[%s1030 + $0x191] sm:$0xff]
        %v1136 = vld [vmem:[%s1030 + $0x199] sm:$0xff]
        %v1137 = vld [vmem:[%s1030 + $0x1a1] sm:$0xff]
        %v1138 = vld [vmem:[%s1030 + $0x1a9] sm:$0xff]
        %v1139 = vld [vmem:[%s1030 + $0x1b9] sm:$0xff]
        %v1140 = vld [vmem:[%s1030 + $0x1c1] sm:$0xff]
        %v1141 = vld [vmem:[%s1030 + $0x1c9] sm:$0xff]
        %v1142 = vld [vmem:[%s1030 + $0x1d1] sm:$0xff]
        %v1143 = vld [vmem:[%s1030 + $0x1e1] sm:$0xff]
        %v1144 = vld [vmem:[%s1030 + $0x1e9] sm:$0xff]
        %v1145 = vld [vmem:[%s1030 + $0x1f1] sm:$0xff]
        %v1146 = vld [vmem:[%s1030 + $0x1f9] sm:$0xff]
        %v1147 = vld [vmem:[%s1030 + $0x209] sm:$0xff]
        %v1148 = vld [vmem:[%s1030 + $0x211] sm:$0xff]
        %v1149 = vld [vmem:[%s1030 + $0x219] sm:$0xff]
        %v1150 = vld [vmem:[%s1030 + $0x221] sm:$0xff]
        %v1151 = vld [vmem:[%s1030 + $0x231] sm:$0xff]
        %v1152 = vld [vmem:[%s1030 + $0x239] sm:$0xff]
        %v1153 = vld [vmem:[%s1030 + $0x241] sm:$0xff]
        %v1154 = vld [vmem:[%s1030 + $0x249] sm:$0xff]
        %v1155 = vld [vmem:[%s1030 + $0x259] sm:$0xff]
        %v1156 = vld [vmem:[%s1030 + $0x261] sm:$0xff]
        %v1157 = vld [vmem:[%s1030 + $0x269] sm:$0xff]
        %v1158 = vld [vmem:[%s1030 + $0x271] sm:$0xff]
        %v1159 = vld [vmem:[%s1030 + $0x2] sm:$0xff]
        %v1160 = vld [vmem:[%s1030 + $0xa] sm:$0xff]
        %v1161 = vld [vmem:[%s1030 + $0x12] sm:$0xff]
        %v1162 = vld [vmem:[%s1030 + $0x1a] sm:$0xff]
        %v1163 = vld [vmem:[%s1030 + $0x2a] sm:$0xff]
        %v1164 = vld [vmem:[%s1030 + $0x32] sm:$0xff]
        %v1165 = vld [vmem:[%s1030 + $0x3a] sm:$0xff]
        %v1166 = vld [vmem:[%s1030 + $0x42] sm:$0xff]
        %v1167 = vld [vmem:[%s1030 + $0x52] sm:$0xff]
        %v1168 = vld [vmem:[%s1030 + $0x5a] sm:$0xff]
        %v1169 = vld [vmem:[%s1030 + $0x62] sm:$0xff]
        %v1170 = vld [vmem:[%s1030 + $0x6a] sm:$0xff]
        %v1171 = vld [vmem:[%s1030 + $0x7a] sm:$0xff]
        %v1172 = vld [vmem:[%s1030 + $0x82] sm:$0xff]
        %v1173 = vld [vmem:[%s1030 + $0x8a] sm:$0xff]
        %v1174 = vld [vmem:[%s1030 + $0x92] sm:$0xff]
        %v1175 = vld [vmem:[%s1030 + $0xa2] sm:$0xff]
        %v1176 = vld [vmem:[%s1030 + $0xaa] sm:$0xff]
        %v1177 = vld [vmem:[%s1030 + $0xb2] sm:$0xff]
        %v1178 = vld [vmem:[%s1030 + $0xba] sm:$0xff]
        %v1179 = vld [vmem:[%s1030 + $0xca] sm:$0xff]
        %v1180 = vld [vmem:[%s1030 + $0xd2] sm:$0xff]
        %v1181 = vld [vmem:[%s1030 + $0xda] sm:$0xff]
        %v1182 = vld [vmem:[%s1030 + $0xe2] sm:$0xff]
        %v1183 = vld [vmem:[%s1030 + $0xf2] sm:$0xff]
        %v1184 = vld [vmem:[%s1030 + $0xfa] sm:$0xff]
        %v1185 = vld [vmem:[%s1030 + $0x102] sm:$0xff]
        %v1186 = vld [vmem:[%s1030 + $0x10a] sm:$0xff]
        %v1187 = vld [vmem:[%s1030 + $0x11a] sm:$0xff]
        %v1188 = vld [vmem:[%s1030 + $0x122] sm:$0xff]
        %v1189 = vld [vmem:[%s1030 + $0x12a] sm:$0xff]
        %v1190 = vld [vmem:[%s1030 + $0x132] sm:$0xff]
        %v1191 = vld [vmem:[%s1030 + $0x142] sm:$0xff]
        %v1192 = vld [vmem:[%s1030 + $0x14a] sm:$0xff]
        %v1193 = vld [vmem:[%s1030 + $0x152] sm:$0xff]
        %v1194 = vld [vmem:[%s1030 + $0x15a] sm:$0xff]
        %v1195 = vld [vmem:[%s1030 + $0x16a] sm:$0xff]
        %v1196 = vld [vmem:[%s1030 + $0x172] sm:$0xff]
        %v1197 = vld [vmem:[%s1030 + $0x17a] sm:$0xff]
        %v1198 = vld [vmem:[%s1030 + $0x182] sm:$0xff]
        %v1199 = vld [vmem:[%s1030 + $0x192] sm:$0xff]
        %v1200 = vld [vmem:[%s1030 + $0x19a] sm:$0xff]
        %v1201 = vld [vmem:[%s1030 + $0x1a2] sm:$0xff]
        %v1202 = vld [vmem:[%s1030 + $0x1aa] sm:$0xff]
        %v1203 = vld [vmem:[%s1030 + $0x1ba] sm:$0xff]
        %v1204 = vld [vmem:[%s1030 + $0x1c2] sm:$0xff]
        %v1205 = vld [vmem:[%s1030 + $0x1ca] sm:$0xff]
        %v1206 = vld [vmem:[%s1030 + $0x1d2] sm:$0xff]
        %v1207 = vld [vmem:[%s1030 + $0x1e2] sm:$0xff]
        %v1208 = vld [vmem:[%s1030 + $0x1ea] sm:$0xff]
        %v1209 = vld [vmem:[%s1030 + $0x1f2] sm:$0xff]
        %v1210 = vld [vmem:[%s1030 + $0x1fa] sm:$0xff]
        %v1211 = vld [vmem:[%s1030 + $0x20a] sm:$0xff]
        %v1212 = vld [vmem:[%s1030 + $0x212] sm:$0xff]
        %v1213 = vld [vmem:[%s1030 + $0x21a] sm:$0xff]
        %v1214 = vld [vmem:[%s1030 + $0x222] sm:$0xff]
        %v1215 = vld [vmem:[%s1030 + $0x232] sm:$0xff]
        %v1216 = vld [vmem:[%s1030 + $0x23a] sm:$0xff]
        %v1217 = vld [vmem:[%s1030 + $0x242] sm:$0xff]
        %v1218 = vld [vmem:[%s1030 + $0x24a] sm:$0xff]
        %v1219 = vld [vmem:[%s1030 + $0x25a] sm:$0xff]
        %v1220 = vld [vmem:[%s1030 + $0x262] sm:$0xff]
        %v1221 = vld [vmem:[%s1030 + $0x26a] sm:$0xff]
        %v1222 = vld [vmem:[%s1030 + $0x272] sm:$0xff]
        %1287 = vrot.lane.b32.xlu0 %v705, 32
        %v1288 = vpop.permute.xlu0 %1287
        %1289 = vrot.lane.b32.xlu0 %v706, 32
        %v1290 = vpop.permute.xlu0 %1289
        %1291 = vrot.lane.b32.xlu0 %v707, 32
        %v1292 = vpop.permute.xlu0 %1291
        %1293 = vrot.lane.b32.xlu0 %v708, 32
        %v1294 = vpop.permute.xlu0 %1293
        %1295 = vrot.lane.b32.xlu0 %v709, 32
        %v1296 = vpop.permute.xlu0 %1295
        %1297 = vrot.lane.b32.xlu0 %v710, 32
        %v1298 = vpop.permute.xlu0 %1297
        %1299 = vrot.lane.b32.xlu0 %v711, 32
        %v1300 = vpop.permute.xlu0 %1299
        %1301 = vrot.lane.b32.xlu0 %v712, 32
        %v1302 = vpop.permute.xlu0 %1301
        %1303 = vrot.lane.b32.xlu0 %v713, 32
        %v1304 = vpop.permute.xlu0 %1303
        %1305 = vrot.lane.b32.xlu0 %v714, 32
        %v1306 = vpop.permute.xlu0 %1305
        %1307 = vrot.lane.b32.xlu0 %v715, 32
        %v1308 = vpop.permute.xlu0 %1307
        %1309 = vrot.lane.b32.xlu0 %v716, 32
        %v1310 = vpop.permute.xlu0 %1309
        %1311 = vrot.lane.b32.xlu0 %v717, 32
        %v1312 = vpop.permute.xlu0 %1311
        %1313 = vrot.lane.b32.xlu0 %v718, 32
        %v1314 = vpop.permute.xlu0 %1313
        %1315 = vrot.lane.b32.xlu0 %v719, 32
        %v1316 = vpop.permute.xlu0 %1315
        %1317 = vrot.lane.b32.xlu0 %v720, 32
        %v1318 = vpop.permute.xlu0 %1317
        %1319 = vrot.lane.b32.xlu0 %v721, 32
        %v1320 = vpop.permute.xlu0 %1319
        %1321 = vrot.lane.b32.xlu0 %v722, 32
        %v1322 = vpop.permute.xlu0 %1321
        %1323 = vrot.lane.b32.xlu0 %v723, 32
        %v1324 = vpop.permute.xlu0 %1323
        %1325 = vrot.lane.b32.xlu0 %v724, 32
        %v1326 = vpop.permute.xlu0 %1325
        %1327 = vrot.lane.b32.xlu0 %v725, 32
        %v1328 = vpop.permute.xlu0 %1327
        %1329 = vrot.lane.b32.xlu0 %v726, 32
        %v1330 = vpop.permute.xlu0 %1329
        %1331 = vrot.lane.b32.xlu0 %v727, 32
        %v1332 = vpop.permute.xlu0 %1331
        %1333 = vrot.lane.b32.xlu0 %v728, 32
        %v1334 = vpop.permute.xlu0 %1333
        %1335 = vrot.lane.b32.xlu0 %v729, 32
        %v1336 = vpop.permute.xlu0 %1335
        %1337 = vrot.lane.b32.xlu0 %v730, 32
        %v1338 = vpop.permute.xlu0 %1337
        %1339 = vrot.lane.b32.xlu0 %v731, 32
        %v1340 = vpop.permute.xlu0 %1339
        %1341 = vrot.lane.b32.xlu0 %v732, 32
        %v1342 = vpop.permute.xlu0 %1341
        %1343 = vrot.lane.b32.xlu0 %v733, 32
        %v1344 = vpop.permute.xlu0 %1343
        %1345 = vrot.lane.b32.xlu0 %v734, 32
        %v1346 = vpop.permute.xlu0 %1345
        %1347 = vrot.lane.b32.xlu0 %v735, 32
        %v1348 = vpop.permute.xlu0 %1347
        %1349 = vrot.lane.b32.xlu0 %v736, 32
        %v1350 = vpop.permute.xlu0 %1349
        %1351 = vrot.lane.b32.xlu0 %v737, 32
        %v1352 = vpop.permute.xlu0 %1351
        %1353 = vrot.lane.b32.xlu0 %v738, 32
        %v1354 = vpop.permute.xlu0 %1353
        %1355 = vrot.lane.b32.xlu0 %v739, 32
        %v1356 = vpop.permute.xlu0 %1355
        %1357 = vrot.lane.b32.xlu0 %v740, 32
        %v1358 = vpop.permute.xlu0 %1357
        %1359 = vrot.lane.b32.xlu0 %v741, 32
        %v1360 = vpop.permute.xlu0 %1359
        %1361 = vrot.lane.b32.xlu0 %v742, 32
        %v1362 = vpop.permute.xlu0 %1361
        %1363 = vrot.lane.b32.xlu0 %v743, 32
        %v1364 = vpop.permute.xlu0 %1363
        %1365 = vrot.lane.b32.xlu0 %v744, 32
        %v1366 = vpop.permute.xlu0 %1365
        %1367 = vrot.lane.b32.xlu0 %v745, 32
        %v1368 = vpop.permute.xlu0 %1367
        %1369 = vrot.lane.b32.xlu0 %v746, 32
        %v1370 = vpop.permute.xlu0 %1369
        %1371 = vrot.lane.b32.xlu0 %v747, 32
        %v1372 = vpop.permute.xlu0 %1371
        %1373 = vrot.lane.b32.xlu0 %v748, 32
        %v1374 = vpop.permute.xlu0 %1373
        %1375 = vrot.lane.b32.xlu0 %v749, 32
        %v1376 = vpop.permute.xlu0 %1375
        %1377 = vrot.lane.b32.xlu0 %v750, 32
        %v1378 = vpop.permute.xlu0 %1377
        %1379 = vrot.lane.b32.xlu0 %v751, 32
        %v1380 = vpop.permute.xlu0 %1379
        %1381 = vrot.lane.b32.xlu0 %v752, 32
        %v1382 = vpop.permute.xlu0 %1381
        %1383 = vrot.lane.b32.xlu0 %v753, 32
        %v1384 = vpop.permute.xlu0 %1383
        %1385 = vrot.lane.b32.xlu0 %v754, 32
        %v1386 = vpop.permute.xlu0 %1385
        %1387 = vrot.lane.b32.xlu0 %v755, 32
        %v1388 = vpop.permute.xlu0 %1387
        %1389 = vrot.lane.b32.xlu0 %v756, 32
        %v1390 = vpop.permute.xlu0 %1389
        %1391 = vrot.lane.b32.xlu0 %v757, 32
        %v1392 = vpop.permute.xlu0 %1391
        %1393 = vrot.lane.b32.xlu0 %v758, 32
        %v1394 = vpop.permute.xlu0 %1393
        %1395 = vrot.lane.b32.xlu0 %v759, 32
        %v1396 = vpop.permute.xlu0 %1395
        %1397 = vrot.lane.b32.xlu0 %v760, 32
        %v1398 = vpop.permute.xlu0 %1397
        %1399 = vrot.lane.b32.xlu0 %v761, 32
        %v1400 = vpop.permute.xlu0 %1399
        %1401 = vrot.lane.b32.xlu0 %v762, 32
        %v1402 = vpop.permute.xlu0 %1401
        %1403 = vrot.lane.b32.xlu0 %v763, 32
        %v1404 = vpop.permute.xlu0 %1403
        %1405 = vrot.lane.b32.xlu0 %v764, 32
        %v1406 = vpop.permute.xlu0 %1405
        %1407 = vrot.lane.b32.xlu0 %v765, 32
        %v1408 = vpop.permute.xlu0 %1407
        %1409 = vrot.lane.b32.xlu0 %v766, 32
        %v1410 = vpop.permute.xlu0 %1409
        %1411 = vrot.lane.b32.xlu0 %v767, 32
        %v1412 = vpop.permute.xlu0 %1411
        %1413 = vrot.lane.b32.xlu0 %v768, 32
        %v1414 = vpop.permute.xlu0 %1413
        %1543 = vrot.lane.b32.xlu0 %v769, 64
        %v1544 = vpop.permute.xlu0 %1543
        %1545 = vrot.lane.b32.xlu0 %v770, 64
        %v1546 = vpop.permute.xlu0 %1545
        %1547 = vrot.lane.b32.xlu0 %v771, 64
        %v1548 = vpop.permute.xlu0 %1547
        %1549 = vrot.lane.b32.xlu0 %v772, 64
        %v1550 = vpop.permute.xlu0 %1549
        %1551 = vrot.lane.b32.xlu0 %v773, 64
        %v1552 = vpop.permute.xlu0 %1551
        %1553 = vrot.lane.b32.xlu0 %v774, 64
        %v1554 = vpop.permute.xlu0 %1553
        %1555 = vrot.lane.b32.xlu0 %v775, 64
        %v1556 = vpop.permute.xlu0 %1555
        %1557 = vrot.lane.b32.xlu0 %v776, 64
        %v1558 = vpop.permute.xlu0 %1557
        %1559 = vrot.lane.b32.xlu0 %v777, 64
        %v1560 = vpop.permute.xlu0 %1559
        %1561 = vrot.lane.b32.xlu0 %v778, 64
        %v1562 = vpop.permute.xlu0 %1561
        %1563 = vrot.lane.b32.xlu0 %v779, 64
        %v1564 = vpop.permute.xlu0 %1563
        %1565 = vrot.lane.b32.xlu0 %v780, 64
        %v1566 = vpop.permute.xlu0 %1565
        %1567 = vrot.lane.b32.xlu0 %v781, 64
        %v1568 = vpop.permute.xlu0 %1567
        %1569 = vrot.lane.b32.xlu0 %v782, 64
        %v1570 = vpop.permute.xlu0 %1569
        %1571 = vrot.lane.b32.xlu0 %v783, 64
        %v1572 = vpop.permute.xlu0 %1571
        %1573 = vrot.lane.b32.xlu0 %v784, 64
        %v1574 = vpop.permute.xlu0 %1573
        %1575 = vrot.lane.b32.xlu0 %v785, 64
        %v1576 = vpop.permute.xlu0 %1575
        %1577 = vrot.lane.b32.xlu0 %v786, 64
        %v1578 = vpop.permute.xlu0 %1577
        %1579 = vrot.lane.b32.xlu0 %v787, 64
        %v1580 = vpop.permute.xlu0 %1579
        %1581 = vrot.lane.b32.xlu0 %v788, 64
        %v1582 = vpop.permute.xlu0 %1581
        %1583 = vrot.lane.b32.xlu0 %v789, 64
        %v1584 = vpop.permute.xlu0 %1583
        %1585 = vrot.lane.b32.xlu0 %v790, 64
        %v1586 = vpop.permute.xlu0 %1585
        %1587 = vrot.lane.b32.xlu0 %v791, 64
        %v1588 = vpop.permute.xlu0 %1587
        %1589 = vrot.lane.b32.xlu0 %v792, 64
        %v1590 = vpop.permute.xlu0 %1589
        %1591 = vrot.lane.b32.xlu0 %v793, 64
        %v1592 = vpop.permute.xlu0 %1591
        %1593 = vrot.lane.b32.xlu0 %v794, 64
        %v1594 = vpop.permute.xlu0 %1593
        %1595 = vrot.lane.b32.xlu0 %v795, 64
        %v1596 = vpop.permute.xlu0 %1595
        %1597 = vrot.lane.b32.xlu0 %v796, 64
        %v1598 = vpop.permute.xlu0 %1597
        %1599 = vrot.lane.b32.xlu0 %v797, 64
        %v1600 = vpop.permute.xlu0 %1599
        %1601 = vrot.lane.b32.xlu0 %v798, 64
        %v1602 = vpop.permute.xlu0 %1601
        %1603 = vrot.lane.b32.xlu0 %v799, 64
        %v1604 = vpop.permute.xlu0 %1603
        %1605 = vrot.lane.b32.xlu0 %v800, 64
        %v1606 = vpop.permute.xlu0 %1605
        %1607 = vrot.lane.b32.xlu0 %v801, 64
        %v1608 = vpop.permute.xlu0 %1607
        %1609 = vrot.lane.b32.xlu0 %v802, 64
        %v1610 = vpop.permute.xlu0 %1609
        %1611 = vrot.lane.b32.xlu0 %v803, 64
        %v1612 = vpop.permute.xlu0 %1611
        %1613 = vrot.lane.b32.xlu0 %v804, 64
        %v1614 = vpop.permute.xlu0 %1613
        %1615 = vrot.lane.b32.xlu0 %v805, 64
        %v1616 = vpop.permute.xlu0 %1615
        %1617 = vrot.lane.b32.xlu0 %v806, 64
        %v1618 = vpop.permute.xlu0 %1617
        %1619 = vrot.lane.b32.xlu0 %v807, 64
        %v1620 = vpop.permute.xlu0 %1619
        %1621 = vrot.lane.b32.xlu0 %v808, 64
        %v1622 = vpop.permute.xlu0 %1621
        %1623 = vrot.lane.b32.xlu0 %v809, 64
        %v1624 = vpop.permute.xlu0 %1623
        %1625 = vrot.lane.b32.xlu0 %v810, 64
        %v1626 = vpop.permute.xlu0 %1625
        %1627 = vrot.lane.b32.xlu0 %v811, 64
        %v1628 = vpop.permute.xlu0 %1627
        %1629 = vrot.lane.b32.xlu0 %v812, 64
        %v1630 = vpop.permute.xlu0 %1629
        %1631 = vrot.lane.b32.xlu0 %v813, 64
        %v1632 = vpop.permute.xlu0 %1631
        %1633 = vrot.lane.b32.xlu0 %v814, 64
        %v1634 = vpop.permute.xlu0 %1633
        %1635 = vrot.lane.b32.xlu0 %v815, 64
        %v1636 = vpop.permute.xlu0 %1635
        %1637 = vrot.lane.b32.xlu0 %v816, 64
        %v1638 = vpop.permute.xlu0 %1637
        %1639 = vrot.lane.b32.xlu0 %v817, 64
        %v1640 = vpop.permute.xlu0 %1639
        %1641 = vrot.lane.b32.xlu0 %v818, 64
        %v1642 = vpop.permute.xlu0 %1641
        %1643 = vrot.lane.b32.xlu0 %v819, 64
        %v1644 = vpop.permute.xlu0 %1643
        %1645 = vrot.lane.b32.xlu0 %v820, 64
        %v1646 = vpop.permute.xlu0 %1645
        %1647 = vrot.lane.b32.xlu0 %v821, 64
        %v1648 = vpop.permute.xlu0 %1647
        %1649 = vrot.lane.b32.xlu0 %v822, 64
        %v1650 = vpop.permute.xlu0 %1649
        %1651 = vrot.lane.b32.xlu0 %v823, 64
        %v1652 = vpop.permute.xlu0 %1651
        %1653 = vrot.lane.b32.xlu0 %v824, 64
        %v1654 = vpop.permute.xlu0 %1653
        %1655 = vrot.lane.b32.xlu0 %v825, 64
        %v1656 = vpop.permute.xlu0 %1655
        %1657 = vrot.lane.b32.xlu0 %v826, 64
        %v1658 = vpop.permute.xlu0 %1657
        %1659 = vrot.lane.b32.xlu0 %v827, 64
        %v1660 = vpop.permute.xlu0 %1659
        %1661 = vrot.lane.b32.xlu0 %v828, 64
        %v1662 = vpop.permute.xlu0 %1661
        %1663 = vrot.lane.b32.xlu0 %v829, 64
        %v1664 = vpop.permute.xlu0 %1663
        %1665 = vrot.lane.b32.xlu0 %v830, 64
        %v1666 = vpop.permute.xlu0 %1665
        %1667 = vrot.lane.b32.xlu0 %v831, 64
        %v1668 = vpop.permute.xlu0 %1667
        %1669 = vrot.lane.b32.xlu0 %v832, 64
        %v1670 = vpop.permute.xlu0 %1669
        %1799 = vrot.lane.b32.xlu0 %v836, 96
        %v1800 = vpop.permute.xlu0 %1799
        %1801 = vrot.lane.b32.xlu0 %v837, 96
        %v1802 = vpop.permute.xlu0 %1801
        %1803 = vrot.lane.b32.xlu0 %v838, 96
        %v1804 = vpop.permute.xlu0 %1803
        %1805 = vrot.lane.b32.xlu0 %v839, 96
        %v1806 = vpop.permute.xlu0 %1805
        %1807 = vrot.lane.b32.xlu0 %v840, 96
        %v1808 = vpop.permute.xlu0 %1807
        %1809 = vrot.lane.b32.xlu0 %v841, 96
        %v1810 = vpop.permute.xlu0 %1809
        %1811 = vrot.lane.b32.xlu0 %v842, 96
        %v1812 = vpop.permute.xlu0 %1811
        %1813 = vrot.lane.b32.xlu0 %v843, 96
        %v1814 = vpop.permute.xlu0 %1813
        %1815 = vrot.lane.b32.xlu0 %v844, 96
        %v1816 = vpop.permute.xlu0 %1815
        %1817 = vrot.lane.b32.xlu0 %v845, 96
        %v1818 = vpop.permute.xlu0 %1817
        %1819 = vrot.lane.b32.xlu0 %v846, 96
        %v1820 = vpop.permute.xlu0 %1819
        %1821 = vrot.lane.b32.xlu0 %v847, 96
        %v1822 = vpop.permute.xlu0 %1821
        %1823 = vrot.lane.b32.xlu0 %v848, 96
        %v1824 = vpop.permute.xlu0 %1823
        %1825 = vrot.lane.b32.xlu0 %v849, 96
        %v1826 = vpop.permute.xlu0 %1825
        %1827 = vrot.lane.b32.xlu0 %v850, 96
        %v1828 = vpop.permute.xlu0 %1827
        %1829 = vrot.lane.b32.xlu0 %v851, 96
        %v1830 = vpop.permute.xlu0 %1829
        %1831 = vrot.lane.b32.xlu0 %v852, 96
        %v1832 = vpop.permute.xlu0 %1831
        %1833 = vrot.lane.b32.xlu0 %v853, 96
        %v1834 = vpop.permute.xlu0 %1833
        %1835 = vrot.lane.b32.xlu0 %v854, 96
        %v1836 = vpop.permute.xlu0 %1835
        %1837 = vrot.lane.b32.xlu0 %v855, 96
        %v1838 = vpop.permute.xlu0 %1837
        %1839 = vrot.lane.b32.xlu0 %v856, 96
        %v1840 = vpop.permute.xlu0 %1839
        %1841 = vrot.lane.b32.xlu0 %v857, 96
        %v1842 = vpop.permute.xlu0 %1841
        %1843 = vrot.lane.b32.xlu0 %v858, 96
        %v1844 = vpop.permute.xlu0 %1843
        %1845 = vrot.lane.b32.xlu0 %v859, 96
        %v1846 = vpop.permute.xlu0 %1845
        %1847 = vrot.lane.b32.xlu0 %v860, 96
        %v1848 = vpop.permute.xlu0 %1847
        %1849 = vrot.lane.b32.xlu0 %v861, 96
        %v1850 = vpop.permute.xlu0 %1849
        %1851 = vrot.lane.b32.xlu0 %v862, 96
        %v1852 = vpop.permute.xlu0 %1851
        %1853 = vrot.lane.b32.xlu0 %v863, 96
        %v1854 = vpop.permute.xlu0 %1853
        %1855 = vrot.lane.b32.xlu0 %v864, 96
        %v1856 = vpop.permute.xlu0 %1855
        %1857 = vrot.lane.b32.xlu0 %v865, 96
        %v1858 = vpop.permute.xlu0 %1857
        %1859 = vrot.lane.b32.xlu0 %v866, 96
        %v1860 = vpop.permute.xlu0 %1859
        %1861 = vrot.lane.b32.xlu0 %v867, 96
        %v1862 = vpop.permute.xlu0 %1861
        %1863 = vrot.lane.b32.xlu0 %v868, 96
        %v1864 = vpop.permute.xlu0 %1863
        %1865 = vrot.lane.b32.xlu0 %v869, 96
        %v1866 = vpop.permute.xlu0 %1865
        %1867 = vrot.lane.b32.xlu0 %v870, 96
        %v1868 = vpop.permute.xlu0 %1867
        %1869 = vrot.lane.b32.xlu0 %v871, 96
        %v1870 = vpop.permute.xlu0 %1869
        %1871 = vrot.lane.b32.xlu0 %v872, 96
        %v1872 = vpop.permute.xlu0 %1871
        %1873 = vrot.lane.b32.xlu0 %v873, 96
        %v1874 = vpop.permute.xlu0 %1873
        %1875 = vrot.lane.b32.xlu0 %v874, 96
        %v1876 = vpop.permute.xlu0 %1875
        %1877 = vrot.lane.b32.xlu0 %v875, 96
        %v1878 = vpop.permute.xlu0 %1877
        %1879 = vrot.lane.b32.xlu0 %v876, 96
        %v1880 = vpop.permute.xlu0 %1879
        %1881 = vrot.lane.b32.xlu0 %v877, 96
        %v1882 = vpop.permute.xlu0 %1881
        %1883 = vrot.lane.b32.xlu0 %v878, 96
        %v1884 = vpop.permute.xlu0 %1883
        %1885 = vrot.lane.b32.xlu0 %v879, 96
        %v1886 = vpop.permute.xlu0 %1885
        %1887 = vrot.lane.b32.xlu0 %v880, 96
        %v1888 = vpop.permute.xlu0 %1887
        %1889 = vrot.lane.b32.xlu0 %v881, 96
        %v1890 = vpop.permute.xlu0 %1889
        %1891 = vrot.lane.b32.xlu0 %v882, 96
        %v1892 = vpop.permute.xlu0 %1891
        %1893 = vrot.lane.b32.xlu0 %v883, 96
        %v1894 = vpop.permute.xlu0 %1893
        %1895 = vrot.lane.b32.xlu0 %v884, 96
        %v1896 = vpop.permute.xlu0 %1895
        %1897 = vrot.lane.b32.xlu0 %v885, 96
        %v1898 = vpop.permute.xlu0 %1897
        %1899 = vrot.lane.b32.xlu0 %v886, 96
        %v1900 = vpop.permute.xlu0 %1899
        %1901 = vrot.lane.b32.xlu0 %v887, 96
        %v1902 = vpop.permute.xlu0 %1901
        %1903 = vrot.lane.b32.xlu0 %v888, 96
        %v1904 = vpop.permute.xlu0 %1903
        %1905 = vrot.lane.b32.xlu0 %v889, 96
        %v1906 = vpop.permute.xlu0 %1905
        %1907 = vrot.lane.b32.xlu0 %v890, 96
        %v1908 = vpop.permute.xlu0 %1907
        %1909 = vrot.lane.b32.xlu0 %v891, 96
        %v1910 = vpop.permute.xlu0 %1909
        %1911 = vrot.lane.b32.xlu0 %v892, 96
        %v1912 = vpop.permute.xlu0 %1911
        %1913 = vrot.lane.b32.xlu0 %v893, 96
        %v1914 = vpop.permute.xlu0 %1913
        %1915 = vrot.lane.b32.xlu0 %v894, 96
        %v1916 = vpop.permute.xlu0 %1915
        %1917 = vrot.lane.b32.xlu0 %v895, 96
        %v1918 = vpop.permute.xlu0 %1917
        %1919 = vrot.lane.b32.xlu0 %v896, 96
        %v1920 = vpop.permute.xlu0 %1919
        %1921 = vrot.lane.b32.xlu0 %v897, 96
        %v1922 = vpop.permute.xlu0 %1921
        %1923 = vrot.lane.b32.xlu0 %v898, 96
        %v1924 = vpop.permute.xlu0 %1923
        %1925 = vrot.lane.b32.xlu0 %v899, 96
        %v1926 = vpop.permute.xlu0 %1925
        %2055 = vrot.lane.b32.xlu0 %v964, 32
        %v2056 = vpop.permute.xlu0 %2055
        %2057 = vrot.lane.b32.xlu0 %v965, 32
        %v2058 = vpop.permute.xlu0 %2057
        %2059 = vrot.lane.b32.xlu0 %v966, 32
        %v2060 = vpop.permute.xlu0 %2059
        %2061 = vrot.lane.b32.xlu0 %v967, 32
        %v2062 = vpop.permute.xlu0 %2061
        %2063 = vrot.lane.b32.xlu0 %v968, 32
        %v2064 = vpop.permute.xlu0 %2063
        %2065 = vrot.lane.b32.xlu0 %v969, 32
        %v2066 = vpop.permute.xlu0 %2065
        %2067 = vrot.lane.b32.xlu0 %v970, 32
        %v2068 = vpop.permute.xlu0 %2067
        %2069 = vrot.lane.b32.xlu0 %v971, 32
        %v2070 = vpop.permute.xlu0 %2069
        %2071 = vrot.lane.b32.xlu0 %v972, 32
        %v2072 = vpop.permute.xlu0 %2071
        %2073 = vrot.lane.b32.xlu0 %v973, 32
        %v2074 = vpop.permute.xlu0 %2073
        %2075 = vrot.lane.b32.xlu0 %v974, 32
        %v2076 = vpop.permute.xlu0 %2075
        %2077 = vrot.lane.b32.xlu0 %v975, 32
        %v2078 = vpop.permute.xlu0 %2077
        %2079 = vrot.lane.b32.xlu0 %v976, 32
        %v2080 = vpop.permute.xlu0 %2079
        %2081 = vrot.lane.b32.xlu0 %v977, 32
        %v2082 = vpop.permute.xlu0 %2081
        %2083 = vrot.lane.b32.xlu0 %v978, 32
        %v2084 = vpop.permute.xlu0 %2083
        %2085 = vrot.lane.b32.xlu0 %v979, 32
        %v2086 = vpop.permute.xlu0 %2085
        %2087 = vrot.lane.b32.xlu0 %v980, 32
        %v2088 = vpop.permute.xlu0 %2087
        %2089 = vrot.lane.b32.xlu0 %v981, 32
        %v2090 = vpop.permute.xlu0 %2089
        %2091 = vrot.lane.b32.xlu0 %v982, 32
        %v2092 = vpop.permute.xlu0 %2091
        %2093 = vrot.lane.b32.xlu0 %v983, 32
        %v2094 = vpop.permute.xlu0 %2093
        %2095 = vrot.lane.b32.xlu0 %v984, 32
        %v2096 = vpop.permute.xlu0 %2095
        %2097 = vrot.lane.b32.xlu0 %v985, 32
        %v2098 = vpop.permute.xlu0 %2097
        %2099 = vrot.lane.b32.xlu0 %v986, 32
        %v2100 = vpop.permute.xlu0 %2099
        %2101 = vrot.lane.b32.xlu0 %v987, 32
        %v2102 = vpop.permute.xlu0 %2101
        %2103 = vrot.lane.b32.xlu0 %v988, 32
        %v2104 = vpop.permute.xlu0 %2103
        %2105 = vrot.lane.b32.xlu0 %v989, 32
        %v2106 = vpop.permute.xlu0 %2105
        %2107 = vrot.lane.b32.xlu0 %v990, 32
        %v2108 = vpop.permute.xlu0 %2107
        %2109 = vrot.lane.b32.xlu0 %v991, 32
        %v2110 = vpop.permute.xlu0 %2109
        %2111 = vrot.lane.b32.xlu0 %v992, 32
        %v2112 = vpop.permute.xlu0 %2111
        %2113 = vrot.lane.b32.xlu0 %v993, 32
        %v2114 = vpop.permute.xlu0 %2113
        %2115 = vrot.lane.b32.xlu0 %v994, 32
        %v2116 = vpop.permute.xlu0 %2115
        %2117 = vrot.lane.b32.xlu0 %v995, 32
        %v2118 = vpop.permute.xlu0 %2117
        %2119 = vrot.lane.b32.xlu0 %v996, 32
        %v2120 = vpop.permute.xlu0 %2119
        %2121 = vrot.lane.b32.xlu0 %v997, 32
        %v2122 = vpop.permute.xlu0 %2121
        %2123 = vrot.lane.b32.xlu0 %v998, 32
        %v2124 = vpop.permute.xlu0 %2123
        %2125 = vrot.lane.b32.xlu0 %v999, 32
        %v2126 = vpop.permute.xlu0 %2125
        %2127 = vrot.lane.b32.xlu0 %v1000, 32
        %v2128 = vpop.permute.xlu0 %2127
        %2129 = vrot.lane.b32.xlu0 %v1001, 32
        %v2130 = vpop.permute.xlu0 %2129
        %2131 = vrot.lane.b32.xlu0 %v1002, 32
        %v2132 = vpop.permute.xlu0 %2131
        %2133 = vrot.lane.b32.xlu0 %v1003, 32
        %v2134 = vpop.permute.xlu0 %2133
        %2135 = vrot.lane.b32.xlu0 %v1004, 32
        %v2136 = vpop.permute.xlu0 %2135
        %2137 = vrot.lane.b32.xlu0 %v1005, 32
        %v2138 = vpop.permute.xlu0 %2137
        %2139 = vrot.lane.b32.xlu0 %v1006, 32
        %v2140 = vpop.permute.xlu0 %2139
        %2141 = vrot.lane.b32.xlu0 %v1007, 32
        %v2142 = vpop.permute.xlu0 %2141
        %2143 = vrot.lane.b32.xlu0 %v1008, 32
        %v2144 = vpop.permute.xlu0 %2143
        %2145 = vrot.lane.b32.xlu0 %v1009, 32
        %v2146 = vpop.permute.xlu0 %2145
        %2147 = vrot.lane.b32.xlu0 %v1010, 32
        %v2148 = vpop.permute.xlu0 %2147
        %2149 = vrot.lane.b32.xlu0 %v1011, 32
        %v2150 = vpop.permute.xlu0 %2149
        %2151 = vrot.lane.b32.xlu0 %v1012, 32
        %v2152 = vpop.permute.xlu0 %2151
        %2153 = vrot.lane.b32.xlu0 %v1013, 32
        %v2154 = vpop.permute.xlu0 %2153
        %2155 = vrot.lane.b32.xlu0 %v1014, 32
        %v2156 = vpop.permute.xlu0 %2155
        %2157 = vrot.lane.b32.xlu0 %v1015, 32
        %v2158 = vpop.permute.xlu0 %2157
        %2159 = vrot.lane.b32.xlu0 %v1016, 32
        %v2160 = vpop.permute.xlu0 %2159
        %2161 = vrot.lane.b32.xlu0 %v1017, 32
        %v2162 = vpop.permute.xlu0 %2161
        %2163 = vrot.lane.b32.xlu0 %v1018, 32
        %v2164 = vpop.permute.xlu0 %2163
        %2165 = vrot.lane.b32.xlu0 %v1019, 32
        %v2166 = vpop.permute.xlu0 %2165
        %2167 = vrot.lane.b32.xlu0 %v1020, 32
        %v2168 = vpop.permute.xlu0 %2167
        %2169 = vrot.lane.b32.xlu0 %v1021, 32
        %v2170 = vpop.permute.xlu0 %2169
        %2171 = vrot.lane.b32.xlu0 %v1022, 32
        %v2172 = vpop.permute.xlu0 %2171
        %2173 = vrot.lane.b32.xlu0 %v1023, 32
        %v2174 = vpop.permute.xlu0 %2173
        %2175 = vrot.lane.b32.xlu0 %v1024, 32
        %v2176 = vpop.permute.xlu0 %2175
        %2177 = vrot.lane.b32.xlu0 %v1025, 32
        %v2178 = vpop.permute.xlu0 %2177
        %2179 = vrot.lane.b32.xlu0 %v1026, 32
        %v2180 = vpop.permute.xlu0 %2179
        %2181 = vrot.lane.b32.xlu0 %v1027, 32
        %v2182 = vpop.permute.xlu0 %2181
        %2311 = vrot.lane.b32.xlu0 %v1031, 64
        %v2312 = vpop.permute.xlu0 %2311
        %2313 = vrot.lane.b32.xlu0 %v1032, 64
        %v2314 = vpop.permute.xlu0 %2313
        %2315 = vrot.lane.b32.xlu0 %v1033, 64
        %v2316 = vpop.permute.xlu0 %2315
        %2317 = vrot.lane.b32.xlu0 %v1034, 64
        %v2318 = vpop.permute.xlu0 %2317
        %2319 = vrot.lane.b32.xlu0 %v1035, 64
        %v2320 = vpop.permute.xlu0 %2319
        %2321 = vrot.lane.b32.xlu0 %v1036, 64
        %v2322 = vpop.permute.xlu0 %2321
        %2323 = vrot.lane.b32.xlu0 %v1037, 64
        %v2324 = vpop.permute.xlu0 %2323
        %2325 = vrot.lane.b32.xlu0 %v1038, 64
        %v2326 = vpop.permute.xlu0 %2325
        %2327 = vrot.lane.b32.xlu0 %v1039, 64
        %v2328 = vpop.permute.xlu0 %2327
        %2329 = vrot.lane.b32.xlu0 %v1040, 64
        %v2330 = vpop.permute.xlu0 %2329
        %2331 = vrot.lane.b32.xlu0 %v1041, 64
        %v2332 = vpop.permute.xlu0 %2331
        %2333 = vrot.lane.b32.xlu0 %v1042, 64
        %v2334 = vpop.permute.xlu0 %2333
        %2335 = vrot.lane.b32.xlu0 %v1043, 64
        %v2336 = vpop.permute.xlu0 %2335
        %2337 = vrot.lane.b32.xlu0 %v1044, 64
        %v2338 = vpop.permute.xlu0 %2337
        %2339 = vrot.lane.b32.xlu0 %v1045, 64
        %v2340 = vpop.permute.xlu0 %2339
        %2341 = vrot.lane.b32.xlu0 %v1046, 64
        %v2342 = vpop.permute.xlu0 %2341
        %2343 = vrot.lane.b32.xlu0 %v1047, 64
        %v2344 = vpop.permute.xlu0 %2343
        %2345 = vrot.lane.b32.xlu0 %v1048, 64
        %v2346 = vpop.permute.xlu0 %2345
        %2347 = vrot.lane.b32.xlu0 %v1049, 64
        %v2348 = vpop.permute.xlu0 %2347
        %2349 = vrot.lane.b32.xlu0 %v1050, 64
        %v2350 = vpop.permute.xlu0 %2349
        %2351 = vrot.lane.b32.xlu0 %v1051, 64
        %v2352 = vpop.permute.xlu0 %2351
        %2353 = vrot.lane.b32.xlu0 %v1052, 64
        %v2354 = vpop.permute.xlu0 %2353
        %2355 = vrot.lane.b32.xlu0 %v1053, 64
        %v2356 = vpop.permute.xlu0 %2355
        %2357 = vrot.lane.b32.xlu0 %v1054, 64
        %v2358 = vpop.permute.xlu0 %2357
        %2359 = vrot.lane.b32.xlu0 %v1055, 64
        %v2360 = vpop.permute.xlu0 %2359
        %2361 = vrot.lane.b32.xlu0 %v1056, 64
        %v2362 = vpop.permute.xlu0 %2361
        %2363 = vrot.lane.b32.xlu0 %v1057, 64
        %v2364 = vpop.permute.xlu0 %2363
        %2365 = vrot.lane.b32.xlu0 %v1058, 64
        %v2366 = vpop.permute.xlu0 %2365
        %2367 = vrot.lane.b32.xlu0 %v1059, 64
        %v2368 = vpop.permute.xlu0 %2367
        %2369 = vrot.lane.b32.xlu0 %v1060, 64
        %v2370 = vpop.permute.xlu0 %2369
        %2371 = vrot.lane.b32.xlu0 %v1061, 64
        %v2372 = vpop.permute.xlu0 %2371
        %2373 = vrot.lane.b32.xlu0 %v1062, 64
        %v2374 = vpop.permute.xlu0 %2373
        %2375 = vrot.lane.b32.xlu0 %v1063, 64
        %v2376 = vpop.permute.xlu0 %2375
        %2377 = vrot.lane.b32.xlu0 %v1064, 64
        %v2378 = vpop.permute.xlu0 %2377
        %2379 = vrot.lane.b32.xlu0 %v1065, 64
        %v2380 = vpop.permute.xlu0 %2379
        %2381 = vrot.lane.b32.xlu0 %v1066, 64
        %v2382 = vpop.permute.xlu0 %2381
        %2383 = vrot.lane.b32.xlu0 %v1067, 64
        %v2384 = vpop.permute.xlu0 %2383
        %2385 = vrot.lane.b32.xlu0 %v1068, 64
        %v2386 = vpop.permute.xlu0 %2385
        %2387 = vrot.lane.b32.xlu0 %v1069, 64
        %v2388 = vpop.permute.xlu0 %2387
        %2389 = vrot.lane.b32.xlu0 %v1070, 64
        %v2390 = vpop.permute.xlu0 %2389
        %2391 = vrot.lane.b32.xlu0 %v1071, 64
        %v2392 = vpop.permute.xlu0 %2391
        %2393 = vrot.lane.b32.xlu0 %v1072, 64
        %v2394 = vpop.permute.xlu0 %2393
        %2395 = vrot.lane.b32.xlu0 %v1073, 64
        %v2396 = vpop.permute.xlu0 %2395
        %2397 = vrot.lane.b32.xlu0 %v1074, 64
        %v2398 = vpop.permute.xlu0 %2397
        %2399 = vrot.lane.b32.xlu0 %v1075, 64
        %v2400 = vpop.permute.xlu0 %2399
        %2401 = vrot.lane.b32.xlu0 %v1076, 64
        %v2402 = vpop.permute.xlu0 %2401
        %2403 = vrot.lane.b32.xlu0 %v1077, 64
        %v2404 = vpop.permute.xlu0 %2403
        %2405 = vrot.lane.b32.xlu0 %v1078, 64
        %v2406 = vpop.permute.xlu0 %2405
        %2407 = vrot.lane.b32.xlu0 %v1079, 64
        %v2408 = vpop.permute.xlu0 %2407
        %2409 = vrot.lane.b32.xlu0 %v1080, 64
        %v2410 = vpop.permute.xlu0 %2409
        %2411 = vrot.lane.b32.xlu0 %v1081, 64
        %v2412 = vpop.permute.xlu0 %2411
        %2413 = vrot.lane.b32.xlu0 %v1082, 64
        %v2414 = vpop.permute.xlu0 %2413
        %2415 = vrot.lane.b32.xlu0 %v1083, 64
        %v2416 = vpop.permute.xlu0 %2415
        %2417 = vrot.lane.b32.xlu0 %v1084, 64
        %v2418 = vpop.permute.xlu0 %2417
        %2419 = vrot.lane.b32.xlu0 %v1085, 64
        %v2420 = vpop.permute.xlu0 %2419
        %2421 = vrot.lane.b32.xlu0 %v1086, 64
        %v2422 = vpop.permute.xlu0 %2421
        %2423 = vrot.lane.b32.xlu0 %v1087, 64
        %v2424 = vpop.permute.xlu0 %2423
        %2425 = vrot.lane.b32.xlu0 %v1088, 64
        %v2426 = vpop.permute.xlu0 %2425
        %2427 = vrot.lane.b32.xlu0 %v1089, 64
        %v2428 = vpop.permute.xlu0 %2427
        %2429 = vrot.lane.b32.xlu0 %v1090, 64
        %v2430 = vpop.permute.xlu0 %2429
        %2431 = vrot.lane.b32.xlu0 %v1091, 64
        %v2432 = vpop.permute.xlu0 %2431
        %2433 = vrot.lane.b32.xlu0 %v1092, 64
        %v2434 = vpop.permute.xlu0 %2433
        %2435 = vrot.lane.b32.xlu0 %v1093, 64
        %v2436 = vpop.permute.xlu0 %2435
        %2437 = vrot.lane.b32.xlu0 %v1094, 64
        %v2438 = vpop.permute.xlu0 %2437
        %2567 = vrot.lane.b32.xlu0 %v1095, 96
        %v2568 = vpop.permute.xlu0 %2567
        %2569 = vrot.lane.b32.xlu0 %v1096, 96
        %v2570 = vpop.permute.xlu0 %2569
        %2571 = vrot.lane.b32.xlu0 %v1097, 96
        %v2572 = vpop.permute.xlu0 %2571
        %2573 = vrot.lane.b32.xlu0 %v1098, 96
        %v2574 = vpop.permute.xlu0 %2573
        %2575 = vrot.lane.b32.xlu0 %v1099, 96
        %v2576 = vpop.permute.xlu0 %2575
        %2577 = vrot.lane.b32.xlu0 %v1100, 96
        %v2578 = vpop.permute.xlu0 %2577
        %2579 = vrot.lane.b32.xlu0 %v1101, 96
        %v2580 = vpop.permute.xlu0 %2579
        %2581 = vrot.lane.b32.xlu0 %v1102, 96
        %v2582 = vpop.permute.xlu0 %2581
        %2583 = vrot.lane.b32.xlu0 %v1103, 96
        %v2584 = vpop.permute.xlu0 %2583
        %2585 = vrot.lane.b32.xlu0 %v1104, 96
        %v2586 = vpop.permute.xlu0 %2585
        %2587 = vrot.lane.b32.xlu0 %v1105, 96
        %v2588 = vpop.permute.xlu0 %2587
        %2589 = vrot.lane.b32.xlu0 %v1106, 96
        %v2590 = vpop.permute.xlu0 %2589
        %2591 = vrot.lane.b32.xlu0 %v1107, 96
        %v2592 = vpop.permute.xlu0 %2591
        %2593 = vrot.lane.b32.xlu0 %v1108, 96
        %v2594 = vpop.permute.xlu0 %2593
        %2595 = vrot.lane.b32.xlu0 %v1109, 96
        %v2596 = vpop.permute.xlu0 %2595
        %2597 = vrot.lane.b32.xlu0 %v1110, 96
        %v2598 = vpop.permute.xlu0 %2597
        %2599 = vrot.lane.b32.xlu0 %v1111, 96
        %v2600 = vpop.permute.xlu0 %2599
        %2601 = vrot.lane.b32.xlu0 %v1112, 96
        %v2602 = vpop.permute.xlu0 %2601
        %2603 = vrot.lane.b32.xlu0 %v1113, 96
        %v2604 = vpop.permute.xlu0 %2603
        %2605 = vrot.lane.b32.xlu0 %v1114, 96
        %v2606 = vpop.permute.xlu0 %2605
        %2607 = vrot.lane.b32.xlu0 %v1115, 96
        %v2608 = vpop.permute.xlu0 %2607
        %2609 = vrot.lane.b32.xlu0 %v1116, 96
        %v2610 = vpop.permute.xlu0 %2609
        %2611 = vrot.lane.b32.xlu0 %v1117, 96
        %v2612 = vpop.permute.xlu0 %2611
        %2613 = vrot.lane.b32.xlu0 %v1118, 96
        %v2614 = vpop.permute.xlu0 %2613
        %2615 = vrot.lane.b32.xlu0 %v1119, 96
        %v2616 = vpop.permute.xlu0 %2615
        %2617 = vrot.lane.b32.xlu0 %v1120, 96
        %v2618 = vpop.permute.xlu0 %2617
        %2619 = vrot.lane.b32.xlu0 %v1121, 96
        %v2620 = vpop.permute.xlu0 %2619
        %2621 = vrot.lane.b32.xlu0 %v1122, 96
        %v2622 = vpop.permute.xlu0 %2621
        %2623 = vrot.lane.b32.xlu0 %v1123, 96
        %v2624 = vpop.permute.xlu0 %2623
        %2625 = vrot.lane.b32.xlu0 %v1124, 96
        %v2626 = vpop.permute.xlu0 %2625
        %2627 = vrot.lane.b32.xlu0 %v1125, 96
        %v2628 = vpop.permute.xlu0 %2627
        %2629 = vrot.lane.b32.xlu0 %v1126, 96
        %v2630 = vpop.permute.xlu0 %2629
        %2631 = vrot.lane.b32.xlu0 %v1127, 96
        %v2632 = vpop.permute.xlu0 %2631
        %2633 = vrot.lane.b32.xlu0 %v1128, 96
        %v2634 = vpop.permute.xlu0 %2633
        %2635 = vrot.lane.b32.xlu0 %v1129, 96
        %v2636 = vpop.permute.xlu0 %2635
        %2637 = vrot.lane.b32.xlu0 %v1130, 96
        %v2638 = vpop.permute.xlu0 %2637
        %2639 = vrot.lane.b32.xlu0 %v1131, 96
        %v2640 = vpop.permute.xlu0 %2639
        %2641 = vrot.lane.b32.xlu0 %v1132, 96
        %v2642 = vpop.permute.xlu0 %2641
        %2643 = vrot.lane.b32.xlu0 %v1133, 96
        %v2644 = vpop.permute.xlu0 %2643
        %2645 = vrot.lane.b32.xlu0 %v1134, 96
        %v2646 = vpop.permute.xlu0 %2645
        %2647 = vrot.lane.b32.xlu0 %v1135, 96
        %v2648 = vpop.permute.xlu0 %2647
        %2649 = vrot.lane.b32.xlu0 %v1136, 96
        %v2650 = vpop.permute.xlu0 %2649
        %2651 = vrot.lane.b32.xlu0 %v1137, 96
        %v2652 = vpop.permute.xlu0 %2651
        %2653 = vrot.lane.b32.xlu0 %v1138, 96
        %v2654 = vpop.permute.xlu0 %2653
        %2655 = vrot.lane.b32.xlu0 %v1139, 96
        %v2656 = vpop.permute.xlu0 %2655
        %2657 = vrot.lane.b32.xlu0 %v1140, 96
        %v2658 = vpop.permute.xlu0 %2657
        %2659 = vrot.lane.b32.xlu0 %v1141, 96
        %v2660 = vpop.permute.xlu0 %2659
        %2661 = vrot.lane.b32.xlu0 %v1142, 96
        %v2662 = vpop.permute.xlu0 %2661
        %2663 = vrot.lane.b32.xlu0 %v1143, 96
        %v2664 = vpop.permute.xlu0 %2663
        %2665 = vrot.lane.b32.xlu0 %v1144, 96
        %v2666 = vpop.permute.xlu0 %2665
        %2667 = vrot.lane.b32.xlu0 %v1145, 96
        %v2668 = vpop.permute.xlu0 %2667
        %2669 = vrot.lane.b32.xlu0 %v1146, 96
        %v2670 = vpop.permute.xlu0 %2669
        %2671 = vrot.lane.b32.xlu0 %v1147, 96
        %v2672 = vpop.permute.xlu0 %2671
        %2673 = vrot.lane.b32.xlu0 %v1148, 96
        %v2674 = vpop.permute.xlu0 %2673
        %2675 = vrot.lane.b32.xlu0 %v1149, 96
        %v2676 = vpop.permute.xlu0 %2675
        %2677 = vrot.lane.b32.xlu0 %v1150, 96
        %v2678 = vpop.permute.xlu0 %2677
        %2679 = vrot.lane.b32.xlu0 %v1151, 96
        %v2680 = vpop.permute.xlu0 %2679
        %2681 = vrot.lane.b32.xlu0 %v1152, 96
        %v2682 = vpop.permute.xlu0 %2681
        %2683 = vrot.lane.b32.xlu0 %v1153, 96
        %v2684 = vpop.permute.xlu0 %2683
        %2685 = vrot.lane.b32.xlu0 %v1154, 96
        %v2686 = vpop.permute.xlu0 %2685
        %2687 = vrot.lane.b32.xlu0 %v1155, 96
        %v2688 = vpop.permute.xlu0 %2687
        %2689 = vrot.lane.b32.xlu0 %v1156, 96
        %v2690 = vpop.permute.xlu0 %2689
        %2691 = vrot.lane.b32.xlu0 %v1157, 96
        %v2692 = vpop.permute.xlu0 %2691
        %2693 = vrot.lane.b32.xlu0 %v1158, 96
        %v2694 = vpop.permute.xlu0 %2693
        %v2759 = vsel %vm210, %v641, %v1288
        %v2760 = vsel %vm210, %v642, %v1290
        %v2761 = vsel %vm210, %v643, %v1292
        %v2762 = vsel %vm210, %v644, %v1294
        %v2763 = vsel %vm210, %v645, %v1296
        %v2764 = vsel %vm210, %v646, %v1298
        %v2765 = vsel %vm210, %v647, %v1300
        %v2766 = vsel %vm210, %v648, %v1302
        %v2767 = vsel %vm210, %v649, %v1304
        %v2768 = vsel %vm210, %v650, %v1306
        %v2769 = vsel %vm210, %v651, %v1308
        %v2770 = vsel %vm210, %v652, %v1310
        %v2771 = vsel %vm210, %v653, %v1312
        %v2772 = vsel %vm210, %v654, %v1314
        %v2773 = vsel %vm210, %v655, %v1316
        %v2774 = vsel %vm210, %v656, %v1318
        %v2775 = vsel %vm210, %v657, %v1320
        %v2776 = vsel %vm210, %v658, %v1322
        %v2777 = vsel %vm210, %v659, %v1324
        %v2778 = vsel %vm210, %v660, %v1326
        %v2779 = vsel %vm210, %v661, %v1328
        %v2780 = vsel %vm210, %v662, %v1330
        %v2781 = vsel %vm210, %v663, %v1332
        %v2782 = vsel %vm210, %v664, %v1334
        %v2783 = vsel %vm210, %v665, %v1336
        %v2784 = vsel %vm210, %v666, %v1338
        %v2785 = vsel %vm210, %v667, %v1340
        %v2786 = vsel %vm210, %v668, %v1342
        %v2787 = vsel %vm210, %v669, %v1344
        %v2788 = vsel %vm210, %v670, %v1346
        %v2789 = vsel %vm210, %v671, %v1348
        %v2790 = vsel %vm210, %v672, %v1350
        %v2791 = vsel %vm210, %v673, %v1352
        %v2792 = vsel %vm210, %v674, %v1354
        %v2793 = vsel %vm210, %v675, %v1356
        %v2794 = vsel %vm210, %v676, %v1358
        %v2795 = vsel %vm210, %v677, %v1360
        %v2796 = vsel %vm210, %v678, %v1362
        %v2797 = vsel %vm210, %v679, %v1364
        %v2798 = vsel %vm210, %v680, %v1366
        %v2799 = vsel %vm210, %v681, %v1368
        %v2800 = vsel %vm210, %v682, %v1370
        %v2801 = vsel %vm210, %v683, %v1372
        %v2802 = vsel %vm210, %v684, %v1374
        %v2803 = vsel %vm210, %v685, %v1376
        %v2804 = vsel %vm210, %v686, %v1378
        %v2805 = vsel %vm210, %v687, %v1380
        %v2806 = vsel %vm210, %v688, %v1382
        %v2807 = vsel %vm210, %v689, %v1384
        %v2808 = vsel %vm210, %v690, %v1386
        %v2809 = vsel %vm210, %v691, %v1388
        %v2810 = vsel %vm210, %v692, %v1390
        %v2811 = vsel %vm210, %v693, %v1392
        %v2812 = vsel %vm210, %v694, %v1394
        %v2813 = vsel %vm210, %v695, %v1396
        %v2814 = vsel %vm210, %v696, %v1398
        %v2815 = vsel %vm210, %v697, %v1400
        %v2816 = vsel %vm210, %v698, %v1402
        %v2817 = vsel %vm210, %v699, %v1404
        %v2818 = vsel %vm210, %v700, %v1406
        %v2819 = vsel %vm210, %v701, %v1408
        %v2820 = vsel %vm210, %v702, %v1410
        %v2821 = vsel %vm210, %v703, %v1412
        %v2822 = vsel %vm210, %v704, %v1414
        %vm2823 = vcmask 523264
        %v2824 = vsel %vm2823, %v2759, %v1544
        %v2825 = vsel %vm2823, %v2760, %v1546
        %v2826 = vsel %vm2823, %v2761, %v1548
        %v2827 = vsel %vm2823, %v2762, %v1550
        %v2828 = vsel %vm2823, %v2763, %v1552
        %v2829 = vsel %vm2823, %v2764, %v1554
        %v2830 = vsel %vm2823, %v2765, %v1556
        %v2831 = vsel %vm2823, %v2766, %v1558
        %v2832 = vsel %vm2823, %v2767, %v1560
        %v2833 = vsel %vm2823, %v2768, %v1562
        %v2834 = vsel %vm2823, %v2769, %v1564
        %v2835 = vsel %vm2823, %v2770, %v1566
        %v2836 = vsel %vm2823, %v2771, %v1568
        %v2837 = vsel %vm2823, %v2772, %v1570
        %v2838 = vsel %vm2823, %v2773, %v1572
        %v2839 = vsel %vm2823, %v2774, %v1574
        %v2840 = vsel %vm2823, %v2775, %v1576
        %v2841 = vsel %vm2823, %v2776, %v1578
        %v2842 = vsel %vm2823, %v2777, %v1580
        %v2843 = vsel %vm2823, %v2778, %v1582
        %v2844 = vsel %vm2823, %v2779, %v1584
        %v2845 = vsel %vm2823, %v2780, %v1586
        %v2846 = vsel %vm2823, %v2781, %v1588
        %v2847 = vsel %vm2823, %v2782, %v1590
        %v2848 = vsel %vm2823, %v2783, %v1592
        %v2849 = vsel %vm2823, %v2784, %v1594
        %v2850 = vsel %vm2823, %v2785, %v1596
        %v2851 = vsel %vm2823, %v2786, %v1598
        %v2852 = vsel %vm2823, %v2787, %v1600
        %v2853 = vsel %vm2823, %v2788, %v1602
        %v2854 = vsel %vm2823, %v2789, %v1604
        %v2855 = vsel %vm2823, %v2790, %v1606
        %v2856 = vsel %vm2823, %v2791, %v1608
        %v2857 = vsel %vm2823, %v2792, %v1610
        %v2858 = vsel %vm2823, %v2793, %v1612
        %v2859 = vsel %vm2823, %v2794, %v1614
        %v2860 = vsel %vm2823, %v2795, %v1616
        %v2861 = vsel %vm2823, %v2796, %v1618
        %v2862 = vsel %vm2823, %v2797, %v1620
        %v2863 = vsel %vm2823, %v2798, %v1622
        %v2864 = vsel %vm2823, %v2799, %v1624
        %v2865 = vsel %vm2823, %v2800, %v1626
        %v2866 = vsel %vm2823, %v2801, %v1628
        %v2867 = vsel %vm2823, %v2802, %v1630
        %v2868 = vsel %vm2823, %v2803, %v1632
        %v2869 = vsel %vm2823, %v2804, %v1634
        %v2870 = vsel %vm2823, %v2805, %v1636
        %v2871 = vsel %vm2823, %v2806, %v1638
        %v2872 = vsel %vm2823, %v2807, %v1640
        %v2873 = vsel %vm2823, %v2808, %v1642
        %v2874 = vsel %vm2823, %v2809, %v1644
        %v2875 = vsel %vm2823, %v2810, %v1646
        %v2876 = vsel %vm2823, %v2811, %v1648
        %v2877 = vsel %vm2823, %v2812, %v1650
        %v2878 = vsel %vm2823, %v2813, %v1652
        %v2879 = vsel %vm2823, %v2814, %v1654
        %v2880 = vsel %vm2823, %v2815, %v1656
        %v2881 = vsel %vm2823, %v2816, %v1658
        %v2882 = vsel %vm2823, %v2817, %v1660
        %v2883 = vsel %vm2823, %v2818, %v1662
        %v2884 = vsel %vm2823, %v2819, %v1664
        %v2885 = vsel %vm2823, %v2820, %v1666
        %v2886 = vsel %vm2823, %v2821, %v1668
        %v2887 = vsel %vm2823, %v2822, %v1670
        %vm2888 = vcmask 785408
        %v2889 = vsel %vm2888, %v2824, %v1800
        %v2890 = vsel %vm2888, %v2825, %v1802
        %v2891 = vsel %vm2888, %v2826, %v1804
        %v2892 = vsel %vm2888, %v2827, %v1806
        %v2893 = vsel %vm2888, %v2828, %v1808
        %v2894 = vsel %vm2888, %v2829, %v1810
        %v2895 = vsel %vm2888, %v2830, %v1812
        %v2896 = vsel %vm2888, %v2831, %v1814
        %v2897 = vsel %vm2888, %v2832, %v1816
        %v2898 = vsel %vm2888, %v2833, %v1818
        %v2899 = vsel %vm2888, %v2834, %v1820
        %v2900 = vsel %vm2888, %v2835, %v1822
        %v2901 = vsel %vm2888, %v2836, %v1824
        %v2902 = vsel %vm2888, %v2837, %v1826
        %v2903 = vsel %vm2888, %v2838, %v1828
        %v2904 = vsel %vm2888, %v2839, %v1830
        %v2905 = vsel %vm2888, %v2840, %v1832
        %v2906 = vsel %vm2888, %v2841, %v1834
        %v2907 = vsel %vm2888, %v2842, %v1836
        %v2908 = vsel %vm2888, %v2843, %v1838
        %v2909 = vsel %vm2888, %v2844, %v1840
        %v2910 = vsel %vm2888, %v2845, %v1842
        %v2911 = vsel %vm2888, %v2846, %v1844
        %v2912 = vsel %vm2888, %v2847, %v1846
        %v2913 = vsel %vm2888, %v2848, %v1848
        %v2914 = vsel %vm2888, %v2849, %v1850
        %v2915 = vsel %vm2888, %v2850, %v1852
        %v2916 = vsel %vm2888, %v2851, %v1854
        %v2917 = vsel %vm2888, %v2852, %v1856
        %v2918 = vsel %vm2888, %v2853, %v1858
        %v2919 = vsel %vm2888, %v2854, %v1860
        %v2920 = vsel %vm2888, %v2855, %v1862
        %v2921 = vsel %vm2888, %v2856, %v1864
        %v2922 = vsel %vm2888, %v2857, %v1866
        %v2923 = vsel %vm2888, %v2858, %v1868
        %v2924 = vsel %vm2888, %v2859, %v1870
        %v2925 = vsel %vm2888, %v2860, %v1872
        %v2926 = vsel %vm2888, %v2861, %v1874
        %v2927 = vsel %vm2888, %v2862, %v1876
        %v2928 = vsel %vm2888, %v2863, %v1878
        %v2929 = vsel %vm2888, %v2864, %v1880
        %v2930 = vsel %vm2888, %v2865, %v1882
        %v2931 = vsel %vm2888, %v2866, %v1884
        %v2932 = vsel %vm2888, %v2867, %v1886
        %v2933 = vsel %vm2888, %v2868, %v1888
        %v2934 = vsel %vm2888, %v2869, %v1890
        %v2935 = vsel %vm2888, %v2870, %v1892
        %v2936 = vsel %vm2888, %v2871, %v1894
        %v2937 = vsel %vm2888, %v2872, %v1896
        %v2938 = vsel %vm2888, %v2873, %v1898
        %v2939 = vsel %vm2888, %v2874, %v1900
        %v2940 = vsel %vm2888, %v2875, %v1902
        %v2941 = vsel %vm2888, %v2876, %v1904
        %v2942 = vsel %vm2888, %v2877, %v1906
        %v2943 = vsel %vm2888, %v2878, %v1908
        %v2944 = vsel %vm2888, %v2879, %v1910
        %v2945 = vsel %vm2888, %v2880, %v1912
        %v2946 = vsel %vm2888, %v2881, %v1914
        %v2947 = vsel %vm2888, %v2882, %v1916
        %v2948 = vsel %vm2888, %v2883, %v1918
        %v2949 = vsel %vm2888, %v2884, %v1920
        %v2950 = vsel %vm2888, %v2885, %v1922
        %v2951 = vsel %vm2888, %v2886, %v1924
        %v2952 = vsel %vm2888, %v2887, %v1926
        %v2953 = vsel %vm210, %v900, %v2056
        %v2954 = vsel %vm210, %v901, %v2058
        %v2955 = vsel %vm210, %v902, %v2060
        %v2956 = vsel %vm210, %v903, %v2062
        %v2957 = vsel %vm210, %v904, %v2064
        %v2958 = vsel %vm210, %v905, %v2066
        %v2959 = vsel %vm210, %v906, %v2068
        %v2960 = vsel %vm210, %v907, %v2070
        %v2961 = vsel %vm210, %v908, %v2072
        %v2962 = vsel %vm210, %v909, %v2074
        %v2963 = vsel %vm210, %v910, %v2076
        %v2964 = vsel %vm210, %v911, %v2078
        %v2965 = vsel %vm210, %v912, %v2080
        %v2966 = vsel %vm210, %v913, %v2082
        %v2967 = vsel %vm210, %v914, %v2084
        %v2968 = vsel %vm210, %v915, %v2086
        %v2969 = vsel %vm210, %v916, %v2088
        %v2970 = vsel %vm210, %v917, %v2090
        %v2971 = vsel %vm210, %v918, %v2092
        %v2972 = vsel %vm210, %v919, %v2094
        %v2973 = vsel %vm210, %v920, %v2096
        %v2974 = vsel %vm210, %v921, %v2098
        %v2975 = vsel %vm210, %v922, %v2100
        %v2976 = vsel %vm210, %v923, %v2102
        %v2977 = vsel %vm210, %v924, %v2104
        %v2978 = vsel %vm210, %v925, %v2106
        %v2979 = vsel %vm210, %v926, %v2108
        %v2980 = vsel %vm210, %v927, %v2110
        %v2981 = vsel %vm210, %v928, %v2112
        %v2982 = vsel %vm210, %v929, %v2114
        %v2983 = vsel %vm210, %v930, %v2116
        %v2984 = vsel %vm210, %v931, %v2118
        %v2985 = vsel %vm210, %v932, %v2120
        %v2986 = vsel %vm210, %v933, %v2122
        %v2987 = vsel %vm210, %v934, %v2124
        %v2988 = vsel %vm210, %v935, %v2126
        %v2989 = vsel %vm210, %v936, %v2128
        %v2990 = vsel %vm210, %v937, %v2130
        %v2991 = vsel %vm210, %v938, %v2132
        %v2992 = vsel %vm210, %v939, %v2134
        %v2993 = vsel %vm210, %v940, %v2136
        %v2994 = vsel %vm210, %v941, %v2138
        %v2995 = vsel %vm210, %v942, %v2140
        %v2996 = vsel %vm210, %v943, %v2142
        %v2997 = vsel %vm210, %v944, %v2144
        %v2998 = vsel %vm210, %v945, %v2146
        %v2999 = vsel %vm210, %v946, %v2148
        %v3000 = vsel %vm210, %v947, %v2150
        %v3001 = vsel %vm210, %v948, %v2152
        %v3002 = vsel %vm210, %v949, %v2154
        %v3003 = vsel %vm210, %v950, %v2156
        %v3004 = vsel %vm210, %v951, %v2158
        %v3005 = vsel %vm210, %v952, %v2160
        %v3006 = vsel %vm210, %v953, %v2162
        %v3007 = vsel %vm210, %v954, %v2164
        %v3008 = vsel %vm210, %v955, %v2166
        %v3009 = vsel %vm210, %v956, %v2168
        %v3010 = vsel %vm210, %v957, %v2170
        %v3011 = vsel %vm210, %v958, %v2172
        %v3012 = vsel %vm210, %v959, %v2174
        %v3013 = vsel %vm210, %v960, %v2176
        %v3014 = vsel %vm210, %v961, %v2178
        %v3015 = vsel %vm210, %v962, %v2180
        %v3016 = vsel %vm210, %v963, %v2182
        %v3017 = vsel %vm2823, %v2953, %v2312
        %v3018 = vsel %vm2823, %v2954, %v2314
        %v3019 = vsel %vm2823, %v2955, %v2316
        %v3020 = vsel %vm2823, %v2956, %v2318
        %v3021 = vsel %vm2823, %v2957, %v2320
        %v3022 = vsel %vm2823, %v2958, %v2322
        %v3023 = vsel %vm2823, %v2959, %v2324
        %v3024 = vsel %vm2823, %v2960, %v2326
        %v3025 = vsel %vm2823, %v2961, %v2328
        %v3026 = vsel %vm2823, %v2962, %v2330
        %v3027 = vsel %vm2823, %v2963, %v2332
        %v3028 = vsel %vm2823, %v2964, %v2334
        %v3029 = vsel %vm2823, %v2965, %v2336
        %v3030 = vsel %vm2823, %v2966, %v2338
        %v3031 = vsel %vm2823, %v2967, %v2340
        %v3032 = vsel %vm2823, %v2968, %v2342
        %v3033 = vsel %vm2823, %v2969, %v2344
        %v3034 = vsel %vm2823, %v2970, %v2346
        %v3035 = vsel %vm2823, %v2971, %v2348
        %v3036 = vsel %vm2823, %v2972, %v2350
        %v3037 = vsel %vm2823, %v2973, %v2352
        %v3038 = vsel %vm2823, %v2974, %v2354
        %v3039 = vsel %vm2823, %v2975, %v2356
        %v3040 = vsel %vm2823, %v2976, %v2358
        %v3041 = vsel %vm2823, %v2977, %v2360
        %v3042 = vsel %vm2823, %v2978, %v2362
        %v3043 = vsel %vm2823, %v2979, %v2364
        %v3044 = vsel %vm2823, %v2980, %v2366
        %v3045 = vsel %vm2823, %v2981, %v2368
        %v3046 = vsel %vm2823, %v2982, %v2370
        %v3047 = vsel %vm2823, %v2983, %v2372
        %v3048 = vsel %vm2823, %v2984, %v2374
        %v3049 = vsel %vm2823, %v2985, %v2376
        %v3050 = vsel %vm2823, %v2986, %v2378
        %v3051 = vsel %vm2823, %v2987, %v2380
        %v3052 = vsel %vm2823, %v2988, %v2382
        %v3053 = vsel %vm2823, %v2989, %v2384
        %v3054 = vsel %vm2823, %v2990, %v2386
        %v3055 = vsel %vm2823, %v2991, %v2388
        %v3056 = vsel %vm2823, %v2992, %v2390
        %v3057 = vsel %vm2823, %v2993, %v2392
        %v3058 = vsel %vm2823, %v2994, %v2394
        %v3059 = vsel %vm2823, %v2995, %v2396
        %v3060 = vsel %vm2823, %v2996, %v2398
        %v3061 = vsel %vm2823, %v2997, %v2400
        %v3062 = vsel %vm2823, %v2998, %v2402
        %v3063 = vsel %vm2823, %v2999, %v2404
        %v3064 = vsel %vm2823, %v3000, %v2406
        %v3065 = vsel %vm2823, %v3001, %v2408
        %v3066 = vsel %vm2823, %v3002, %v2410
        %v3067 = vsel %vm2823, %v3003, %v2412
        %v3068 = vsel %vm2823, %v3004, %v2414
        %v3069 = vsel %vm2823, %v3005, %v2416
        %v3070 = vsel %vm2823, %v3006, %v2418
        %v3071 = vsel %vm2823, %v3007, %v2420
        %v3072 = vsel %vm2823, %v3008, %v2422
        %v3073 = vsel %vm2823, %v3009, %v2424
        %v3074 = vsel %vm2823, %v3010, %v2426
        %v3075 = vsel %vm2823, %v3011, %v2428
        %v3076 = vsel %vm2823, %v3012, %v2430
        %v3077 = vsel %vm2823, %v3013, %v2432
        %v3078 = vsel %vm2823, %v3014, %v2434
        %v3079 = vsel %vm2823, %v3015, %v2436
        %v3080 = vsel %vm2823, %v3016, %v2438
        %v3081 = vsel %vm2888, %v3017, %v2568
        %v3082 = vsel %vm2888, %v3018, %v2570
        %v3083 = vsel %vm2888, %v3019, %v2572
        %v3084 = vsel %vm2888, %v3020, %v2574
        %v3085 = vsel %vm2888, %v3021, %v2576
        %v3086 = vsel %vm2888, %v3022, %v2578
        %v3087 = vsel %vm2888, %v3023, %v2580
        %v3088 = vsel %vm2888, %v3024, %v2582
        %v3089 = vsel %vm2888, %v3025, %v2584
        %v3090 = vsel %vm2888, %v3026, %v2586
        %v3091 = vsel %vm2888, %v3027, %v2588
        %v3092 = vsel %vm2888, %v3028, %v2590
        %v3093 = vsel %vm2888, %v3029, %v2592
        %v3094 = vsel %vm2888, %v3030, %v2594
        %v3095 = vsel %vm2888, %v3031, %v2596
        %v3096 = vsel %vm2888, %v3032, %v2598
        %v3097 = vsel %vm2888, %v3033, %v2600
        %v3098 = vsel %vm2888, %v3034, %v2602
        %v3099 = vsel %vm2888, %v3035, %v2604
        %v3100 = vsel %vm2888, %v3036, %v2606
        %v3101 = vsel %vm2888, %v3037, %v2608
        %v3102 = vsel %vm2888, %v3038, %v2610
        %v3103 = vsel %vm2888, %v3039, %v2612
        %v3104 = vsel %vm2888, %v3040, %v2614
        %v3105 = vsel %vm2888, %v3041, %v2616
        %v3106 = vsel %vm2888, %v3042, %v2618
        %v3107 = vsel %vm2888, %v3043, %v2620
        %v3108 = vsel %vm2888, %v3044, %v2622
        %v3109 = vsel %vm2888, %v3045, %v2624
        %v3110 = vsel %vm2888, %v3046, %v2626
        %v3111 = vsel %vm2888, %v3047, %v2628
        %v3112 = vsel %vm2888, %v3048, %v2630
        %v3113 = vsel %vm2888, %v3049, %v2632
        %v3114 = vsel %vm2888, %v3050, %v2634
        %v3115 = vsel %vm2888, %v3051, %v2636
        %v3116 = vsel %vm2888, %v3052, %v2638
        %v3117 = vsel %vm2888, %v3053, %v2640
        %v3118 = vsel %vm2888, %v3054, %v2642
        %v3119 = vsel %vm2888, %v3055, %v2644
        %v3120 = vsel %vm2888, %v3056, %v2646
        %v3121 = vsel %vm2888, %v3057, %v2648
        %v3122 = vsel %vm2888, %v3058, %v2650
        %v3123 = vsel %vm2888, %v3059, %v2652
        %v3124 = vsel %vm2888, %v3060, %v2654
        %v3125 = vsel %vm2888, %v3061, %v2656
        %v3126 = vsel %vm2888, %v3062, %v2658
        %v3127 = vsel %vm2888, %v3063, %v2660
        %v3128 = vsel %vm2888, %v3064, %v2662
        %v3129 = vsel %vm2888, %v3065, %v2664
        %v3130 = vsel %vm2888, %v3066, %v2666
        %v3131 = vsel %vm2888, %v3067, %v2668
        %v3132 = vsel %vm2888, %v3068, %v2670
        %v3133 = vsel %vm2888, %v3069, %v2672
        %v3134 = vsel %vm2888, %v3070, %v2674
        %v3135 = vsel %vm2888, %v3071, %v2676
        %v3136 = vsel %vm2888, %v3072, %v2678
        %v3137 = vsel %vm2888, %v3073, %v2680
        %v3138 = vsel %vm2888, %v3074, %v2682
        %v3139 = vsel %vm2888, %v3075, %v2684
        %v3140 = vsel %vm2888, %v3076, %v2686
        %v3141 = vsel %vm2888, %v3077, %v2688
        %v3142 = vsel %vm2888, %v3078, %v2690
        %v3143 = vsel %vm2888, %v3079, %v2692
        %v3144 = vsel %vm2888, %v3080, %v2694
        %v3145 = vld [vmem:[%s1] sm:$0xff]
        %v3146 = vld [vmem:[%s1 + $0x8] sm:$0xff]
        %v3147 = vld [vmem:[%s1 + $0x10] sm:$0xff]
        %v3148 = vld [vmem:[%s1 + $0x18] sm:$0xff]
        %v3149 = vld [vmem:[%s1 + $0x20] sm:$0xff]
        %v3150 = vld [vmem:[%s1 + $0x28] sm:$0xff]
        %v3151 = vld [vmem:[%s1 + $0x30] sm:$0xff]
        %v3152 = vld [vmem:[%s1 + $0x38] sm:$0xff]
        %v3153 = vld [vmem:[%s1 + $0x40] sm:$0xff]
        %v3154 = vld [vmem:[%s1 + $0x48] sm:$0xff]
        %v3155 = vld [vmem:[%s1 + $0x50] sm:$0xff]
        %v3156 = vld [vmem:[%s1 + $0x58] sm:$0xff]
        %v3157 = vld [vmem:[%s1 + $0x60] sm:$0xff]
        %v3158 = vld [vmem:[%s1 + $0x68] sm:$0xff]
        %v3159 = vld [vmem:[%s1 + $0x70] sm:$0xff]
        %v3160 = vld [vmem:[%s1 + $0x78] sm:$0xff]
        %v3161 = vld [vmem:[%s1 + $0x80] sm:$0xff]
        %v3162 = vld [vmem:[%s1 + $0x88] sm:$0xff]
        %v3163 = vld [vmem:[%s1 + $0x90] sm:$0xff]
        %v3164 = vld [vmem:[%s1 + $0x98] sm:$0xff]
        %v3165 = vld [vmem:[%s1 + $0xa0] sm:$0xff]
        %v3166 = vld [vmem:[%s1 + $0xa8] sm:$0xff]
        %v3167 = vld [vmem:[%s1 + $0xb0] sm:$0xff]
        %v3168 = vld [vmem:[%s1 + $0xb8] sm:$0xff]
        %v3169 = vld [vmem:[%s1 + $0xc0] sm:$0xff]
        %v3170 = vld [vmem:[%s1 + $0xc8] sm:$0xff]
        %v3171 = vld [vmem:[%s1 + $0xd0] sm:$0xff]
        %v3172 = vld [vmem:[%s1 + $0xd8] sm:$0xff]
        %v3173 = vld [vmem:[%s1 + $0xe0] sm:$0xff]
        %v3174 = vld [vmem:[%s1 + $0xe8] sm:$0xff]
        %v3175 = vld [vmem:[%s1 + $0xf0] sm:$0xff]
        %v3176 = vld [vmem:[%s1 + $0xf8] sm:$0xff]
        %v3177 = vld [vmem:[%s1 + $0x100] sm:$0xff]
        %v3178 = vld [vmem:[%s1 + $0x108] sm:$0xff]
        %v3179 = vld [vmem:[%s1 + $0x110] sm:$0xff]
        %v3180 = vld [vmem:[%s1 + $0x118] sm:$0xff]
        %v3181 = vld [vmem:[#allocation3] sm:$0x1]
        %v3183 = vlaneseq
        %v3184 = vshrl.u32 %v3183, 7
        %v3185 = vsub.s32 0, %v3184
        %v3186 = vrot.slane %v3181, %v3185
        %v3189 = vsel %vm210, %v1159, 0
        %v3192 = vsel %vm210, %v1160, 0
        %v3195 = vsel %vm210, %v1161, 0
        %v3198 = vsel %vm210, %v1162, 0
        %v3201 = vsel %vm210, %v1163, 0
        %v3204 = vsel %vm210, %v1164, 0
        %v3207 = vsel %vm210, %v1165, 0
        %v3210 = vsel %vm210, %v1166, 0
        %v3213 = vsel %vm210, %v1167, 0
        %v3216 = vsel %vm210, %v1168, 0
        %v3219 = vsel %vm210, %v1169, 0
        %v3222 = vsel %vm210, %v1170, 0
        %v3225 = vsel %vm210, %v1171, 0
        %v3228 = vsel %vm210, %v1172, 0
        %v3231 = vsel %vm210, %v1173, 0
        %v3234 = vsel %vm210, %v1174, 0
        %v3237 = vsel %vm210, %v1175, 0
        %v3240 = vsel %vm210, %v1176, 0
        %v3243 = vsel %vm210, %v1177, 0
        %v3246 = vsel %vm210, %v1178, 0
        %v3249 = vsel %vm210, %v1179, 0
        %v3252 = vsel %vm210, %v1180, 0
        %v3255 = vsel %vm210, %v1181, 0
        %v3258 = vsel %vm210, %v1182, 0
        %v3261 = vsel %vm210, %v1183, 0
        %v3264 = vsel %vm210, %v1184, 0
        %v3267 = vsel %vm210, %v1185, 0
        %v3270 = vsel %vm210, %v1186, 0
        %v3273 = vsel %vm210, %v1187, 0
        %v3276 = vsel %vm210, %v1188, 0
        %v3279 = vsel %vm210, %v1189, 0
        %v3282 = vsel %vm210, %v1190, 0
        %v3285 = vsel %vm210, %v1191, 0
        %v3288 = vsel %vm210, %v1192, 0
        %v3291 = vsel %vm210, %v1193, 0
        %v3294 = vsel %vm210, %v1194, 0
        %v3297 = vsel %vm210, %v1195, 0
        %v3300 = vsel %vm210, %v1196, 0
        %v3303 = vsel %vm210, %v1197, 0
        %v3306 = vsel %vm210, %v1198, 0
        %v3309 = vsel %vm210, %v1199, 0
        %v3312 = vsel %vm210, %v1200, 0
        %v3315 = vsel %vm210, %v1201, 0
        %v3318 = vsel %vm210, %v1202, 0
        %v3321 = vsel %vm210, %v1203, 0
        %v3324 = vsel %vm210, %v1204, 0
        %v3327 = vsel %vm210, %v1205, 0
        %v3330 = vsel %vm210, %v1206, 0
        %v3333 = vsel %vm210, %v1207, 0
        %v3336 = vsel %vm210, %v1208, 0
        %v3339 = vsel %vm210, %v1209, 0
        %v3342 = vsel %vm210, %v1210, 0
        %v3345 = vsel %vm210, %v1211, 0
        %v3348 = vsel %vm210, %v1212, 0
        %v3351 = vsel %vm210, %v1213, 0
        %v3354 = vsel %vm210, %v1214, 0
        %v3357 = vsel %vm210, %v1215, 0
        %v3360 = vsel %vm210, %v1216, 0
        %v3363 = vsel %vm210, %v1217, 0
        %v3366 = vsel %vm210, %v1218, 0
        %v3369 = vsel %vm210, %v1219, 0
        %v3372 = vsel %vm210, %v1220, 0
        %v3375 = vsel %vm210, %v1221, 0
        %v3378 = vsel %vm210, %v1222, 0
        %3380 = vmatprep.subr.mxu0 0.0
        %3381 = vmatpush1.msra.mxu0 %v3145
        %3382 = vmatprep.subr.mxu0 0.0
        %3383 = vmatpush1.msra.mxu0 %v3146
        %3384 = vmatprep.subr.mxu0 0.0
        %3385 = vmatpush1.msra.mxu0 %v3147
        %3386 = vmatprep.subr.mxu0 0.0
        %3387 = vmatpush1.msra.mxu0 %v3148
        %3388 = vmatprep.subr.mxu0 0.0
        %3389 = vmatpush1.msra.mxu0 %v3149
        %3390 = vmatprep.subr.mxu0 0.0
        %3391 = vmatpush1.msra.mxu0 %v3150
        %3392 = vmatprep.subr.mxu0 0.0
        %3393 = vmatpush1.msra.mxu0 %v3151
        %3394 = vmatprep.subr.mxu0 0.0
        %3395 = vmatpush1.msra.mxu0 %v3152
        %3396 = vmatprep.subr.mxu0 0.0
        %3397 = vmatpush1.msra.mxu0 %v3153
        %3398 = vmatprep.subr.mxu0 0.0
        %3399 = vmatpush1.msra.mxu0 %v3154
        %3400 = vmatprep.subr.mxu0 0.0
        %3401 = vmatpush1.msra.mxu0 %v3155
        %3402 = vmatprep.subr.mxu0 0.0
        %3403 = vmatpush1.msra.mxu0 %v3156
        %3404 = vmatprep.subr.mxu0 0.0
        %3405 = vmatpush1.msra.mxu0 %v3157
        %3406 = vmatprep.subr.mxu0 0.0
        %3407 = vmatpush1.msra.mxu0 %v3158
        %3408 = vmatprep.subr.mxu0 0.0
        %3409 = vmatpush1.msra.mxu0 %v3159
        %3410 = vmatprep.subr.mxu0 0.0
        %3411 = vmatpush1.msra.mxu0 %v3160
        %3412 = vmatprep.subr.mxu0 0.0
        %3413 = vmatpush1.msra.mxu0 %v3161
        %3414 = vmatprep.subr.mxu0 0.0
        %3415 = vmatpush1.msra.mxu0 %v3162
        %3416 = vmatprep.subr.mxu0 0.0
        %3417 = vmatpush1.msra.mxu0 %v3163
        %3418 = vmatprep.subr.mxu0 0.0
        %3419 = vmatpush1.msra.mxu0 %v3164
        %3420 = vmatprep.subr.mxu0 0.0
        %3421 = vmatpush1.msra.mxu0 %v3165
        %3422 = vmatprep.subr.mxu0 0.0
        %3423 = vmatpush1.msra.mxu0 %v3166
        %3424 = vmatprep.subr.mxu0 0.0
        %3425 = vmatpush1.msra.mxu0 %v3167
        %3426 = vmatprep.subr.mxu0 0.0
        %3427 = vmatpush1.msra.mxu0 %v3168
        %3428 = vmatprep.subr.mxu0 0.0
        %3429 = vmatpush1.msra.mxu0 %v3169
        %3430 = vmatprep.subr.mxu0 0.0
        %3431 = vmatpush1.msra.mxu0 %v3170
        %3432 = vmatprep.subr.mxu0 0.0
        %3433 = vmatpush1.msra.mxu0 %v3171
        %3434 = vmatprep.subr.mxu0 0.0
        %3435 = vmatpush1.msra.mxu0 %v3172
        %3436 = vmatprep.subr.mxu0 0.0
        %3437 = vmatpush1.msra.mxu0 %v3173
        %3438 = vmatprep.subr.mxu0 0.0
        %3439 = vmatpush1.msra.mxu0 %v3174
        %3440 = vmatprep.subr.mxu0 0.0
        %3441 = vmatpush1.msra.mxu0 %v3175
        %3442 = vmatprep.subr.mxu0 0.0
        %3443 = vmatpush1.msra.mxu0 %v3176
        %3444 = vmatprep.mubr.f32.mxu0 %v3081
        %3445 = vmatmul.mubr.f32.gmra.mrb[0].mxu0 %v2889
        %v3446 = vpop.f32.mrb[0].mxu0
        %v3447 = vadd.f32 %v3186, %v3446
        %v3448 = vpop.f32.mrb[0].mxu0
        %3449 = vmatprep.mubr.f32.mxu0 %v3082
        %3450 = vmatmul.mubr.f32.gmra.mrb[0].mxu0 %v2890
        %v3451 = vpop.f32.mrb[0].mxu0
        %v3452 = vadd.f32 %v3186, %v3451
        %v3453 = vpop.f32.mrb[0].mxu0
        %3454 = vmatprep.mubr.f32.mxu0 %v3083
        %3455 = vmatmul.mubr.f32.gmra.mrb[0].mxu0 %v2891
        %v3456 = vpop.f32.mrb[0].mxu0
        %v3457 = vadd.f32 %v3186, %v3456
        %v3458 = vpop.f32.mrb[0].mxu0
        %3459 = vmatprep.mubr.f32.mxu0 %v3084
        %3460 = vmatmul.mubr.f32.gmra.mrb[0].mxu0 %v2892
        %v3461 = vpop.f32.mrb[0].mxu0
        %v3462 = vadd.f32 %v3186, %v3461
        %v3463 = vpop.f32.mrb[0].mxu0
        %3464 = vmatprep.mubr.f32.mxu0 %v3085
        %3465 = vmatmul.mubr.f32.gmra.mrb[0].mxu0 %v2893
        %v3466 = vpop.f32.mrb[0].mxu0
        %v3467 = vadd.f32 %v3186, %v3466
        %v3468 = vpop.f32.mrb[0].mxu0
        %3469 = vmatprep.mubr.f32.mxu0 %v3086
        %3470 = vmatmul.mubr.f32.gmra.mrb[0].mxu0 %v2894
        %v3471 = vpop.f32.mrb[0].mxu0
        %v3472 = vadd.f32 %v3186, %v3471
        %v3473 = vpop.f32.mrb[0].mxu0
        %3474 = vmatprep.mubr.f32.mxu0 %v3087
        %3475 = vmatmul.mubr.f32.gmra.mrb[0].mxu0 %v2895
        %v3476 = vpop.f32.mrb[0].mxu0
        %v3477 = vadd.f32 %v3186, %v3476
        %v3478 = vpop.f32.mrb[0].mxu0
        %3479 = vmatprep.mubr.f32.mxu0 %v3088
        %3480 = vmatmul.mubr.f32.gmra.mrb[0].mxu0 %v2896
        %v3481 = vpop.f32.mrb[0].mxu0
        %v3482 = vadd.f32 %v3186, %v3481
        %v3483 = vpop.f32.mrb[0].mxu0
        %3484 = vmatprep.mubr.f32.mxu0 %v3089
        %3485 = vmatmul.mubr.f32.gmra.mrb[0].mxu0 %v2897
        %v3486 = vpop.f32.mrb[0].mxu0
        %v3487 = vadd.f32 %v3186, %v3486
        %v3488 = vpop.f32.mrb[0].mxu0
        %3489 = vmatprep.mubr.f32.mxu0 %v3090
        %3490 = vmatmul.mubr.f32.gmra.mrb[0].mxu0 %v2898
        %v3491 = vpop.f32.mrb[0].mxu0
        %v3492 = vadd.f32 %v3186, %v3491
        %v3493 = vpop.f32.mrb[0].mxu0
        %3494 = vmatprep.mubr.f32.mxu0 %v3091
        %3495 = vmatmul.mubr.f32.gmra.mrb[0].mxu0 %v2899
        %v3496 = vpop.f32.mrb[0].mxu0
        %v3497 = vadd.f32 %v3186, %v3496
        %v3498 = vpop.f32.mrb[0].mxu0
        %3499 = vmatprep.mubr.f32.mxu0 %v3092
        %3500 = vmatmul.mubr.f32.gmra.mrb[0].mxu0 %v2900
        %v3501 = vpop.f32.mrb[0].mxu0
        %v3502 = vadd.f32 %v3186, %v3501
        %v3503 = vpop.f32.mrb[0].mxu0
        %3504 = vmatprep.mubr.f32.mxu0 %v3093
        %3505 = vmatmul.mubr.f32.gmra.mrb[0].mxu0 %v2901
        %v3506 = vpop.f32.mrb[0].mxu0
        %v3507 = vadd.f32 %v3186, %v3506
        %v3508 = vpop.f32.mrb[0].mxu0
        %3509 = vmatprep.mubr.f32.mxu0 %v3094
        %3510 = vmatmul.mubr.f32.gmra.mrb[0].mxu0 %v2902
        %v3511 = vpop.f32.mrb[0].mxu0
        %v3512 = vadd.f32 %v3186, %v3511
        %v3513 = vpop.f32.mrb[0].mxu0
        %3514 = vmatprep.mubr.f32.mxu0 %v3095
        %3515 = vmatmul.mubr.f32.gmra.mrb[0].mxu0 %v2903
        %v3516 = vpop.f32.mrb[0].mxu0
        %v3517 = vadd.f32 %v3186, %v3516
        %v3518 = vpop.f32.mrb[0].mxu0
        %3519 = vmatprep.mubr.f32.mxu0 %v3096
        %3520 = vmatmul.mubr.f32.gmra.mrb[0].mxu0 %v2904
        %v3521 = vpop.f32.mrb[0].mxu0
        %v3522 = vadd.f32 %v3186, %v3521
        %v3523 = vpop.f32.mrb[0].mxu0
        %3524 = vmatprep.mubr.f32.mxu0 %v3097
        %3525 = vmatmul.mubr.f32.gmra.mrb[0].mxu0 %v2905
        %v3526 = vpop.f32.mrb[0].mxu0
        %v3527 = vadd.f32 %v3186, %v3526
        %v3528 = vpop.f32.mrb[0].mxu0
        %3529 = vmatprep.mubr.f32.mxu0 %v3098
        %3530 = vmatmul.mubr.f32.gmra.mrb[0].mxu0 %v2906
        %v3531 = vpop.f32.mrb[0].mxu0
        %v3532 = vadd.f32 %v3186, %v3531
        %v3533 = vpop.f32.mrb[0].mxu0
        %3534 = vmatprep.mubr.f32.mxu0 %v3099
        %3535 = vmatmul.mubr.f32.gmra.mrb[0].mxu0 %v2907
        %v3536 = vpop.f32.mrb[0].mxu0
        %v3537 = vadd.f32 %v3186, %v3536
        %v3538 = vpop.f32.mrb[0].mxu0
        %3539 = vmatprep.mubr.f32.mxu0 %v3100
        %3540 = vmatmul.mubr.f32.gmra.mrb[0].mxu0 %v2908
        %v3541 = vpop.f32.mrb[0].mxu0
        %v3542 = vadd.f32 %v3186, %v3541
        %v3543 = vpop.f32.mrb[0].mxu0
        %3544 = vmatprep.mubr.f32.mxu0 %v3101
        %3545 = vmatmul.mubr.f32.gmra.mrb[0].mxu0 %v2909
        %v3546 = vpop.f32.mrb[0].mxu0
        %v3547 = vadd.f32 %v3186, %v3546
        %v3548 = vpop.f32.mrb[0].mxu0
        %3549 = vmatprep.mubr.f32.mxu0 %v3102
        %3550 = vmatmul.mubr.f32.gmra.mrb[0].mxu0 %v2910
        %v3551 = vpop.f32.mrb[0].mxu0
        %v3552 = vadd.f32 %v3186, %v3551
        %v3553 = vpop.f32.mrb[0].mxu0
        %3554 = vmatprep.mubr.f32.mxu0 %v3103
        %3555 = vmatmul.mubr.f32.gmra.mrb[0].mxu0 %v2911
        %v3556 = vpop.f32.mrb[0].mxu0
        %v3557 = vadd.f32 %v3186, %v3556
        %v3558 = vpop.f32.mrb[0].mxu0
        %3559 = vmatprep.mubr.f32.mxu0 %v3104
        %3560 = vmatmul.mubr.f32.gmra.mrb[0].mxu0 %v2912
        %v3561 = vpop.f32.mrb[0].mxu0
        %v3562 = vadd.f32 %v3186, %v3561
        %v3563 = vpop.f32.mrb[0].mxu0
        %3564 = vmatprep.mubr.f32.mxu0 %v3105
        %3565 = vmatmul.mubr.f32.gmra.mrb[0].mxu0 %v2913
        %v3566 = vpop.f32.mrb[0].mxu0
        %v3567 = vadd.f32 %v3186, %v3566
        %v3568 = vpop.f32.mrb[0].mxu0
        %3569 = vmatprep.mubr.f32.mxu0 %v3106
        %3570 = vmatmul.mubr.f32.gmra.mrb[0].mxu0 %v2914
        %v3571 = vpop.f32.mrb[0].mxu0
        %v3572 = vadd.f32 %v3186, %v3571
        %v3573 = vpop.f32.mrb[0].mxu0
        %3574 = vmatprep.mubr.f32.mxu0 %v3107
        %3575 = vmatmul.mubr.f32.gmra.mrb[0].mxu0 %v2915
        %v3576 = vpop.f32.mrb[0].mxu0
        %v3577 = vadd.f32 %v3186, %v3576
        %v3578 = vpop.f32.mrb[0].mxu0
        %3579 = vmatprep.mubr.f32.mxu0 %v3108
        %3580 = vmatmul.mubr.f32.gmra.mrb[0].mxu0 %v2916
        %v3581 = vpop.f32.mrb[0].mxu0
        %v3582 = vadd.f32 %v3186, %v3581
        %v3583 = vpop.f32.mrb[0].mxu0
        %3584 = vmatprep.mubr.f32.mxu0 %v3109
        %3585 = vmatmul.mubr.f32.gmra.mrb[0].mxu0 %v2917
        %v3586 = vpop.f32.mrb[0].mxu0
        %v3587 = vadd.f32 %v3186, %v3586
        %v3588 = vpop.f32.mrb[0].mxu0
        %3589 = vmatprep.mubr.f32.mxu0 %v3110
        %3590 = vmatmul.mubr.f32.gmra.mrb[0].mxu0 %v2918
        %v3591 = vpop.f32.mrb[0].mxu0
        %v3592 = vadd.f32 %v3186, %v3591
        %v3593 = vpop.f32.mrb[0].mxu0
        %3594 = vmatprep.mubr.f32.mxu0 %v3111
        %3595 = vmatmul.mubr.f32.gmra.mrb[0].mxu0 %v2919
        %v3596 = vpop.f32.mrb[0].mxu0
        %v3597 = vadd.f32 %v3186, %v3596
        %v3598 = vpop.f32.mrb[0].mxu0
        %3599 = vmatprep.mubr.f32.mxu0 %v3112
        %3600 = vmatmul.mubr.f32.gmra.mrb[0].mxu0 %v2920
        %v3601 = vpop.f32.mrb[0].mxu0
        %v3602 = vadd.f32 %v3186, %v3601
        %v3603 = vpop.f32.mrb[0].mxu0
        %3604 = vmatprep.mubr.f32.mxu0 %v3113
        %3605 = vmatmul.mubr.f32.gmra.mrb[0].mxu0 %v2921
        %v3606 = vpop.f32.mrb[0].mxu0
        %v3607 = vadd.f32 %v3186, %v3606
        %v3608 = vpop.f32.mrb[0].mxu0
        %3609 = vmatprep.mubr.f32.mxu0 %v3114
        %3610 = vmatmul.mubr.f32.gmra.mrb[0].mxu0 %v2922
        %v3611 = vpop.f32.mrb[0].mxu0
        %v3612 = vadd.f32 %v3186, %v3611
        %v3613 = vpop.f32.mrb[0].mxu0
        %3614 = vmatprep.mubr.f32.mxu0 %v3115
        %3615 = vmatmul.mubr.f32.gmra.mrb[0].mxu0 %v2923
        %v3616 = vpop.f32.mrb[0].mxu0
        %v3617 = vadd.f32 %v3186, %v3616
        %v3618 = vpop.f32.mrb[0].mxu0
        %3619 = vmatprep.mubr.f32.mxu0 %v3116
        %3620 = vmatmul.mubr.f32.gmra.mrb[0].mxu0 %v2924
        %v3621 = vpop.f32.mrb[0].mxu0
        %v3622 = vadd.f32 %v3186, %v3621
        %v3623 = vpop.f32.mrb[0].mxu0
        %3624 = vmatprep.mubr.f32.mxu0 %v3117
        %3625 = vmatmul.mubr.f32.gmra.mrb[0].mxu0 %v2925
        %v3626 = vpop.f32.mrb[0].mxu0
        %v3627 = vadd.f32 %v3186, %v3626
        %v3628 = vpop.f32.mrb[0].mxu0
        %3629 = vmatprep.mubr.f32.mxu0 %v3118
        %3630 = vmatmul.mubr.f32.gmra.mrb[0].mxu0 %v2926
        %v3631 = vpop.f32.mrb[0].mxu0
        %v3632 = vadd.f32 %v3186, %v3631
        %v3633 = vpop.f32.mrb[0].mxu0
        %3634 = vmatprep.mubr.f32.mxu0 %v3119
        %3635 = vmatmul.mubr.f32.gmra.mrb[0].mxu0 %v2927
        %v3636 = vpop.f32.mrb[0].mxu0
        %v3637 = vadd.f32 %v3186, %v3636
        %v3638 = vpop.f32.mrb[0].mxu0
        %3639 = vmatprep.mubr.f32.mxu0 %v3120
        %3640 = vmatmul.mubr.f32.gmra.mrb[0].mxu0 %v2928
        %v3641 = vpop.f32.mrb[0].mxu0
        %v3642 = vadd.f32 %v3186, %v3641
        %v3643 = vpop.f32.mrb[0].mxu0
        %3644 = vmatprep.mubr.f32.mxu0 %v3121
        %3645 = vmatmul.mubr.f32.gmra.mrb[0].mxu0 %v2929
        %v3646 = vpop.f32.mrb[0].mxu0
        %v3647 = vadd.f32 %v3186, %v3646
        %v3648 = vpop.f32.mrb[0].mxu0
        %3649 = vmatprep.mubr.f32.mxu0 %v3122
        %3650 = vmatmul.mubr.f32.gmra.mrb[0].mxu0 %v2930
        %v3651 = vpop.f32.mrb[0].mxu0
        %v3652 = vadd.f32 %v3186, %v3651
        %v3653 = vpop.f32.mrb[0].mxu0
        %3654 = vmatprep.mubr.f32.mxu0 %v3123
        %3655 = vmatmul.mubr.f32.gmra.mrb[0].mxu0 %v2931
        %v3656 = vpop.f32.mrb[0].mxu0
        %v3657 = vadd.f32 %v3186, %v3656
        %v3658 = vpop.f32.mrb[0].mxu0
        %3659 = vmatprep.mubr.f32.mxu0 %v3124
        %3660 = vmatmul.mubr.f32.gmra.mrb[0].mxu0 %v2932
        %v3661 = vpop.f32.mrb[0].mxu0
        %v3662 = vadd.f32 %v3186, %v3661
        %v3663 = vpop.f32.mrb[0].mxu0
        %3664 = vmatprep.mubr.f32.mxu0 %v3125
        %3665 = vmatmul.mubr.f32.gmra.mrb[0].mxu0 %v2933
        %v3666 = vpop.f32.mrb[0].mxu0
        %v3667 = vadd.f32 %v3186, %v3666
        %v3668 = vpop.f32.mrb[0].mxu0
        %3669 = vmatprep.mubr.f32.mxu0 %v3126
        %3670 = vmatmul.mubr.f32.gmra.mrb[0].mxu0 %v2934
        %v3671 = vpop.f32.mrb[0].mxu0
        %v3672 = vadd.f32 %v3186, %v3671
        %v3673 = vpop.f32.mrb[0].mxu0
        %3674 = vmatprep.mubr.f32.mxu0 %v3127
        %3675 = vmatmul.mubr.f32.gmra.mrb[0].mxu0 %v2935
        %v3676 = vpop.f32.mrb[0].mxu0
        %v3677 = vadd.f32 %v3186, %v3676
        %v3678 = vpop.f32.mrb[0].mxu0
        %3679 = vmatprep.mubr.f32.mxu0 %v3128
        %3680 = vmatmul.mubr.f32.gmra.mrb[0].mxu0 %v2936
        %v3681 = vpop.f32.mrb[0].mxu0
        %v3682 = vadd.f32 %v3186, %v3681
        %v3683 = vpop.f32.mrb[0].mxu0
        %3684 = vmatprep.mubr.f32.mxu0 %v3129
        %3685 = vmatmul.mubr.f32.gmra.mrb[0].mxu0 %v2937
        %v3686 = vpop.f32.mrb[0].mxu0
        %v3687 = vadd.f32 %v3186, %v3686
        %v3688 = vpop.f32.mrb[0].mxu0
        %3689 = vmatprep.mubr.f32.mxu0 %v3130
        %3690 = vmatmul.mubr.f32.gmra.mrb[0].mxu0 %v2938
        %v3691 = vpop.f32.mrb[0].mxu0
        %v3692 = vadd.f32 %v3186, %v3691
        %v3693 = vpop.f32.mrb[0].mxu0
        %3694 = vmatprep.mubr.f32.mxu0 %v3131
        %3695 = vmatmul.mubr.f32.gmra.mrb[0].mxu0 %v2939
        %v3696 = vpop.f32.mrb[0].mxu0
        %v3697 = vadd.f32 %v3186, %v3696
        %v3698 = vpop.f32.mrb[0].mxu0
        %3699 = vmatprep.mubr.f32.mxu0 %v3132
        %3700 = vmatmul.mubr.f32.gmra.mrb[0].mxu0 %v2940
        %v3701 = vpop.f32.mrb[0].mxu0
        %v3702 = vadd.f32 %v3186, %v3701
        %v3703 = vpop.f32.mrb[0].mxu0
        %3704 = vmatprep.mubr.f32.mxu0 %v3133
        %3705 = vmatmul.mubr.f32.gmra.mrb[0].mxu0 %v2941
        %v3706 = vpop.f32.mrb[0].mxu0
        %v3707 = vadd.f32 %v3186, %v3706
        %v3708 = vpop.f32.mrb[0].mxu0
        %3709 = vmatprep.mubr.f32.mxu0 %v3134
        %3710 = vmatmul.mubr.f32.gmra.mrb[0].mxu0 %v2942
        %v3711 = vpop.f32.mrb[0].mxu0
        %v3712 = vadd.f32 %v3186, %v3711
        %v3713 = vpop.f32.mrb[0].mxu0
        %3714 = vmatprep.mubr.f32.mxu0 %v3135
        %3715 = vmatmul.mubr.f32.gmra.mrb[0].mxu0 %v2943
        %v3716 = vpop.f32.mrb[0].mxu0
        %v3717 = vadd.f32 %v3186, %v3716
        %v3718 = vpop.f32.mrb[0].mxu0
        %3719 = vmatprep.mubr.f32.mxu0 %v3136
        %3720 = vmatmul.mubr.f32.gmra.mrb[0].mxu0 %v2944
        %v3721 = vpop.f32.mrb[0].mxu0
        %v3722 = vadd.f32 %v3186, %v3721
        %v3723 = vpop.f32.mrb[0].mxu0
        %3724 = vmatprep.mubr.f32.mxu0 %v3137
        %3725 = vmatmul.mubr.f32.gmra.mrb[0].mxu0 %v2945
        %v3726 = vpop.f32.mrb[0].mxu0
        %v3727 = vadd.f32 %v3186, %v3726
        %v3728 = vpop.f32.mrb[0].mxu0
        %3729 = vmatprep.mubr.f32.mxu0 %v3138
        %3730 = vmatmul.mubr.f32.gmra.mrb[0].mxu0 %v2946
        %v3731 = vpop.f32.mrb[0].mxu0
        %v3732 = vadd.f32 %v3186, %v3731
        %v3733 = vpop.f32.mrb[0].mxu0
        %3734 = vmatprep.mubr.f32.mxu0 %v3139
        %3735 = vmatmul.mubr.f32.gmra.mrb[0].mxu0 %v2947
        %v3736 = vpop.f32.mrb[0].mxu0
        %v3737 = vadd.f32 %v3186, %v3736
        %v3738 = vpop.f32.mrb[0].mxu0
        %3739 = vmatprep.mubr.f32.mxu0 %v3140
        %3740 = vmatmul.mubr.f32.gmra.mrb[0].mxu0 %v2948
        %v3741 = vpop.f32.mrb[0].mxu0
        %v3742 = vadd.f32 %v3186, %v3741
        %v3743 = vpop.f32.mrb[0].mxu0
        %3744 = vmatprep.mubr.f32.mxu0 %v3141
        %3745 = vmatmul.mubr.f32.gmra.mrb[0].mxu0 %v2949
        %v3746 = vpop.f32.mrb[0].mxu0
        %v3747 = vadd.f32 %v3186, %v3746
        %v3748 = vpop.f32.mrb[0].mxu0
        %3749 = vmatprep.mubr.f32.mxu0 %v3142
        %3750 = vmatmul.mubr.f32.gmra.mrb[0].mxu0 %v2950
        %v3751 = vpop.f32.mrb[0].mxu0
        %v3752 = vadd.f32 %v3186, %v3751
        %v3753 = vpop.f32.mrb[0].mxu0
        %3754 = vmatprep.mubr.f32.mxu0 %v3143
        %3755 = vmatmul.mubr.f32.gmra.mrb[0].mxu0 %v2951
        %v3756 = vpop.f32.mrb[0].mxu0
        %v3757 = vadd.f32 %v3186, %v3756
        %v3758 = vpop.f32.mrb[0].mxu0
        %3759 = vmatprep.mubr.f32.mxu0 %v3144
        %3760 = vmatmul.mubr.f32.gmra.mrb[0].mxu0 %v2952
        %v3761 = vpop.f32.mrb[0].mxu0
        %v3762 = vadd.f32 %v3186, %v3761
        %v3763 = vpop.f32.mrb[0].mxu0
        %3764 = vdwg.mxu0
        %3765 = vmatprep.subr.mxu0 0.0
        %3766 = vmatpush1.msra.mxu0 %v3177
        %3767 = vmatprep.subr.mxu0 0.0
        %3768 = vmatpush1.msra.mxu0 %v3178
        %3769 = vmatprep.subr.mxu0 0.0
        %3770 = vmatpush1.msra.mxu0 %v3179
        %3771 = vmatprep.subr.mxu0 0.0
        %3772 = vmatpush1.msra.mxu0 %v3180
        %3773 = vmatprep.subr.mxu0 0.0
        %3774 = vmatpush1.msra.mxu0 0.0
        %3775 = vmatprep.subr.mxu0 0.0
        %3776 = vmatpush1.msra.mxu0 0.0
        %3777 = vmatprep.subr.mxu0 0.0
        %3778 = vmatpush1.msra.mxu0 0.0
        %3779 = vmatprep.subr.mxu0 0.0
        %3780 = vmatpush1.msra.mxu0 0.0
        %3781 = vmatprep.subr.mxu0 0.0
        %3782 = vmatpush1.msra.mxu0 0.0
        %3783 = vmatprep.subr.mxu0 0.0
        %3784 = vmatpush1.msra.mxu0 0.0
        %3785 = vmatprep.subr.mxu0 0.0
        %3786 = vmatpush1.msra.mxu0 0.0
        %3787 = vmatprep.subr.mxu0 0.0
        %3788 = vmatpush1.msra.mxu0 0.0
        %3789 = vmatprep.subr.mxu0 0.0
        %3790 = vmatpush1.msra.mxu0 0.0
        %3791 = vmatprep.subr.mxu0 0.0
        %3792 = vmatpush1.msra.mxu0 0.0
        %3793 = vmatprep.subr.mxu0 0.0
        %3794 = vmatpush1.msra.mxu0 0.0
        %3795 = vmatprep.subr.mxu0 0.0
        %3796 = vmatpush1.msra.mxu0 0.0
        %3797 = vmatprep.subr.mxu0 0.0
        %3798 = vmatpush1.msra.mxu0 0.0
        %3799 = vmatprep.subr.mxu0 0.0
        %3800 = vmatpush1.msra.mxu0 0.0
        %3801 = vmatprep.subr.mxu0 0.0
        %3802 = vmatpush1.msra.mxu0 0.0
        %3803 = vmatprep.subr.mxu0 0.0
        %3804 = vmatpush1.msra.mxu0 0.0
        %3805 = vmatprep.subr.mxu0 0.0
        %3806 = vmatpush1.msra.mxu0 0.0
        %3807 = vmatprep.subr.mxu0 0.0
        %3808 = vmatpush1.msra.mxu0 0.0
        %3809 = vmatprep.subr.mxu0 0.0
        %3810 = vmatpush1.msra.mxu0 0.0
        %3811 = vmatprep.subr.mxu0 0.0
        %3812 = vmatpush1.msra.mxu0 0.0
        %3813 = vmatprep.subr.mxu0 0.0
        %3814 = vmatpush1.msra.mxu0 0.0
        %3815 = vmatprep.subr.mxu0 0.0
        %3816 = vmatpush1.msra.mxu0 0.0
        %3817 = vmatprep.subr.mxu0 0.0
        %3818 = vmatpush1.msra.mxu0 0.0
        %3819 = vmatprep.subr.mxu0 0.0
        %3820 = vmatpush1.msra.mxu0 0.0
        %3821 = vmatprep.subr.mxu0 0.0
        %3822 = vmatpush1.msra.mxu0 0.0
        %3823 = vmatprep.subr.mxu0 0.0
        %3824 = vmatpush1.msra.mxu0 0.0
        %3825 = vmatprep.subr.mxu0 0.0
        %3826 = vmatpush1.msra.mxu0 0.0
        %3827 = vmatprep.subr.mxu0 0.0
        %3828 = vmatpush1.msra.mxu0 0.0
        %3829 = vmatprep.mubr.f32.mxu0 0.0
        %3830 = vmatmul.mubr.f32.gmra.mrb[0].mxu0 %v3189
        %v3831 = vpop.f32.mrb[0].mxu0
        %v3832 = vadd.f32 %v3447, %v3831
        %v3833 = vpop.f32.mrb[0].mxu0
        %3834 = vmatprep.mubr.f32.mxu0 0.0
        %3835 = vmatmul.mubr.f32.gmra.mrb[0].mxu0 %v3192
        %v3836 = vpop.f32.mrb[0].mxu0
        %v3837 = vadd.f32 %v3452, %v3836
        %v3838 = vpop.f32.mrb[0].mxu0
        %3839 = vmatprep.mubr.f32.mxu0 0.0
        %3840 = vmatmul.mubr.f32.gmra.mrb[0].mxu0 %v3195
        %v3841 = vpop.f32.mrb[0].mxu0
        %v3842 = vadd.f32 %v3457, %v3841
        %v3843 = vpop.f32.mrb[0].mxu0
        %3844 = vmatprep.mubr.f32.mxu0 0.0
        %3845 = vmatmul.mubr.f32.gmra.mrb[0].mxu0 %v3198
        %v3846 = vpop.f32.mrb[0].mxu0
        %v3847 = vadd.f32 %v3462, %v3846
        %v3848 = vpop.f32.mrb[0].mxu0
        %3849 = vmatprep.mubr.f32.mxu0 0.0
        %3850 = vmatmul.mubr.f32.gmra.mrb[0].mxu0 %v3201
        %v3851 = vpop.f32.mrb[0].mxu0
        %v3852 = vadd.f32 %v3467, %v3851
        %v3853 = vpop.f32.mrb[0].mxu0
        %3854 = vmatprep.mubr.f32.mxu0 0.0
        %3855 = vmatmul.mubr.f32.gmra.mrb[0].mxu0 %v3204
        %v3856 = vpop.f32.mrb[0].mxu0
        %v3857 = vadd.f32 %v3472, %v3856
        %v3858 = vpop.f32.mrb[0].mxu0
        %3859 = vmatprep.mubr.f32.mxu0 0.0
        %3860 = vmatmul.mubr.f32.gmra.mrb[0].mxu0 %v3207
        %v3861 = vpop.f32.mrb[0].mxu0
        %v3862 = vadd.f32 %v3477, %v3861
        %v3863 = vpop.f32.mrb[0].mxu0
        %3864 = vmatprep.mubr.f32.mxu0 0.0
        %3865 = vmatmul.mubr.f32.gmra.mrb[0].mxu0 %v3210
        %v3866 = vpop.f32.mrb[0].mxu0
        %v3867 = vadd.f32 %v3482, %v3866
        %v3868 = vpop.f32.mrb[0].mxu0
        %3869 = vmatprep.mubr.f32.mxu0 0.0
        %3870 = vmatmul.mubr.f32.gmra.mrb[0].mxu0 %v3213
        %v3871 = vpop.f32.mrb[0].mxu0
        %v3872 = vadd.f32 %v3487, %v3871
        %v3873 = vpop.f32.mrb[0].mxu0
        %3874 = vmatprep.mubr.f32.mxu0 0.0
        %3875 = vmatmul.mubr.f32.gmra.mrb[0].mxu0 %v3216
        %v3876 = vpop.f32.mrb[0].mxu0
        %v3877 = vadd.f32 %v3492, %v3876
        %v3878 = vpop.f32.mrb[0].mxu0
        %3879 = vmatprep.mubr.f32.mxu0 0.0
        %3880 = vmatmul.mubr.f32.gmra.mrb[0].mxu0 %v3219
        %v3881 = vpop.f32.mrb[0].mxu0
        %v3882 = vadd.f32 %v3497, %v3881
        %v3883 = vpop.f32.mrb[0].mxu0
        %3884 = vmatprep.mubr.f32.mxu0 0.0
        %3885 = vmatmul.mubr.f32.gmra.mrb[0].mxu0 %v3222
        %v3886 = vpop.f32.mrb[0].mxu0
        %v3887 = vadd.f32 %v3502, %v3886
        %v3888 = vpop.f32.mrb[0].mxu0
        %3889 = vmatprep.mubr.f32.mxu0 0.0
        %3890 = vmatmul.mubr.f32.gmra.mrb[0].mxu0 %v3225
        %v3891 = vpop.f32.mrb[0].mxu0
        %v3892 = vadd.f32 %v3507, %v3891
        %v3893 = vpop.f32.mrb[0].mxu0
        %3894 = vmatprep.mubr.f32.mxu0 0.0
        %3895 = vmatmul.mubr.f32.gmra.mrb[0].mxu0 %v3228
        %v3896 = vpop.f32.mrb[0].mxu0
        %v3897 = vadd.f32 %v3512, %v3896
        %v3898 = vpop.f32.mrb[0].mxu0
        %3899 = vmatprep.mubr.f32.mxu0 0.0
        %3900 = vmatmul.mubr.f32.gmra.mrb[0].mxu0 %v3231
        %v3901 = vpop.f32.mrb[0].mxu0
        %v3902 = vadd.f32 %v3517, %v3901
        %v3903 = vpop.f32.mrb[0].mxu0
        %3904 = vmatprep.mubr.f32.mxu0 0.0
        %3905 = vmatmul.mubr.f32.gmra.mrb[0].mxu0 %v3234
        %v3906 = vpop.f32.mrb[0].mxu0
        %v3907 = vadd.f32 %v3522, %v3906
        %v3908 = vpop.f32.mrb[0].mxu0
        %3909 = vmatprep.mubr.f32.mxu0 0.0
        %3910 = vmatmul.mubr.f32.gmra.mrb[0].mxu0 %v3237
        %v3911 = vpop.f32.mrb[0].mxu0
        %v3912 = vadd.f32 %v3527, %v3911
        %v3913 = vpop.f32.mrb[0].mxu0
        %3914 = vmatprep.mubr.f32.mxu0 0.0
        %3915 = vmatmul.mubr.f32.gmra.mrb[0].mxu0 %v3240
        %v3916 = vpop.f32.mrb[0].mxu0
        %v3917 = vadd.f32 %v3532, %v3916
        %v3918 = vpop.f32.mrb[0].mxu0
        %3919 = vmatprep.mubr.f32.mxu0 0.0
        %3920 = vmatmul.mubr.f32.gmra.mrb[0].mxu0 %v3243
        %v3921 = vpop.f32.mrb[0].mxu0
        %v3922 = vadd.f32 %v3537, %v3921
        %v3923 = vpop.f32.mrb[0].mxu0
        %3924 = vmatprep.mubr.f32.mxu0 0.0
        %3925 = vmatmul.mubr.f32.gmra.mrb[0].mxu0 %v3246
        %v3926 = vpop.f32.mrb[0].mxu0
        %v3927 = vadd.f32 %v3542, %v3926
        %v3928 = vpop.f32.mrb[0].mxu0
        %3929 = vmatprep.mubr.f32.mxu0 0.0
        %3930 = vmatmul.mubr.f32.gmra.mrb[0].mxu0 %v3249
        %v3931 = vpop.f32.mrb[0].mxu0
        %v3932 = vadd.f32 %v3547, %v3931
        %v3933 = vpop.f32.mrb[0].mxu0
        %3934 = vmatprep.mubr.f32.mxu0 0.0
        %3935 = vmatmul.mubr.f32.gmra.mrb[0].mxu0 %v3252
        %v3936 = vpop.f32.mrb[0].mxu0
        %v3937 = vadd.f32 %v3552, %v3936
        %v3938 = vpop.f32.mrb[0].mxu0
        %3939 = vmatprep.mubr.f32.mxu0 0.0
        %3940 = vmatmul.mubr.f32.gmra.mrb[0].mxu0 %v3255
        %v3941 = vpop.f32.mrb[0].mxu0
        %v3942 = vadd.f32 %v3557, %v3941
        %v3943 = vpop.f32.mrb[0].mxu0
        %3944 = vmatprep.mubr.f32.mxu0 0.0
        %3945 = vmatmul.mubr.f32.gmra.mrb[0].mxu0 %v3258
        %v3946 = vpop.f32.mrb[0].mxu0
        %v3947 = vadd.f32 %v3562, %v3946
        %v3948 = vpop.f32.mrb[0].mxu0
        %3949 = vmatprep.mubr.f32.mxu0 0.0
        %3950 = vmatmul.mubr.f32.gmra.mrb[0].mxu0 %v3261
        %v3951 = vpop.f32.mrb[0].mxu0
        %v3952 = vadd.f32 %v3567, %v3951
        %v3953 = vpop.f32.mrb[0].mxu0
        %3954 = vmatprep.mubr.f32.mxu0 0.0
        %3955 = vmatmul.mubr.f32.gmra.mrb[0].mxu0 %v3264
        %v3956 = vpop.f32.mrb[0].mxu0
        %v3957 = vadd.f32 %v3572, %v3956
        %v3958 = vpop.f32.mrb[0].mxu0
        %3959 = vmatprep.mubr.f32.mxu0 0.0
        %3960 = vmatmul.mubr.f32.gmra.mrb[0].mxu0 %v3267
        %v3961 = vpop.f32.mrb[0].mxu0
        %v3962 = vadd.f32 %v3577, %v3961
        %v3963 = vpop.f32.mrb[0].mxu0
        %3964 = vmatprep.mubr.f32.mxu0 0.0
        %3965 = vmatmul.mubr.f32.gmra.mrb[0].mxu0 %v3270
        %v3966 = vpop.f32.mrb[0].mxu0
        %v3967 = vadd.f32 %v3582, %v3966
        %v3968 = vpop.f32.mrb[0].mxu0
        %3969 = vmatprep.mubr.f32.mxu0 0.0
        %3970 = vmatmul.mubr.f32.gmra.mrb[0].mxu0 %v3273
        %v3971 = vpop.f32.mrb[0].mxu0
        %v3972 = vadd.f32 %v3587, %v3971
        %v3973 = vpop.f32.mrb[0].mxu0
        %3974 = vmatprep.mubr.f32.mxu0 0.0
        %3975 = vmatmul.mubr.f32.gmra.mrb[0].mxu0 %v3276
        %v3976 = vpop.f32.mrb[0].mxu0
        %v3977 = vadd.f32 %v3592, %v3976
        %v3978 = vpop.f32.mrb[0].mxu0
        %3979 = vmatprep.mubr.f32.mxu0 0.0
        %3980 = vmatmul.mubr.f32.gmra.mrb[0].mxu0 %v3279
        %v3981 = vpop.f32.mrb[0].mxu0
        %v3982 = vadd.f32 %v3597, %v3981
        %v3983 = vpop.f32.mrb[0].mxu0
        %3984 = vmatprep.mubr.f32.mxu0 0.0
        %3985 = vmatmul.mubr.f32.gmra.mrb[0].mxu0 %v3282
        %v3986 = vpop.f32.mrb[0].mxu0
        %v3987 = vadd.f32 %v3602, %v3986
        %v3988 = vpop.f32.mrb[0].mxu0
        %3989 = vmatprep.mubr.f32.mxu0 0.0
        %3990 = vmatmul.mubr.f32.gmra.mrb[0].mxu0 %v3285
        %v3991 = vpop.f32.mrb[0].mxu0
        %v3992 = vadd.f32 %v3607, %v3991
        %v3993 = vpop.f32.mrb[0].mxu0
        %3994 = vmatprep.mubr.f32.mxu0 0.0
        %3995 = vmatmul.mubr.f32.gmra.mrb[0].mxu0 %v3288
        %v3996 = vpop.f32.mrb[0].mxu0
        %v3997 = vadd.f32 %v3612, %v3996
        %v3998 = vpop.f32.mrb[0].mxu0
        %3999 = vmatprep.mubr.f32.mxu0 0.0
        %4000 = vmatmul.mubr.f32.gmra.mrb[0].mxu0 %v3291
        %v4001 = vpop.f32.mrb[0].mxu0
        %v4002 = vadd.f32 %v3617, %v4001
        %v4003 = vpop.f32.mrb[0].mxu0
        %4004 = vmatprep.mubr.f32.mxu0 0.0
        %4005 = vmatmul.mubr.f32.gmra.mrb[0].mxu0 %v3294
        %v4006 = vpop.f32.mrb[0].mxu0
        %v4007 = vadd.f32 %v3622, %v4006
        %v4008 = vpop.f32.mrb[0].mxu0
        %4009 = vmatprep.mubr.f32.mxu0 0.0
        %4010 = vmatmul.mubr.f32.gmra.mrb[0].mxu0 %v3297
        %v4011 = vpop.f32.mrb[0].mxu0
        %v4012 = vadd.f32 %v3627, %v4011
        %v4013 = vpop.f32.mrb[0].mxu0
        %4014 = vmatprep.mubr.f32.mxu0 0.0
        %4015 = vmatmul.mubr.f32.gmra.mrb[0].mxu0 %v3300
        %v4016 = vpop.f32.mrb[0].mxu0
        %v4017 = vadd.f32 %v3632, %v4016
        %v4018 = vpop.f32.mrb[0].mxu0
        %4019 = vmatprep.mubr.f32.mxu0 0.0
        %4020 = vmatmul.mubr.f32.gmra.mrb[0].mxu0 %v3303
        %v4021 = vpop.f32.mrb[0].mxu0
        %v4022 = vadd.f32 %v3637, %v4021
        %v4023 = vpop.f32.mrb[0].mxu0
        %4024 = vmatprep.mubr.f32.mxu0 0.0
        %4025 = vmatmul.mubr.f32.gmra.mrb[0].mxu0 %v3306
        %v4026 = vpop.f32.mrb[0].mxu0
        %v4027 = vadd.f32 %v3642, %v4026
        %v4028 = vpop.f32.mrb[0].mxu0
        %4029 = vmatprep.mubr.f32.mxu0 0.0
        %4030 = vmatmul.mubr.f32.gmra.mrb[0].mxu0 %v3309
        %v4031 = vpop.f32.mrb[0].mxu0
        %v4032 = vadd.f32 %v3647, %v4031
        %v4033 = vpop.f32.mrb[0].mxu0
        %4034 = vmatprep.mubr.f32.mxu0 0.0
        %4035 = vmatmul.mubr.f32.gmra.mrb[0].mxu0 %v3312
        %v4036 = vpop.f32.mrb[0].mxu0
        %v4037 = vadd.f32 %v3652, %v4036
        %v4038 = vpop.f32.mrb[0].mxu0
        %4039 = vmatprep.mubr.f32.mxu0 0.0
        %4040 = vmatmul.mubr.f32.gmra.mrb[0].mxu0 %v3315
        %v4041 = vpop.f32.mrb[0].mxu0
        %v4042 = vadd.f32 %v3657, %v4041
        %v4043 = vpop.f32.mrb[0].mxu0
        %4044 = vmatprep.mubr.f32.mxu0 0.0
        %4045 = vmatmul.mubr.f32.gmra.mrb[0].mxu0 %v3318
        %v4046 = vpop.f32.mrb[0].mxu0
        %v4047 = vadd.f32 %v3662, %v4046
        %v4048 = vpop.f32.mrb[0].mxu0
        %4049 = vmatprep.mubr.f32.mxu0 0.0
        %4050 = vmatmul.mubr.f32.gmra.mrb[0].mxu0 %v3321
        %v4051 = vpop.f32.mrb[0].mxu0
        %v4052 = vadd.f32 %v3667, %v4051
        %v4053 = vpop.f32.mrb[0].mxu0
        %4054 = vmatprep.mubr.f32.mxu0 0.0
        %4055 = vmatmul.mubr.f32.gmra.mrb[0].mxu0 %v3324
        %v4056 = vpop.f32.mrb[0].mxu0
        %v4057 = vadd.f32 %v3672, %v4056
        %v4058 = vpop.f32.mrb[0].mxu0
        %4059 = vmatprep.mubr.f32.mxu0 0.0
        %4060 = vmatmul.mubr.f32.gmra.mrb[0].mxu0 %v3327
        %v4061 = vpop.f32.mrb[0].mxu0
        %v4062 = vadd.f32 %v3677, %v4061
        %v4063 = vpop.f32.mrb[0].mxu0
        %4064 = vmatprep.mubr.f32.mxu0 0.0
        %4065 = vmatmul.mubr.f32.gmra.mrb[0].mxu0 %v3330
        %v4066 = vpop.f32.mrb[0].mxu0
        %v4067 = vadd.f32 %v3682, %v4066
        %v4068 = vpop.f32.mrb[0].mxu0
        %4069 = vmatprep.mubr.f32.mxu0 0.0
        %4070 = vmatmul.mubr.f32.gmra.mrb[0].mxu0 %v3333
        %v4071 = vpop.f32.mrb[0].mxu0
        %v4072 = vadd.f32 %v3687, %v4071
        %v4073 = vpop.f32.mrb[0].mxu0
        %4074 = vmatprep.mubr.f32.mxu0 0.0
        %4075 = vmatmul.mubr.f32.gmra.mrb[0].mxu0 %v3336
        %v4076 = vpop.f32.mrb[0].mxu0
        %v4077 = vadd.f32 %v3692, %v4076
        %v4078 = vpop.f32.mrb[0].mxu0
        %4079 = vmatprep.mubr.f32.mxu0 0.0
        %4080 = vmatmul.mubr.f32.gmra.mrb[0].mxu0 %v3339
        %v4081 = vpop.f32.mrb[0].mxu0
        %v4082 = vadd.f32 %v3697, %v4081
        %v4083 = vpop.f32.mrb[0].mxu0
        %4084 = vmatprep.mubr.f32.mxu0 0.0
        %4085 = vmatmul.mubr.f32.gmra.mrb[0].mxu0 %v3342
        %v4086 = vpop.f32.mrb[0].mxu0
        %v4087 = vadd.f32 %v3702, %v4086
        %v4088 = vpop.f32.mrb[0].mxu0
        %4089 = vmatprep.mubr.f32.mxu0 0.0
        %4090 = vmatmul.mubr.f32.gmra.mrb[0].mxu0 %v3345
        %v4091 = vpop.f32.mrb[0].mxu0
        %v4092 = vadd.f32 %v3707, %v4091
        %v4093 = vpop.f32.mrb[0].mxu0
        %4094 = vmatprep.mubr.f32.mxu0 0.0
        %4095 = vmatmul.mubr.f32.gmra.mrb[0].mxu0 %v3348
        %v4096 = vpop.f32.mrb[0].mxu0
        %v4097 = vadd.f32 %v3712, %v4096
        %v4098 = vpop.f32.mrb[0].mxu0
        %4099 = vmatprep.mubr.f32.mxu0 0.0
        %4100 = vmatmul.mubr.f32.gmra.mrb[0].mxu0 %v3351
        %v4101 = vpop.f32.mrb[0].mxu0
        %v4102 = vadd.f32 %v3717, %v4101
        %v4103 = vpop.f32.mrb[0].mxu0
        %4104 = vmatprep.mubr.f32.mxu0 0.0
        %4105 = vmatmul.mubr.f32.gmra.mrb[0].mxu0 %v3354
        %v4106 = vpop.f32.mrb[0].mxu0
        %v4107 = vadd.f32 %v3722, %v4106
        %v4108 = vpop.f32.mrb[0].mxu0
        %4109 = vmatprep.mubr.f32.mxu0 0.0
        %4110 = vmatmul.mubr.f32.gmra.mrb[0].mxu0 %v3357
        %v4111 = vpop.f32.mrb[0].mxu0
        %v4112 = vadd.f32 %v3727, %v4111
        %v4113 = vpop.f32.mrb[0].mxu0
        %4114 = vmatprep.mubr.f32.mxu0 0.0
        %4115 = vmatmul.mubr.f32.gmra.mrb[0].mxu0 %v3360
        %v4116 = vpop.f32.mrb[0].mxu0
        %v4117 = vadd.f32 %v3732, %v4116
        %v4118 = vpop.f32.mrb[0].mxu0
        %4119 = vmatprep.mubr.f32.mxu0 0.0
        %4120 = vmatmul.mubr.f32.gmra.mrb[0].mxu0 %v3363
        %v4121 = vpop.f32.mrb[0].mxu0
        %v4122 = vadd.f32 %v3737, %v4121
        %v4123 = vpop.f32.mrb[0].mxu0
        %4124 = vmatprep.mubr.f32.mxu0 0.0
        %4125 = vmatmul.mubr.f32.gmra.mrb[0].mxu0 %v3366
        %v4126 = vpop.f32.mrb[0].mxu0
        %v4127 = vadd.f32 %v3742, %v4126
        %v4128 = vpop.f32.mrb[0].mxu0
        %4129 = vmatprep.mubr.f32.mxu0 0.0
        %4130 = vmatmul.mubr.f32.gmra.mrb[0].mxu0 %v3369
        %v4131 = vpop.f32.mrb[0].mxu0
        %v4132 = vadd.f32 %v3747, %v4131
        %v4133 = vpop.f32.mrb[0].mxu0
        %4134 = vmatprep.mubr.f32.mxu0 0.0
        %4135 = vmatmul.mubr.f32.gmra.mrb[0].mxu0 %v3372
        %v4136 = vpop.f32.mrb[0].mxu0
        %v4137 = vadd.f32 %v3752, %v4136
        %v4138 = vpop.f32.mrb[0].mxu0
        %4139 = vmatprep.mubr.f32.mxu0 0.0
        %4140 = vmatmul.mubr.f32.gmra.mrb[0].mxu0 %v3375
        %v4141 = vpop.f32.mrb[0].mxu0
        %v4142 = vadd.f32 %v3757, %v4141
        %v4143 = vpop.f32.mrb[0].mxu0
        %4144 = vmatprep.mubr.f32.mxu0 0.0
        %4145 = vmatmul.mubr.f32.gmra.mrb[0].mxu0 %v3378
        %v4146 = vpop.f32.mrb[0].mxu0
        %v4147 = vadd.f32 %v3762, %v4146
        %v4148 = vpop.f32.mrb[0].mxu0
        %4149 = vdwg.mxu0
        %vm4150 = vcmask 48128
        %4151 = vst.msk [vmem:[%s205] sm:$0xff] %vm4150, %v3832
        %4152 = vst.msk [vmem:[%s205 + $0x8] sm:$0xff] %vm4150, %v3837
        %4153 = vst.msk [vmem:[%s205 + $0x10] sm:$0xff] %vm4150, %v3842
        %4154 = vst.msk [vmem:[%s205 + $0x18] sm:$0xff] %vm4150, %v3847
        %4155 = vst.msk [vmem:[%s205 + $0x40] sm:$0xff] %vm4150, %v3852
        %4156 = vst.msk [vmem:[%s205 + $0x48] sm:$0xff] %vm4150, %v3857
        %4157 = vst.msk [vmem:[%s205 + $0x50] sm:$0xff] %vm4150, %v3862
        %4158 = vst.msk [vmem:[%s205 + $0x58] sm:$0xff] %vm4150, %v3867
        %4159 = vst.msk [vmem:[%s205 + $0x80] sm:$0xff] %vm4150, %v3872
        %4160 = vst.msk [vmem:[%s205 + $0x88] sm:$0xff] %vm4150, %v3877
        %4161 = vst.msk [vmem:[%s205 + $0x90] sm:$0xff] %vm4150, %v3882
        %4162 = vst.msk [vmem:[%s205 + $0x98] sm:$0xff] %vm4150, %v3887
        %4163 = vst.msk [vmem:[%s205 + $0xc0] sm:$0xff] %vm4150, %v3892
        %4164 = vst.msk [vmem:[%s205 + $0xc8] sm:$0xff] %vm4150, %v3897
        %4165 = vst.msk [vmem:[%s205 + $0xd0] sm:$0xff] %vm4150, %v3902
        %4166 = vst.msk [vmem:[%s205 + $0xd8] sm:$0xff] %vm4150, %v3907
        %4167 = vst.msk [vmem:[%s205 + $0x100] sm:$0xff] %vm4150, %v3912
        %4168 = vst.msk [vmem:[%s205 + $0x108] sm:$0xff] %vm4150, %v3917
        %4169 = vst.msk [vmem:[%s205 + $0x110] sm:$0xff] %vm4150, %v3922
        %4170 = vst.msk [vmem:[%s205 + $0x118] sm:$0xff] %vm4150, %v3927
        %4171 = vst.msk [vmem:[%s205 + $0x140] sm:$0xff] %vm4150, %v3932
        %4172 = vst.msk [vmem:[%s205 + $0x148] sm:$0xff] %vm4150, %v3937
        %4173 = vst.msk [vmem:[%s205 + $0x150] sm:$0xff] %vm4150, %v3942
        %4174 = vst.msk [vmem:[%s205 + $0x158] sm:$0xff] %vm4150, %v3947
        %4175 = vst.msk [vmem:[%s205 + $0x180] sm:$0xff] %vm4150, %v3952
        %4176 = vst.msk [vmem:[%s205 + $0x188] sm:$0xff] %vm4150, %v3957
        %4177 = vst.msk [vmem:[%s205 + $0x190] sm:$0xff] %vm4150, %v3962
        %4178 = vst.msk [vmem:[%s205 + $0x198] sm:$0xff] %vm4150, %v3967
        %4179 = vst.msk [vmem:[%s205 + $0x1c0] sm:$0xff] %vm4150, %v3972
        %4180 = vst.msk [vmem:[%s205 + $0x1c8] sm:$0xff] %vm4150, %v3977
        %4181 = vst.msk [vmem:[%s205 + $0x1d0] sm:$0xff] %vm4150, %v3982
        %4182 = vst.msk [vmem:[%s205 + $0x1d8] sm:$0xff] %vm4150, %v3987
        %4183 = vst.msk [vmem:[%s205 + $0x200] sm:$0xff] %vm4150, %v3992
        %4184 = vst.msk [vmem:[%s205 + $0x208] sm:$0xff] %vm4150, %v3997
        %4185 = vst.msk [vmem:[%s205 + $0x210] sm:$0xff] %vm4150, %v4002
        %4186 = vst.msk [vmem:[%s205 + $0x218] sm:$0xff] %vm4150, %v4007
        %4187 = vst.msk [vmem:[%s205 + $0x240] sm:$0xff] %vm4150, %v4012
        %4188 = vst.msk [vmem:[%s205 + $0x248] sm:$0xff] %vm4150, %v4017
        %4189 = vst.msk [vmem:[%s205 + $0x250] sm:$0xff] %vm4150, %v4022
        %4190 = vst.msk [vmem:[%s205 + $0x258] sm:$0xff] %vm4150, %v4027
        %4191 = vst.msk [vmem:[%s205 + $0x280] sm:$0xff] %vm4150, %v4032
        %4192 = vst.msk [vmem:[%s205 + $0x288] sm:$0xff] %vm4150, %v4037
        %4193 = vst.msk [vmem:[%s205 + $0x290] sm:$0xff] %vm4150, %v4042
        %4194 = vst.msk [vmem:[%s205 + $0x298] sm:$0xff] %vm4150, %v4047
        %4195 = vst.msk [vmem:[%s205 + $0x2c0] sm:$0xff] %vm4150, %v4052
        %4196 = vst.msk [vmem:[%s205 + $0x2c8] sm:$0xff] %vm4150, %v4057
        %4197 = vst.msk [vmem:[%s205 + $0x2d0] sm:$0xff] %vm4150, %v4062
        %4198 = vst.msk [vmem:[%s205 + $0x2d8] sm:$0xff] %vm4150, %v4067
        %4199 = vst.msk [vmem:[%s205 + $0x300] sm:$0xff] %vm4150, %v4072
        %4200 = vst.msk [vmem:[%s205 + $0x308] sm:$0xff] %vm4150, %v4077
        %4201 = vst.msk [vmem:[%s205 + $0x310] sm:$0xff] %vm4150, %v4082
        %4202 = vst.msk [vmem:[%s205 + $0x318] sm:$0xff] %vm4150, %v4087
        %4203 = vst.msk [vmem:[%s205 + $0x340] sm:$0xff] %vm4150, %v4092
        %4204 = vst.msk [vmem:[%s205 + $0x348] sm:$0xff] %vm4150, %v4097
        %4205 = vst.msk [vmem:[%s205 + $0x350] sm:$0xff] %vm4150, %v4102
        %4206 = vst.msk [vmem:[%s205 + $0x358] sm:$0xff] %vm4150, %v4107
        %4207 = vst.msk [vmem:[%s205 + $0x380] sm:$0xff] %vm4150, %v4112
        %4208 = vst.msk [vmem:[%s205 + $0x388] sm:$0xff] %vm4150, %v4117
        %4209 = vst.msk [vmem:[%s205 + $0x390] sm:$0xff] %vm4150, %v4122
        %4210 = vst.msk [vmem:[%s205 + $0x398] sm:$0xff] %vm4150, %v4127
        %4211 = vst.msk [vmem:[%s205 + $0x3c0] sm:$0xff] %vm4150, %v4132
        %4212 = vst.msk [vmem:[%s205 + $0x3c8] sm:$0xff] %vm4150, %v4137
        %4213 = vst.msk [vmem:[%s205 + $0x3d0] sm:$0xff] %vm4150, %v4142
        %4214 = vst.msk [vmem:[%s205 + $0x3d8] sm:$0xff] %vm4150, %v4147
        %4279 = vrot.lane.b32.xlu0 %v3832, 122
        %v4280 = vpop.permute.xlu0 %4279
        %4281 = vrot.lane.b32.xlu0 %v3837, 122
        %v4282 = vpop.permute.xlu0 %4281
        %4283 = vrot.lane.b32.xlu0 %v3842, 122
        %v4284 = vpop.permute.xlu0 %4283
        %4285 = vrot.lane.b32.xlu0 %v3847, 122
        %v4286 = vpop.permute.xlu0 %4285
        %4287 = vrot.lane.b32.xlu0 %v3852, 122
        %v4288 = vpop.permute.xlu0 %4287
        %4289 = vrot.lane.b32.xlu0 %v3857, 122
        %v4290 = vpop.permute.xlu0 %4289
        %4291 = vrot.lane.b32.xlu0 %v3862, 122
        %v4292 = vpop.permute.xlu0 %4291
        %4293 = vrot.lane.b32.xlu0 %v3867, 122
        %v4294 = vpop.permute.xlu0 %4293
        %4295 = vrot.lane.b32.xlu0 %v3872, 122
        %v4296 = vpop.permute.xlu0 %4295
        %4297 = vrot.lane.b32.xlu0 %v3877, 122
        %v4298 = vpop.permute.xlu0 %4297
        %4299 = vrot.lane.b32.xlu0 %v3882, 122
        %v4300 = vpop.permute.xlu0 %4299
        %4301 = vrot.lane.b32.xlu0 %v3887, 122
        %v4302 = vpop.permute.xlu0 %4301
        %4303 = vrot.lane.b32.xlu0 %v3892, 122
        %v4304 = vpop.permute.xlu0 %4303
        %4305 = vrot.lane.b32.xlu0 %v3897, 122
        %v4306 = vpop.permute.xlu0 %4305
        %4307 = vrot.lane.b32.xlu0 %v3902, 122
        %v4308 = vpop.permute.xlu0 %4307
        %4309 = vrot.lane.b32.xlu0 %v3907, 122
        %v4310 = vpop.permute.xlu0 %4309
        %4311 = vrot.lane.b32.xlu0 %v3912, 122
        %v4312 = vpop.permute.xlu0 %4311
        %4313 = vrot.lane.b32.xlu0 %v3917, 122
        %v4314 = vpop.permute.xlu0 %4313
        %4315 = vrot.lane.b32.xlu0 %v3922, 122
        %v4316 = vpop.permute.xlu0 %4315
        %4317 = vrot.lane.b32.xlu0 %v3927, 122
        %v4318 = vpop.permute.xlu0 %4317
        %4319 = vrot.lane.b32.xlu0 %v3932, 122
        %v4320 = vpop.permute.xlu0 %4319
        %4321 = vrot.lane.b32.xlu0 %v3937, 122
        %v4322 = vpop.permute.xlu0 %4321
        %4323 = vrot.lane.b32.xlu0 %v3942, 122
        %v4324 = vpop.permute.xlu0 %4323
        %4325 = vrot.lane.b32.xlu0 %v3947, 122
        %v4326 = vpop.permute.xlu0 %4325
        %4327 = vrot.lane.b32.xlu0 %v3952, 122
        %v4328 = vpop.permute.xlu0 %4327
        %4329 = vrot.lane.b32.xlu0 %v3957, 122
        %v4330 = vpop.permute.xlu0 %4329
        %4331 = vrot.lane.b32.xlu0 %v3962, 122
        %v4332 = vpop.permute.xlu0 %4331
        %4333 = vrot.lane.b32.xlu0 %v3967, 122
        %v4334 = vpop.permute.xlu0 %4333
        %4335 = vrot.lane.b32.xlu0 %v3972, 122
        %v4336 = vpop.permute.xlu0 %4335
        %4337 = vrot.lane.b32.xlu0 %v3977, 122
        %v4338 = vpop.permute.xlu0 %4337
        %4339 = vrot.lane.b32.xlu0 %v3982, 122
        %v4340 = vpop.permute.xlu0 %4339
        %4341 = vrot.lane.b32.xlu0 %v3987, 122
        %v4342 = vpop.permute.xlu0 %4341
        %4343 = vrot.lane.b32.xlu0 %v3992, 122
        %v4344 = vpop.permute.xlu0 %4343
        %4345 = vrot.lane.b32.xlu0 %v3997, 122
        %v4346 = vpop.permute.xlu0 %4345
        %4347 = vrot.lane.b32.xlu0 %v4002, 122
        %v4348 = vpop.permute.xlu0 %4347
        %4349 = vrot.lane.b32.xlu0 %v4007, 122
        %v4350 = vpop.permute.xlu0 %4349
        %4351 = vrot.lane.b32.xlu0 %v4012, 122
        %v4352 = vpop.permute.xlu0 %4351
        %4353 = vrot.lane.b32.xlu0 %v4017, 122
        %v4354 = vpop.permute.xlu0 %4353
        %4355 = vrot.lane.b32.xlu0 %v4022, 122
        %v4356 = vpop.permute.xlu0 %4355
        %4357 = vrot.lane.b32.xlu0 %v4027, 122
        %v4358 = vpop.permute.xlu0 %4357
        %4359 = vrot.lane.b32.xlu0 %v4032, 122
        %v4360 = vpop.permute.xlu0 %4359
        %4361 = vrot.lane.b32.xlu0 %v4037, 122
        %v4362 = vpop.permute.xlu0 %4361
        %4363 = vrot.lane.b32.xlu0 %v4042, 122
        %v4364 = vpop.permute.xlu0 %4363
        %4365 = vrot.lane.b32.xlu0 %v4047, 122
        %v4366 = vpop.permute.xlu0 %4365
        %4367 = vrot.lane.b32.xlu0 %v4052, 122
        %v4368 = vpop.permute.xlu0 %4367
        %4369 = vrot.lane.b32.xlu0 %v4057, 122
        %v4370 = vpop.permute.xlu0 %4369
        %4371 = vrot.lane.b32.xlu0 %v4062, 122
        %v4372 = vpop.permute.xlu0 %4371
        %4373 = vrot.lane.b32.xlu0 %v4067, 122
        %v4374 = vpop.permute.xlu0 %4373
        %4375 = vrot.lane.b32.xlu0 %v4072, 122
        %v4376 = vpop.permute.xlu0 %4375
        %4377 = vrot.lane.b32.xlu0 %v4077, 122
        %v4378 = vpop.permute.xlu0 %4377
        %4379 = vrot.lane.b32.xlu0 %v4082, 122
        %v4380 = vpop.permute.xlu0 %4379
        %4381 = vrot.lane.b32.xlu0 %v4087, 122
        %v4382 = vpop.permute.xlu0 %4381
        %4383 = vrot.lane.b32.xlu0 %v4092, 122
        %v4384 = vpop.permute.xlu0 %4383
        %4385 = vrot.lane.b32.xlu0 %v4097, 122
        %v4386 = vpop.permute.xlu0 %4385
        %4387 = vrot.lane.b32.xlu0 %v4102, 122
        %v4388 = vpop.permute.xlu0 %4387
        %4389 = vrot.lane.b32.xlu0 %v4107, 122
        %v4390 = vpop.permute.xlu0 %4389
        %4391 = vrot.lane.b32.xlu0 %v4112, 122
        %v4392 = vpop.permute.xlu0 %4391
        %4393 = vrot.lane.b32.xlu0 %v4117, 122
        %v4394 = vpop.permute.xlu0 %4393
        %4395 = vrot.lane.b32.xlu0 %v4122, 122
        %v4396 = vpop.permute.xlu0 %4395
        %4397 = vrot.lane.b32.xlu0 %v4127, 122
        %v4398 = vpop.permute.xlu0 %4397
        %4399 = vrot.lane.b32.xlu0 %v4132, 122
        %v4400 = vpop.permute.xlu0 %4399
        %4401 = vrot.lane.b32.xlu0 %v4137, 122
        %v4402 = vpop.permute.xlu0 %4401
        %4403 = vrot.lane.b32.xlu0 %v4142, 122
        %v4404 = vpop.permute.xlu0 %4403
        %4405 = vrot.lane.b32.xlu0 %v4147, 122
        %v4406 = vpop.permute.xlu0 %4405
        %s4471 = scalar_lea.vmem %s205, 32
        %4472 = vst.msk [vmem:[%s4471] sm:$0xff] %vm4150, %v4280
        %4473 = vst.msk [vmem:[%s4471 + $0x8] sm:$0xff] %vm4150, %v4282
        %4474 = vst.msk [vmem:[%s4471 + $0x10] sm:$0xff] %vm4150, %v4284
        %4475 = vst.msk [vmem:[%s4471 + $0x18] sm:$0xff] %vm4150, %v4286
        %4476 = vst.msk [vmem:[%s4471 + $0x40] sm:$0xff] %vm4150, %v4288
        %4477 = vst.msk [vmem:[%s4471 + $0x48] sm:$0xff] %vm4150, %v4290
        %4478 = vst.msk [vmem:[%s4471 + $0x50] sm:$0xff] %vm4150, %v4292
        %4479 = vst.msk [vmem:[%s4471 + $0x58] sm:$0xff] %vm4150, %v4294
        %4480 = vst.msk [vmem:[%s4471 + $0x80] sm:$0xff] %vm4150, %v4296
        %4481 = vst.msk [vmem:[%s4471 + $0x88] sm:$0xff] %vm4150, %v4298
        %4482 = vst.msk [vmem:[%s4471 + $0x90] sm:$0xff] %vm4150, %v4300
        %4483 = vst.msk [vmem:[%s4471 + $0x98] sm:$0xff] %vm4150, %v4302
        %4484 = vst.msk [vmem:[%s4471 + $0xc0] sm:$0xff] %vm4150, %v4304
        %4485 = vst.msk [vmem:[%s4471 + $0xc8] sm:$0xff] %vm4150, %v4306
        %4486 = vst.msk [vmem:[%s4471 + $0xd0] sm:$0xff] %vm4150, %v4308
        %4487 = vst.msk [vmem:[%s4471 + $0xd8] sm:$0xff] %vm4150, %v4310
        %4488 = vst.msk [vmem:[%s4471 + $0x100] sm:$0xff] %vm4150, %v4312
        %4489 = vst.msk [vmem:[%s4471 + $0x108] sm:$0xff] %vm4150, %v4314
        %4490 = vst.msk [vmem:[%s4471 + $0x110] sm:$0xff] %vm4150, %v4316
        %4491 = vst.msk [vmem:[%s4471 + $0x118] sm:$0xff] %vm4150, %v4318
        %4492 = vst.msk [vmem:[%s4471 + $0x140] sm:$0xff] %vm4150, %v4320
        %4493 = vst.msk [vmem:[%s4471 + $0x148] sm:$0xff] %vm4150, %v4322
        %4494 = vst.msk [vmem:[%s4471 + $0x150] sm:$0xff] %vm4150, %v4324
        %4495 = vst.msk [vmem:[%s4471 + $0x158] sm:$0xff] %vm4150, %v4326
        %4496 = vst.msk [vmem:[%s4471 + $0x180] sm:$0xff] %vm4150, %v4328
        %4497 = vst.msk [vmem:[%s4471 + $0x188] sm:$0xff] %vm4150, %v4330
        %4498 = vst.msk [vmem:[%s4471 + $0x190] sm:$0xff] %vm4150, %v4332
        %4499 = vst.msk [vmem:[%s4471 + $0x198] sm:$0xff] %vm4150, %v4334
        %4500 = vst.msk [vmem:[%s4471 + $0x1c0] sm:$0xff] %vm4150, %v4336
        %4501 = vst.msk [vmem:[%s4471 + $0x1c8] sm:$0xff] %vm4150, %v4338
        %4502 = vst.msk [vmem:[%s4471 + $0x1d0] sm:$0xff] %vm4150, %v4340
        %4503 = vst.msk [vmem:[%s4471 + $0x1d8] sm:$0xff] %vm4150, %v4342
        %4504 = vst.msk [vmem:[%s4471 + $0x200] sm:$0xff] %vm4150, %v4344
        %4505 = vst.msk [vmem:[%s4471 + $0x208] sm:$0xff] %vm4150, %v4346
        %4506 = vst.msk [vmem:[%s4471 + $0x210] sm:$0xff] %vm4150, %v4348
        %4507 = vst.msk [vmem:[%s4471 + $0x218] sm:$0xff] %vm4150, %v4350
        %4508 = vst.msk [vmem:[%s4471 + $0x240] sm:$0xff] %vm4150, %v4352
        %4509 = vst.msk [vmem:[%s4471 + $0x248] sm:$0xff] %vm4150, %v4354
        %4510 = vst.msk [vmem:[%s4471 + $0x250] sm:$0xff] %vm4150, %v4356
        %4511 = vst.msk [vmem:[%s4471 + $0x258] sm:$0xff] %vm4150, %v4358
        %4512 = vst.msk [vmem:[%s4471 + $0x280] sm:$0xff] %vm4150, %v4360
        %4513 = vst.msk [vmem:[%s4471 + $0x288] sm:$0xff] %vm4150, %v4362
        %4514 = vst.msk [vmem:[%s4471 + $0x290] sm:$0xff] %vm4150, %v4364
        %4515 = vst.msk [vmem:[%s4471 + $0x298] sm:$0xff] %vm4150, %v4366
        %4516 = vst.msk [vmem:[%s4471 + $0x2c0] sm:$0xff] %vm4150, %v4368
        %4517 = vst.msk [vmem:[%s4471 + $0x2c8] sm:$0xff] %vm4150, %v4370
        %4518 = vst.msk [vmem:[%s4471 + $0x2d0] sm:$0xff] %vm4150, %v4372
        %4519 = vst.msk [vmem:[%s4471 + $0x2d8] sm:$0xff] %vm4150, %v4374
        %4520 = vst.msk [vmem:[%s4471 + $0x300] sm:$0xff] %vm4150, %v4376
        %4521 = vst.msk [vmem:[%s4471 + $0x308] sm:$0xff] %vm4150, %v4378
        %4522 = vst.msk [vmem:[%s4471 + $0x310] sm:$0xff] %vm4150, %v4380
        %4523 = vst.msk [vmem:[%s4471 + $0x318] sm:$0xff] %vm4150, %v4382
        %4524 = vst.msk [vmem:[%s4471 + $0x340] sm:$0xff] %vm4150, %v4384
        %4525 = vst.msk [vmem:[%s4471 + $0x348] sm:$0xff] %vm4150, %v4386
        %4526 = vst.msk [vmem:[%s4471 + $0x350] sm:$0xff] %vm4150, %v4388
        %4527 = vst.msk [vmem:[%s4471 + $0x358] sm:$0xff] %vm4150, %v4390
        %4528 = vst.msk [vmem:[%s4471 + $0x380] sm:$0xff] %vm4150, %v4392
        %4529 = vst.msk [vmem:[%s4471 + $0x388] sm:$0xff] %vm4150, %v4394
        %4530 = vst.msk [vmem:[%s4471 + $0x390] sm:$0xff] %vm4150, %v4396
        %4531 = vst.msk [vmem:[%s4471 + $0x398] sm:$0xff] %vm4150, %v4398
        %4532 = vst.msk [vmem:[%s4471 + $0x3c0] sm:$0xff] %vm4150, %v4400
        %4533 = vst.msk [vmem:[%s4471 + $0x3c8] sm:$0xff] %vm4150, %v4402
        %4534 = vst.msk [vmem:[%s4471 + $0x3d0] sm:$0xff] %vm4150, %v4404
        %4535 = vst.msk [vmem:[%s4471 + $0x3d8] sm:$0xff] %vm4150, %v4406
        %s4536 = smul.u32 %s19, 2
        %s4537 = sadd.s32 %s4536, %s20
        %s4538 = smul.u32 16, %s4537
        %p4539 = scmp.lt.s32.totalorder %s4538, 63
        %s4540 = scalar_select %p4539, %s4538, 63
        %s4541 = smul.addr %s4540, 8
        %s4542 = smul.addr %s4541, 8
        %s4543 = scalar_lea.vmem %s3, %s4542
        // Predicated region
        $region37: #{decoder_pallas.7} parent=31 // pred_check
          %p4544 = pneg %p117
        $region38: #{decoder_pallas.7} parent=31 // pred_check_branch
          %4546 = sbr.rel (%p4544) target = $region40
        $region39: #{decoder_pallas.7} parent=31 // pred_region
          %s4547 = smul.u32 %s19, 2
          %s4548 = sadd.s32 %s4547, %s20
          %s4549 = smul.u32 16, %s4548
        $region40: #{decoder_pallas.7} parent=31 // pred_fallthru
          _
      $region32: #{decoder_pallas.7} parent=5 // pred_fallthru
        _
      %p4550 = scmp.le.s32.totalorder 2, %s10
      // Predicated region
      $region41: #{decoder_pallas.7} parent=5 // pred_check
        %p4551 = pneg %p4550
      $region42: #{decoder_pallas.7} parent=5 // pred_check_branch
        %4553 = sbr.rel (%p4551) target = $region44
      $region43: #{decoder_pallas.7} parent=5 // pred_region
        %s4554 = ssub.s32 %s10, 2
        // Predicated region
        $region45: #{decoder_pallas.7} parent=43 // pred_check
          %p4555 = pneg %p123
        $region46: #{decoder_pallas.7} parent=43 // pred_check_branch
          %4557 = sbr.rel (%p4555) target = $region48
        $region47: #{decoder_pallas.7} parent=43 // pred_region
          %s4558 = smul.u32 %s21, 2
          %s4559 = sadd.s32 %s4558, %s22
          %s4560 = smul.u32 16, %s4559
          %p4561 = scmp.lt.s32.totalorder %s4560, 63
          %s4562 = scalar_select %p4561, %s4560, 63
          %s4563 = smul.addr %s4562, 8
          %s4564 = smul.addr %s4563, 8
          %s4565 = scalar_lea.vmem %s3, %s4564
        $region48: #{decoder_pallas.7} parent=43 // pred_fallthru
          _
      $region44: #{decoder_pallas.7} parent=5 // pred_fallthru
        _
    $region6: #{decoder_pallas.7} parent=1 // loop_footer
      %s14 = sadd.s32 1, %s10
    $region7: #{decoder_pallas.7} parent=1 // loop_footer_branch
      %9 = sbr.rel target = $region3
    $region8: #{decoder_pallas.7} parent=1 // loop_exit
      _
    %4566 = vsyncpa [#allocation4], 1
    %s4567 = scalar_lea.sflag [#allocation4], 1
    %4568 = vsyncpa %s4567, 1

</llo_original>
